<compile_context>
chip_gen: v7x
topology: tpu7x:2x2x1
jax: 0.10.0
libtpu: 0.0.40
codegen_flags: <defaults>
</compile_context>

<pallas_src>
import math

import jax
import jax.numpy as jnp
from jax.experimental import pallas as pl
from jax.experimental.pallas import tpu as pltpu


def _layernorm(v, g, b, eps=1e-5):
    mu = jnp.mean(v, axis=-1, keepdims=True)
    var = jnp.mean((v - mu) ** 2, axis=-1, keepdims=True)
    return (v - mu) * jax.lax.rsqrt(var + eps) * g + b


def _gelu_exact(v):
    # x * Phi(x), erf-based, matching torch.distributions.Normal(0,1).cdf(x)*x
    # TODO(synk): on v5e consider tanh-approx GELU (EUP slot) if the accuracy
    # budget allows; exact erf lowers to a VPU polynomial.
    return v * 0.5 * (1.0 + jax.lax.erf(v * (1.0 / math.sqrt(2.0))))


def _make_mhsa_kernel(num_heads, n_rff_linears):
    def kernel(xf_ref, xq_ref,
               ln0_g, ln0_b, ln1_g, ln1_b,
               w_res, b_res, w_q, b_q, w_k, b_k, w_v, b_v,
               w_mix, b_mix,
               *rest):
        out_ref, k_scr, v_scr, o_scr = rest[-4], rest[-3], rest[-2], rest[-1]
        rff_params = rest[:-4]
        assert len(rff_params) == 2 * n_rff_linears

        qt = pl.program_id(1)
        S = xf_ref.shape[1]
        tq, D = xq_ref.shape[1], xq_ref.shape[2]
        nh = num_heads
        dh = D // nh
        bf16 = jnp.bfloat16
        f32 = jnp.float32

        # ---- K / V for the whole sequence: computed once per batch element.
        # Full lane-dense (S, D) @ (D, D) projections; K/V stay 2-D (dense, no
        # per-head lane padding) in persistent VMEM scratch.
        # TODO(synk): for production S on v7x (64 MiB VMEM), hoist K/V
        # production out of this kernel and tile the key axis with an online
        # (flash-style) softmax so VMEM stays O(tile) and both grid axes can be
        # marked "parallel" (also removes the qt==0 load imbalance).
        @pl.when(qt == 0)
        def _():
            xf = xf_ref[0]                                         # (S, D) bf16
            k2 = jnp.dot(xf, w_k[...], preferred_element_type=f32) + b_k[...]
            v2 = jnp.dot(xf, w_v[...], preferred_element_type=f32) + b_v[...]
            k_scr[...] = k2.astype(bf16)
            v_scr[...] = v2.astype(bf16)

        # ---- row-wise work for this query tile -----------------------------
        xq = xq_ref[0]                                             # (tq, D) f32
        xq_bf = xq.astype(bf16)
        xmh_bf = _layernorm(xq, ln0_g[...], ln0_b[...]).astype(bf16)

        x_res = jnp.dot(xq_bf, w_res[...],
                        preferred_element_type=f32) + b_res[...]   # (tq, D)

        # Q projection: full (tq, D) @ (D, D); 1/sqrt(D) temperature already
        # folded into w_q / b_q by the wrapper.
        q2 = jnp.dot(xmh_bf, w_q[...],
                     preferred_element_type=f32) + b_q[...]
        q_bf = q2.astype(bf16)

        # Attention per head: static lane-slice views of the dense Q/K/V,
        # scores via A @ B^T (contract feature dims -> lane-dense (tq, S)
        # output), softmax in f32, per-head output written head-major into
        # o_scr so mix_heads becomes one full-depth matmul.
        dn_qk = (((1,), (1,)), ((), ()))
        for h in range(nh):
            lo, hi = h * dh, (h + 1) * dh
            qh = q_bf[:, lo:hi]                                    # (tq, dh)
            kh = k_scr[:, lo:hi]                                   # (S, dh) bf16
            vh = v_scr[:, lo:hi]                                   # (S, dh) bf16
            s = jax.lax.dot_general(qh, kh, dimension_numbers=dn_qk,
                                    preferred_element_type=f32)    # (tq, S)
            m = jnp.max(s, axis=-1, keepdims=True)
            e = jnp.exp(s - m)
            p = e * pl.reciprocal(jnp.sum(e, axis=-1, keepdims=True),
                                  approx=True)
            o_h = jnp.dot(p.astype(bf16), vh,
                          preferred_element_type=f32)              # (tq, dh)
            o_scr[:, lo:hi] = o_h.astype(bf16)

        # mix_heads: single (tq, D) @ (D, D) matmul on concat_h(o_h).
        h_out = (jnp.dot(o_scr[...], w_mix[...], preferred_element_type=f32)
                 + b_mix[...] + x_res)                             # (tq, D)

        # row-wise feed-forward on ln_1(h_out); bf16 operands, f32 accumulate.
        z = _layernorm(h_out, ln1_g[...], ln1_b[...])
        for i in range(n_rff_linears - 1):
            w, b = rff_params[2 * i], rff_params[2 * i + 1]
            z = _gelu_exact(jnp.dot(z.astype(bf16), w[...],
                                    preferred_element_type=f32) + b[...])
        w, b = rff_params[-2], rff_params[-1]
        z = jnp.dot(z.astype(bf16), w[...],
                    preferred_element_type=f32) + b[...]

        # TODO(synk): emit bf16 output if downstream consumers accept it
        # (halves the (B, S, D) HBM writeback).
        out_ref[0] = h_out + z

    return kernel


def mhsa_pallas(x, params, num_heads, rff_layers, tq=None):
    B, S, D = x.shape
    assert D % num_heads == 0
    if tq is None:
        if S % 128 == 0 and S >= 128:
            tq = 128
        elif S % 64 == 0 and S >= 64:
            tq = 64
        else:
            tq = S
    assert S % tq == 0
    n_qt = S // tq

    (ln0_g, ln0_b, ln1_g, ln1_b,
     w_res, b_res, w_k, b_k, w_q, b_q, w_v, b_v, w_mix, b_mix, *rff_p) = params
    n_rff_linears = 2 + rff_layers
    assert len(rff_p) == 2 * n_rff_linears

    bf16 = jnp.bfloat16
    # Fold softmax temperature 1/sqrt(input_dim) (module uses self.h = D)
    # into the Q projection.
    scale = 1.0 / math.sqrt(D)

    packed = [ln0_g, ln0_b, ln1_g, ln1_b,
              w_res.astype(bf16), b_res,
              (w_q * scale).astype(bf16), b_q * scale,
              w_k.astype(bf16), b_k,
              w_v.astype(bf16), b_v,
              w_mix.astype(bf16), b_mix]
    for i in range(0, len(rff_p), 2):
        packed += [rff_p[i].astype(bf16), rff_p[i + 1]]

    def const_spec(p):
        # Constant-index weight block: never re-DMA'd across grid steps.
        # TODO(synk): single-buffer these (pipeline_mode=pl.Buffered(1)) once
        # that is reliable for top-level pallas_call, to halve resident-weight
        # VMEM on v7x.
        return pl.BlockSpec(p.shape, lambda b, qt: (0, 0))

    in_specs = ([pl.BlockSpec((1, S, D), lambda b, qt: (b, 0, 0)),    # bf16 seq (K/V path)
                 pl.BlockSpec((1, tq, D), lambda b, qt: (b, qt, 0))]  # f32 query tile
                + [const_spec(p) for p in packed])
    out_specs = pl.BlockSpec((1, tq, D), lambda b, qt: (b, qt, 0))

    scratch_shapes = [pltpu.VMEM((S, D), bf16),    # K (dense 2-D)
                      pltpu.VMEM((S, D), bf16),    # V (dense 2-D)
                      pltpu.VMEM((tq, D), bf16)]   # concat per-head attn out

    # Shape-derived VMEM limit (instead of a hard-coded 32 MiB); capped at
    # ~85% of physical VMEM when that is queryable (keeps v7x headroom).
    def nbytes(a):
        return a.size * a.dtype.itemsize
    resident = (2 * S * D * 2          # xf block (bf16), double-buffered
                + 2 * tq * D * 4       # xq block (f32)
                + 2 * tq * D * 4       # output block (f32)
                + 2 * sum(nbytes(p) for p in packed)   # double-buffered weights
                + 2 * S * D * 2 + tq * D * 2)          # scratch
    vmem_limit = max(int(resident * 1.5) + (16 << 20), 32 << 20)
    cap = 100 << 20
    try:
        phys = getattr(pltpu.get_tpu_info(), "vmem_capacity_bytes", None)
        if phys:
            cap = min(cap, int(phys * 0.85))
    except Exception:
        pass
    vmem_limit = min(vmem_limit, cap)

    kernel = _make_mhsa_kernel(num_heads, n_rff_linears)

    return pl.pallas_call(
        kernel,
        out_shape=jax.ShapeDtypeStruct((B, S, D), jnp.float32),
        grid_spec=pltpu.PrefetchScalarGridSpec(
            num_scalar_prefetch=0,
            grid=(B, n_qt),
            in_specs=in_specs,
            out_specs=out_specs,
            scratch_shapes=scratch_shapes,
        ),
        compiler_params=pltpu.CompilerParams(
            dimension_semantics=("parallel", "arbitrary"),
            vmem_limit_bytes=vmem_limit,
        ),
    )(x.astype(bf16), x, *packed)


# ------------------------- parameter construction -------------------------

def _init_linear(key, in_dim, out_dim):
    # mimic torch nn.Linear default init; weight stored as (in, out) == W^T
    k1, k2 = jax.random.split(key)
    bound = 1.0 / math.sqrt(in_dim)
    w = jax.random.uniform(k1, (in_dim, out_dim), jnp.float32, -bound, bound)
    b = jax.random.uniform(k2, (1, out_dim), jnp.float32, -bound, bound)
    return w, b


def make_params(key, input_dim, rff_layers):
    D = input_dim
    keys = jax.random.split(key, 8 + rff_layers)
    params = []
    # layernorm 0 / 1 (torch default: gamma=1, beta=0)
    params += [jnp.ones((1, D), jnp.float32), jnp.zeros((1, D), jnp.float32)]
    params += [jnp.ones((1, D), jnp.float32), jnp.zeros((1, D), jnp.float32)]
    # res, keys, queries, values, mix_heads
    for i in range(5):
        w, b = _init_linear(keys[i], D, D)
        params += [w, b]
    # rff: Linear(D,4D), rff_layers x Linear(4D,4D), Linear(4D,D)
    w, b = _init_linear(keys[5], D, 4 * D)
    params += [w, b]
    for i in range(rff_layers):
        w, b = _init_linear(keys[6 + i], 4 * D, 4 * D)
        params += [w, b]
    w, b = _init_linear(keys[6 + rff_layers], 4 * D, D)
    params += [w, b]
    return params


# ------------------------- plain-JAX reference -------------------------
# Mirrors the kernel's precision policy (bf16 matmul operands, f32 accumulate,
# f32 LayerNorm/softmax/GELU) so the comparison tolerance stays tight.

def mhsa_reference(x, params, num_heads, rff_layers):
    (ln0_g, ln0_b, ln1_g, ln1_b,
     w_res, b_res, w_k, b_k, w_q, b_q, w_v, b_v, w_mix, b_mix, *rff_p) = params
    B, S, D = x.shape
    dh = D // num_heads
    bf = jnp.bfloat16

    def mm(a, w, b):
        return jnp.dot(a.astype(bf), w.astype(bf),
                       preferred_element_type=jnp.float32) + b

    x_mh = _layernorm(x, ln0_g, ln0_b)
    x_res = mm(x, w_res, b_res)
    K = mm(x, w_k, b_k)
    Q = mm(x_mh, w_q, b_q)
    V = mm(x, w_v, b_v)

    def heads(t):  # (B,S,D) -> (B,H,S,dh)
        return t.reshape(B, S, num_heads, dh).transpose(0, 2, 1, 3)

    Qh, Kh, Vh = heads(Q), heads(K), heads(V)
    s = jnp.einsum('bhqd,bhkd->bhqk', Qh.astype(bf), Kh.astype(bf),
                   preferred_element_type=jnp.float32) / math.sqrt(D)
    a = jax.nn.softmax(s, axis=-1)
    mh = jnp.einsum('bhqk,bhkd->bhqd', a.astype(bf), Vh.astype(bf),
                    preferred_element_type=jnp.float32)
    mh = mh.transpose(0, 2, 1, 3).reshape(B, S, D)

    H = mm(mh, w_mix, b_mix) + x_res
    z = _layernorm(H, ln1_g, ln1_b)
    idx = 0
    for _ in range(1 + rff_layers):
        z = _gelu_exact(mm(z, rff_p[idx], rff_p[idx + 1]))
        idx += 2
    z = mm(z, rff_p[idx], rff_p[idx + 1])
    return H + z


if __name__ == "__main__":
    # lane-dense small test shapes (D and 4*D are multiples of 128); S = 256
    # exercises both the qt==0 K/V-fill path and the scratch-reuse path.
    B, S, D = 2, 256, 128
    num_heads = 4
    rff_layers = 1

    key = jax.random.PRNGKey(0)
    kx, kp = jax.random.split(key)
    x = jax.random.normal(kx, (B, S, D), jnp.float32)
    params = make_params(kp, D, rff_layers)

    out = mhsa_pallas(x, params, num_heads, rff_layers)
    out = jax.block_until_ready(out)

    ref = mhsa_reference(x, params, num_heads, rff_layers)
    assert out.shape == (B, S, D)
    max_err = float(jnp.max(jnp.abs(out - ref)))
    assert jnp.allclose(out, ref, atol=2e-2, rtol=2e-2), max_err

    print("KERNEL_OK")
</pallas_src>

<mosaic_0001>
module attributes {stable_mosaic.version = 11 : i64} {
  func.func @kernel(%arg0: i32, %arg1: i32, %arg2: memref<1x256x128xbf16, #tpu.memory_space<vmem>>, %arg3: memref<1x128x128xf32, #tpu.memory_space<vmem>>, %arg4: memref<1x128xf32, #tpu.memory_space<vmem>>, %arg5: memref<1x128xf32, #tpu.memory_space<vmem>>, %arg6: memref<1x128xf32, #tpu.memory_space<vmem>>, %arg7: memref<1x128xf32, #tpu.memory_space<vmem>>, %arg8: memref<128x128xbf16, #tpu.memory_space<vmem>>, %arg9: memref<1x128xf32, #tpu.memory_space<vmem>>, %arg10: memref<128x128xbf16, #tpu.memory_space<vmem>>, %arg11: memref<1x128xf32, #tpu.memory_space<vmem>>, %arg12: memref<128x128xbf16, #tpu.memory_space<vmem>>, %arg13: memref<1x128xf32, #tpu.memory_space<vmem>>, %arg14: memref<128x128xbf16, #tpu.memory_space<vmem>>, %arg15: memref<1x128xf32, #tpu.memory_space<vmem>>, %arg16: memref<128x128xbf16, #tpu.memory_space<vmem>>, %arg17: memref<1x128xf32, #tpu.memory_space<vmem>>, %arg18: memref<128x512xbf16, #tpu.memory_space<vmem>>, %arg19: memref<1x512xf32, #tpu.memory_space<vmem>>, %arg20: memref<512x512xbf16, #tpu.memory_space<vmem>>, %arg21: memref<1x512xf32, #tpu.memory_space<vmem>>, %arg22: memref<512x128xbf16, #tpu.memory_space<vmem>>, %arg23: memref<1x128xf32, #tpu.memory_space<vmem>>, %arg24: memref<1x128x128xf32, #tpu.memory_space<vmem>>, %arg25: memref<256x128xbf16, #tpu.memory_space<vmem>>, %arg26: memref<256x128xbf16, #tpu.memory_space<vmem>>, %arg27: memref<128x128xbf16, #tpu.memory_space<vmem>>) attributes {dimension_semantics = [#tpu.dimension_semantics<parallel>, #tpu.dimension_semantics<arbitrary>], iteration_bounds = array<i64: 2, 2>, scalar_prefetch = 0 : i64, scratch_operands = 3 : i64, tpu.core_type = #tpu.core_type<tc>, window_params = [{transform_indices = @transform_0, window_bounds = array<i64: 1, 256, 128>}, {transform_indices = @transform_1, window_bounds = array<i64: 1, 128, 128>}, {pipeline_mode = #tpu.pipeline_mode<synchronous>, transform_indices = @transform_2, window_bounds = array<i64: 1, 128>}, {pipeline_mode = #tpu.pipeline_mode<synchronous>, transform_indices = @transform_3, window_bounds = array<i64: 1, 128>}, {pipeline_mode = #tpu.pipeline_mode<synchronous>, transform_indices = @transform_4, window_bounds = array<i64: 1, 128>}, {pipeline_mode = #tpu.pipeline_mode<synchronous>, transform_indices = @transform_5, window_bounds = array<i64: 1, 128>}, {pipeline_mode = #tpu.pipeline_mode<synchronous>, transform_indices = @transform_6, window_bounds = array<i64: 128, 128>}, {pipeline_mode = #tpu.pipeline_mode<synchronous>, transform_indices = @transform_7, window_bounds = array<i64: 1, 128>}, {pipeline_mode = #tpu.pipeline_mode<synchronous>, transform_indices = @transform_8, window_bounds = array<i64: 128, 128>}, {pipeline_mode = #tpu.pipeline_mode<synchronous>, transform_indices = @transform_9, window_bounds = array<i64: 1, 128>}, {pipeline_mode = #tpu.pipeline_mode<synchronous>, transform_indices = @transform_10, window_bounds = array<i64: 128, 128>}, {pipeline_mode = #tpu.pipeline_mode<synchronous>, transform_indices = @transform_11, window_bounds = array<i64: 1, 128>}, {pipeline_mode = #tpu.pipeline_mode<synchronous>, transform_indices = @transform_12, window_bounds = array<i64: 128, 128>}, {pipeline_mode = #tpu.pipeline_mode<synchronous>, transform_indices = @transform_13, window_bounds = array<i64: 1, 128>}, {pipeline_mode = #tpu.pipeline_mode<synchronous>, transform_indices = @transform_14, window_bounds = array<i64: 128, 128>}, {pipeline_mode = #tpu.pipeline_mode<synchronous>, transform_indices = @transform_15, window_bounds = array<i64: 1, 128>}, {pipeline_mode = #tpu.pipeline_mode<synchronous>, transform_indices = @transform_16, window_bounds = array<i64: 128, 512>}, {pipeline_mode = #tpu.pipeline_mode<synchronous>, transform_indices = @transform_17, window_bounds = array<i64: 1, 512>}, {pipeline_mode = #tpu.pipeline_mode<synchronous>, transform_indices = @transform_18, window_bounds = array<i64: 512, 512>}, {pipeline_mode = #tpu.pipeline_mode<synchronous>, transform_indices = @transform_19, window_bounds = array<i64: 1, 512>}, {pipeline_mode = #tpu.pipeline_mode<synchronous>, transform_indices = @transform_20, window_bounds = array<i64: 512, 128>}, {pipeline_mode = #tpu.pipeline_mode<synchronous>, transform_indices = @transform_21, window_bounds = array<i64: 1, 128>}, {transform_indices = @transform_22, window_bounds = array<i64: 1, 128, 128>}]} {
    %c0_i32 = arith.constant 0 : i32
    %0 = arith.cmpi eq, %arg1, %c0_i32 : i32
    %1 = arith.extui %0 : i1 to i32
    %c0_i32_0 = arith.constant 0 : i32
    %2 = arith.cmpi ne, %1, %c0_i32_0 : i32
    scf.if %2 {
      %c0_98 = arith.constant 0 : index
      %c0_99 = arith.constant 0 : index
      %c0_100 = arith.constant 0 : index
      %183 = vector.load %arg2[%c0_98, %c0_99, %c0_100] : memref<1x256x128xbf16, #tpu.memory_space<vmem>>, vector<1x256x128xbf16>
      %184 = vector.shape_cast %183 : vector<1x256x128xbf16> to vector<256x128xbf16>
      %c0_101 = arith.constant 0 : index
      %c0_102 = arith.constant 0 : index
      %185 = vector.load %arg12[%c0_101, %c0_102] : memref<128x128xbf16, #tpu.memory_space<vmem>>, vector<128x128xbf16>
      %cst_103 = arith.constant dense<0.000000e+00> : vector<256x128xf32>
      %186 = tpu.matmul %184, %185, %cst_103 {dimension_numbers = #tpu.dot_dimension_numbers<[1], [0], [0], [1], [0, 0, 1, 1], [], []>} : vector<256x128xbf16>, vector<128x128xbf16>, vector<256x128xf32> -> vector<256x128xf32>
      %c0_104 = arith.constant 0 : index
      %c0_105 = arith.constant 0 : index
      %187 = vector.load %arg13[%c0_104, %c0_105] : memref<1x128xf32, #tpu.memory_space<vmem>>, vector<1x128xf32>
      %188 = vector.broadcast %187 : vector<1x128xf32> to vector<256x128xf32>
      %189 = arith.addf %186, %188 : vector<256x128xf32>
      %c0_106 = arith.constant 0 : index
      %c0_107 = arith.constant 0 : index
      %190 = vector.load %arg14[%c0_106, %c0_107] : memref<128x128xbf16, #tpu.memory_space<vmem>>, vector<128x128xbf16>
      %cst_108 = arith.constant dense<0.000000e+00> : vector<256x128xf32>
      %191 = tpu.matmul %184, %190, %cst_108 {dimension_numbers = #tpu.dot_dimension_numbers<[1], [0], [0], [1], [0, 0, 1, 1], [], []>} : vector<256x128xbf16>, vector<128x128xbf16>, vector<256x128xf32> -> vector<256x128xf32>
      %c0_109 = arith.constant 0 : index
      %c0_110 = arith.constant 0 : index
      %192 = vector.load %arg15[%c0_109, %c0_110] : memref<1x128xf32, #tpu.memory_space<vmem>>, vector<1x128xf32>
      %193 = vector.broadcast %192 : vector<1x128xf32> to vector<256x128xf32>
      %194 = arith.addf %191, %193 : vector<256x128xf32>
      %195 = arith.truncf %189 : vector<256x128xf32> to vector<256x128xbf16>
      %c0_111 = arith.constant 0 : index
      %c0_112 = arith.constant 0 : index
      %196 = vector.load %arg25[%c0_111, %c0_112] : memref<256x128xbf16, #tpu.memory_space<vmem>>, vector<256x128xbf16>
      tpu.vector_store %arg25[%c0_111, %c0_112], %195 {strides = array<i32>} : memref<256x128xbf16, #tpu.memory_space<vmem>>, vector<256x128xbf16>,
      %197 = arith.truncf %194 : vector<256x128xf32> to vector<256x128xbf16>
      %c0_113 = arith.constant 0 : index
      %c0_114 = arith.constant 0 : index
      %198 = vector.load %arg26[%c0_113, %c0_114] : memref<256x128xbf16, #tpu.memory_space<vmem>>, vector<256x128xbf16>
      tpu.vector_store %arg26[%c0_113, %c0_114], %197 {strides = array<i32>} : memref<256x128xbf16, #tpu.memory_space<vmem>>, vector<256x128xbf16>,
    } else {
    }
    %c0 = arith.constant 0 : index
    %c0_1 = arith.constant 0 : index
    %c0_2 = arith.constant 0 : index
    %3 = vector.load %arg3[%c0, %c0_1, %c0_2] : memref<1x128x128xf32, #tpu.memory_space<vmem>>, vector<1x128x128xf32>
    %4 = vector.shape_cast %3 : vector<1x128x128xf32> to vector<128x128xf32>
    %5 = arith.truncf %4 : vector<128x128xf32> to vector<128x128xbf16>
    %c0_3 = arith.constant 0 : index
    %c0_4 = arith.constant 0 : index
    %6 = vector.load %arg4[%c0_3, %c0_4] : memref<1x128xf32, #tpu.memory_space<vmem>>, vector<1x128xf32>
    %c0_5 = arith.constant 0 : index
    %c0_6 = arith.constant 0 : index
    %7 = vector.load %arg5[%c0_5, %c0_6] : memref<1x128xf32, #tpu.memory_space<vmem>>, vector<1x128xf32>
    %cst = arith.constant dense<0.000000e+00> : vector<128xf32>
    %8 = vector.multi_reduction <add>, %4, %cst [1] : vector<128x128xf32> to vector<128xf32>
    %9 = vector.shape_cast %8 : vector<128xf32> to vector<128x1xf32>
    %cst_7 = arith.constant 1.280000e+02 : f32
    %10 = vector.broadcast %cst_7 : f32 to vector<128x1xf32>
    %11 = arith.divf %9, %10 : vector<128x1xf32>
    %12 = vector.broadcast %11 : vector<128x1xf32> to vector<128x128xf32>
    %13 = arith.subf %4, %12 : vector<128x128xf32>
    %14 = arith.mulf %13, %13 : vector<128x128xf32>
    %cst_8 = arith.constant dense<0.000000e+00> : vector<128xf32>
    %15 = vector.multi_reduction <add>, %14, %cst_8 [1] : vector<128x128xf32> to vector<128xf32>
    %16 = vector.shape_cast %15 : vector<128xf32> to vector<128x1xf32>
    %cst_9 = arith.constant 1.280000e+02 : f32
    %17 = vector.broadcast %cst_9 : f32 to vector<128x1xf32>
    %18 = arith.divf %16, %17 : vector<128x1xf32>
    %19 = vector.broadcast %11 : vector<128x1xf32> to vector<128x128xf32>
    %20 = arith.subf %4, %19 : vector<128x128xf32>
    %cst_10 = arith.constant 9.99999974E-6 : f32
    %21 = vector.broadcast %cst_10 : f32 to vector<128x1xf32>
    %22 = arith.addf %18, %21 : vector<128x1xf32>
    %23 = math.rsqrt %22 : vector<128x1xf32>
    %24 = vector.broadcast %23 : vector<128x1xf32> to vector<128x128xf32>
    %25 = arith.mulf %20, %24 : vector<128x128xf32>
    %26 = vector.broadcast %6 : vector<1x128xf32> to vector<128x128xf32>
    %27 = arith.mulf %25, %26 : vector<128x128xf32>
    %28 = vector.broadcast %7 : vector<1x128xf32> to vector<128x128xf32>
    %29 = arith.addf %27, %28 : vector<128x128xf32>
    %30 = arith.truncf %29 : vector<128x128xf32> to vector<128x128xbf16>
    %c0_11 = arith.constant 0 : index
    %c0_12 = arith.constant 0 : index
    %31 = vector.load %arg8[%c0_11, %c0_12] : memref<128x128xbf16, #tpu.memory_space<vmem>>, vector<128x128xbf16>
    %cst_13 = arith.constant dense<0.000000e+00> : vector<128x128xf32>
    %32 = tpu.matmul %5, %31, %cst_13 {dimension_numbers = #tpu.dot_dimension_numbers<[1], [0], [0], [1], [0, 0, 1, 1], [], []>} : vector<128x128xbf16>, vector<128x128xbf16>, vector<128x128xf32> -> vector<128x128xf32>
    %c0_14 = arith.constant 0 : index
    %c0_15 = arith.constant 0 : index
    %33 = vector.load %arg9[%c0_14, %c0_15] : memref<1x128xf32, #tpu.memory_space<vmem>>, vector<1x128xf32>
    %34 = vector.broadcast %33 : vector<1x128xf32> to vector<128x128xf32>
    %35 = arith.addf %32, %34 : vector<128x128xf32>
    %c0_16 = arith.constant 0 : index
    %c0_17 = arith.constant 0 : index
    %36 = vector.load %arg10[%c0_16, %c0_17] : memref<128x128xbf16, #tpu.memory_space<vmem>>, vector<128x128xbf16>
    %cst_18 = arith.constant dense<0.000000e+00> : vector<128x128xf32>
    %37 = tpu.matmul %30, %36, %cst_18 {dimension_numbers = #tpu.dot_dimension_numbers<[1], [0], [0], [1], [0, 0, 1, 1], [], []>} : vector<128x128xbf16>, vector<128x128xbf16>, vector<128x128xf32> -> vector<128x128xf32>
    %c0_19 = arith.constant 0 : index
    %c0_20 = arith.constant 0 : index
    %38 = vector.load %arg11[%c0_19, %c0_20] : memref<1x128xf32, #tpu.memory_space<vmem>>, vector<1x128xf32>
    %39 = vector.broadcast %38 : vector<1x128xf32> to vector<128x128xf32>
    %40 = arith.addf %37, %39 : vector<128x128xf32>
    %41 = arith.truncf %40 : vector<128x128xf32> to vector<128x128xbf16>
    %42 = vector.extract_strided_slice %41 {offsets = [0, 0], sizes = [128, 32], strides = [1, 1]} : vector<128x128xbf16> to vector<128x32xbf16>
    %c0_21 = arith.constant 0 : index
    %c0_22 = arith.constant 0 : index
    %43 = vector.load %arg25[%c0_21, %c0_22] : memref<256x128xbf16, #tpu.memory_space<vmem>>, vector<256x32xbf16>
    %c0_23 = arith.constant 0 : index
    %c0_24 = arith.constant 0 : index
    %44 = vector.load %arg26[%c0_23, %c0_24] : memref<256x128xbf16, #tpu.memory_space<vmem>>, vector<256x32xbf16>
    %cst_25 = arith.constant dense<0.000000e+00> : vector<128x256xf32>
    %45 = tpu.matmul %42, %43, %cst_25 {dimension_numbers = #tpu.dot_dimension_numbers<[1], [1], [0], [0], [0, 0, 1, 0], [], []>} : vector<128x32xbf16>, vector<256x32xbf16>, vector<128x256xf32> -> vector<128x256xf32>
    %cst_26 = arith.constant dense<0xFF800000> : vector<128xf32>
    %46 = vector.multi_reduction <maximumf>, %45, %cst_26 [1] : vector<128x256xf32> to vector<128xf32>
    %47 = vector.shape_cast %46 : vector<128xf32> to vector<128x1xf32>
    %48 = vector.broadcast %47 : vector<128x1xf32> to vector<128x256xf32>
    %49 = arith.subf %45, %48 : vector<128x256xf32>
    %50 = math.exp %49 : vector<128x256xf32>
    %cst_27 = arith.constant dense<0.000000e+00> : vector<128xf32>
    %51 = vector.multi_reduction <add>, %50, %cst_27 [1] : vector<128x256xf32> to vector<128xf32>
    %52 = vector.shape_cast %51 : vector<128xf32> to vector<128x1xf32>
    %53 = tpu.reciprocal %52 {approx = true} : vector<128x1xf32> -> vector<128x1xf32>
    %54 = vector.broadcast %53 : vector<128x1xf32> to vector<128x256xf32>
    %55 = arith.mulf %50, %54 : vector<128x256xf32>
    %56 = arith.truncf %55 : vector<128x256xf32> to vector<128x256xbf16>
    %cst_28 = arith.constant dense<0.000000e+00> : vector<128x32xf32>
    %57 = tpu.matmul %56, %44, %cst_28 {dimension_numbers = #tpu.dot_dimension_numbers<[1], [0], [0], [1], [0, 0, 1, 1], [], []>} : vector<128x256xbf16>, vector<256x32xbf16>, vector<128x32xf32> -> vector<128x32xf32>
    %58 = arith.truncf %57 : vector<128x32xf32> to vector<128x32xbf16>
    %c0_29 = arith.constant 0 : index
    %c0_30 = arith.constant 0 : index
    %59 = vector.load %arg27[%c0_29, %c0_30] : memref<128x128xbf16, #tpu.memory_space<vmem>>, vector<128x32xbf16>
    tpu.vector_store %arg27[%c0_29, %c0_30], %58 {strides = array<i32>} : memref<128x128xbf16, #tpu.memory_space<vmem>>, vector<128x32xbf16>,
    %60 = vector.extract_strided_slice %41 {offsets = [0, 32], sizes = [128, 32], strides = [1, 1]} : vector<128x128xbf16> to vector<128x32xbf16>
    %c0_31 = arith.constant 0 : index
    %c32 = arith.constant 32 : index
    %61 = vector.load %arg25[%c0_31, %c32] : memref<256x128xbf16, #tpu.memory_space<vmem>>, vector<256x32xbf16>
    %c0_32 = arith.constant 0 : index
    %c32_33 = arith.constant 32 : index
    %62 = vector.load %arg26[%c0_32, %c32_33] : memref<256x128xbf16, #tpu.memory_space<vmem>>, vector<256x32xbf16>
    %cst_34 = arith.constant dense<0.000000e+00> : vector<128x256xf32>
    %63 = tpu.matmul %60, %61, %cst_34 {dimension_numbers = #tpu.dot_dimension_numbers<[1], [1], [0], [0], [0, 0, 1, 0], [], []>} : vector<128x32xbf16>, vector<256x32xbf16>, vector<128x256xf32> -> vector<128x256xf32>
    %cst_35 = arith.constant dense<0xFF800000> : vector<128xf32>
    %64 = vector.multi_reduction <maximumf>, %63, %cst_35 [1] : vector<128x256xf32> to vector<128xf32>
    %65 = vector.shape_cast %64 : vector<128xf32> to vector<128x1xf32>
    %66 = vector.broadcast %65 : vector<128x1xf32> to vector<128x256xf32>
    %67 = arith.subf %63, %66 : vector<128x256xf32>
    %68 = math.exp %67 : vector<128x256xf32>
    %cst_36 = arith.constant dense<0.000000e+00> : vector<128xf32>
    %69 = vector.multi_reduction <add>, %68, %cst_36 [1] : vector<128x256xf32> to vector<128xf32>
    %70 = vector.shape_cast %69 : vector<128xf32> to vector<128x1xf32>
    %71 = tpu.reciprocal %70 {approx = true} : vector<128x1xf32> -> vector<128x1xf32>
    %72 = vector.broadcast %71 : vector<128x1xf32> to vector<128x256xf32>
    %73 = arith.mulf %68, %72 : vector<128x256xf32>
    %74 = arith.truncf %73 : vector<128x256xf32> to vector<128x256xbf16>
    %cst_37 = arith.constant dense<0.000000e+00> : vector<128x32xf32>
    %75 = tpu.matmul %74, %62, %cst_37 {dimension_numbers = #tpu.dot_dimension_numbers<[1], [0], [0], [1], [0, 0, 1, 1], [], []>} : vector<128x256xbf16>, vector<256x32xbf16>, vector<128x32xf32> -> vector<128x32xf32>
    %76 = arith.truncf %75 : vector<128x32xf32> to vector<128x32xbf16>
    %c0_38 = arith.constant 0 : index
    %c32_39 = arith.constant 32 : index
    %77 = vector.load %arg27[%c0_38, %c32_39] : memref<128x128xbf16, #tpu.memory_space<vmem>>, vector<128x32xbf16>
    tpu.vector_store %arg27[%c0_38, %c32_39], %76 {strides = array<i32>} : memref<128x128xbf16, #tpu.memory_space<vmem>>, vector<128x32xbf16>,
    %78 = vector.extract_strided_slice %41 {offsets = [0, 64], sizes = [128, 32], strides = [1, 1]} : vector<128x128xbf16> to vector<128x32xbf16>
    %c0_40 = arith.constant 0 : index
    %c64 = arith.constant 64 : index
    %79 = vector.load %arg25[%c0_40, %c64] : memref<256x128xbf16, #tpu.memory_space<vmem>>, vector<256x32xbf16>
    %c0_41 = arith.constant 0 : index
    %c64_42 = arith.constant 64 : index
    %80 = vector.load %arg26[%c0_41, %c64_42] : memref<256x128xbf16, #tpu.memory_space<vmem>>, vector<256x32xbf16>
    %cst_43 = arith.constant dense<0.000000e+00> : vector<128x256xf32>
    %81 = tpu.matmul %78, %79, %cst_43 {dimension_numbers = #tpu.dot_dimension_numbers<[1], [1], [0], [0], [0, 0, 1, 0], [], []>} : vector<128x32xbf16>, vector<256x32xbf16>, vector<128x256xf32> -> vector<128x256xf32>
    %cst_44 = arith.constant dense<0xFF800000> : vector<128xf32>
    %82 = vector.multi_reduction <maximumf>, %81, %cst_44 [1] : vector<128x256xf32> to vector<128xf32>
    %83 = vector.shape_cast %82 : vector<128xf32> to vector<128x1xf32>
    %84 = vector.broadcast %83 : vector<128x1xf32> to vector<128x256xf32>
    %85 = arith.subf %81, %84 : vector<128x256xf32>
    %86 = math.exp %85 : vector<128x256xf32>
    %cst_45 = arith.constant dense<0.000000e+00> : vector<128xf32>
    %87 = vector.multi_reduction <add>, %86, %cst_45 [1] : vector<128x256xf32> to vector<128xf32>
    %88 = vector.shape_cast %87 : vector<128xf32> to vector<128x1xf32>
    %89 = tpu.reciprocal %88 {approx = true} : vector<128x1xf32> -> vector<128x1xf32>
    %90 = vector.broadcast %89 : vector<128x1xf32> to vector<128x256xf32>
    %91 = arith.mulf %86, %90 : vector<128x256xf32>
    %92 = arith.truncf %91 : vector<128x256xf32> to vector<128x256xbf16>
    %cst_46 = arith.constant dense<0.000000e+00> : vector<128x32xf32>
    %93 = tpu.matmul %92, %80, %cst_46 {dimension_numbers = #tpu.dot_dimension_numbers<[1], [0], [0], [1], [0, 0, 1, 1], [], []>} : vector<128x256xbf16>, vector<256x32xbf16>, vector<128x32xf32> -> vector<128x32xf32>
    %94 = arith.truncf %93 : vector<128x32xf32> to vector<128x32xbf16>
    %c0_47 = arith.constant 0 : index
    %c64_48 = arith.constant 64 : index
    %95 = vector.load %arg27[%c0_47, %c64_48] : memref<128x128xbf16, #tpu.memory_space<vmem>>, vector<128x32xbf16>
    tpu.vector_store %arg27[%c0_47, %c64_48], %94 {strides = array<i32>} : memref<128x128xbf16, #tpu.memory_space<vmem>>, vector<128x32xbf16>,
    %96 = vector.extract_strided_slice %41 {offsets = [0, 96], sizes = [128, 32], strides = [1, 1]} : vector<128x128xbf16> to vector<128x32xbf16>
    %c0_49 = arith.constant 0 : index
    %c96 = arith.constant 96 : index
    %97 = vector.load %arg25[%c0_49, %c96] : memref<256x128xbf16, #tpu.memory_space<vmem>>, vector<256x32xbf16>
    %c0_50 = arith.constant 0 : index
    %c96_51 = arith.constant 96 : index
    %98 = vector.load %arg26[%c0_50, %c96_51] : memref<256x128xbf16, #tpu.memory_space<vmem>>, vector<256x32xbf16>
    %cst_52 = arith.constant dense<0.000000e+00> : vector<128x256xf32>
    %99 = tpu.matmul %96, %97, %cst_52 {dimension_numbers = #tpu.dot_dimension_numbers<[1], [1], [0], [0], [0, 0, 1, 0], [], []>} : vector<128x32xbf16>, vector<256x32xbf16>, vector<128x256xf32> -> vector<128x256xf32>
    %cst_53 = arith.constant dense<0xFF800000> : vector<128xf32>
    %100 = vector.multi_reduction <maximumf>, %99, %cst_53 [1] : vector<128x256xf32> to vector<128xf32>
    %101 = vector.shape_cast %100 : vector<128xf32> to vector<128x1xf32>
    %102 = vector.broadcast %101 : vector<128x1xf32> to vector<128x256xf32>
    %103 = arith.subf %99, %102 : vector<128x256xf32>
    %104 = math.exp %103 : vector<128x256xf32>
    %cst_54 = arith.constant dense<0.000000e+00> : vector<128xf32>
    %105 = vector.multi_reduction <add>, %104, %cst_54 [1] : vector<128x256xf32> to vector<128xf32>
    %106 = vector.shape_cast %105 : vector<128xf32> to vector<128x1xf32>
    %107 = tpu.reciprocal %106 {approx = true} : vector<128x1xf32> -> vector<128x1xf32>
    %108 = vector.broadcast %107 : vector<128x1xf32> to vector<128x256xf32>
    %109 = arith.mulf %104, %108 : vector<128x256xf32>
    %110 = arith.truncf %109 : vector<128x256xf32> to vector<128x256xbf16>
    %cst_55 = arith.constant dense<0.000000e+00> : vector<128x32xf32>
    %111 = tpu.matmul %110, %98, %cst_55 {dimension_numbers = #tpu.dot_dimension_numbers<[1], [0], [0], [1], [0, 0, 1, 1], [], []>} : vector<128x256xbf16>, vector<256x32xbf16>, vector<128x32xf32> -> vector<128x32xf32>
    %112 = arith.truncf %111 : vector<128x32xf32> to vector<128x32xbf16>
    %c0_56 = arith.constant 0 : index
    %c96_57 = arith.constant 96 : index
    %113 = vector.load %arg27[%c0_56, %c96_57] : memref<128x128xbf16, #tpu.memory_space<vmem>>, vector<128x32xbf16>
    tpu.vector_store %arg27[%c0_56, %c96_57], %112 {strides = array<i32>} : memref<128x128xbf16, #tpu.memory_space<vmem>>, vector<128x32xbf16>,
    %c0_58 = arith.constant 0 : index
    %c0_59 = arith.constant 0 : index
    %114 = vector.load %arg27[%c0_58, %c0_59] : memref<128x128xbf16, #tpu.memory_space<vmem>>, vector<128x128xbf16>
    %c0_60 = arith.constant 0 : index
    %c0_61 = arith.constant 0 : index
    %115 = vector.load %arg16[%c0_60, %c0_61] : memref<128x128xbf16, #tpu.memory_space<vmem>>, vector<128x128xbf16>
    %cst_62 = arith.constant dense<0.000000e+00> : vector<128x128xf32>
    %116 = tpu.matmul %114, %115, %cst_62 {dimension_numbers = #tpu.dot_dimension_numbers<[1], [0], [0], [1], [0, 0, 1, 1], [], []>} : vector<128x128xbf16>, vector<128x128xbf16>, vector<128x128xf32> -> vector<128x128xf32>
    %c0_63 = arith.constant 0 : index
    %c0_64 = arith.constant 0 : index
    %117 = vector.load %arg17[%c0_63, %c0_64] : memref<1x128xf32, #tpu.memory_space<vmem>>, vector<1x128xf32>
    %118 = vector.broadcast %117 : vector<1x128xf32> to vector<128x128xf32>
    %119 = arith.addf %116, %118 : vector<128x128xf32>
    %120 = arith.addf %119, %35 : vector<128x128xf32>
    %c0_65 = arith.constant 0 : index
    %c0_66 = arith.constant 0 : index
    %121 = vector.load %arg6[%c0_65, %c0_66] : memref<1x128xf32, #tpu.memory_space<vmem>>, vector<1x128xf32>
    %c0_67 = arith.constant 0 : index
    %c0_68 = arith.constant 0 : index
    %122 = vector.load %arg7[%c0_67, %c0_68] : memref<1x128xf32, #tpu.memory_space<vmem>>, vector<1x128xf32>
    %cst_69 = arith.constant dense<0.000000e+00> : vector<128xf32>
    %123 = vector.multi_reduction <add>, %120, %cst_69 [1] : vector<128x128xf32> to vector<128xf32>
    %124 = vector.shape_cast %123 : vector<128xf32> to vector<128x1xf32>
    %cst_70 = arith.constant 1.280000e+02 : f32
    %125 = vector.broadcast %cst_70 : f32 to vector<128x1xf32>
    %126 = arith.divf %124, %125 : vector<128x1xf32>
    %127 = vector.broadcast %126 : vector<128x1xf32> to vector<128x128xf32>
    %128 = arith.subf %120, %127 : vector<128x128xf32>
    %129 = arith.mulf %128, %128 : vector<128x128xf32>
    %cst_71 = arith.constant dense<0.000000e+00> : vector<128xf32>
    %130 = vector.multi_reduction <add>, %129, %cst_71 [1] : vector<128x128xf32> to vector<128xf32>
    %131 = vector.shape_cast %130 : vector<128xf32> to vector<128x1xf32>
    %cst_72 = arith.constant 1.280000e+02 : f32
    %132 = vector.broadcast %cst_72 : f32 to vector<128x1xf32>
    %133 = arith.divf %131, %132 : vector<128x1xf32>
    %134 = vector.broadcast %126 : vector<128x1xf32> to vector<128x128xf32>
    %135 = arith.subf %120, %134 : vector<128x128xf32>
    %cst_73 = arith.constant 9.99999974E-6 : f32
    %136 = vector.broadcast %cst_73 : f32 to vector<128x1xf32>
    %137 = arith.addf %133, %136 : vector<128x1xf32>
    %138 = math.rsqrt %137 : vector<128x1xf32>
    %139 = vector.broadcast %138 : vector<128x1xf32> to vector<128x128xf32>
    %140 = arith.mulf %135, %139 : vector<128x128xf32>
    %141 = vector.broadcast %121 : vector<1x128xf32> to vector<128x128xf32>
    %142 = arith.mulf %140, %141 : vector<128x128xf32>
    %143 = vector.broadcast %122 : vector<1x128xf32> to vector<128x128xf32>
    %144 = arith.addf %142, %143 : vector<128x128xf32>
    %145 = arith.truncf %144 : vector<128x128xf32> to vector<128x128xbf16>
    %c0_74 = arith.constant 0 : index
    %c0_75 = arith.constant 0 : index
    %146 = vector.load %arg18[%c0_74, %c0_75] : memref<128x512xbf16, #tpu.memory_space<vmem>>, vector<128x512xbf16>
    %cst_76 = arith.constant dense<0.000000e+00> : vector<128x512xf32>
    %147 = tpu.matmul %145, %146, %cst_76 {dimension_numbers = #tpu.dot_dimension_numbers<[1], [0], [0], [1], [0, 0, 1, 1], [], []>} : vector<128x128xbf16>, vector<128x512xbf16>, vector<128x512xf32> -> vector<128x512xf32>
    %c0_77 = arith.constant 0 : index
    %c0_78 = arith.constant 0 : index
    %148 = vector.load %arg19[%c0_77, %c0_78] : memref<1x512xf32, #tpu.memory_space<vmem>>, vector<1x512xf32>
    %149 = vector.broadcast %148 : vector<1x512xf32> to vector<128x512xf32>
    %150 = arith.addf %147, %149 : vector<128x512xf32>
    %cst_79 = arith.constant 5.000000e-01 : f32
    %151 = vector.broadcast %cst_79 : f32 to vector<128x512xf32>
    %152 = arith.mulf %150, %151 : vector<128x512xf32>
    %cst_80 = arith.constant 0.707106769 : f32
    %153 = vector.broadcast %cst_80 : f32 to vector<128x512xf32>
    %154 = arith.mulf %150, %153 : vector<128x512xf32>
    %155 = math.erf %154 : vector<128x512xf32>
    %cst_81 = arith.constant 1.000000e+00 : f32
    %156 = vector.broadcast %cst_81 : f32 to vector<128x512xf32>
    %157 = arith.addf %156, %155 : vector<128x512xf32>
    %158 = arith.mulf %152, %157 : vector<128x512xf32>
    %159 = arith.truncf %158 : vector<128x512xf32> to vector<128x512xbf16>
    %c0_82 = arith.constant 0 : index
    %c0_83 = arith.constant 0 : index
    %160 = vector.load %arg20[%c0_82, %c0_83] : memref<512x512xbf16, #tpu.memory_space<vmem>>, vector<512x512xbf16>
    %cst_84 = arith.constant dense<0.000000e+00> : vector<128x512xf32>
    %161 = tpu.matmul %159, %160, %cst_84 {dimension_numbers = #tpu.dot_dimension_numbers<[1], [0], [0], [1], [0, 0, 1, 1], [], []>} : vector<128x512xbf16>, vector<512x512xbf16>, vector<128x512xf32> -> vector<128x512xf32>
    %c0_85 = arith.constant 0 : index
    %c0_86 = arith.constant 0 : index
    %162 = vector.load %arg21[%c0_85, %c0_86] : memref<1x512xf32, #tpu.memory_space<vmem>>, vector<1x512xf32>
    %163 = vector.broadcast %162 : vector<1x512xf32> to vector<128x512xf32>
    %164 = arith.addf %161, %163 : vector<128x512xf32>
    %cst_87 = arith.constant 5.000000e-01 : f32
    %165 = vector.broadcast %cst_87 : f32 to vector<128x512xf32>
    %166 = arith.mulf %164, %165 : vector<128x512xf32>
    %cst_88 = arith.constant 0.707106769 : f32
    %167 = vector.broadcast %cst_88 : f32 to vector<128x512xf32>
    %168 = arith.mulf %164, %167 : vector<128x512xf32>
    %169 = math.erf %168 : vector<128x512xf32>
    %cst_89 = arith.constant 1.000000e+00 : f32
    %170 = vector.broadcast %cst_89 : f32 to vector<128x512xf32>
    %171 = arith.addf %170, %169 : vector<128x512xf32>
    %172 = arith.mulf %166, %171 : vector<128x512xf32>
    %173 = arith.truncf %172 : vector<128x512xf32> to vector<128x512xbf16>
    %c0_90 = arith.constant 0 : index
    %c0_91 = arith.constant 0 : index
    %174 = vector.load %arg22[%c0_90, %c0_91] : memref<512x128xbf16, #tpu.memory_space<vmem>>, vector<512x128xbf16>
    %cst_92 = arith.constant dense<0.000000e+00> : vector<128x128xf32>
    %175 = tpu.matmul %173, %174, %cst_92 {dimension_numbers = #tpu.dot_dimension_numbers<[1], [0], [0], [1], [0, 0, 1, 1], [], []>} : vector<128x512xbf16>, vector<512x128xbf16>, vector<128x128xf32> -> vector<128x128xf32>
    %c0_93 = arith.constant 0 : index
    %c0_94 = arith.constant 0 : index
    %176 = vector.load %arg23[%c0_93, %c0_94] : memref<1x128xf32, #tpu.memory_space<vmem>>, vector<1x128xf32>
    %177 = vector.broadcast %176 : vector<1x128xf32> to vector<128x128xf32>
    %178 = arith.addf %175, %177 : vector<128x128xf32>
    %179 = arith.addf %120, %178 : vector<128x128xf32>
    %c0_95 = arith.constant 0 : index
    %c0_96 = arith.constant 0 : index
    %c0_97 = arith.constant 0 : index
    %180 = vector.load %arg24[%c0_95, %c0_96, %c0_97] : memref<1x128x128xf32, #tpu.memory_space<vmem>>, vector<1x128x128xf32>
    %181 = vector.shape_cast %180 : vector<1x128x128xf32> to vector<128x128xf32>
    %182 = vector.shape_cast %179 : vector<128x128xf32> to vector<1x128x128xf32>
    tpu.vector_store %arg24[%c0_95, %c0_96, %c0_97], %182 {strides = array<i32>} : memref<1x128x128xf32, #tpu.memory_space<vmem>>, vector<1x128x128xf32>,
    return
  }
  func.func @transform_0(%arg0: i32, %arg1: i32) -> (i32, i32, i32) {
    %c0_i32 = arith.constant 0 : i32
    %c0_i32_0 = arith.constant 0 : i32
    %c0_i32_1 = arith.constant 0 : i32
    return %arg0, %c0_i32, %c0_i32_0 : i32, i32, i32
  }
  func.func @transform_1(%arg0: i32, %arg1: i32) -> (i32, i32, i32) {
    %c0_i32 = arith.constant 0 : i32
    %c0_i32_0 = arith.constant 0 : i32
    return %arg0, %arg1, %c0_i32 : i32, i32, i32
  }
  func.func @transform_2(%arg0: i32, %arg1: i32) -> (i32, i32) {
    %c0_i32 = arith.constant 0 : i32
    %c0_i32_0 = arith.constant 0 : i32
    %c0_i32_1 = arith.constant 0 : i32
    return %c0_i32, %c0_i32_0 : i32, i32
  }
  func.func @transform_3(%arg0: i32, %arg1: i32) -> (i32, i32) {
    %c0_i32 = arith.constant 0 : i32
    %c0_i32_0 = arith.constant 0 : i32
    %c0_i32_1 = arith.constant 0 : i32
    return %c0_i32, %c0_i32_0 : i32, i32
  }
  func.func @transform_4(%arg0: i32, %arg1: i32) -> (i32, i32) {
    %c0_i32 = arith.constant 0 : i32
    %c0_i32_0 = arith.constant 0 : i32
    %c0_i32_1 = arith.constant 0 : i32
    return %c0_i32, %c0_i32_0 : i32, i32
  }
  func.func @transform_5(%arg0: i32, %arg1: i32) -> (i32, i32) {
    %c0_i32 = arith.constant 0 : i32
    %c0_i32_0 = arith.constant 0 : i32
    %c0_i32_1 = arith.constant 0 : i32
    return %c0_i32, %c0_i32_0 : i32, i32
  }
  func.func @transform_6(%arg0: i32, %arg1: i32) -> (i32, i32) {
    %c0_i32 = arith.constant 0 : i32
    %c0_i32_0 = arith.constant 0 : i32
    %c0_i32_1 = arith.constant 0 : i32
    return %c0_i32, %c0_i32_0 : i32, i32
  }
  func.func @transform_7(%arg0: i32, %arg1: i32) -> (i32, i32) {
    %c0_i32 = arith.constant 0 : i32
    %c0_i32_0 = arith.constant 0 : i32
    %c0_i32_1 = arith.constant 0 : i32
    return %c0_i32, %c0_i32_0 : i32, i32
  }
  func.func @transform_8(%arg0: i32, %arg1: i32) -> (i32, i32) {
    %c0_i32 = arith.constant 0 : i32
    %c0_i32_0 = arith.constant 0 : i32
    %c0_i32_1 = arith.constant 0 : i32
    return %c0_i32, %c0_i32_0 : i32, i32
  }
  func.func @transform_9(%arg0: i32, %arg1: i32) -> (i32, i32) {
    %c0_i32 = arith.constant 0 : i32
    %c0_i32_0 = arith.constant 0 : i32
    %c0_i32_1 = arith.constant 0 : i32
    return %c0_i32, %c0_i32_0 : i32, i32
  }
  func.func @transform_10(%arg0: i32, %arg1: i32) -> (i32, i32) {
    %c0_i32 = arith.constant 0 : i32
    %c0_i32_0 = arith.constant 0 : i32
    %c0_i32_1 = arith.constant 0 : i32
    return %c0_i32, %c0_i32_0 : i32, i32
  }
  func.func @transform_11(%arg0: i32, %arg1: i32) -> (i32, i32) {
    %c0_i32 = arith.constant 0 : i32
    %c0_i32_0 = arith.constant 0 : i32
    %c0_i32_1 = arith.constant 0 : i32
    return %c0_i32, %c0_i32_0 : i32, i32
  }
  func.func @transform_12(%arg0: i32, %arg1: i32) -> (i32, i32) {
    %c0_i32 = arith.constant 0 : i32
    %c0_i32_0 = arith.constant 0 : i32
    %c0_i32_1 = arith.constant 0 : i32
    return %c0_i32, %c0_i32_0 : i32, i32
  }
  func.func @transform_13(%arg0: i32, %arg1: i32) -> (i32, i32) {
    %c0_i32 = arith.constant 0 : i32
    %c0_i32_0 = arith.constant 0 : i32
    %c0_i32_1 = arith.constant 0 : i32
    return %c0_i32, %c0_i32_0 : i32, i32
  }
  func.func @transform_14(%arg0: i32, %arg1: i32) -> (i32, i32) {
    %c0_i32 = arith.constant 0 : i32
    %c0_i32_0 = arith.constant 0 : i32
    %c0_i32_1 = arith.constant 0 : i32
    return %c0_i32, %c0_i32_0 : i32, i32
  }
  func.func @transform_15(%arg0: i32, %arg1: i32) -> (i32, i32) {
    %c0_i32 = arith.constant 0 : i32
    %c0_i32_0 = arith.constant 0 : i32
    %c0_i32_1 = arith.constant 0 : i32
    return %c0_i32, %c0_i32_0 : i32, i32
  }
  func.func @transform_16(%arg0: i32, %arg1: i32) -> (i32, i32) {
    %c0_i32 = arith.constant 0 : i32
    %c0_i32_0 = arith.constant 0 : i32
    %c0_i32_1 = arith.constant 0 : i32
    return %c0_i32, %c0_i32_0 : i32, i32
  }
  func.func @transform_17(%arg0: i32, %arg1: i32) -> (i32, i32) {
    %c0_i32 = arith.constant 0 : i32
    %c0_i32_0 = arith.constant 0 : i32
    %c0_i32_1 = arith.constant 0 : i32
    return %c0_i32, %c0_i32_0 : i32, i32
  }
  func.func @transform_18(%arg0: i32, %arg1: i32) -> (i32, i32) {
    %c0_i32 = arith.constant 0 : i32
    %c0_i32_0 = arith.constant 0 : i32
    %c0_i32_1 = arith.constant 0 : i32
    return %c0_i32, %c0_i32_0 : i32, i32
  }
  func.func @transform_19(%arg0: i32, %arg1: i32) -> (i32, i32) {
    %c0_i32 = arith.constant 0 : i32
    %c0_i32_0 = arith.constant 0 : i32
    %c0_i32_1 = arith.constant 0 : i32
    return %c0_i32, %c0_i32_0 : i32, i32
  }
  func.func @transform_20(%arg0: i32, %arg1: i32) -> (i32, i32) {
    %c0_i32 = arith.constant 0 : i32
    %c0_i32_0 = arith.constant 0 : i32
    %c0_i32_1 = arith.constant 0 : i32
    return %c0_i32, %c0_i32_0 : i32, i32
  }
  func.func @transform_21(%arg0: i32, %arg1: i32) -> (i32, i32) {
    %c0_i32 = arith.constant 0 : i32
    %c0_i32_0 = arith.constant 0 : i32
    %c0_i32_1 = arith.constant 0 : i32
    return %c0_i32, %c0_i32_0 : i32, i32
  }
  func.func @transform_22(%arg0: i32, %arg1: i32) -> (i32, i32, i32) {
    %c0_i32 = arith.constant 0 : i32
    %c0_i32_0 = arith.constant 0 : i32
    return %arg0, %arg1, %c0_i32 : i32, i32, i32
  }
}

</mosaic_0001>

<llo_original>
// kernel: tpu_custom_call.1
$region0: #{tpu_custom_call.1}
  #allocation0 [shape = 'u32[]', space=smem, size = 0x4, offset = 0x4, fixed_abs, tag = 'smem constant byte address 0x4 - core index']
  #allocation1 [shape = 'u32[144,128]{1,0:T(1,128)}', space=vmem, size = 0x12000, scoped, tag = 'internal scratch']
  #allocation2 [shape = 'bf16[256,128]{1,0:T(16,128)(2,1)}', space=vmem, size = 0x10000, scoped, tag = 'scratch operand']
  #allocation3 [shape = 'bf16[256,128]{1,0:T(16,128)(2,1)}', space=vmem, size = 0x10000, scoped, tag = 'scratch operand']
  #allocation4 [shape = 'bf16[128,128]{1,0:T(16,128)(2,1)}', space=vmem, size = 0x8000, scoped, tag = 'scratch operand']
  %s0 = inlined_call_operand.hbm [shape: bf16[2,256,128], index: 0, kind: input, shape index: {}]
  %s1 = inlined_call_operand.hbm [shape: f32[2,256,128], index: 1, kind: input, shape index: {}]
  %s2 = inlined_call_operand.vmem [shape: f32[1,128], index: 2, kind: input, shape index: {}]
  %s3 = inlined_call_operand.vmem [shape: f32[1,128], index: 3, kind: input, shape index: {}]
  %s4 = inlined_call_operand.vmem [shape: f32[1,128], index: 4, kind: input, shape index: {}]
  %s5 = inlined_call_operand.vmem [shape: f32[1,128], index: 5, kind: input, shape index: {}]
  %s6 = inlined_call_operand.hbm [shape: bf16[128,128], index: 6, kind: input, shape index: {}]
  %s7 = inlined_call_operand.vmem [shape: f32[1,128], index: 7, kind: input, shape index: {}]
  %s8 = inlined_call_operand.hbm [shape: bf16[128,128], index: 8, kind: input, shape index: {}]
  %s9 = inlined_call_operand.vmem [shape: f32[1,128], index: 9, kind: input, shape index: {}]
  %s10 = inlined_call_operand.hbm [shape: bf16[128,128], index: 10, kind: input, shape index: {}]
  %s11 = inlined_call_operand.vmem [shape: f32[1,128], index: 11, kind: input, shape index: {}]
  %s12 = inlined_call_operand.hbm [shape: bf16[128,128], index: 12, kind: input, shape index: {}]
  %s13 = inlined_call_operand.vmem [shape: f32[1,128], index: 13, kind: input, shape index: {}]
  %s14 = inlined_call_operand.hbm [shape: bf16[128,128], index: 14, kind: input, shape index: {}]
  %s15 = inlined_call_operand.vmem [shape: f32[1,128], index: 15, kind: input, shape index: {}]
  %s16 = inlined_call_operand.hbm [shape: bf16[128,512], index: 16, kind: input, shape index: {}]
  %s17 = inlined_call_operand.vmem [shape: f32[1,512], index: 17, kind: input, shape index: {}]
  %s18 = inlined_call_operand.hbm [shape: bf16[512,512], index: 18, kind: input, shape index: {}]
  %s19 = inlined_call_operand.vmem [shape: f32[1,512], index: 19, kind: input, shape index: {}]
  %s20 = inlined_call_operand.hbm [shape: bf16[512,128], index: 20, kind: input, shape index: {}]
  %s21 = inlined_call_operand.vmem [shape: f32[1,128], index: 21, kind: input, shape index: {}]
  %s22 = inlined_call_operand.hbm [shape: f32[2,256,128], index: 22, kind: output, shape index: {}]
  %s23 = sld [smem:[#allocation0]]
  $region165: #{tpu_custom_call.1} parent=0
    _
  %s25 = ssub.s32 1, %s23
  %s26 = scalar_select 0, %s25, %s23
  $region1: #{tpu_custom_call.1} parent=0
    #allocation5 [shape = 'u8[131072]{0}', space=vmem, size = 0x20000, scoped, tag = 'input window, operand 0']
    #allocation6 [shape = 's32[2]{0}', space=sflag, size = 0x8, scoped, tag = 'scoped memory for tpu_custom_call.1']
    #allocation7 [shape = 's32[2]{0}', space=sflag, size = 0x8, scoped, tag = 'scoped memory for tpu_custom_call.1']
    #allocation8 [shape = 'u8[131072]{0}', space=vmem, size = 0x20000, scoped, tag = 'input window, operand 1']
    #allocation9 [shape = 's32[2]{0}', space=sflag, size = 0x8, scoped, tag = 'scoped memory for tpu_custom_call.1']
    #allocation10 [shape = 'u8[32768]{0}', space=vmem, size = 0x8000, scoped, tag = 'input window, operand 6, single buffered']
    #allocation11 [shape = 'u8[32768]{0}', space=vmem, size = 0x8000, scoped, tag = 'input window, operand 8, single buffered']
    #allocation12 [shape = 's32[1]{0}', space=sflag, size = 0x4, scoped, tag = 'scoped memory for tpu_custom_call.1']
    #allocation13 [shape = 'u8[32768]{0}', space=vmem, size = 0x8000, scoped, tag = 'input window, operand 10, single buffered']
    #allocation14 [shape = 'u8[32768]{0}', space=vmem, size = 0x8000, scoped, tag = 'input window, operand 12, single buffered']
    #allocation15 [shape = 's32[1]{0}', space=sflag, size = 0x4, scoped, tag = 'scoped memory for tpu_custom_call.1']
    #allocation16 [shape = 'u8[32768]{0}', space=vmem, size = 0x8000, scoped, tag = 'input window, operand 14, single buffered']
    #allocation17 [shape = 'u8[131072]{0}', space=vmem, size = 0x20000, scoped, tag = 'input window, operand 16, single buffered']
    #allocation18 [shape = 's32[1]{0}', space=sflag, size = 0x4, scoped, tag = 'scoped memory for tpu_custom_call.1']
    #allocation19 [shape = 'u8[524288]{0}', space=vmem, size = 0x80000, scoped, tag = 'input window, operand 18, single buffered']
    #allocation20 [shape = 'u8[131072]{0}', space=vmem, size = 0x20000, scoped, tag = 'input window, operand 20, single buffered']
    #allocation21 [shape = 's32[1]{0}', space=sflag, size = 0x4, scoped, tag = 'scoped memory for tpu_custom_call.1']
    #allocation22 [shape = 'u8[131072]{0}', space=vmem, size = 0x20000, scoped, tag = 'output window, operand 0']
    %27 = vsyncpa [#allocation6], 0
    %s28 = scalar_lea.sflag [#allocation6], 1
    %29 = vsyncpa %s28, 0
    %30 = vsyncpa [#allocation9], 0
    %s31 = scalar_lea.sflag [#allocation9], 1
    %32 = vsyncpa %s31, 0
    %33 = vsyncpa [#allocation12], 0
    %34 = vsyncpa [#allocation15], 0
    %35 = vsyncpa [#allocation18], 0
    %36 = vsyncpa [#allocation21], 0
    %37 = vsyncpa [#allocation7], 0
    %s38 = scalar_lea.sflag [#allocation7], 1
    %39 = vsyncpa %s38, 0
    loop: start=0, step=1, limit=6
    $region2: #{tpu_custom_call.1} parent=1 // loop_pre_header
      _
    $region3: #{tpu_custom_call.1} parent=1 // loop_header
      %s41 = sphi 0, %s45
      %p42 = scmp.ge.s32.totalorder %s41, 6
      %s48 = sphi 0, %s60
      %s49 = sphi 0, %s56
      %s50 = sphi 0, %s48
      %s51 = sphi 0, %s49
      %s52 = sphi 0, %s50
      %s53 = sphi 0, %s51
      %s63 = sphi 0, %s65
      %s66 = sphi 0, %s63
      %s67 = sphi 0, %s66
      %s83 = sphi 0, %s67
      %s91 = sphi 0, %s93
      %s94 = sphi 0, %s91
      %s95 = sphi 0, %s94
      %s111 = sphi 0, %s95
      %s115 = sphi 0, %s115
      %s117 = sphi 0, %s115
      %s118 = sphi 0, %s117
      %s132 = sphi 0, %s118
      %s136 = sphi 0, %s136
      %s138 = sphi 0, %s136
      %s139 = sphi 0, %s138
      %s153 = sphi 0, %s139
      %s157 = sphi 0, %s157
      %s159 = sphi 0, %s157
      %s160 = sphi 0, %s159
      %s174 = sphi 0, %s160
      %s178 = sphi 0, %s178
      %s180 = sphi 0, %s178
      %s181 = sphi 0, %s180
      %s195 = sphi 0, %s181
      %s199 = sphi 0, %s199
      %s201 = sphi 0, %s199
      %s202 = sphi 0, %s201
      %s216 = sphi 0, %s202
      %s220 = sphi 0, %s220
      %s222 = sphi 0, %s220
      %s223 = sphi 0, %s222
      %s237 = sphi 0, %s223
      %s241 = sphi 0, %s241
      %s243 = sphi 0, %s241
      %s244 = sphi 0, %s243
      %s258 = sphi 0, %s244
      %s262 = sphi 0, %s262
      %s264 = sphi 0, %s262
      %s265 = sphi 0, %s264
      %s279 = sphi 0, %s265
      %s283 = sphi 0, %s283
      %s285 = sphi 0, %s283
      %s286 = sphi 0, %s285
      %s300 = sphi 0, %s286
      %s304 = sphi 0, %s304
      %s306 = sphi 0, %s304
      %s307 = sphi 0, %s306
      %s321 = sphi 0, %s307
      %s325 = sphi 0, %s325
      %s327 = sphi 0, %s325
      %s328 = sphi 0, %s327
      %s342 = sphi 0, %s328
      %s346 = sphi 0, %s346
      %s348 = sphi 0, %s346
      %s349 = sphi 0, %s348
      %s363 = sphi 0, %s349
      %s367 = sphi 0, %s367
      %s369 = sphi 0, %s367
      %s370 = sphi 0, %s369
      %s384 = sphi 0, %s370
      %s388 = sphi 0, %s388
      %s390 = sphi 0, %s388
      %s391 = sphi 0, %s390
      %s405 = sphi 0, %s391
      %s409 = sphi 0, %s409
      %s411 = sphi 0, %s409
      %s412 = sphi 0, %s411
      %s426 = sphi 0, %s412
      %s430 = sphi 0, %s430
      %s432 = sphi 0, %s430
      %s433 = sphi 0, %s432
      %s447 = sphi 0, %s433
      %s451 = sphi 0, %s451
      %s453 = sphi 0, %s451
      %s454 = sphi 0, %s453
      %s468 = sphi 0, %s454
      %s472 = sphi 0, %s472
      %s474 = sphi 0, %s472
      %s475 = sphi 0, %s474
      %s489 = sphi 0, %s475
      %s493 = sphi 0, %s493
      %s495 = sphi 0, %s493
      %s496 = sphi 0, %s495
      %s510 = sphi 0, %s496
      %s514 = sphi 0, %s514
      %s516 = sphi 0, %s514
      %s517 = sphi 0, %s516
      %s531 = sphi 0, %s517
      %s539 = sphi 0, %s541
      %s542 = sphi 0, %s539
      %s543 = sphi 0, %s542
      %s559 = sphi 0, %s543
    $region4: #{tpu_custom_call.1} parent=1 // loop_header_branch
      %44 = sbr.rel (%p42) target = $region8
    $region5: #{tpu_custom_call.1} parent=1 // loop_body
      %s46 = ssub.s32 %s41, 1
      %s47 = ssub.s32 %s41, 2
      %s54 = sadd.s32 1, %s49
      %p55 = scmp.ge.s32.totalorder %s54, 2
      %s56 = scalar_select %p55, 0, %s54
      %s57 = sadd.s32 1, %s48
      %s58 = scalar_select %p55, %s57, %s48
      %p59 = scmp.ge.s32.totalorder %s58, 2
      %s60 = scalar_select %p59, 0, %s58
      %s61 = ssub.s32 %s48, %s60
      %p62 = scmp.eq.s32.totalorder %s61, 0
      %s64 = sadd.s32 %s63, 1
      %s65 = scalar_select %p62, %s63, %s64
      %p68 = pneg %p62
      %p69 = scmp.eq.s32.totalorder %s41, 3
      %p70 = por %p68, %p69
      %p71 = scmp.ne.s32.totalorder %s63, %s66
      %p72 = scmp.eq.s32.totalorder %s41, 0
      %p73 = por %p71, %p72
      %p74 = scmp.ne.s32.totalorder %s63, %s66
      %p75 = scmp.eq.s32.totalorder %s46, 3
      %p76 = por %p74, %p75
      %p77 = scmp.ne.s32.totalorder %s66, %s67
      %p78 = scmp.eq.s32.totalorder %s46, 0
      %p79 = por %p77, %p78
      %p80 = scmp.ne.s32.totalorder %s66, %s67
      %p81 = scmp.eq.s32.totalorder %s47, 3
      %p82 = por %p80, %p81
      %p84 = scmp.ne.s32.totalorder %s67, %s83
      %p85 = scmp.eq.s32.totalorder %s47, 0
      %p86 = por %p84, %p85
      %s87 = ssub.s32 %s48, %s60
      %s88 = ssub.s32 %s49, %s56
      %s89 = sor.u32 %s87, %s88
      %p90 = scmp.eq.s32.totalorder %s89, 0
      %s92 = sadd.s32 %s91, 1
      %s93 = scalar_select %p90, %s91, %s92
      %p96 = pneg %p90
      %p97 = scmp.eq.s32.totalorder %s41, 3
      %p98 = por %p96, %p97
      %p99 = scmp.ne.s32.totalorder %s91, %s94
      %p100 = scmp.eq.s32.totalorder %s41, 0
      %p101 = por %p99, %p100
      %p102 = scmp.ne.s32.totalorder %s91, %s94
      %p103 = scmp.eq.s32.totalorder %s46, 3
      %p104 = por %p102, %p103
      %p105 = scmp.ne.s32.totalorder %s94, %s95
      %p106 = scmp.eq.s32.totalorder %s46, 0
      %p107 = por %p105, %p106
      %p108 = scmp.ne.s32.totalorder %s94, %s95
      %p109 = scmp.eq.s32.totalorder %s47, 3
      %p110 = por %p108, %p109
      %p112 = scmp.ne.s32.totalorder %s95, %s111
      %p113 = scmp.eq.s32.totalorder %s47, 0
      %p114 = por %p112, %p113
      %s116 = sadd.s32 %s115, 1
      %p119 = scmp.eq.s32.totalorder %s41, 3
      %p120 = scmp.ne.s32.totalorder %s115, %s117
      %p121 = scmp.eq.s32.totalorder %s41, 0
      %p122 = por %p120, %p121
      %p123 = scmp.ne.s32.totalorder %s115, %s117
      %p124 = scmp.eq.s32.totalorder %s46, 3
      %p125 = por %p123, %p124
      %p126 = scmp.ne.s32.totalorder %s117, %s118
      %p127 = scmp.eq.s32.totalorder %s46, 0
      %p128 = por %p126, %p127
      %p129 = scmp.ne.s32.totalorder %s117, %s118
      %p130 = scmp.eq.s32.totalorder %s47, 3
      %p131 = por %p129, %p130
      %p133 = scmp.ne.s32.totalorder %s118, %s132
      %p134 = scmp.eq.s32.totalorder %s47, 0
      %p135 = por %p133, %p134
      %s137 = sadd.s32 %s136, 1
      %p140 = scmp.eq.s32.totalorder %s41, 3
      %p141 = scmp.ne.s32.totalorder %s136, %s138
      %p142 = scmp.eq.s32.totalorder %s41, 0
      %p143 = por %p141, %p142
      %p144 = scmp.ne.s32.totalorder %s136, %s138
      %p145 = scmp.eq.s32.totalorder %s46, 3
      %p146 = por %p144, %p145
      %p147 = scmp.ne.s32.totalorder %s138, %s139
      %p148 = scmp.eq.s32.totalorder %s46, 0
      %p149 = por %p147, %p148
      %p150 = scmp.ne.s32.totalorder %s138, %s139
      %p151 = scmp.eq.s32.totalorder %s47, 3
      %p152 = por %p150, %p151
      %p154 = scmp.ne.s32.totalorder %s139, %s153
      %p155 = scmp.eq.s32.totalorder %s47, 0
      %p156 = por %p154, %p155
      %s158 = sadd.s32 %s157, 1
      %p161 = scmp.eq.s32.totalorder %s41, 3
      %p162 = scmp.ne.s32.totalorder %s157, %s159
      %p163 = scmp.eq.s32.totalorder %s41, 0
      %p164 = por %p162, %p163
      %p165 = scmp.ne.s32.totalorder %s157, %s159
      %p166 = scmp.eq.s32.totalorder %s46, 3
      %p167 = por %p165, %p166
      %p168 = scmp.ne.s32.totalorder %s159, %s160
      %p169 = scmp.eq.s32.totalorder %s46, 0
      %p170 = por %p168, %p169
      %p171 = scmp.ne.s32.totalorder %s159, %s160
      %p172 = scmp.eq.s32.totalorder %s47, 3
      %p173 = por %p171, %p172
      %p175 = scmp.ne.s32.totalorder %s160, %s174
      %p176 = scmp.eq.s32.totalorder %s47, 0
      %p177 = por %p175, %p176
      %s179 = sadd.s32 %s178, 1
      %p182 = scmp.eq.s32.totalorder %s41, 3
      %p183 = scmp.ne.s32.totalorder %s178, %s180
      %p184 = scmp.eq.s32.totalorder %s41, 0
      %p185 = por %p183, %p184
      %p186 = scmp.ne.s32.totalorder %s178, %s180
      %p187 = scmp.eq.s32.totalorder %s46, 3
      %p188 = por %p186, %p187
      %p189 = scmp.ne.s32.totalorder %s180, %s181
      %p190 = scmp.eq.s32.totalorder %s46, 0
      %p191 = por %p189, %p190
      %p192 = scmp.ne.s32.totalorder %s180, %s181
      %p193 = scmp.eq.s32.totalorder %s47, 3
      %p194 = por %p192, %p193
      %p196 = scmp.ne.s32.totalorder %s181, %s195
      %p197 = scmp.eq.s32.totalorder %s47, 0
      %p198 = por %p196, %p197
      %s200 = sadd.s32 %s199, 1
      %p203 = scmp.eq.s32.totalorder %s41, 3
      %p204 = scmp.ne.s32.totalorder %s199, %s201
      %p205 = scmp.eq.s32.totalorder %s41, 0
      %p206 = por %p204, %p205
      %p207 = scmp.ne.s32.totalorder %s199, %s201
      %p208 = scmp.eq.s32.totalorder %s46, 3
      %p209 = por %p207, %p208
      %p210 = scmp.ne.s32.totalorder %s201, %s202
      %p211 = scmp.eq.s32.totalorder %s46, 0
      %p212 = por %p210, %p211
      %p213 = scmp.ne.s32.totalorder %s201, %s202
      %p214 = scmp.eq.s32.totalorder %s47, 3
      %p215 = por %p213, %p214
      %p217 = scmp.ne.s32.totalorder %s202, %s216
      %p218 = scmp.eq.s32.totalorder %s47, 0
      %p219 = por %p217, %p218
      %s221 = sadd.s32 %s220, 1
      %p224 = scmp.eq.s32.totalorder %s41, 3
      %p225 = scmp.ne.s32.totalorder %s220, %s222
      %p226 = scmp.eq.s32.totalorder %s41, 0
      %p227 = por %p225, %p226
      %p228 = scmp.ne.s32.totalorder %s220, %s222
      %p229 = scmp.eq.s32.totalorder %s46, 3
      %p230 = por %p228, %p229
      %p231 = scmp.ne.s32.totalorder %s222, %s223
      %p232 = scmp.eq.s32.totalorder %s46, 0
      %p233 = por %p231, %p232
      %p234 = scmp.ne.s32.totalorder %s222, %s223
      %p235 = scmp.eq.s32.totalorder %s47, 3
      %p236 = por %p234, %p235
      %p238 = scmp.ne.s32.totalorder %s223, %s237
      %p239 = scmp.eq.s32.totalorder %s47, 0
      %p240 = por %p238, %p239
      %s242 = sadd.s32 %s241, 1
      %p245 = scmp.eq.s32.totalorder %s41, 3
      %p246 = scmp.ne.s32.totalorder %s241, %s243
      %p247 = scmp.eq.s32.totalorder %s41, 0
      %p248 = por %p246, %p247
      %p249 = scmp.ne.s32.totalorder %s241, %s243
      %p250 = scmp.eq.s32.totalorder %s46, 3
      %p251 = por %p249, %p250
      %p252 = scmp.ne.s32.totalorder %s243, %s244
      %p253 = scmp.eq.s32.totalorder %s46, 0
      %p254 = por %p252, %p253
      %p255 = scmp.ne.s32.totalorder %s243, %s244
      %p256 = scmp.eq.s32.totalorder %s47, 3
      %p257 = por %p255, %p256
      %p259 = scmp.ne.s32.totalorder %s244, %s258
      %p260 = scmp.eq.s32.totalorder %s47, 0
      %p261 = por %p259, %p260
      %s263 = sadd.s32 %s262, 1
      %p266 = scmp.eq.s32.totalorder %s41, 3
      %p267 = scmp.ne.s32.totalorder %s262, %s264
      %p268 = scmp.eq.s32.totalorder %s41, 0
      %p269 = por %p267, %p268
      %p270 = scmp.ne.s32.totalorder %s262, %s264
      %p271 = scmp.eq.s32.totalorder %s46, 3
      %p272 = por %p270, %p271
      %p273 = scmp.ne.s32.totalorder %s264, %s265
      %p274 = scmp.eq.s32.totalorder %s46, 0
      %p275 = por %p273, %p274
      %p276 = scmp.ne.s32.totalorder %s264, %s265
      %p277 = scmp.eq.s32.totalorder %s47, 3
      %p278 = por %p276, %p277
      %p280 = scmp.ne.s32.totalorder %s265, %s279
      %p281 = scmp.eq.s32.totalorder %s47, 0
      %p282 = por %p280, %p281
      %s284 = sadd.s32 %s283, 1
      %p287 = scmp.eq.s32.totalorder %s41, 3
      %p288 = scmp.ne.s32.totalorder %s283, %s285
      %p289 = scmp.eq.s32.totalorder %s41, 0
      %p290 = por %p288, %p289
      %p291 = scmp.ne.s32.totalorder %s283, %s285
      %p292 = scmp.eq.s32.totalorder %s46, 3
      %p293 = por %p291, %p292
      %p294 = scmp.ne.s32.totalorder %s285, %s286
      %p295 = scmp.eq.s32.totalorder %s46, 0
      %p296 = por %p294, %p295
      %p297 = scmp.ne.s32.totalorder %s285, %s286
      %p298 = scmp.eq.s32.totalorder %s47, 3
      %p299 = por %p297, %p298
      %p301 = scmp.ne.s32.totalorder %s286, %s300
      %p302 = scmp.eq.s32.totalorder %s47, 0
      %p303 = por %p301, %p302
      %s305 = sadd.s32 %s304, 1
      %p308 = scmp.eq.s32.totalorder %s41, 3
      %p309 = scmp.ne.s32.totalorder %s304, %s306
      %p310 = scmp.eq.s32.totalorder %s41, 0
      %p311 = por %p309, %p310
      %p312 = scmp.ne.s32.totalorder %s304, %s306
      %p313 = scmp.eq.s32.totalorder %s46, 3
      %p314 = por %p312, %p313
      %p315 = scmp.ne.s32.totalorder %s306, %s307
      %p316 = scmp.eq.s32.totalorder %s46, 0
      %p317 = por %p315, %p316
      %p318 = scmp.ne.s32.totalorder %s306, %s307
      %p319 = scmp.eq.s32.totalorder %s47, 3
      %p320 = por %p318, %p319
      %p322 = scmp.ne.s32.totalorder %s307, %s321
      %p323 = scmp.eq.s32.totalorder %s47, 0
      %p324 = por %p322, %p323
      %s326 = sadd.s32 %s325, 1
      %p329 = scmp.eq.s32.totalorder %s41, 3
      %p330 = scmp.ne.s32.totalorder %s325, %s327
      %p331 = scmp.eq.s32.totalorder %s41, 0
      %p332 = por %p330, %p331
      %p333 = scmp.ne.s32.totalorder %s325, %s327
      %p334 = scmp.eq.s32.totalorder %s46, 3
      %p335 = por %p333, %p334
      %p336 = scmp.ne.s32.totalorder %s327, %s328
      %p337 = scmp.eq.s32.totalorder %s46, 0
      %p338 = por %p336, %p337
      %p339 = scmp.ne.s32.totalorder %s327, %s328
      %p340 = scmp.eq.s32.totalorder %s47, 3
      %p341 = por %p339, %p340
      %p343 = scmp.ne.s32.totalorder %s328, %s342
      %p344 = scmp.eq.s32.totalorder %s47, 0
      %p345 = por %p343, %p344
      %s347 = sadd.s32 %s346, 1
      %p350 = scmp.eq.s32.totalorder %s41, 3
      %p351 = scmp.ne.s32.totalorder %s346, %s348
      %p352 = scmp.eq.s32.totalorder %s41, 0
      %p353 = por %p351, %p352
      %p354 = scmp.ne.s32.totalorder %s346, %s348
      %p355 = scmp.eq.s32.totalorder %s46, 3
      %p356 = por %p354, %p355
      %p357 = scmp.ne.s32.totalorder %s348, %s349
      %p358 = scmp.eq.s32.totalorder %s46, 0
      %p359 = por %p357, %p358
      %p360 = scmp.ne.s32.totalorder %s348, %s349
      %p361 = scmp.eq.s32.totalorder %s47, 3
      %p362 = por %p360, %p361
      %p364 = scmp.ne.s32.totalorder %s349, %s363
      %p365 = scmp.eq.s32.totalorder %s47, 0
      %p366 = por %p364, %p365
      %s368 = sadd.s32 %s367, 1
      %p371 = scmp.eq.s32.totalorder %s41, 3
      %p372 = scmp.ne.s32.totalorder %s367, %s369
      %p373 = scmp.eq.s32.totalorder %s41, 0
      %p374 = por %p372, %p373
      %p375 = scmp.ne.s32.totalorder %s367, %s369
      %p376 = scmp.eq.s32.totalorder %s46, 3
      %p377 = por %p375, %p376
      %p378 = scmp.ne.s32.totalorder %s369, %s370
      %p379 = scmp.eq.s32.totalorder %s46, 0
      %p380 = por %p378, %p379
      %p381 = scmp.ne.s32.totalorder %s369, %s370
      %p382 = scmp.eq.s32.totalorder %s47, 3
      %p383 = por %p381, %p382
      %p385 = scmp.ne.s32.totalorder %s370, %s384
      %p386 = scmp.eq.s32.totalorder %s47, 0
      %p387 = por %p385, %p386
      %s389 = sadd.s32 %s388, 1
      %p392 = scmp.eq.s32.totalorder %s41, 3
      %p393 = scmp.ne.s32.totalorder %s388, %s390
      %p394 = scmp.eq.s32.totalorder %s41, 0
      %p395 = por %p393, %p394
      %p396 = scmp.ne.s32.totalorder %s388, %s390
      %p397 = scmp.eq.s32.totalorder %s46, 3
      %p398 = por %p396, %p397
      %p399 = scmp.ne.s32.totalorder %s390, %s391
      %p400 = scmp.eq.s32.totalorder %s46, 0
      %p401 = por %p399, %p400
      %p402 = scmp.ne.s32.totalorder %s390, %s391
      %p403 = scmp.eq.s32.totalorder %s47, 3
      %p404 = por %p402, %p403
      %p406 = scmp.ne.s32.totalorder %s391, %s405
      %p407 = scmp.eq.s32.totalorder %s47, 0
      %p408 = por %p406, %p407
      %s410 = sadd.s32 %s409, 1
      %p413 = scmp.eq.s32.totalorder %s41, 3
      %p414 = scmp.ne.s32.totalorder %s409, %s411
      %p415 = scmp.eq.s32.totalorder %s41, 0
      %p416 = por %p414, %p415
      %p417 = scmp.ne.s32.totalorder %s409, %s411
      %p418 = scmp.eq.s32.totalorder %s46, 3
      %p419 = por %p417, %p418
      %p420 = scmp.ne.s32.totalorder %s411, %s412
      %p421 = scmp.eq.s32.totalorder %s46, 0
      %p422 = por %p420, %p421
      %p423 = scmp.ne.s32.totalorder %s411, %s412
      %p424 = scmp.eq.s32.totalorder %s47, 3
      %p425 = por %p423, %p424
      %p427 = scmp.ne.s32.totalorder %s412, %s426
      %p428 = scmp.eq.s32.totalorder %s47, 0
      %p429 = por %p427, %p428
      %s431 = sadd.s32 %s430, 1
      %p434 = scmp.eq.s32.totalorder %s41, 3
      %p435 = scmp.ne.s32.totalorder %s430, %s432
      %p436 = scmp.eq.s32.totalorder %s41, 0
      %p437 = por %p435, %p436
      %p438 = scmp.ne.s32.totalorder %s430, %s432
      %p439 = scmp.eq.s32.totalorder %s46, 3
      %p440 = por %p438, %p439
      %p441 = scmp.ne.s32.totalorder %s432, %s433
      %p442 = scmp.eq.s32.totalorder %s46, 0
      %p443 = por %p441, %p442
      %p444 = scmp.ne.s32.totalorder %s432, %s433
      %p445 = scmp.eq.s32.totalorder %s47, 3
      %p446 = por %p444, %p445
      %p448 = scmp.ne.s32.totalorder %s433, %s447
      %p449 = scmp.eq.s32.totalorder %s47, 0
      %p450 = por %p448, %p449
      %s452 = sadd.s32 %s451, 1
      %p455 = scmp.eq.s32.totalorder %s41, 3
      %p456 = scmp.ne.s32.totalorder %s451, %s453
      %p457 = scmp.eq.s32.totalorder %s41, 0
      %p458 = por %p456, %p457
      %p459 = scmp.ne.s32.totalorder %s451, %s453
      %p460 = scmp.eq.s32.totalorder %s46, 3
      %p461 = por %p459, %p460
      %p462 = scmp.ne.s32.totalorder %s453, %s454
      %p463 = scmp.eq.s32.totalorder %s46, 0
      %p464 = por %p462, %p463
      %p465 = scmp.ne.s32.totalorder %s453, %s454
      %p466 = scmp.eq.s32.totalorder %s47, 3
      %p467 = por %p465, %p466
      %p469 = scmp.ne.s32.totalorder %s454, %s468
      %p470 = scmp.eq.s32.totalorder %s47, 0
      %p471 = por %p469, %p470
      %s473 = sadd.s32 %s472, 1
      %p476 = scmp.eq.s32.totalorder %s41, 3
      %p477 = scmp.ne.s32.totalorder %s472, %s474
      %p478 = scmp.eq.s32.totalorder %s41, 0
      %p479 = por %p477, %p478
      %p480 = scmp.ne.s32.totalorder %s472, %s474
      %p481 = scmp.eq.s32.totalorder %s46, 3
      %p482 = por %p480, %p481
      %p483 = scmp.ne.s32.totalorder %s474, %s475
      %p484 = scmp.eq.s32.totalorder %s46, 0
      %p485 = por %p483, %p484
      %p486 = scmp.ne.s32.totalorder %s474, %s475
      %p487 = scmp.eq.s32.totalorder %s47, 3
      %p488 = por %p486, %p487
      %p490 = scmp.ne.s32.totalorder %s475, %s489
      %p491 = scmp.eq.s32.totalorder %s47, 0
      %p492 = por %p490, %p491
      %s494 = sadd.s32 %s493, 1
      %p497 = scmp.eq.s32.totalorder %s41, 3
      %p498 = scmp.ne.s32.totalorder %s493, %s495
      %p499 = scmp.eq.s32.totalorder %s41, 0
      %p500 = por %p498, %p499
      %p501 = scmp.ne.s32.totalorder %s493, %s495
      %p502 = scmp.eq.s32.totalorder %s46, 3
      %p503 = por %p501, %p502
      %p504 = scmp.ne.s32.totalorder %s495, %s496
      %p505 = scmp.eq.s32.totalorder %s46, 0
      %p506 = por %p504, %p505
      %p507 = scmp.ne.s32.totalorder %s495, %s496
      %p508 = scmp.eq.s32.totalorder %s47, 3
      %p509 = por %p507, %p508
      %p511 = scmp.ne.s32.totalorder %s496, %s510
      %p512 = scmp.eq.s32.totalorder %s47, 0
      %p513 = por %p511, %p512
      %s515 = sadd.s32 %s514, 1
      %p518 = scmp.eq.s32.totalorder %s41, 3
      %p519 = scmp.ne.s32.totalorder %s514, %s516
      %p520 = scmp.eq.s32.totalorder %s41, 0
      %p521 = por %p519, %p520
      %p522 = scmp.ne.s32.totalorder %s514, %s516
      %p523 = scmp.eq.s32.totalorder %s46, 3
      %p524 = por %p522, %p523
      %p525 = scmp.ne.s32.totalorder %s516, %s517
      %p526 = scmp.eq.s32.totalorder %s46, 0
      %p527 = por %p525, %p526
      %p528 = scmp.ne.s32.totalorder %s516, %s517
      %p529 = scmp.eq.s32.totalorder %s47, 3
      %p530 = por %p528, %p529
      %p532 = scmp.ne.s32.totalorder %s517, %s531
      %p533 = scmp.eq.s32.totalorder %s47, 0
      %p534 = por %p532, %p533
      %s535 = ssub.s32 %s48, %s60
      %s536 = ssub.s32 %s49, %s56
      %s537 = sor.u32 %s535, %s536
      %p538 = scmp.eq.s32.totalorder %s537, 0
      %s540 = sadd.s32 %s539, 1
      %s541 = scalar_select %p538, %s539, %s540
      %p544 = pneg %p538
      %p545 = scmp.eq.s32.totalorder %s41, 3
      %p546 = por %p544, %p545
      %p547 = scmp.ne.s32.totalorder %s539, %s542
      %p548 = scmp.eq.s32.totalorder %s41, 0
      %p549 = por %p547, %p548
      %p550 = scmp.ne.s32.totalorder %s539, %s542
      %p551 = scmp.eq.s32.totalorder %s46, 3
      %p552 = por %p550, %p551
      %p553 = scmp.ne.s32.totalorder %s542, %s543
      %p554 = scmp.eq.s32.totalorder %s46, 0
      %p555 = por %p553, %p554
      %p556 = scmp.ne.s32.totalorder %s542, %s543
      %p557 = scmp.eq.s32.totalorder %s47, 3
      %p558 = por %p556, %p557
      %p560 = scmp.ne.s32.totalorder %s543, %s559
      %p561 = scmp.eq.s32.totalorder %s47, 0
      %p562 = por %p560, %p561
      %p563 = scmp.le.s32.totalorder 1, %s41
      %p564 = scmp.lt.s32.totalorder %s41, 5
      %p565 = pnand %p563, %p564
      %p566 = pneg %p565
      // Predicated region
      $region9: #{tpu_custom_call.1} parent=5 // pred_check
        _
      $region10: #{tpu_custom_call.1} parent=5 // pred_check_branch
        %568 = sbr.rel (%p565) target = $region12
      $region11: #{tpu_custom_call.1} parent=5 // pred_region
        %s569 = ssub.s32 %s41, 1
        // Predicated region
        $region13: #{tpu_custom_call.1} parent=11 // pred_check
          %p570 = pneg %p128
        $region14: #{tpu_custom_call.1} parent=11 // pred_check_branch
          %572 = sbr.rel (%p570) target = $region16
        $region15: #{tpu_custom_call.1} parent=11 // pred_region
          _
        $region16: #{tpu_custom_call.1} parent=11 // pred_fallthru
          _
        // Predicated region
        $region17: #{tpu_custom_call.1} parent=11 // pred_check
          %p573 = pneg %p149
        $region18: #{tpu_custom_call.1} parent=11 // pred_check_branch
          %575 = sbr.rel (%p573) target = $region20
        $region19: #{tpu_custom_call.1} parent=11 // pred_region
          _
        $region20: #{tpu_custom_call.1} parent=11 // pred_fallthru
          _
        // Predicated region
        $region21: #{tpu_custom_call.1} parent=11 // pred_check
          %p576 = pneg %p170
        $region22: #{tpu_custom_call.1} parent=11 // pred_check_branch
          %578 = sbr.rel (%p576) target = $region24
        $region23: #{tpu_custom_call.1} parent=11 // pred_region
          _
        $region24: #{tpu_custom_call.1} parent=11 // pred_fallthru
          _
        // Predicated region
        $region25: #{tpu_custom_call.1} parent=11 // pred_check
          %p579 = pneg %p191
        $region26: #{tpu_custom_call.1} parent=11 // pred_check_branch
          %581 = sbr.rel (%p579) target = $region28
        $region27: #{tpu_custom_call.1} parent=11 // pred_region
          _
        $region28: #{tpu_custom_call.1} parent=11 // pred_fallthru
          _
        // Predicated region
        $region29: #{tpu_custom_call.1} parent=11 // pred_check
          %p582 = pneg %p212
        $region30: #{tpu_custom_call.1} parent=11 // pred_check_branch
          %584 = sbr.rel (%p582) target = $region32
        $region31: #{tpu_custom_call.1} parent=11 // pred_region
          %s586 = ssub.s32 1024, 1024
          %587 = vsyncadd [#allocation9], %s586
          %s588 = sshll.u32 [#allocation10], 4
          %s589 = int_to_ptr.vmem [resolvable:$true] %s588
          %594 = dma.hbm_to_vmem [thread:$0]  %s6, 1024, %s589, [#allocation9], 64, 64, 4
        $region32: #{tpu_custom_call.1} parent=11 // pred_fallthru
          _
        // Predicated region
        $region33: #{tpu_custom_call.1} parent=11 // pred_check
          %p595 = pneg %p233
        $region34: #{tpu_custom_call.1} parent=11 // pred_check_branch
          %597 = sbr.rel (%p595) target = $region36
        $region35: #{tpu_custom_call.1} parent=11 // pred_region
          _
        $region36: #{tpu_custom_call.1} parent=11 // pred_fallthru
          _
        // Predicated region
        $region37: #{tpu_custom_call.1} parent=11 // pred_check
          %p598 = pneg %p254
        $region38: #{tpu_custom_call.1} parent=11 // pred_check_branch
          %600 = sbr.rel (%p598) target = $region40
        $region39: #{tpu_custom_call.1} parent=11 // pred_region
          %s602 = ssub.s32 1024, 1024
          %603 = vsyncadd [#allocation12], %s602
          %s604 = sshll.u32 [#allocation11], 4
          %s605 = int_to_ptr.vmem [resolvable:$true] %s604
          %610 = dma.hbm_to_vmem [thread:$0]  %s8, 1024, %s605, [#allocation12], 64, 64, 4
        $region40: #{tpu_custom_call.1} parent=11 // pred_fallthru
          _
        // Predicated region
        $region41: #{tpu_custom_call.1} parent=11 // pred_check
          %p611 = pneg %p275
        $region42: #{tpu_custom_call.1} parent=11 // pred_check_branch
          %613 = sbr.rel (%p611) target = $region44
        $region43: #{tpu_custom_call.1} parent=11 // pred_region
          _
        $region44: #{tpu_custom_call.1} parent=11 // pred_fallthru
          _
        // Predicated region
        $region45: #{tpu_custom_call.1} parent=11 // pred_check
          %p614 = pneg %p296
        $region46: #{tpu_custom_call.1} parent=11 // pred_check_branch
          %616 = sbr.rel (%p614) target = $region48
        $region47: #{tpu_custom_call.1} parent=11 // pred_region
          %s618 = ssub.s32 1024, 1024
          %619 = vsyncadd [#allocation12], %s618
          %s620 = sshll.u32 [#allocation13], 4
          %s621 = int_to_ptr.vmem [resolvable:$true] %s620
          %626 = dma.hbm_to_vmem [thread:$0]  %s10, 1024, %s621, [#allocation12], 64, 64, 4
        $region48: #{tpu_custom_call.1} parent=11 // pred_fallthru
          _
        // Predicated region
        $region49: #{tpu_custom_call.1} parent=11 // pred_check
          %p627 = pneg %p317
        $region50: #{tpu_custom_call.1} parent=11 // pred_check_branch
          %629 = sbr.rel (%p627) target = $region52
        $region51: #{tpu_custom_call.1} parent=11 // pred_region
          _
        $region52: #{tpu_custom_call.1} parent=11 // pred_fallthru
          _
        // Predicated region
        $region53: #{tpu_custom_call.1} parent=11 // pred_check
          %p630 = pneg %p338
        $region54: #{tpu_custom_call.1} parent=11 // pred_check_branch
          %632 = sbr.rel (%p630) target = $region56
        $region55: #{tpu_custom_call.1} parent=11 // pred_region
          %s634 = ssub.s32 1024, 1024
          %635 = vsyncadd [#allocation15], %s634
          %s636 = sshll.u32 [#allocation14], 4
          %s637 = int_to_ptr.vmem [resolvable:$true] %s636
          %642 = dma.hbm_to_vmem [thread:$0]  %s12, 1024, %s637, [#allocation15], 64, 64, 4
        $region56: #{tpu_custom_call.1} parent=11 // pred_fallthru
          _
        // Predicated region
        $region57: #{tpu_custom_call.1} parent=11 // pred_check
          %p643 = pneg %p359
        $region58: #{tpu_custom_call.1} parent=11 // pred_check_branch
          %645 = sbr.rel (%p643) target = $region60
        $region59: #{tpu_custom_call.1} parent=11 // pred_region
          _
        $region60: #{tpu_custom_call.1} parent=11 // pred_fallthru
          _
        // Predicated region
        $region61: #{tpu_custom_call.1} parent=11 // pred_check
          %p646 = pneg %p380
        $region62: #{tpu_custom_call.1} parent=11 // pred_check_branch
          %648 = sbr.rel (%p646) target = $region64
        $region63: #{tpu_custom_call.1} parent=11 // pred_region
          %s650 = ssub.s32 1024, 1024
          %651 = vsyncadd [#allocation15], %s650
          %s652 = sshll.u32 [#allocation16], 4
          %s653 = int_to_ptr.vmem [resolvable:$true] %s652
          %658 = dma.hbm_to_vmem [thread:$0]  %s14, 1024, %s653, [#allocation15], 64, 64, 4
        $region64: #{tpu_custom_call.1} parent=11 // pred_fallthru
          _
        // Predicated region
        $region65: #{tpu_custom_call.1} parent=11 // pred_check
          %p659 = pneg %p401
        $region66: #{tpu_custom_call.1} parent=11 // pred_check_branch
          %661 = sbr.rel (%p659) target = $region68
        $region67: #{tpu_custom_call.1} parent=11 // pred_region
          _
        $region68: #{tpu_custom_call.1} parent=11 // pred_fallthru
          _
        // Predicated region
        $region69: #{tpu_custom_call.1} parent=11 // pred_check
          %p662 = pneg %p422
        $region70: #{tpu_custom_call.1} parent=11 // pred_check_branch
          %664 = sbr.rel (%p662) target = $region72
        $region71: #{tpu_custom_call.1} parent=11 // pred_region
          %s666 = ssub.s32 4096, 4096
          %667 = vsyncadd [#allocation18], %s666
          %s668 = sshll.u32 [#allocation17], 4
          %s669 = int_to_ptr.vmem [resolvable:$true] %s668
          %674 = dma.hbm_to_vmem [thread:$0]  %s16, 4096, %s669, [#allocation18], 256, 256, 16
        $region72: #{tpu_custom_call.1} parent=11 // pred_fallthru
          _
        // Predicated region
        $region73: #{tpu_custom_call.1} parent=11 // pred_check
          %p675 = pneg %p443
        $region74: #{tpu_custom_call.1} parent=11 // pred_check_branch
          %677 = sbr.rel (%p675) target = $region76
        $region75: #{tpu_custom_call.1} parent=11 // pred_region
          _
        $region76: #{tpu_custom_call.1} parent=11 // pred_fallthru
          _
        // Predicated region
        $region77: #{tpu_custom_call.1} parent=11 // pred_check
          %p678 = pneg %p464
        $region78: #{tpu_custom_call.1} parent=11 // pred_check_branch
          %680 = sbr.rel (%p678) target = $region80
        $region79: #{tpu_custom_call.1} parent=11 // pred_region
          %s682 = ssub.s32 16384, 16384
          %683 = vsyncadd [#allocation18], %s682
          %s684 = sshll.u32 [#allocation19], 4
          %s685 = int_to_ptr.vmem [resolvable:$true] %s684
          %690 = dma.hbm_to_vmem [thread:$0]  %s18, 16384, %s685, [#allocation18], 256, 256, 16
        $region80: #{tpu_custom_call.1} parent=11 // pred_fallthru
          _
        // Predicated region
        $region81: #{tpu_custom_call.1} parent=11 // pred_check
          %p691 = pneg %p485
        $region82: #{tpu_custom_call.1} parent=11 // pred_check_branch
          %693 = sbr.rel (%p691) target = $region84
        $region83: #{tpu_custom_call.1} parent=11 // pred_region
          _
        $region84: #{tpu_custom_call.1} parent=11 // pred_fallthru
          _
        // Predicated region
        $region85: #{tpu_custom_call.1} parent=11 // pred_check
          %p694 = pneg %p506
        $region86: #{tpu_custom_call.1} parent=11 // pred_check_branch
          %696 = sbr.rel (%p694) target = $region88
        $region87: #{tpu_custom_call.1} parent=11 // pred_region
          %s698 = ssub.s32 4096, 4096
          %699 = vsyncadd [#allocation21], %s698
          %s700 = sshll.u32 [#allocation20], 4
          %s701 = int_to_ptr.vmem [resolvable:$true] %s700
          %706 = dma.hbm_to_vmem [thread:$0]  %s20, 4096, %s701, [#allocation21], 64, 64, 4
        $region88: #{tpu_custom_call.1} parent=11 // pred_fallthru
          _
        // Predicated region
        $region89: #{tpu_custom_call.1} parent=11 // pred_check
          %p707 = pneg %p527
        $region90: #{tpu_custom_call.1} parent=11 // pred_check_branch
          %709 = sbr.rel (%p707) target = $region92
        $region91: #{tpu_custom_call.1} parent=11 // pred_region
          _
        $region92: #{tpu_custom_call.1} parent=11 // pred_fallthru
          _
      $region12: #{tpu_custom_call.1} parent=5 // pred_fallthru
        _
      %p710 = scmp.lt.s32.totalorder %s41, 4
      // Predicated region
      $region93: #{tpu_custom_call.1} parent=5 // pred_check
        %p711 = pneg %p710
      $region94: #{tpu_custom_call.1} parent=5 // pred_check_branch
        %713 = sbr.rel (%p711) target = $region96
      $region95: #{tpu_custom_call.1} parent=5 // pred_region
        // Predicated region
        $region97: #{tpu_custom_call.1} parent=95 // pred_check
          %p714 = pneg %p73
        $region98: #{tpu_custom_call.1} parent=95 // pred_check_branch
          %716 = sbr.rel (%p714) target = $region100
        $region99: #{tpu_custom_call.1} parent=95 // pred_region
          %s717 = sand.u32 %s63, 1
          %s718 = scalar_lea.sflag [#allocation6], %s717
          %s719 = sand.u32 %s63, 1
          %s720 = smul.addr %s719, 128
          %s721 = scalar_lea.vmem [#allocation5], %s720
          %s723 = ssub.s32 2048, 2048
          %724 = vsyncadd %s718, %s723
          %s725 = smul.addr %s48, 32
          %s726 = smul.addr %s725, 64
          %s727 = scalar_lea.hbm %s0, %s726
          %s728 = sshll.u32 %s721, 4
          %s729 = int_to_ptr.vmem [resolvable:$true] %s728
          %734 = dma.hbm_to_vmem [thread:$0]  %s727, 2048, %s729, %s718, 64, 64, 4
        $region100: #{tpu_custom_call.1} parent=95 // pred_fallthru
          _
        // Predicated region
        $region101: #{tpu_custom_call.1} parent=95 // pred_check
          %p735 = pneg %p101
        $region102: #{tpu_custom_call.1} parent=95 // pred_check_branch
          %737 = sbr.rel (%p735) target = $region104
        $region103: #{tpu_custom_call.1} parent=95 // pred_region
          %s738 = sand.u32 %s41, 1
          %s739 = scalar_lea.sflag [#allocation9], %s738
          %s740 = sand.u32 %s91, 1
          %s741 = smul.addr %s740, 128
          %s742 = scalar_lea.vmem [#allocation8], %s741
          %s743 = smul.u32 16, %s49
          %s745 = ssub.s32 2048, 2048
          %746 = vsyncadd %s739, %s745
          %s747 = smul.addr %s48, 32
          %s748 = sadd.s32 %s743, %s747
          %s749 = smul.addr %s748, 128
          %s750 = scalar_lea.hbm %s1, %s749
          %s751 = sshll.u32 %s742, 4
          %s752 = int_to_ptr.vmem [resolvable:$true] %s751
          %757 = dma.hbm_to_vmem [thread:$0]  %s750, 2048, %s752, %s739, 128, 128, 8
        $region104: #{tpu_custom_call.1} parent=95 // pred_fallthru
          _
      $region96: #{tpu_custom_call.1} parent=5 // pred_fallthru
        _
      %p758 = scmp.le.s32.totalorder 1, %s41
      %p759 = scmp.lt.s32.totalorder %s41, 5
      %p760 = pnand %p758, %p759
      %p761 = pneg %p760
      // Predicated region
      $region105: #{tpu_custom_call.1} parent=5 // pred_check
        _
      $region106: #{tpu_custom_call.1} parent=5 // pred_check_branch
        %763 = sbr.rel (%p760) target = $region108
      $region107: #{tpu_custom_call.1} parent=5 // pred_region
        %s764 = ssub.s32 %s41, 1
        %s765 = sand.u32 %s66, 1
        %s766 = scalar_lea.sflag [#allocation6], %s765
        %s767 = sand.u32 %s66, 1
        %s768 = smul.addr %s767, 128
        %s769 = scalar_lea.vmem [#allocation5], %s768
        // Predicated region
        $region109: #{tpu_custom_call.1} parent=107 // pred_check
          %p770 = pneg %p79
        $region110: #{tpu_custom_call.1} parent=107 // pred_check_branch
          %772 = sbr.rel (%p770) target = $region112
        $region111: #{tpu_custom_call.1} parent=107 // pred_region
          %773 = dma.done %s766, 2048
        $region112: #{tpu_custom_call.1} parent=107 // pred_fallthru
          _
        %s774 = sand.u32 %s46, 1
        %s775 = scalar_lea.sflag [#allocation9], %s774
        %s776 = sand.u32 %s94, 1
        %s777 = smul.addr %s776, 128
        %s778 = scalar_lea.vmem [#allocation8], %s777
        // Predicated region
        $region113: #{tpu_custom_call.1} parent=107 // pred_check
          %p779 = pneg %p107
        $region114: #{tpu_custom_call.1} parent=107 // pred_check_branch
          %781 = sbr.rel (%p779) target = $region116
        $region115: #{tpu_custom_call.1} parent=107 // pred_region
          %782 = dma.done %s775, 2048
        $region116: #{tpu_custom_call.1} parent=107 // pred_fallthru
          _
        // Predicated region
        $region117: #{tpu_custom_call.1} parent=107 // pred_check
          %p783 = pneg %p212
        $region118: #{tpu_custom_call.1} parent=107 // pred_check_branch
          %785 = sbr.rel (%p783) target = $region120
        $region119: #{tpu_custom_call.1} parent=107 // pred_region
          %786 = dma.done [#allocation9], 1024
        $region120: #{tpu_custom_call.1} parent=107 // pred_fallthru
          _
        // Predicated region
        $region121: #{tpu_custom_call.1} parent=107 // pred_check
          %p787 = pneg %p254
        $region122: #{tpu_custom_call.1} parent=107 // pred_check_branch
          %789 = sbr.rel (%p787) target = $region124
        $region123: #{tpu_custom_call.1} parent=107 // pred_region
          %790 = dma.done [#allocation12], 1024
        $region124: #{tpu_custom_call.1} parent=107 // pred_fallthru
          _
        // Predicated region
        $region125: #{tpu_custom_call.1} parent=107 // pred_check
          %p791 = pneg %p296
        $region126: #{tpu_custom_call.1} parent=107 // pred_check_branch
          %793 = sbr.rel (%p791) target = $region128
        $region127: #{tpu_custom_call.1} parent=107 // pred_region
          %794 = dma.done [#allocation12], 1024
        $region128: #{tpu_custom_call.1} parent=107 // pred_fallthru
          _
        // Predicated region
        $region129: #{tpu_custom_call.1} parent=107 // pred_check
          %p795 = pneg %p338
        $region130: #{tpu_custom_call.1} parent=107 // pred_check_branch
          %797 = sbr.rel (%p795) target = $region132
        $region131: #{tpu_custom_call.1} parent=107 // pred_region
          %798 = dma.done [#allocation15], 1024
        $region132: #{tpu_custom_call.1} parent=107 // pred_fallthru
          _
        // Predicated region
        $region133: #{tpu_custom_call.1} parent=107 // pred_check
          %p799 = pneg %p380
        $region134: #{tpu_custom_call.1} parent=107 // pred_check_branch
          %801 = sbr.rel (%p799) target = $region136
        $region135: #{tpu_custom_call.1} parent=107 // pred_region
          %802 = dma.done [#allocation15], 1024
        $region136: #{tpu_custom_call.1} parent=107 // pred_fallthru
          _
        // Predicated region
        $region137: #{tpu_custom_call.1} parent=107 // pred_check
          %p803 = pneg %p422
        $region138: #{tpu_custom_call.1} parent=107 // pred_check_branch
          %805 = sbr.rel (%p803) target = $region140
        $region139: #{tpu_custom_call.1} parent=107 // pred_region
          %806 = dma.done [#allocation18], 4096
        $region140: #{tpu_custom_call.1} parent=107 // pred_fallthru
          _
        // Predicated region
        $region141: #{tpu_custom_call.1} parent=107 // pred_check
          %p807 = pneg %p464
        $region142: #{tpu_custom_call.1} parent=107 // pred_check_branch
          %809 = sbr.rel (%p807) target = $region144
        $region143: #{tpu_custom_call.1} parent=107 // pred_region
          %810 = dma.done [#allocation18], 16384
        $region144: #{tpu_custom_call.1} parent=107 // pred_fallthru
          _
        // Predicated region
        $region145: #{tpu_custom_call.1} parent=107 // pred_check
          %p811 = pneg %p506
        $region146: #{tpu_custom_call.1} parent=107 // pred_check_branch
          %813 = sbr.rel (%p811) target = $region148
        $region147: #{tpu_custom_call.1} parent=107 // pred_region
          %814 = dma.done [#allocation21], 4096
        $region148: #{tpu_custom_call.1} parent=107 // pred_fallthru
          _
        %s815 = sand.u32 %s66, 1
        %s816 = scalar_lea.sflag [#allocation6], %s815
        %s817 = sand.u32 %s66, 1
        %s818 = smul.addr %s817, 128
        %s819 = scalar_lea.vmem [#allocation5], %s818
        %p820 = pneg %p79
        %p821 = pneg %p76
        %s822 = sand.u32 %s46, 1
        %s823 = scalar_lea.sflag [#allocation9], %s822
        %s824 = sand.u32 %s94, 1
        %s825 = smul.addr %s824, 128
        %s826 = scalar_lea.vmem [#allocation8], %s825
        %p827 = pneg %p107
        %p828 = pneg %p104
        %p829 = pneg %p128
        %p830 = pneg %p125
        %p831 = pneg %p149
        %p832 = pneg %p146
        %p833 = pneg %p170
        %p834 = pneg %p167
        %p835 = pneg %p191
        %p836 = pneg %p188
        %p837 = pneg %p212
        %p838 = pneg %p209
        %p839 = pneg %p233
        %p840 = pneg %p230
        %p841 = pneg %p254
        %p842 = pneg %p251
        %p843 = pneg %p275
        %p844 = pneg %p272
        %p845 = pneg %p296
        %p846 = pneg %p293
        %p847 = pneg %p317
        %p848 = pneg %p314
        %p849 = pneg %p338
        %p850 = pneg %p335
        %p851 = pneg %p359
        %p852 = pneg %p356
        %p853 = pneg %p380
        %p854 = pneg %p377
        %p855 = pneg %p401
        %p856 = pneg %p398
        %p857 = pneg %p422
        %p858 = pneg %p419
        %p859 = pneg %p443
        %p860 = pneg %p440
        %p861 = pneg %p464
        %p862 = pneg %p461
        %p863 = pneg %p485
        %p864 = pneg %p482
        %p865 = pneg %p506
        %p866 = pneg %p503
        %p867 = pneg %p527
        %p868 = pneg %p524
        %p869 = pneg %p555
        %p870 = pneg %p552
        %s871 = sand.u32 %s542, 1
        %s872 = scalar_lea.sflag [#allocation7], %s871
        %s873 = sand.u32 %s542, 1
        %s874 = smul.addr %s873, 128
        %s875 = scalar_lea.vmem [#allocation22], %s874
        %s876 = smul.u32 16, %s51
        %s877 = smul.u32 16, %s51
        %p879 = scmp.eq.s32.totalorder %s51, 0
        // Predicated region
        $region149: #{tpu_custom_call.1} parent=107 // pred_check
          %p880 = pneg %p879
        $region150: #{tpu_custom_call.1} parent=107 // pred_check_branch
          %882 = sbr.rel (%p880) target = $region152
        $region151: #{tpu_custom_call.1} parent=107 // pred_region
          %v883 = vld [vmem:[%s769] sm:$0xf]
          %v884 = vld [vmem:[%s769 + $0x4] sm:$0xf]
          %v885 = vld [vmem:[%s769 + $0x8] sm:$0xf]
          %v886 = vld [vmem:[%s769 + $0xc] sm:$0xf]
          %v887 = vld [vmem:[%s769 + $0x10] sm:$0xf]
          %v888 = vld [vmem:[%s769 + $0x14] sm:$0xf]
          %v889 = vld [vmem:[%s769 + $0x18] sm:$0xf]
          %v890 = vld [vmem:[%s769 + $0x1c] sm:$0xf]
          %v891 = vld [vmem:[%s769 + $0x20] sm:$0xf]
          %v892 = vld [vmem:[%s769 + $0x24] sm:$0xf]
          %v893 = vld [vmem:[%s769 + $0x28] sm:$0xf]
          %v894 = vld [vmem:[%s769 + $0x2c] sm:$0xf]
          %v895 = vld [vmem:[%s769 + $0x30] sm:$0xf]
          %v896 = vld [vmem:[%s769 + $0x34] sm:$0xf]
          %v897 = vld [vmem:[%s769 + $0x38] sm:$0xf]
          %v898 = vld [vmem:[%s769 + $0x3c] sm:$0xf]
          %v899 = vld [vmem:[%s769 + $0x40] sm:$0xf]
          %v900 = vld [vmem:[%s769 + $0x44] sm:$0xf]
          %v901 = vld [vmem:[%s769 + $0x48] sm:$0xf]
          %v902 = vld [vmem:[%s769 + $0x4c] sm:$0xf]
          %v903 = vld [vmem:[%s769 + $0x50] sm:$0xf]
          %v904 = vld [vmem:[%s769 + $0x54] sm:$0xf]
          %v905 = vld [vmem:[%s769 + $0x58] sm:$0xf]
          %v906 = vld [vmem:[%s769 + $0x5c] sm:$0xf]
          %v907 = vld [vmem:[%s769 + $0x60] sm:$0xf]
          %v908 = vld [vmem:[%s769 + $0x64] sm:$0xf]
          %v909 = vld [vmem:[%s769 + $0x68] sm:$0xf]
          %v910 = vld [vmem:[%s769 + $0x6c] sm:$0xf]
          %v911 = vld [vmem:[%s769 + $0x70] sm:$0xf]
          %v912 = vld [vmem:[%s769 + $0x74] sm:$0xf]
          %v913 = vld [vmem:[%s769 + $0x78] sm:$0xf]
          %v914 = vld [vmem:[%s769 + $0x7c] sm:$0xf]
          %v915 = vld [vmem:[#allocation13] sm:$0xf]
          %v916 = vld [vmem:[#allocation13 + $0x4] sm:$0xf]
          %v917 = vld [vmem:[#allocation13 + $0x8] sm:$0xf]
          %v918 = vld [vmem:[#allocation13 + $0xc] sm:$0xf]
          %v919 = vld [vmem:[#allocation13 + $0x10] sm:$0xf]
          %v920 = vld [vmem:[#allocation13 + $0x14] sm:$0xf]
          %v921 = vld [vmem:[#allocation13 + $0x18] sm:$0xf]
          %v922 = vld [vmem:[#allocation13 + $0x1c] sm:$0xf]
          %v923 = vld [vmem:[#allocation13 + $0x20] sm:$0xf]
          %v924 = vld [vmem:[#allocation13 + $0x24] sm:$0xf]
          %v925 = vld [vmem:[#allocation13 + $0x28] sm:$0xf]
          %v926 = vld [vmem:[#allocation13 + $0x2c] sm:$0xf]
          %v927 = vld [vmem:[#allocation13 + $0x30] sm:$0xf]
          %v928 = vld [vmem:[#allocation13 + $0x34] sm:$0xf]
          %v929 = vld [vmem:[#allocation13 + $0x38] sm:$0xf]
          %v930 = vld [vmem:[#allocation13 + $0x3c] sm:$0xf]
          %v931 = vld [vmem:[%s11] sm:$0x1]
          %v933 = vlaneseq
          %v934 = vshrl.u32 %v933, 7
          %v935 = vsub.s32 0, %v934
          %v936 = vrot.slane %v931, %v935
          %v970 = vunpack.c.l.b16 %v883
          %v971 = vunpack.c.l.b16 %v884
          %v972 = vunpack.c.l.b16 %v885
          %v973 = vunpack.c.l.b16 %v886
          %v974 = vunpack.c.l.b16 %v887
          %v975 = vunpack.c.l.b16 %v888
          %v976 = vunpack.c.l.b16 %v889
          %v977 = vunpack.c.l.b16 %v890
          %v978 = vunpack.c.l.b16 %v891
          %v979 = vunpack.c.l.b16 %v892
          %v980 = vunpack.c.l.b16 %v893
          %v981 = vunpack.c.l.b16 %v894
          %v982 = vunpack.c.l.b16 %v895
          %v983 = vunpack.c.l.b16 %v896
          %v984 = vunpack.c.l.b16 %v897
          %v985 = vunpack.c.l.b16 %v898
          %v986 = vunpack.c.l.b16 %v899
          %v987 = vunpack.c.l.b16 %v900
          %v988 = vunpack.c.l.b16 %v901
          %v989 = vunpack.c.l.b16 %v902
          %v990 = vunpack.c.l.b16 %v903
          %v991 = vunpack.c.l.b16 %v904
          %v992 = vunpack.c.l.b16 %v905
          %v993 = vunpack.c.l.b16 %v906
          %v994 = vunpack.c.l.b16 %v907
          %v995 = vunpack.c.l.b16 %v908
          %v996 = vunpack.c.l.b16 %v909
          %v997 = vunpack.c.l.b16 %v910
          %v998 = vunpack.c.l.b16 %v911
          %v999 = vunpack.c.l.b16 %v912
          %v1000 = vunpack.c.l.b16 %v913
          %v1001 = vunpack.c.l.b16 %v914
          %v1002 = vpack.c.b16 %v971, %v970
          %v1003 = vpack.c.b16 %v973, %v972
          %v1004 = vpack.c.b16 %v975, %v974
          %v1005 = vpack.c.b16 %v977, %v976
          %v1006 = vpack.c.b16 %v979, %v978
          %v1007 = vpack.c.b16 %v981, %v980
          %v1008 = vpack.c.b16 %v983, %v982
          %v1009 = vpack.c.b16 %v985, %v984
          %v1010 = vpack.c.b16 %v987, %v986
          %v1011 = vpack.c.b16 %v989, %v988
          %v1012 = vpack.c.b16 %v991, %v990
          %v1013 = vpack.c.b16 %v993, %v992
          %v1014 = vpack.c.b16 %v995, %v994
          %v1015 = vpack.c.b16 %v997, %v996
          %v1016 = vpack.c.b16 %v999, %v998
          %v1017 = vpack.c.b16 %v1001, %v1000
          %v1050 = vunpack.c.l.b16 %v915
          %v1051 = vunpack.c.l.b16 %v916
          %v1052 = vunpack.c.l.b16 %v917
          %v1053 = vunpack.c.l.b16 %v918
          %v1054 = vunpack.c.l.b16 %v919
          %v1055 = vunpack.c.l.b16 %v920
          %v1056 = vunpack.c.l.b16 %v921
          %v1057 = vunpack.c.l.b16 %v922
          %v1058 = vunpack.c.l.b16 %v923
          %v1059 = vunpack.c.l.b16 %v924
          %v1060 = vunpack.c.l.b16 %v925
          %v1061 = vunpack.c.l.b16 %v926
          %v1062 = vunpack.c.l.b16 %v927
          %v1063 = vunpack.c.l.b16 %v928
          %v1064 = vunpack.c.l.b16 %v929
          %v1065 = vunpack.c.l.b16 %v930
          %v1066 = vpack.c.b16 %v1051, %v1050
          %v1067 = vpack.c.b16 %v1053, %v1052
          %v1068 = vpack.c.b16 %v1055, %v1054
          %v1069 = vpack.c.b16 %v1057, %v1056
          %v1070 = vpack.c.b16 %v1059, %v1058
          %v1071 = vpack.c.b16 %v1061, %v1060
          %v1072 = vpack.c.b16 %v1063, %v1062
          %v1073 = vpack.c.b16 %v1065, %v1064
          %1082 = vmatprep.subr.bf16.mxu0 0
          %1083 = vmatpush1.bf16.msra.mxu0 %v1066
          %1084 = vmatprep.subr.bf16.mxu0 0
          %1085 = vmatpush1.bf16.msra.mxu0 %v1067
          %1086 = vmatprep.subr.bf16.mxu0 0
          %1087 = vmatpush1.bf16.msra.mxu0 %v1068
          %1088 = vmatprep.subr.bf16.mxu0 0
          %1089 = vmatpush1.bf16.msra.mxu0 %v1069
          %1090 = vmatprep.subr.bf16.mxu0 0
          %1091 = vmatpush1.bf16.msra.mxu0 %v1070
          %1092 = vmatprep.subr.bf16.mxu0 0
          %1093 = vmatpush1.bf16.msra.mxu0 %v1071
          %1094 = vmatprep.subr.bf16.mxu0 0
          %1095 = vmatpush1.bf16.msra.mxu0 %v1072
          %1096 = vmatprep.subr.bf16.mxu0 0
          %1097 = vmatpush1.bf16.msra.mxu0 %v1073
          %1098 = vmatprep.subr.bf16.mxu0 0
          %1099 = vmatpush1.bf16.msra.mxu0 0
          %1100 = vmatprep.subr.bf16.mxu0 0
          %1101 = vmatpush1.bf16.msra.mxu0 0
          %1102 = vmatprep.subr.bf16.mxu0 0
          %1103 = vmatpush1.bf16.msra.mxu0 0
          %1104 = vmatprep.subr.bf16.mxu0 0
          %1105 = vmatpush1.bf16.msra.mxu0 0
          %1106 = vmatprep.subr.bf16.mxu0 0
          %1107 = vmatpush1.bf16.msra.mxu0 0
          %1108 = vmatprep.subr.bf16.mxu0 0
          %1109 = vmatpush1.bf16.msra.mxu0 0
          %1110 = vmatprep.subr.bf16.mxu0 0
          %1111 = vmatpush1.bf16.msra.mxu0 0
          %1112 = vmatprep.subr.bf16.mxu0 0
          %1113 = vmatpush1.bf16.msra.mxu0 0
          %1114 = vmatprep.mubr.bf16.mxu0 0
          %1115 = vmatmul.mubr.bf16.gmra.mrb[0].mxu0 %v1002
          %v1116 = vpop.f32.mrb[0].mxu0
          %v1117 = vadd.f32 %v936, %v1116
          %v1118 = vpop.f32.mrb[0].mxu0
          %v1119 = vpop.f32.mrb[0].mxu0
          %v1120 = vadd.f32 %v936, %v1119
          %v1121 = vpop.f32.mrb[0].mxu0
          %1122 = vmatprep.mubr.bf16.mxu0 0
          %1123 = vmatmul.mubr.bf16.gmra.mrb[0].mxu0 %v1003
          %v1124 = vpop.f32.mrb[0].mxu0
          %v1125 = vadd.f32 %v936, %v1124
          %v1126 = vpop.f32.mrb[0].mxu0
          %v1127 = vpop.f32.mrb[0].mxu0
          %v1128 = vadd.f32 %v936, %v1127
          %v1129 = vpop.f32.mrb[0].mxu0
          %1130 = vmatprep.mubr.bf16.mxu0 0
          %1131 = vmatmul.mubr.bf16.gmra.mrb[0].mxu0 %v1004
          %v1132 = vpop.f32.mrb[0].mxu0
          %v1133 = vadd.f32 %v936, %v1132
          %v1134 = vpop.f32.mrb[0].mxu0
          %v1135 = vpop.f32.mrb[0].mxu0
          %v1136 = vadd.f32 %v936, %v1135
          %v1137 = vpop.f32.mrb[0].mxu0
          %1138 = vmatprep.mubr.bf16.mxu0 0
          %1139 = vmatmul.mubr.bf16.gmra.mrb[0].mxu0 %v1005
          %v1140 = vpop.f32.mrb[0].mxu0
          %v1141 = vadd.f32 %v936, %v1140
          %v1142 = vpop.f32.mrb[0].mxu0
          %v1143 = vpop.f32.mrb[0].mxu0
          %v1144 = vadd.f32 %v936, %v1143
          %v1145 = vpop.f32.mrb[0].mxu0
          %1146 = vmatprep.mubr.bf16.mxu0 0
          %1147 = vmatmul.mubr.bf16.gmra.mrb[0].mxu0 %v1006
          %v1148 = vpop.f32.mrb[0].mxu0
          %v1149 = vadd.f32 %v936, %v1148
          %v1150 = vpop.f32.mrb[0].mxu0
          %v1151 = vpop.f32.mrb[0].mxu0
          %v1152 = vadd.f32 %v936, %v1151
          %v1153 = vpop.f32.mrb[0].mxu0
          %1154 = vmatprep.mubr.bf16.mxu0 0
          %1155 = vmatmul.mubr.bf16.gmra.mrb[0].mxu0 %v1007
          %v1156 = vpop.f32.mrb[0].mxu0
          %v1157 = vadd.f32 %v936, %v1156
          %v1158 = vpop.f32.mrb[0].mxu0
          %v1159 = vpop.f32.mrb[0].mxu0
          %v1160 = vadd.f32 %v936, %v1159
          %v1161 = vpop.f32.mrb[0].mxu0
          %1162 = vmatprep.mubr.bf16.mxu0 0
          %1163 = vmatmul.mubr.bf16.gmra.mrb[0].mxu0 %v1008
          %v1164 = vpop.f32.mrb[0].mxu0
          %v1165 = vadd.f32 %v936, %v1164
          %v1166 = vpop.f32.mrb[0].mxu0
          %v1167 = vpop.f32.mrb[0].mxu0
          %v1168 = vadd.f32 %v936, %v1167
          %v1169 = vpop.f32.mrb[0].mxu0
          %1170 = vmatprep.mubr.bf16.mxu0 0
          %1171 = vmatmul.mubr.bf16.gmra.mrb[0].mxu0 %v1009
          %v1172 = vpop.f32.mrb[0].mxu0
          %v1173 = vadd.f32 %v936, %v1172
          %v1174 = vpop.f32.mrb[0].mxu0
          %v1175 = vpop.f32.mrb[0].mxu0
          %v1176 = vadd.f32 %v936, %v1175
          %v1177 = vpop.f32.mrb[0].mxu0
          %1178 = vmatprep.mubr.bf16.mxu0 0
          %1179 = vmatmul.mubr.bf16.gmra.mrb[0].mxu0 %v1010
          %v1180 = vpop.f32.mrb[0].mxu0
          %v1181 = vadd.f32 %v936, %v1180
          %v1182 = vpop.f32.mrb[0].mxu0
          %v1183 = vpop.f32.mrb[0].mxu0
          %v1184 = vadd.f32 %v936, %v1183
          %v1185 = vpop.f32.mrb[0].mxu0
          %1186 = vmatprep.mubr.bf16.mxu0 0
          %1187 = vmatmul.mubr.bf16.gmra.mrb[0].mxu0 %v1011
          %v1188 = vpop.f32.mrb[0].mxu0
          %v1189 = vadd.f32 %v936, %v1188
          %v1190 = vpop.f32.mrb[0].mxu0
          %v1191 = vpop.f32.mrb[0].mxu0
          %v1192 = vadd.f32 %v936, %v1191
          %v1193 = vpop.f32.mrb[0].mxu0
          %1194 = vmatprep.mubr.bf16.mxu0 0
          %1195 = vmatmul.mubr.bf16.gmra.mrb[0].mxu0 %v1012
          %v1196 = vpop.f32.mrb[0].mxu0
          %v1197 = vadd.f32 %v936, %v1196
          %v1198 = vpop.f32.mrb[0].mxu0
          %v1199 = vpop.f32.mrb[0].mxu0
          %v1200 = vadd.f32 %v936, %v1199
          %v1201 = vpop.f32.mrb[0].mxu0
          %1202 = vmatprep.mubr.bf16.mxu0 0
          %1203 = vmatmul.mubr.bf16.gmra.mrb[0].mxu0 %v1013
          %v1204 = vpop.f32.mrb[0].mxu0
          %v1205 = vadd.f32 %v936, %v1204
          %v1206 = vpop.f32.mrb[0].mxu0
          %v1207 = vpop.f32.mrb[0].mxu0
          %v1208 = vadd.f32 %v936, %v1207
          %v1209 = vpop.f32.mrb[0].mxu0
          %1210 = vmatprep.mubr.bf16.mxu0 0
          %1211 = vmatmul.mubr.bf16.gmra.mrb[0].mxu0 %v1014
          %v1212 = vpop.f32.mrb[0].mxu0
          %v1213 = vadd.f32 %v936, %v1212
          %v1214 = vpop.f32.mrb[0].mxu0
          %v1215 = vpop.f32.mrb[0].mxu0
          %v1216 = vadd.f32 %v936, %v1215
          %v1217 = vpop.f32.mrb[0].mxu0
          %1218 = vmatprep.mubr.bf16.mxu0 0
          %1219 = vmatmul.mubr.bf16.gmra.mrb[0].mxu0 %v1015
          %v1220 = vpop.f32.mrb[0].mxu0
          %v1221 = vadd.f32 %v936, %v1220
          %v1222 = vpop.f32.mrb[0].mxu0
          %v1223 = vpop.f32.mrb[0].mxu0
          %v1224 = vadd.f32 %v936, %v1223
          %v1225 = vpop.f32.mrb[0].mxu0
          %1226 = vmatprep.mubr.bf16.mxu0 0
          %1227 = vmatmul.mubr.bf16.gmra.mrb[0].mxu0 %v1016
          %v1228 = vpop.f32.mrb[0].mxu0
          %v1229 = vadd.f32 %v936, %v1228
          %v1230 = vpop.f32.mrb[0].mxu0
          %v1231 = vpop.f32.mrb[0].mxu0
          %v1232 = vadd.f32 %v936, %v1231
          %v1233 = vpop.f32.mrb[0].mxu0
          %1234 = vmatprep.mubr.bf16.mxu0 0
          %1235 = vmatmul.mubr.bf16.gmra.mrb[0].mxu0 %v1017
          %v1236 = vpop.f32.mrb[0].mxu0
          %v1237 = vadd.f32 %v936, %v1236
          %v1238 = vpop.f32.mrb[0].mxu0
          %v1239 = vpop.f32.mrb[0].mxu0
          %v1240 = vadd.f32 %v936, %v1239
          %v1241 = vpop.f32.mrb[0].mxu0
          %1242 = vdwg.mxu0
          %v1243 = vld [vmem:[#allocation14] sm:$0xf]
          %v1244 = vld [vmem:[#allocation14 + $0x4] sm:$0xf]
          %v1245 = vld [vmem:[#allocation14 + $0x8] sm:$0xf]
          %v1246 = vld [vmem:[#allocation14 + $0xc] sm:$0xf]
          %v1247 = vld [vmem:[#allocation14 + $0x10] sm:$0xf]
          %v1248 = vld [vmem:[#allocation14 + $0x14] sm:$0xf]
          %v1249 = vld [vmem:[#allocation14 + $0x18] sm:$0xf]
          %v1250 = vld [vmem:[#allocation14 + $0x1c] sm:$0xf]
          %v1251 = vld [vmem:[#allocation14 + $0x20] sm:$0xf]
          %v1252 = vld [vmem:[#allocation14 + $0x24] sm:$0xf]
          %v1253 = vld [vmem:[#allocation14 + $0x28] sm:$0xf]
          %v1254 = vld [vmem:[#allocation14 + $0x2c] sm:$0xf]
          %v1255 = vld [vmem:[#allocation14 + $0x30] sm:$0xf]
          %v1256 = vld [vmem:[#allocation14 + $0x34] sm:$0xf]
          %v1257 = vld [vmem:[#allocation14 + $0x38] sm:$0xf]
          %v1258 = vld [vmem:[#allocation14 + $0x3c] sm:$0xf]
          %v1259 = vld [vmem:[%s13] sm:$0x1]
          %v1261 = vlaneseq
          %v1262 = vshrl.u32 %v1261, 7
          %v1263 = vsub.s32 0, %v1262
          %v1264 = vrot.slane %v1259, %v1263
          %v1282 = vunpack.c.l.b16 %v1243
          %v1283 = vunpack.c.l.b16 %v1244
          %v1284 = vunpack.c.l.b16 %v1245
          %v1285 = vunpack.c.l.b16 %v1246
          %v1286 = vunpack.c.l.b16 %v1247
          %v1287 = vunpack.c.l.b16 %v1248
          %v1288 = vunpack.c.l.b16 %v1249
          %v1289 = vunpack.c.l.b16 %v1250
          %v1290 = vunpack.c.l.b16 %v1251
          %v1291 = vunpack.c.l.b16 %v1252
          %v1292 = vunpack.c.l.b16 %v1253
          %v1293 = vunpack.c.l.b16 %v1254
          %v1294 = vunpack.c.l.b16 %v1255
          %v1295 = vunpack.c.l.b16 %v1256
          %v1296 = vunpack.c.l.b16 %v1257
          %v1297 = vunpack.c.l.b16 %v1258
          %v1298 = vpack.c.b16 %v1283, %v1282
          %v1299 = vpack.c.b16 %v1285, %v1284
          %v1300 = vpack.c.b16 %v1287, %v1286
          %v1301 = vpack.c.b16 %v1289, %v1288
          %v1302 = vpack.c.b16 %v1291, %v1290
          %v1303 = vpack.c.b16 %v1293, %v1292
          %v1304 = vpack.c.b16 %v1295, %v1294
          %v1305 = vpack.c.b16 %v1297, %v1296
          %1314 = vmatprep.subr.bf16.mxu0 0
          %1315 = vmatpush1.bf16.msra.mxu0 %v1298
          %1316 = vmatprep.subr.bf16.mxu0 0
          %1317 = vmatpush1.bf16.msra.mxu0 %v1299
          %1318 = vmatprep.subr.bf16.mxu0 0
          %1319 = vmatpush1.bf16.msra.mxu0 %v1300
          %1320 = vmatprep.subr.bf16.mxu0 0
          %1321 = vmatpush1.bf16.msra.mxu0 %v1301
          %1322 = vmatprep.subr.bf16.mxu0 0
          %1323 = vmatpush1.bf16.msra.mxu0 %v1302
          %1324 = vmatprep.subr.bf16.mxu0 0
          %1325 = vmatpush1.bf16.msra.mxu0 %v1303
          %1326 = vmatprep.subr.bf16.mxu0 0
          %1327 = vmatpush1.bf16.msra.mxu0 %v1304
          %1328 = vmatprep.subr.bf16.mxu0 0
          %1329 = vmatpush1.bf16.msra.mxu0 %v1305
          %1330 = vmatprep.subr.bf16.mxu0 0
          %1331 = vmatpush1.bf16.msra.mxu0 0
          %1332 = vmatprep.subr.bf16.mxu0 0
          %1333 = vmatpush1.bf16.msra.mxu0 0
          %1334 = vmatprep.subr.bf16.mxu0 0
          %1335 = vmatpush1.bf16.msra.mxu0 0
          %1336 = vmatprep.subr.bf16.mxu0 0
          %1337 = vmatpush1.bf16.msra.mxu0 0
          %1338 = vmatprep.subr.bf16.mxu0 0
          %1339 = vmatpush1.bf16.msra.mxu0 0
          %1340 = vmatprep.subr.bf16.mxu0 0
          %1341 = vmatpush1.bf16.msra.mxu0 0
          %1342 = vmatprep.subr.bf16.mxu0 0
          %1343 = vmatpush1.bf16.msra.mxu0 0
          %1344 = vmatprep.subr.bf16.mxu0 0
          %1345 = vmatpush1.bf16.msra.mxu0 0
          %1346 = vmatprep.mubr.bf16.mxu0 0
          %1347 = vmatmul.mubr.bf16.gmra.mrb[0].mxu0 %v1002
          %v1348 = vpop.f32.mrb[0].mxu0
          %v1349 = vadd.f32 %v1264, %v1348
          %v1350 = vpop.f32.mrb[0].mxu0
          %v1351 = vpop.f32.mrb[0].mxu0
          %v1352 = vadd.f32 %v1264, %v1351
          %v1353 = vpop.f32.mrb[0].mxu0
          %1354 = vmatprep.mubr.bf16.mxu0 0
          %1355 = vmatmul.mubr.bf16.gmra.mrb[0].mxu0 %v1003
          %v1356 = vpop.f32.mrb[0].mxu0
          %v1357 = vadd.f32 %v1264, %v1356
          %v1358 = vpop.f32.mrb[0].mxu0
          %v1359 = vpop.f32.mrb[0].mxu0
          %v1360 = vadd.f32 %v1264, %v1359
          %v1361 = vpop.f32.mrb[0].mxu0
          %1362 = vmatprep.mubr.bf16.mxu0 0
          %1363 = vmatmul.mubr.bf16.gmra.mrb[0].mxu0 %v1004
          %v1364 = vpop.f32.mrb[0].mxu0
          %v1365 = vadd.f32 %v1264, %v1364
          %v1366 = vpop.f32.mrb[0].mxu0
          %v1367 = vpop.f32.mrb[0].mxu0
          %v1368 = vadd.f32 %v1264, %v1367
          %v1369 = vpop.f32.mrb[0].mxu0
          %1370 = vmatprep.mubr.bf16.mxu0 0
          %1371 = vmatmul.mubr.bf16.gmra.mrb[0].mxu0 %v1005
          %v1372 = vpop.f32.mrb[0].mxu0
          %v1373 = vadd.f32 %v1264, %v1372
          %v1374 = vpop.f32.mrb[0].mxu0
          %v1375 = vpop.f32.mrb[0].mxu0
          %v1376 = vadd.f32 %v1264, %v1375
          %v1377 = vpop.f32.mrb[0].mxu0
          %1378 = vmatprep.mubr.bf16.mxu0 0
          %1379 = vmatmul.mubr.bf16.gmra.mrb[0].mxu0 %v1006
          %v1380 = vpop.f32.mrb[0].mxu0
          %v1381 = vadd.f32 %v1264, %v1380
          %v1382 = vpop.f32.mrb[0].mxu0
          %v1383 = vpop.f32.mrb[0].mxu0
          %v1384 = vadd.f32 %v1264, %v1383
          %v1385 = vpop.f32.mrb[0].mxu0
          %1386 = vmatprep.mubr.bf16.mxu0 0
          %1387 = vmatmul.mubr.bf16.gmra.mrb[0].mxu0 %v1007
          %v1388 = vpop.f32.mrb[0].mxu0
          %v1389 = vadd.f32 %v1264, %v1388
          %v1390 = vpop.f32.mrb[0].mxu0
          %v1391 = vpop.f32.mrb[0].mxu0
          %v1392 = vadd.f32 %v1264, %v1391
          %v1393 = vpop.f32.mrb[0].mxu0
          %1394 = vmatprep.mubr.bf16.mxu0 0
          %1395 = vmatmul.mubr.bf16.gmra.mrb[0].mxu0 %v1008
          %v1396 = vpop.f32.mrb[0].mxu0
          %v1397 = vadd.f32 %v1264, %v1396
          %v1398 = vpop.f32.mrb[0].mxu0
          %v1399 = vpop.f32.mrb[0].mxu0
          %v1400 = vadd.f32 %v1264, %v1399
          %v1401 = vpop.f32.mrb[0].mxu0
          %1402 = vmatprep.mubr.bf16.mxu0 0
          %1403 = vmatmul.mubr.bf16.gmra.mrb[0].mxu0 %v1009
          %v1404 = vpop.f32.mrb[0].mxu0
          %v1405 = vadd.f32 %v1264, %v1404
          %v1406 = vpop.f32.mrb[0].mxu0
          %v1407 = vpop.f32.mrb[0].mxu0
          %v1408 = vadd.f32 %v1264, %v1407
          %v1409 = vpop.f32.mrb[0].mxu0
          %1410 = vmatprep.mubr.bf16.mxu0 0
          %1411 = vmatmul.mubr.bf16.gmra.mrb[0].mxu0 %v1010
          %v1412 = vpop.f32.mrb[0].mxu0
          %v1413 = vadd.f32 %v1264, %v1412
          %v1414 = vpop.f32.mrb[0].mxu0
          %v1415 = vpop.f32.mrb[0].mxu0
          %v1416 = vadd.f32 %v1264, %v1415
          %v1417 = vpop.f32.mrb[0].mxu0
          %1418 = vmatprep.mubr.bf16.mxu0 0
          %1419 = vmatmul.mubr.bf16.gmra.mrb[0].mxu0 %v1011
          %v1420 = vpop.f32.mrb[0].mxu0
          %v1421 = vadd.f32 %v1264, %v1420
          %v1422 = vpop.f32.mrb[0].mxu0
          %v1423 = vpop.f32.mrb[0].mxu0
          %v1424 = vadd.f32 %v1264, %v1423
          %v1425 = vpop.f32.mrb[0].mxu0
          %1426 = vmatprep.mubr.bf16.mxu0 0
          %1427 = vmatmul.mubr.bf16.gmra.mrb[0].mxu0 %v1012
          %v1428 = vpop.f32.mrb[0].mxu0
          %v1429 = vadd.f32 %v1264, %v1428
          %v1430 = vpop.f32.mrb[0].mxu0
          %v1431 = vpop.f32.mrb[0].mxu0
          %v1432 = vadd.f32 %v1264, %v1431
          %v1433 = vpop.f32.mrb[0].mxu0
          %1434 = vmatprep.mubr.bf16.mxu0 0
          %1435 = vmatmul.mubr.bf16.gmra.mrb[0].mxu0 %v1013
          %v1436 = vpop.f32.mrb[0].mxu0
          %v1437 = vadd.f32 %v1264, %v1436
          %v1438 = vpop.f32.mrb[0].mxu0
          %v1439 = vpop.f32.mrb[0].mxu0
          %v1440 = vadd.f32 %v1264, %v1439
          %v1441 = vpop.f32.mrb[0].mxu0
          %1442 = vmatprep.mubr.bf16.mxu0 0
          %1443 = vmatmul.mubr.bf16.gmra.mrb[0].mxu0 %v1014
          %v1444 = vpop.f32.mrb[0].mxu0
          %v1445 = vadd.f32 %v1264, %v1444
          %v1446 = vpop.f32.mrb[0].mxu0
          %v1447 = vpop.f32.mrb[0].mxu0
          %v1448 = vadd.f32 %v1264, %v1447
          %v1449 = vpop.f32.mrb[0].mxu0
          %1450 = vmatprep.mubr.bf16.mxu0 0
          %1451 = vmatmul.mubr.bf16.gmra.mrb[0].mxu0 %v1015
          %v1452 = vpop.f32.mrb[0].mxu0
          %v1453 = vadd.f32 %v1264, %v1452
          %v1454 = vpop.f32.mrb[0].mxu0
          %v1455 = vpop.f32.mrb[0].mxu0
          %v1456 = vadd.f32 %v1264, %v1455
          %v1457 = vpop.f32.mrb[0].mxu0
          %1458 = vmatprep.mubr.bf16.mxu0 0
          %1459 = vmatmul.mubr.bf16.gmra.mrb[0].mxu0 %v1016
          %v1460 = vpop.f32.mrb[0].mxu0
          %v1461 = vadd.f32 %v1264, %v1460
          %v1462 = vpop.f32.mrb[0].mxu0
          %v1463 = vpop.f32.mrb[0].mxu0
          %v1464 = vadd.f32 %v1264, %v1463
          %v1465 = vpop.f32.mrb[0].mxu0
          %1466 = vmatprep.mubr.bf16.mxu0 0
          %1467 = vmatmul.mubr.bf16.gmra.mrb[0].mxu0 %v1017
          %v1468 = vpop.f32.mrb[0].mxu0
          %v1469 = vadd.f32 %v1264, %v1468
          %v1470 = vpop.f32.mrb[0].mxu0
          %v1471 = vpop.f32.mrb[0].mxu0
          %v1472 = vadd.f32 %v1264, %v1471
          %v1473 = vpop.f32.mrb[0].mxu0
          %1474 = vdwg.mxu0
          %v1475 = vpack.c.bf16 %v1120, %v1117
          %v1476 = vpack.c.bf16 %v1128, %v1125
          %v1477 = vpack.c.bf16 %v1136, %v1133
          %v1478 = vpack.c.bf16 %v1144, %v1141
          %v1479 = vpack.c.bf16 %v1152, %v1149
          %v1480 = vpack.c.bf16 %v1160, %v1157
          %v1481 = vpack.c.bf16 %v1168, %v1165
          %v1482 = vpack.c.bf16 %v1176, %v1173
          %v1483 = vpack.c.bf16 %v1184, %v1181
          %v1484 = vpack.c.bf16 %v1192, %v1189
          %v1485 = vpack.c.bf16 %v1200, %v1197
          %v1486 = vpack.c.bf16 %v1208, %v1205
          %v1487 = vpack.c.bf16 %v1216, %v1213
          %v1488 = vpack.c.bf16 %v1224, %v1221
          %v1489 = vpack.c.bf16 %v1232, %v1229
          %v1490 = vpack.c.bf16 %v1240, %v1237
          %1491 = vst [vmem:[#allocation2] sm:$0xff] %v1475
          %1492 = vst [vmem:[#allocation2 + $0x8] sm:$0xff] %v1476
          %1493 = vst [vmem:[#allocation2 + $0x10] sm:$0xff] %v1477
          %1494 = vst [vmem:[#allocation2 + $0x18] sm:$0xff] %v1478
          %1495 = vst [vmem:[#allocation2 + $0x20] sm:$0xff] %v1479
          %1496 = vst [vmem:[#allocation2 + $0x28] sm:$0xff] %v1480
          %1497 = vst [vmem:[#allocation2 + $0x30] sm:$0xff] %v1481
          %1498 = vst [vmem:[#allocation2 + $0x38] sm:$0xff] %v1482
          %1499 = vst [vmem:[#allocation2 + $0x40] sm:$0xff] %v1483
          %1500 = vst [vmem:[#allocation2 + $0x48] sm:$0xff] %v1484
          %1501 = vst [vmem:[#allocation2 + $0x50] sm:$0xff] %v1485
          %1502 = vst [vmem:[#allocation2 + $0x58] sm:$0xff] %v1486
          %1503 = vst [vmem:[#allocation2 + $0x60] sm:$0xff] %v1487
          %1504 = vst [vmem:[#allocation2 + $0x68] sm:$0xff] %v1488
          %1505 = vst [vmem:[#allocation2 + $0x70] sm:$0xff] %v1489
          %1506 = vst [vmem:[#allocation2 + $0x78] sm:$0xff] %v1490
          %v1507 = vpack.c.bf16 %v1352, %v1349
          %v1508 = vpack.c.bf16 %v1360, %v1357
          %v1509 = vpack.c.bf16 %v1368, %v1365
          %v1510 = vpack.c.bf16 %v1376, %v1373
          %v1511 = vpack.c.bf16 %v1384, %v1381
          %v1512 = vpack.c.bf16 %v1392, %v1389
          %v1513 = vpack.c.bf16 %v1400, %v1397
          %v1514 = vpack.c.bf16 %v1408, %v1405
          %v1515 = vpack.c.bf16 %v1416, %v1413
          %v1516 = vpack.c.bf16 %v1424, %v1421
          %v1517 = vpack.c.bf16 %v1432, %v1429
          %v1518 = vpack.c.bf16 %v1440, %v1437
          %v1519 = vpack.c.bf16 %v1448, %v1445
          %v1520 = vpack.c.bf16 %v1456, %v1453
          %v1521 = vpack.c.bf16 %v1464, %v1461
          %v1522 = vpack.c.bf16 %v1472, %v1469
          %1523 = vst [vmem:[#allocation3] sm:$0xff] %v1507
          %1524 = vst [vmem:[#allocation3 + $0x8] sm:$0xff] %v1508
          %1525 = vst [vmem:[#allocation3 + $0x10] sm:$0xff] %v1509
          %1526 = vst [vmem:[#allocation3 + $0x18] sm:$0xff] %v1510
          %1527 = vst [vmem:[#allocation3 + $0x20] sm:$0xff] %v1511
          %1528 = vst [vmem:[#allocation3 + $0x28] sm:$0xff] %v1512
          %1529 = vst [vmem:[#allocation3 + $0x30] sm:$0xff] %v1513
          %1530 = vst [vmem:[#allocation3 + $0x38] sm:$0xff] %v1514
          %1531 = vst [vmem:[#allocation3 + $0x40] sm:$0xff] %v1515
          %1532 = vst [vmem:[#allocation3 + $0x48] sm:$0xff] %v1516
          %1533 = vst [vmem:[#allocation3 + $0x50] sm:$0xff] %v1517
          %1534 = vst [vmem:[#allocation3 + $0x58] sm:$0xff] %v1518
          %1535 = vst [vmem:[#allocation3 + $0x60] sm:$0xff] %v1519
          %1536 = vst [vmem:[#allocation3 + $0x68] sm:$0xff] %v1520
          %1537 = vst [vmem:[#allocation3 + $0x70] sm:$0xff] %v1521
          %1538 = vst [vmem:[#allocation3 + $0x78] sm:$0xff] %v1522
        $region152: #{tpu_custom_call.1} parent=107 // pred_fallthru
          _
        %v1539 = vld [vmem:[%s778] sm:$0xff]
        %v1540 = vld [vmem:[%s778 + $0x8] sm:$0xff]
        %v1541 = vld [vmem:[%s778 + $0x10] sm:$0xff]
        %v1542 = vld [vmem:[%s778 + $0x18] sm:$0xff]
        %v1543 = vld [vmem:[%s778 + $0x20] sm:$0xff]
        %v1544 = vld [vmem:[%s778 + $0x28] sm:$0xff]
        %v1545 = vld [vmem:[%s778 + $0x30] sm:$0xff]
        %v1546 = vld [vmem:[%s778 + $0x38] sm:$0xff]
        %v1547 = vld [vmem:[%s778 + $0x40] sm:$0xff]
        %v1548 = vld [vmem:[%s778 + $0x48] sm:$0xff]
        %v1549 = vld [vmem:[%s778 + $0x50] sm:$0xff]
        %v1550 = vld [vmem:[%s778 + $0x58] sm:$0xff]
        %v1551 = vld [vmem:[%s778 + $0x60] sm:$0xff]
        %v1552 = vld [vmem:[%s778 + $0x68] sm:$0xff]
        %v1553 = vld [vmem:[%s778 + $0x70] sm:$0xff]
        %v1554 = vld [vmem:[%s778 + $0x78] sm:$0xff]
        %v1555 = vpack.c.bf16 %v1540, %v1539
        %v1556 = vpack.c.bf16 %v1542, %v1541
        %v1557 = vpack.c.bf16 %v1544, %v1543
        %v1558 = vpack.c.bf16 %v1546, %v1545
        %v1559 = vpack.c.bf16 %v1548, %v1547
        %v1560 = vpack.c.bf16 %v1550, %v1549
        %v1561 = vpack.c.bf16 %v1552, %v1551
        %v1562 = vpack.c.bf16 %v1554, %v1553
        %v1563 = vld [vmem:[%s2] sm:$0x1]
        %v1564 = vld [vmem:[%s3] sm:$0x1]
        %1565 = vadd.xlane.f32.xlu0 %v1539
        %v1566 = vpop.xlane.xlu0 %1565
        %1567 = vadd.xlane.f32.xlu0 %v1540
        %v1568 = vpop.xlane.xlu0 %1567
        %1569 = vadd.xlane.f32.xlu0 %v1541
        %v1570 = vpop.xlane.xlu0 %1569
        %1571 = vadd.xlane.f32.xlu0 %v1542
        %v1572 = vpop.xlane.xlu0 %1571
        %1573 = vadd.xlane.f32.xlu0 %v1543
        %v1574 = vpop.xlane.xlu0 %1573
        %1575 = vadd.xlane.f32.xlu0 %v1544
        %v1576 = vpop.xlane.xlu0 %1575
        %1577 = vadd.xlane.f32.xlu0 %v1545
        %v1578 = vpop.xlane.xlu0 %1577
        %1579 = vadd.xlane.f32.xlu0 %v1546
        %v1580 = vpop.xlane.xlu0 %1579
        %1581 = vadd.xlane.f32.xlu0 %v1547
        %v1582 = vpop.xlane.xlu0 %1581
        %1583 = vadd.xlane.f32.xlu0 %v1548
        %v1584 = vpop.xlane.xlu0 %1583
        %1585 = vadd.xlane.f32.xlu0 %v1549
        %v1586 = vpop.xlane.xlu0 %1585
        %1587 = vadd.xlane.f32.xlu0 %v1550
        %v1588 = vpop.xlane.xlu0 %1587
        %1589 = vadd.xlane.f32.xlu0 %v1551
        %v1590 = vpop.xlane.xlu0 %1589
        %1591 = vadd.xlane.f32.xlu0 %v1552
        %v1592 = vpop.xlane.xlu0 %1591
        %1593 = vadd.xlane.f32.xlu0 %v1553
        %v1594 = vpop.xlane.xlu0 %1593
        %1595 = vadd.xlane.f32.xlu0 %v1554
        %v1596 = vpop.xlane.xlu0 %1595
        %v1597 = vrcp.pop 128.0
        %v1598 = vmul.f32 %v1566, %v1597
        %v1599 = vmul.f32 %v1568, %v1597
        %v1600 = vmul.f32 %v1570, %v1597
        %v1601 = vmul.f32 %v1572, %v1597
        %v1602 = vmul.f32 %v1574, %v1597
        %v1603 = vmul.f32 %v1576, %v1597
        %v1604 = vmul.f32 %v1578, %v1597
        %v1605 = vmul.f32 %v1580, %v1597
        %v1606 = vmul.f32 %v1582, %v1597
        %v1607 = vmul.f32 %v1584, %v1597
        %v1608 = vmul.f32 %v1586, %v1597
        %v1609 = vmul.f32 %v1588, %v1597
        %v1610 = vmul.f32 %v1590, %v1597
        %v1611 = vmul.f32 %v1592, %v1597
        %v1612 = vmul.f32 %v1594, %v1597
        %v1613 = vmul.f32 %v1596, %v1597
        %v1614 = vsub.f32 %v1539, %v1598
        %v1615 = vsub.f32 %v1540, %v1599
        %v1616 = vsub.f32 %v1541, %v1600
        %v1617 = vsub.f32 %v1542, %v1601
        %v1618 = vsub.f32 %v1543, %v1602
        %v1619 = vsub.f32 %v1544, %v1603
        %v1620 = vsub.f32 %v1545, %v1604
        %v1621 = vsub.f32 %v1546, %v1605
        %v1622 = vsub.f32 %v1547, %v1606
        %v1623 = vsub.f32 %v1548, %v1607
        %v1624 = vsub.f32 %v1549, %v1608
        %v1625 = vsub.f32 %v1550, %v1609
        %v1626 = vsub.f32 %v1551, %v1610
        %v1627 = vsub.f32 %v1552, %v1611
        %v1628 = vsub.f32 %v1553, %v1612
        %v1629 = vsub.f32 %v1554, %v1613
        %v1630 = vmul.f32 %v1614, %v1614
        %v1631 = vmul.f32 %v1615, %v1615
        %v1632 = vmul.f32 %v1616, %v1616
        %v1633 = vmul.f32 %v1617, %v1617
        %v1634 = vmul.f32 %v1618, %v1618
        %v1635 = vmul.f32 %v1619, %v1619
        %v1636 = vmul.f32 %v1620, %v1620
        %v1637 = vmul.f32 %v1621, %v1621
        %v1638 = vmul.f32 %v1622, %v1622
        %v1639 = vmul.f32 %v1623, %v1623
        %v1640 = vmul.f32 %v1624, %v1624
        %v1641 = vmul.f32 %v1625, %v1625
        %v1642 = vmul.f32 %v1626, %v1626
        %v1643 = vmul.f32 %v1627, %v1627
        %v1644 = vmul.f32 %v1628, %v1628
        %v1645 = vmul.f32 %v1629, %v1629
        %1646 = vadd.xlane.f32.xlu0 %v1630
        %v1647 = vpop.xlane.xlu0 %1646
        %1648 = vadd.xlane.f32.xlu0 %v1631
        %v1649 = vpop.xlane.xlu0 %1648
        %1650 = vadd.xlane.f32.xlu0 %v1632
        %v1651 = vpop.xlane.xlu0 %1650
        %1652 = vadd.xlane.f32.xlu0 %v1633
        %v1653 = vpop.xlane.xlu0 %1652
        %1654 = vadd.xlane.f32.xlu0 %v1634
        %v1655 = vpop.xlane.xlu0 %1654
        %1656 = vadd.xlane.f32.xlu0 %v1635
        %v1657 = vpop.xlane.xlu0 %1656
        %1658 = vadd.xlane.f32.xlu0 %v1636
        %v1659 = vpop.xlane.xlu0 %1658
        %1660 = vadd.xlane.f32.xlu0 %v1637
        %v1661 = vpop.xlane.xlu0 %1660
        %1662 = vadd.xlane.f32.xlu0 %v1638
        %v1663 = vpop.xlane.xlu0 %1662
        %1664 = vadd.xlane.f32.xlu0 %v1639
        %v1665 = vpop.xlane.xlu0 %1664
        %1666 = vadd.xlane.f32.xlu0 %v1640
        %v1667 = vpop.xlane.xlu0 %1666
        %1668 = vadd.xlane.f32.xlu0 %v1641
        %v1669 = vpop.xlane.xlu0 %1668
        %1670 = vadd.xlane.f32.xlu0 %v1642
        %v1671 = vpop.xlane.xlu0 %1670
        %1672 = vadd.xlane.f32.xlu0 %v1643
        %v1673 = vpop.xlane.xlu0 %1672
        %1674 = vadd.xlane.f32.xlu0 %v1644
        %v1675 = vpop.xlane.xlu0 %1674
        %1676 = vadd.xlane.f32.xlu0 %v1645
        %v1677 = vpop.xlane.xlu0 %1676
        %v1678 = vmul.f32 %v1647, %v1597
        %v1679 = vmul.f32 %v1649, %v1597
        %v1680 = vmul.f32 %v1651, %v1597
        %v1681 = vmul.f32 %v1653, %v1597
        %v1682 = vmul.f32 %v1655, %v1597
        %v1683 = vmul.f32 %v1657, %v1597
        %v1684 = vmul.f32 %v1659, %v1597
        %v1685 = vmul.f32 %v1661, %v1597
        %v1686 = vmul.f32 %v1663, %v1597
        %v1687 = vmul.f32 %v1665, %v1597
        %v1688 = vmul.f32 %v1667, %v1597
        %v1689 = vmul.f32 %v1669, %v1597
        %v1690 = vmul.f32 %v1671, %v1597
        %v1691 = vmul.f32 %v1673, %v1597
        %v1692 = vmul.f32 %v1675, %v1597
        %v1693 = vmul.f32 %v1677, %v1597
        %v1694 = vadd.f32 %v1678, 1e-05
        %v1695 = vadd.f32 %v1679, 1e-05
        %v1696 = vadd.f32 %v1680, 1e-05
        %v1697 = vadd.f32 %v1681, 1e-05
        %v1698 = vadd.f32 %v1682, 1e-05
        %v1699 = vadd.f32 %v1683, 1e-05
        %v1700 = vadd.f32 %v1684, 1e-05
        %v1701 = vadd.f32 %v1685, 1e-05
        %v1702 = vadd.f32 %v1686, 1e-05
        %v1703 = vadd.f32 %v1687, 1e-05
        %v1704 = vadd.f32 %v1688, 1e-05
        %v1705 = vadd.f32 %v1689, 1e-05
        %v1706 = vadd.f32 %v1690, 1e-05
        %v1707 = vadd.f32 %v1691, 1e-05
        %v1708 = vadd.f32 %v1692, 1e-05
        %v1709 = vadd.f32 %v1693, 1e-05
        %v1710 = vrsqrt.pop %v1694
        %v1711 = vrsqrt.pop %v1695
        %v1712 = vrsqrt.pop %v1696
        %v1713 = vrsqrt.pop %v1697
        %v1714 = vrsqrt.pop %v1698
        %v1715 = vrsqrt.pop %v1699
        %v1716 = vrsqrt.pop %v1700
        %v1717 = vrsqrt.pop %v1701
        %v1718 = vrsqrt.pop %v1702
        %v1719 = vrsqrt.pop %v1703
        %v1720 = vrsqrt.pop %v1704
        %v1721 = vrsqrt.pop %v1705
        %v1722 = vrsqrt.pop %v1706
        %v1723 = vrsqrt.pop %v1707
        %v1724 = vrsqrt.pop %v1708
        %v1725 = vrsqrt.pop %v1709
        %v1726 = vmul.f32 %v1614, %v1710
        %v1727 = vmul.f32 %v1615, %v1711
        %v1728 = vmul.f32 %v1616, %v1712
        %v1729 = vmul.f32 %v1617, %v1713
        %v1730 = vmul.f32 %v1618, %v1714
        %v1731 = vmul.f32 %v1619, %v1715
        %v1732 = vmul.f32 %v1620, %v1716
        %v1733 = vmul.f32 %v1621, %v1717
        %v1734 = vmul.f32 %v1622, %v1718
        %v1735 = vmul.f32 %v1623, %v1719
        %v1736 = vmul.f32 %v1624, %v1720
        %v1737 = vmul.f32 %v1625, %v1721
        %v1738 = vmul.f32 %v1626, %v1722
        %v1739 = vmul.f32 %v1627, %v1723
        %v1740 = vmul.f32 %v1628, %v1724
        %v1741 = vmul.f32 %v1629, %v1725
        %v1743 = vlaneseq
        %v1744 = vshrl.u32 %v1743, 7
        %v1745 = vsub.s32 0, %v1744
        %v1746 = vrot.slane %v1563, %v1745
        %v1748 = vmul.f32 %v1726, %v1746
        %v1749 = vmul.f32 %v1727, %v1746
        %v1750 = vmul.f32 %v1728, %v1746
        %v1751 = vmul.f32 %v1729, %v1746
        %v1752 = vmul.f32 %v1730, %v1746
        %v1753 = vmul.f32 %v1731, %v1746
        %v1754 = vmul.f32 %v1732, %v1746
        %v1755 = vmul.f32 %v1733, %v1746
        %v1756 = vmul.f32 %v1734, %v1746
        %v1757 = vmul.f32 %v1735, %v1746
        %v1758 = vmul.f32 %v1736, %v1746
        %v1759 = vmul.f32 %v1737, %v1746
        %v1760 = vmul.f32 %v1738, %v1746
        %v1761 = vmul.f32 %v1739, %v1746
        %v1762 = vmul.f32 %v1740, %v1746
        %v1763 = vmul.f32 %v1741, %v1746
        %v1765 = vlaneseq
        %v1766 = vshrl.u32 %v1765, 7
        %v1767 = vsub.s32 0, %v1766
        %v1768 = vrot.slane %v1564, %v1767
        %v1770 = vadd.f32 %v1748, %v1768
        %v1771 = vadd.f32 %v1749, %v1768
        %v1772 = vadd.f32 %v1750, %v1768
        %v1773 = vadd.f32 %v1751, %v1768
        %v1774 = vadd.f32 %v1752, %v1768
        %v1775 = vadd.f32 %v1753, %v1768
        %v1776 = vadd.f32 %v1754, %v1768
        %v1777 = vadd.f32 %v1755, %v1768
        %v1778 = vadd.f32 %v1756, %v1768
        %v1779 = vadd.f32 %v1757, %v1768
        %v1780 = vadd.f32 %v1758, %v1768
        %v1781 = vadd.f32 %v1759, %v1768
        %v1782 = vadd.f32 %v1760, %v1768
        %v1783 = vadd.f32 %v1761, %v1768
        %v1784 = vadd.f32 %v1762, %v1768
        %v1785 = vadd.f32 %v1763, %v1768
        %v1786 = vpack.c.bf16 %v1771, %v1770
        %v1787 = vpack.c.bf16 %v1773, %v1772
        %v1788 = vpack.c.bf16 %v1775, %v1774
        %v1789 = vpack.c.bf16 %v1777, %v1776
        %v1790 = vpack.c.bf16 %v1779, %v1778
        %v1791 = vpack.c.bf16 %v1781, %v1780
        %v1792 = vpack.c.bf16 %v1783, %v1782
        %v1793 = vpack.c.bf16 %v1785, %v1784
        %v1794 = vld [vmem:[#allocation10] sm:$0xf]
        %v1795 = vld [vmem:[#allocation10 + $0x4] sm:$0xf]
        %v1796 = vld [vmem:[#allocation10 + $0x8] sm:$0xf]
        %v1797 = vld [vmem:[#allocation10 + $0xc] sm:$0xf]
        %v1798 = vld [vmem:[#allocation10 + $0x10] sm:$0xf]
        %v1799 = vld [vmem:[#allocation10 + $0x14] sm:$0xf]
        %v1800 = vld [vmem:[#allocation10 + $0x18] sm:$0xf]
        %v1801 = vld [vmem:[#allocation10 + $0x1c] sm:$0xf]
        %v1802 = vld [vmem:[#allocation10 + $0x20] sm:$0xf]
        %v1803 = vld [vmem:[#allocation10 + $0x24] sm:$0xf]
        %v1804 = vld [vmem:[#allocation10 + $0x28] sm:$0xf]
        %v1805 = vld [vmem:[#allocation10 + $0x2c] sm:$0xf]
        %v1806 = vld [vmem:[#allocation10 + $0x30] sm:$0xf]
        %v1807 = vld [vmem:[#allocation10 + $0x34] sm:$0xf]
        %v1808 = vld [vmem:[#allocation10 + $0x38] sm:$0xf]
        %v1809 = vld [vmem:[#allocation10 + $0x3c] sm:$0xf]
        %v1810 = vld [vmem:[%s7] sm:$0x1]
        %v1812 = vlaneseq
        %v1813 = vshrl.u32 %v1812, 7
        %v1814 = vsub.s32 0, %v1813
        %v1815 = vrot.slane %v1810, %v1814
        %v1833 = vunpack.c.l.b16 %v1794
        %v1834 = vunpack.c.l.b16 %v1795
        %v1835 = vunpack.c.l.b16 %v1796
        %v1836 = vunpack.c.l.b16 %v1797
        %v1837 = vunpack.c.l.b16 %v1798
        %v1838 = vunpack.c.l.b16 %v1799
        %v1839 = vunpack.c.l.b16 %v1800
        %v1840 = vunpack.c.l.b16 %v1801
        %v1841 = vunpack.c.l.b16 %v1802
        %v1842 = vunpack.c.l.b16 %v1803
        %v1843 = vunpack.c.l.b16 %v1804
        %v1844 = vunpack.c.l.b16 %v1805
        %v1845 = vunpack.c.l.b16 %v1806
        %v1846 = vunpack.c.l.b16 %v1807
        %v1847 = vunpack.c.l.b16 %v1808
        %v1848 = vunpack.c.l.b16 %v1809
        %v1849 = vpack.c.b16 %v1834, %v1833
        %v1850 = vpack.c.b16 %v1836, %v1835
        %v1851 = vpack.c.b16 %v1838, %v1837
        %v1852 = vpack.c.b16 %v1840, %v1839
        %v1853 = vpack.c.b16 %v1842, %v1841
        %v1854 = vpack.c.b16 %v1844, %v1843
        %v1855 = vpack.c.b16 %v1846, %v1845
        %v1856 = vpack.c.b16 %v1848, %v1847
        %1865 = vmatprep.subr.bf16.mxu0 0
        %1866 = vmatpush1.bf16.msra.mxu0 %v1849
        %1867 = vmatprep.subr.bf16.mxu0 0
        %1868 = vmatpush1.bf16.msra.mxu0 %v1850
        %1869 = vmatprep.subr.bf16.mxu0 0
        %1870 = vmatpush1.bf16.msra.mxu0 %v1851
        %1871 = vmatprep.subr.bf16.mxu0 0
        %1872 = vmatpush1.bf16.msra.mxu0 %v1852
        %1873 = vmatprep.subr.bf16.mxu0 0
        %1874 = vmatpush1.bf16.msra.mxu0 %v1853
        %1875 = vmatprep.subr.bf16.mxu0 0
        %1876 = vmatpush1.bf16.msra.mxu0 %v1854
        %1877 = vmatprep.subr.bf16.mxu0 0
        %1878 = vmatpush1.bf16.msra.mxu0 %v1855
        %1879 = vmatprep.subr.bf16.mxu0 0
        %1880 = vmatpush1.bf16.msra.mxu0 %v1856
        %1881 = vmatprep.subr.bf16.mxu0 0
        %1882 = vmatpush1.bf16.msra.mxu0 0
        %1883 = vmatprep.subr.bf16.mxu0 0
        %1884 = vmatpush1.bf16.msra.mxu0 0
        %1885 = vmatprep.subr.bf16.mxu0 0
        %1886 = vmatpush1.bf16.msra.mxu0 0
        %1887 = vmatprep.subr.bf16.mxu0 0
        %1888 = vmatpush1.bf16.msra.mxu0 0
        %1889 = vmatprep.subr.bf16.mxu0 0
        %1890 = vmatpush1.bf16.msra.mxu0 0
        %1891 = vmatprep.subr.bf16.mxu0 0
        %1892 = vmatpush1.bf16.msra.mxu0 0
        %1893 = vmatprep.subr.bf16.mxu0 0
        %1894 = vmatpush1.bf16.msra.mxu0 0
        %1895 = vmatprep.subr.bf16.mxu0 0
        %1896 = vmatpush1.bf16.msra.mxu0 0
        %1897 = vmatprep.mubr.bf16.mxu0 0
        %1898 = vmatmul.mubr.bf16.gmra.mrb[0].mxu0 %v1555
        %v1899 = vpop.f32.mrb[0].mxu0
        %v1900 = vadd.f32 %v1815, %v1899
        %v1901 = vpop.f32.mrb[0].mxu0
        %v1902 = vpop.f32.mrb[0].mxu0
        %v1903 = vadd.f32 %v1815, %v1902
        %v1904 = vpop.f32.mrb[0].mxu0
        %1905 = vmatprep.mubr.bf16.mxu0 0
        %1906 = vmatmul.mubr.bf16.gmra.mrb[0].mxu0 %v1556
        %v1907 = vpop.f32.mrb[0].mxu0
        %v1908 = vadd.f32 %v1815, %v1907
        %v1909 = vpop.f32.mrb[0].mxu0
        %v1910 = vpop.f32.mrb[0].mxu0
        %v1911 = vadd.f32 %v1815, %v1910
        %v1912 = vpop.f32.mrb[0].mxu0
        %1913 = vmatprep.mubr.bf16.mxu0 0
        %1914 = vmatmul.mubr.bf16.gmra.mrb[0].mxu0 %v1557
        %v1915 = vpop.f32.mrb[0].mxu0
        %v1916 = vadd.f32 %v1815, %v1915
        %v1917 = vpop.f32.mrb[0].mxu0
        %v1918 = vpop.f32.mrb[0].mxu0
        %v1919 = vadd.f32 %v1815, %v1918
        %v1920 = vpop.f32.mrb[0].mxu0
        %1921 = vmatprep.mubr.bf16.mxu0 0
        %1922 = vmatmul.mubr.bf16.gmra.mrb[0].mxu0 %v1558
        %v1923 = vpop.f32.mrb[0].mxu0
        %v1924 = vadd.f32 %v1815, %v1923
        %v1925 = vpop.f32.mrb[0].mxu0
        %v1926 = vpop.f32.mrb[0].mxu0
        %v1927 = vadd.f32 %v1815, %v1926
        %v1928 = vpop.f32.mrb[0].mxu0
        %1929 = vmatprep.mubr.bf16.mxu0 0
        %1930 = vmatmul.mubr.bf16.gmra.mrb[0].mxu0 %v1559
        %v1931 = vpop.f32.mrb[0].mxu0
        %v1932 = vadd.f32 %v1815, %v1931
        %v1933 = vpop.f32.mrb[0].mxu0
        %v1934 = vpop.f32.mrb[0].mxu0
        %v1935 = vadd.f32 %v1815, %v1934
        %v1936 = vpop.f32.mrb[0].mxu0
        %1937 = vmatprep.mubr.bf16.mxu0 0
        %1938 = vmatmul.mubr.bf16.gmra.mrb[0].mxu0 %v1560
        %v1939 = vpop.f32.mrb[0].mxu0
        %v1940 = vadd.f32 %v1815, %v1939
        %v1941 = vpop.f32.mrb[0].mxu0
        %v1942 = vpop.f32.mrb[0].mxu0
        %v1943 = vadd.f32 %v1815, %v1942
        %v1944 = vpop.f32.mrb[0].mxu0
        %1945 = vmatprep.mubr.bf16.mxu0 0
        %1946 = vmatmul.mubr.bf16.gmra.mrb[0].mxu0 %v1561
        %v1947 = vpop.f32.mrb[0].mxu0
        %v1948 = vadd.f32 %v1815, %v1947
        %v1949 = vpop.f32.mrb[0].mxu0
        %v1950 = vpop.f32.mrb[0].mxu0
        %v1951 = vadd.f32 %v1815, %v1950
        %v1952 = vpop.f32.mrb[0].mxu0
        %1953 = vmatprep.mubr.bf16.mxu0 0
        %1954 = vmatmul.mubr.bf16.gmra.mrb[0].mxu0 %v1562
        %v1955 = vpop.f32.mrb[0].mxu0
        %v1956 = vadd.f32 %v1815, %v1955
        %v1957 = vpop.f32.mrb[0].mxu0
        %v1958 = vpop.f32.mrb[0].mxu0
        %v1959 = vadd.f32 %v1815, %v1958
        %v1960 = vpop.f32.mrb[0].mxu0
        %1961 = vdwg.mxu0
        %v1962 = vld [vmem:[#allocation11] sm:$0xf]
        %v1963 = vld [vmem:[#allocation11 + $0x4] sm:$0xf]
        %v1964 = vld [vmem:[#allocation11 + $0x8] sm:$0xf]
        %v1965 = vld [vmem:[#allocation11 + $0xc] sm:$0xf]
        %v1966 = vld [vmem:[#allocation11 + $0x10] sm:$0xf]
        %v1967 = vld [vmem:[#allocation11 + $0x14] sm:$0xf]
        %v1968 = vld [vmem:[#allocation11 + $0x18] sm:$0xf]
        %v1969 = vld [vmem:[#allocation11 + $0x1c] sm:$0xf]
        %v1970 = vld [vmem:[#allocation11 + $0x20] sm:$0xf]
        %v1971 = vld [vmem:[#allocation11 + $0x24] sm:$0xf]
        %v1972 = vld [vmem:[#allocation11 + $0x28] sm:$0xf]
        %v1973 = vld [vmem:[#allocation11 + $0x2c] sm:$0xf]
        %v1974 = vld [vmem:[#allocation11 + $0x30] sm:$0xf]
        %v1975 = vld [vmem:[#allocation11 + $0x34] sm:$0xf]
        %v1976 = vld [vmem:[#allocation11 + $0x38] sm:$0xf]
        %v1977 = vld [vmem:[#allocation11 + $0x3c] sm:$0xf]
        %v1978 = vld [vmem:[%s9] sm:$0x1]
        %v1980 = vlaneseq
        %v1981 = vshrl.u32 %v1980, 7
        %v1982 = vsub.s32 0, %v1981
        %v1983 = vrot.slane %v1978, %v1982
        %v2001 = vunpack.c.l.b16 %v1962
        %v2002 = vunpack.c.l.b16 %v1963
        %v2003 = vunpack.c.l.b16 %v1964
        %v2004 = vunpack.c.l.b16 %v1965
        %v2005 = vunpack.c.l.b16 %v1966
        %v2006 = vunpack.c.l.b16 %v1967
        %v2007 = vunpack.c.l.b16 %v1968
        %v2008 = vunpack.c.l.b16 %v1969
        %v2009 = vunpack.c.l.b16 %v1970
        %v2010 = vunpack.c.l.b16 %v1971
        %v2011 = vunpack.c.l.b16 %v1972
        %v2012 = vunpack.c.l.b16 %v1973
        %v2013 = vunpack.c.l.b16 %v1974
        %v2014 = vunpack.c.l.b16 %v1975
        %v2015 = vunpack.c.l.b16 %v1976
        %v2016 = vunpack.c.l.b16 %v1977
        %v2017 = vpack.c.b16 %v2002, %v2001
        %v2018 = vpack.c.b16 %v2004, %v2003
        %v2019 = vpack.c.b16 %v2006, %v2005
        %v2020 = vpack.c.b16 %v2008, %v2007
        %v2021 = vpack.c.b16 %v2010, %v2009
        %v2022 = vpack.c.b16 %v2012, %v2011
        %v2023 = vpack.c.b16 %v2014, %v2013
        %v2024 = vpack.c.b16 %v2016, %v2015
        %2033 = vmatprep.subr.bf16.mxu0 0
        %2034 = vmatpush1.bf16.msra.mxu0 %v2017
        %2035 = vmatprep.subr.bf16.mxu0 0
        %2036 = vmatpush1.bf16.msra.mxu0 %v2018
        %2037 = vmatprep.subr.bf16.mxu0 0
        %2038 = vmatpush1.bf16.msra.mxu0 %v2019
        %2039 = vmatprep.subr.bf16.mxu0 0
        %2040 = vmatpush1.bf16.msra.mxu0 %v2020
        %2041 = vmatprep.subr.bf16.mxu0 0
        %2042 = vmatpush1.bf16.msra.mxu0 %v2021
        %2043 = vmatprep.subr.bf16.mxu0 0
        %2044 = vmatpush1.bf16.msra.mxu0 %v2022
        %2045 = vmatprep.subr.bf16.mxu0 0
        %2046 = vmatpush1.bf16.msra.mxu0 %v2023
        %2047 = vmatprep.subr.bf16.mxu0 0
        %2048 = vmatpush1.bf16.msra.mxu0 %v2024
        %2049 = vmatprep.subr.bf16.mxu0 0
        %2050 = vmatpush1.bf16.msra.mxu0 0
        %2051 = vmatprep.subr.bf16.mxu0 0
        %2052 = vmatpush1.bf16.msra.mxu0 0
        %2053 = vmatprep.subr.bf16.mxu0 0
        %2054 = vmatpush1.bf16.msra.mxu0 0
        %2055 = vmatprep.subr.bf16.mxu0 0
        %2056 = vmatpush1.bf16.msra.mxu0 0
        %2057 = vmatprep.subr.bf16.mxu0 0
        %2058 = vmatpush1.bf16.msra.mxu0 0
        %2059 = vmatprep.subr.bf16.mxu0 0
        %2060 = vmatpush1.bf16.msra.mxu0 0
        %2061 = vmatprep.subr.bf16.mxu0 0
        %2062 = vmatpush1.bf16.msra.mxu0 0
        %2063 = vmatprep.subr.bf16.mxu0 0
        %2064 = vmatpush1.bf16.msra.mxu0 0
        %2065 = vmatprep.mubr.bf16.mxu0 0
        %2066 = vmatmul.mubr.bf16.gmra.mrb[0].mxu0 %v1786
        %v2067 = vpop.f32.mrb[0].mxu0
        %v2068 = vadd.f32 %v1983, %v2067
        %v2069 = vpop.f32.mrb[0].mxu0
        %v2070 = vpop.f32.mrb[0].mxu0
        %v2071 = vadd.f32 %v1983, %v2070
        %v2072 = vpop.f32.mrb[0].mxu0
        %2073 = vmatprep.mubr.bf16.mxu0 0
        %2074 = vmatmul.mubr.bf16.gmra.mrb[0].mxu0 %v1787
        %v2075 = vpop.f32.mrb[0].mxu0
        %v2076 = vadd.f32 %v1983, %v2075
        %v2077 = vpop.f32.mrb[0].mxu0
        %v2078 = vpop.f32.mrb[0].mxu0
        %v2079 = vadd.f32 %v1983, %v2078
        %v2080 = vpop.f32.mrb[0].mxu0
        %2081 = vmatprep.mubr.bf16.mxu0 0
        %2082 = vmatmul.mubr.bf16.gmra.mrb[0].mxu0 %v1788
        %v2083 = vpop.f32.mrb[0].mxu0
        %v2084 = vadd.f32 %v1983, %v2083
        %v2085 = vpop.f32.mrb[0].mxu0
        %v2086 = vpop.f32.mrb[0].mxu0
        %v2087 = vadd.f32 %v1983, %v2086
        %v2088 = vpop.f32.mrb[0].mxu0
        %2089 = vmatprep.mubr.bf16.mxu0 0
        %2090 = vmatmul.mubr.bf16.gmra.mrb[0].mxu0 %v1789
        %v2091 = vpop.f32.mrb[0].mxu0
        %v2092 = vadd.f32 %v1983, %v2091
        %v2093 = vpop.f32.mrb[0].mxu0
        %v2094 = vpop.f32.mrb[0].mxu0
        %v2095 = vadd.f32 %v1983, %v2094
        %v2096 = vpop.f32.mrb[0].mxu0
        %2097 = vmatprep.mubr.bf16.mxu0 0
        %2098 = vmatmul.mubr.bf16.gmra.mrb[0].mxu0 %v1790
        %v2099 = vpop.f32.mrb[0].mxu0
        %v2100 = vadd.f32 %v1983, %v2099
        %v2101 = vpop.f32.mrb[0].mxu0
        %v2102 = vpop.f32.mrb[0].mxu0
        %v2103 = vadd.f32 %v1983, %v2102
        %v2104 = vpop.f32.mrb[0].mxu0
        %2105 = vmatprep.mubr.bf16.mxu0 0
        %2106 = vmatmul.mubr.bf16.gmra.mrb[0].mxu0 %v1791
        %v2107 = vpop.f32.mrb[0].mxu0
        %v2108 = vadd.f32 %v1983, %v2107
        %v2109 = vpop.f32.mrb[0].mxu0
        %v2110 = vpop.f32.mrb[0].mxu0
        %v2111 = vadd.f32 %v1983, %v2110
        %v2112 = vpop.f32.mrb[0].mxu0
        %2113 = vmatprep.mubr.bf16.mxu0 0
        %2114 = vmatmul.mubr.bf16.gmra.mrb[0].mxu0 %v1792
        %v2115 = vpop.f32.mrb[0].mxu0
        %v2116 = vadd.f32 %v1983, %v2115
        %v2117 = vpop.f32.mrb[0].mxu0
        %v2118 = vpop.f32.mrb[0].mxu0
        %v2119 = vadd.f32 %v1983, %v2118
        %v2120 = vpop.f32.mrb[0].mxu0
        %2121 = vmatprep.mubr.bf16.mxu0 0
        %2122 = vmatmul.mubr.bf16.gmra.mrb[0].mxu0 %v1793
        %v2123 = vpop.f32.mrb[0].mxu0
        %v2124 = vadd.f32 %v1983, %v2123
        %v2125 = vpop.f32.mrb[0].mxu0
        %v2126 = vpop.f32.mrb[0].mxu0
        %v2127 = vadd.f32 %v1983, %v2126
        %v2128 = vpop.f32.mrb[0].mxu0
        %2129 = vdwg.mxu0
        %v2130 = vpack.c.bf16 %v2071, %v2068
        %v2131 = vpack.c.bf16 %v2079, %v2076
        %v2132 = vpack.c.bf16 %v2087, %v2084
        %v2133 = vpack.c.bf16 %v2095, %v2092
        %v2134 = vpack.c.bf16 %v2103, %v2100
        %v2135 = vpack.c.bf16 %v2111, %v2108
        %v2136 = vpack.c.bf16 %v2119, %v2116
        %v2137 = vpack.c.bf16 %v2127, %v2124
        %v2138 = vld [vmem:[#allocation2] sm:$0xff]
        %v2139 = vld [vmem:[#allocation2 + $0x8] sm:$0xff]
        %v2140 = vld [vmem:[#allocation2 + $0x10] sm:$0xff]
        %v2141 = vld [vmem:[#allocation2 + $0x18] sm:$0xff]
        %v2142 = vld [vmem:[#allocation2 + $0x20] sm:$0xff]
        %v2143 = vld [vmem:[#allocation2 + $0x28] sm:$0xff]
        %v2144 = vld [vmem:[#allocation2 + $0x30] sm:$0xff]
        %v2145 = vld [vmem:[#allocation2 + $0x38] sm:$0xff]
        %v2146 = vld [vmem:[#allocation2 + $0x40] sm:$0xff]
        %v2147 = vld [vmem:[#allocation2 + $0x48] sm:$0xff]
        %v2148 = vld [vmem:[#allocation2 + $0x50] sm:$0xff]
        %v2149 = vld [vmem:[#allocation2 + $0x58] sm:$0xff]
        %v2150 = vld [vmem:[#allocation2 + $0x60] sm:$0xff]
        %v2151 = vld [vmem:[#allocation2 + $0x68] sm:$0xff]
        %v2152 = vld [vmem:[#allocation2 + $0x70] sm:$0xff]
        %v2153 = vld [vmem:[#allocation2 + $0x78] sm:$0xff]
        %v2154 = vld [vmem:[#allocation3] sm:$0xff]
        %v2155 = vld [vmem:[#allocation3 + $0x8] sm:$0xff]
        %v2156 = vld [vmem:[#allocation3 + $0x10] sm:$0xff]
        %v2157 = vld [vmem:[#allocation3 + $0x18] sm:$0xff]
        %v2158 = vld [vmem:[#allocation3 + $0x20] sm:$0xff]
        %v2159 = vld [vmem:[#allocation3 + $0x28] sm:$0xff]
        %v2160 = vld [vmem:[#allocation3 + $0x30] sm:$0xff]
        %v2161 = vld [vmem:[#allocation3 + $0x38] sm:$0xff]
        %v2162 = vld [vmem:[#allocation3 + $0x40] sm:$0xff]
        %v2163 = vld [vmem:[#allocation3 + $0x48] sm:$0xff]
        %v2164 = vld [vmem:[#allocation3 + $0x50] sm:$0xff]
        %v2165 = vld [vmem:[#allocation3 + $0x58] sm:$0xff]
        %v2166 = vld [vmem:[#allocation3 + $0x60] sm:$0xff]
        %v2167 = vld [vmem:[#allocation3 + $0x68] sm:$0xff]
        %v2168 = vld [vmem:[#allocation3 + $0x70] sm:$0xff]
        %v2169 = vld [vmem:[#allocation3 + $0x78] sm:$0xff]
        %vm2170 = vcmask 261120
        %v2172 = vsel %vm2170, %v2130, 0
        %v2175 = vsel %vm2170, %v2131, 0
        %v2178 = vsel %vm2170, %v2132, 0
        %v2181 = vsel %vm2170, %v2133, 0
        %v2184 = vsel %vm2170, %v2134, 0
        %v2187 = vsel %vm2170, %v2135, 0
        %v2190 = vsel %vm2170, %v2136, 0
        %v2193 = vsel %vm2170, %v2137, 0
        %v2196 = vsel %vm2170, %v2138, 0
        %v2199 = vsel %vm2170, %v2139, 0
        %v2202 = vsel %vm2170, %v2140, 0
        %v2205 = vsel %vm2170, %v2141, 0
        %v2208 = vsel %vm2170, %v2142, 0
        %v2211 = vsel %vm2170, %v2143, 0
        %v2214 = vsel %vm2170, %v2144, 0
        %v2217 = vsel %vm2170, %v2145, 0
        %v2220 = vsel %vm2170, %v2146, 0
        %v2223 = vsel %vm2170, %v2147, 0
        %v2226 = vsel %vm2170, %v2148, 0
        %v2229 = vsel %vm2170, %v2149, 0
        %v2232 = vsel %vm2170, %v2150, 0
        %v2235 = vsel %vm2170, %v2151, 0
        %v2238 = vsel %vm2170, %v2152, 0
        %v2241 = vsel %vm2170, %v2153, 0
        %2243 = vmatprep.subr.bf16.mxu0 0
        %2244 = vmatpush1.bf16.xpose.msra.mxu0 %v2196
        %2245 = vmatprep.subr.bf16.mxu0 0
        %2246 = vmatpush1.bf16.xpose.msra.mxu0 %v2199
        %2247 = vmatprep.subr.bf16.mxu0 0
        %2248 = vmatpush1.bf16.xpose.msra.mxu0 %v2202
        %2249 = vmatprep.subr.bf16.mxu0 0
        %2250 = vmatpush1.bf16.xpose.msra.mxu0 %v2205
        %2251 = vmatprep.subr.bf16.mxu0 0
        %2252 = vmatpush1.bf16.xpose.msra.mxu0 %v2208
        %2253 = vmatprep.subr.bf16.mxu0 0
        %2254 = vmatpush1.bf16.xpose.msra.mxu0 %v2211
        %2255 = vmatprep.subr.bf16.mxu0 0
        %2256 = vmatpush1.bf16.xpose.msra.mxu0 %v2214
        %2257 = vmatprep.subr.bf16.mxu0 0
        %2258 = vmatpush1.bf16.xpose.msra.mxu0 %v2217
        %2259 = vmatprep.subr.bf16.mxu0 0
        %2260 = vmatpush1.bf16.xpose.msra.mxu0 %v2220
        %2261 = vmatprep.subr.bf16.mxu0 0
        %2262 = vmatpush1.bf16.xpose.msra.mxu0 %v2223
        %2263 = vmatprep.subr.bf16.mxu0 0
        %2264 = vmatpush1.bf16.xpose.msra.mxu0 %v2226
        %2265 = vmatprep.subr.bf16.mxu0 0
        %2266 = vmatpush1.bf16.xpose.msra.mxu0 %v2229
        %2267 = vmatprep.subr.bf16.mxu0 0
        %2268 = vmatpush1.bf16.xpose.msra.mxu0 %v2232
        %2269 = vmatprep.subr.bf16.mxu0 0
        %2270 = vmatpush1.bf16.xpose.msra.mxu0 %v2235
        %2271 = vmatprep.subr.bf16.mxu0 0
        %2272 = vmatpush1.bf16.xpose.msra.mxu0 %v2238
        %2273 = vmatprep.subr.bf16.mxu0 0
        %2274 = vmatpush1.bf16.xpose.msra.mxu0 %v2241
        %2275 = vmatprep.mubr.bf16.mxu0 0
        %2276 = vmatmul.mubr.bf16.gmra.mrb[0].mxu0 %v2172
        %v2277 = vpop.f32.mrb[0].mxu0
        %v2278 = vadd.f32 0.0, %v2277
        %v2279 = vpop.f32.mrb[0].mxu0
        %v2280 = vadd.f32 0.0, %v2279
        %v2281 = vpop.f32.mrb[0].mxu0
        %v2282 = vadd.f32 0.0, %v2281
        %v2283 = vpop.f32.mrb[0].mxu0
        %v2284 = vadd.f32 0.0, %v2283
        %2285 = vmatprep.mubr.bf16.mxu0 0
        %2286 = vmatmul.mubr.bf16.gmra.mrb[0].mxu0 %v2175
        %v2287 = vpop.f32.mrb[0].mxu0
        %v2288 = vadd.f32 0.0, %v2287
        %v2289 = vpop.f32.mrb[0].mxu0
        %v2290 = vadd.f32 0.0, %v2289
        %v2291 = vpop.f32.mrb[0].mxu0
        %v2292 = vadd.f32 0.0, %v2291
        %v2293 = vpop.f32.mrb[0].mxu0
        %v2294 = vadd.f32 0.0, %v2293
        %2295 = vmatprep.mubr.bf16.mxu0 0
        %2296 = vmatmul.mubr.bf16.gmra.mrb[0].mxu0 %v2178
        %v2297 = vpop.f32.mrb[0].mxu0
        %v2298 = vadd.f32 0.0, %v2297
        %v2299 = vpop.f32.mrb[0].mxu0
        %v2300 = vadd.f32 0.0, %v2299
        %v2301 = vpop.f32.mrb[0].mxu0
        %v2302 = vadd.f32 0.0, %v2301
        %v2303 = vpop.f32.mrb[0].mxu0
        %v2304 = vadd.f32 0.0, %v2303
        %2305 = vmatprep.mubr.bf16.mxu0 0
        %2306 = vmatmul.mubr.bf16.gmra.mrb[0].mxu0 %v2181
        %v2307 = vpop.f32.mrb[0].mxu0
        %v2308 = vadd.f32 0.0, %v2307
        %v2309 = vpop.f32.mrb[0].mxu0
        %v2310 = vadd.f32 0.0, %v2309
        %v2311 = vpop.f32.mrb[0].mxu0
        %v2312 = vadd.f32 0.0, %v2311
        %v2313 = vpop.f32.mrb[0].mxu0
        %v2314 = vadd.f32 0.0, %v2313
        %2315 = vmatprep.mubr.bf16.mxu0 0
        %2316 = vmatmul.mubr.bf16.gmra.mrb[0].mxu0 %v2184
        %v2317 = vpop.f32.mrb[0].mxu0
        %v2318 = vadd.f32 0.0, %v2317
        %v2319 = vpop.f32.mrb[0].mxu0
        %v2320 = vadd.f32 0.0, %v2319
        %v2321 = vpop.f32.mrb[0].mxu0
        %v2322 = vadd.f32 0.0, %v2321
        %v2323 = vpop.f32.mrb[0].mxu0
        %v2324 = vadd.f32 0.0, %v2323
        %2325 = vmatprep.mubr.bf16.mxu0 0
        %2326 = vmatmul.mubr.bf16.gmra.mrb[0].mxu0 %v2187
        %v2327 = vpop.f32.mrb[0].mxu0
        %v2328 = vadd.f32 0.0, %v2327
        %v2329 = vpop.f32.mrb[0].mxu0
        %v2330 = vadd.f32 0.0, %v2329
        %v2331 = vpop.f32.mrb[0].mxu0
        %v2332 = vadd.f32 0.0, %v2331
        %v2333 = vpop.f32.mrb[0].mxu0
        %v2334 = vadd.f32 0.0, %v2333
        %2335 = vmatprep.mubr.bf16.mxu0 0
        %2336 = vmatmul.mubr.bf16.gmra.mrb[0].mxu0 %v2190
        %v2337 = vpop.f32.mrb[0].mxu0
        %v2338 = vadd.f32 0.0, %v2337
        %v2339 = vpop.f32.mrb[0].mxu0
        %v2340 = vadd.f32 0.0, %v2339
        %v2341 = vpop.f32.mrb[0].mxu0
        %v2342 = vadd.f32 0.0, %v2341
        %v2343 = vpop.f32.mrb[0].mxu0
        %v2344 = vadd.f32 0.0, %v2343
        %2345 = vmatprep.mubr.bf16.mxu0 0
        %2346 = vmatmul.mubr.bf16.gmra.mrb[0].mxu0 %v2193
        %v2347 = vpop.f32.mrb[0].mxu0
        %v2348 = vadd.f32 0.0, %v2347
        %v2349 = vpop.f32.mrb[0].mxu0
        %v2350 = vadd.f32 0.0, %v2349
        %v2351 = vpop.f32.mrb[0].mxu0
        %v2352 = vadd.f32 0.0, %v2351
        %v2353 = vpop.f32.mrb[0].mxu0
        %v2354 = vadd.f32 0.0, %v2353
        %2355 = vdwg.mxu0
        %v2356 = vmax.f32 %v2278, %v2280
        %2357 = vmax.xlane.f32.xlu0 %v2356
        %v2358 = vpop.xlane.xlu0 %2357
        %v2359 = vmax.f32 %v2282, %v2284
        %2360 = vmax.xlane.f32.xlu0 %v2359
        %v2361 = vpop.xlane.xlu0 %2360
        %v2362 = vmax.f32 %v2288, %v2290
        %2363 = vmax.xlane.f32.xlu0 %v2362
        %v2364 = vpop.xlane.xlu0 %2363
        %v2365 = vmax.f32 %v2292, %v2294
        %2366 = vmax.xlane.f32.xlu0 %v2365
        %v2367 = vpop.xlane.xlu0 %2366
        %v2368 = vmax.f32 %v2298, %v2300
        %2369 = vmax.xlane.f32.xlu0 %v2368
        %v2370 = vpop.xlane.xlu0 %2369
        %v2371 = vmax.f32 %v2302, %v2304
        %2372 = vmax.xlane.f32.xlu0 %v2371
        %v2373 = vpop.xlane.xlu0 %2372
        %v2374 = vmax.f32 %v2308, %v2310
        %2375 = vmax.xlane.f32.xlu0 %v2374
        %v2376 = vpop.xlane.xlu0 %2375
        %v2377 = vmax.f32 %v2312, %v2314
        %2378 = vmax.xlane.f32.xlu0 %v2377
        %v2379 = vpop.xlane.xlu0 %2378
        %v2380 = vmax.f32 %v2318, %v2320
        %2381 = vmax.xlane.f32.xlu0 %v2380
        %v2382 = vpop.xlane.xlu0 %2381
        %v2383 = vmax.f32 %v2322, %v2324
        %2384 = vmax.xlane.f32.xlu0 %v2383
        %v2385 = vpop.xlane.xlu0 %2384
        %v2386 = vmax.f32 %v2328, %v2330
        %2387 = vmax.xlane.f32.xlu0 %v2386
        %v2388 = vpop.xlane.xlu0 %2387
        %v2389 = vmax.f32 %v2332, %v2334
        %2390 = vmax.xlane.f32.xlu0 %v2389
        %v2391 = vpop.xlane.xlu0 %2390
        %v2392 = vmax.f32 %v2338, %v2340
        %2393 = vmax.xlane.f32.xlu0 %v2392
        %v2394 = vpop.xlane.xlu0 %2393
        %v2395 = vmax.f32 %v2342, %v2344
        %2396 = vmax.xlane.f32.xlu0 %v2395
        %v2397 = vpop.xlane.xlu0 %2396
        %v2398 = vmax.f32 %v2348, %v2350
        %2399 = vmax.xlane.f32.xlu0 %v2398
        %v2400 = vpop.xlane.xlu0 %2399
        %v2401 = vmax.f32 %v2352, %v2354
        %2402 = vmax.xlane.f32.xlu0 %v2401
        %v2403 = vpop.xlane.xlu0 %2402
        %v2404 = vsub.f32 %v2278, %v2358
        %v2405 = vsub.f32 %v2280, %v2358
        %v2406 = vsub.f32 %v2282, %v2361
        %v2407 = vsub.f32 %v2284, %v2361
        %v2408 = vsub.f32 %v2288, %v2364
        %v2409 = vsub.f32 %v2290, %v2364
        %v2410 = vsub.f32 %v2292, %v2367
        %v2411 = vsub.f32 %v2294, %v2367
        %v2412 = vsub.f32 %v2298, %v2370
        %v2413 = vsub.f32 %v2300, %v2370
        %v2414 = vsub.f32 %v2302, %v2373
        %v2415 = vsub.f32 %v2304, %v2373
        %v2416 = vsub.f32 %v2308, %v2376
        %v2417 = vsub.f32 %v2310, %v2376
        %v2418 = vsub.f32 %v2312, %v2379
        %v2419 = vsub.f32 %v2314, %v2379
        %v2420 = vsub.f32 %v2318, %v2382
        %v2421 = vsub.f32 %v2320, %v2382
        %v2422 = vsub.f32 %v2322, %v2385
        %v2423 = vsub.f32 %v2324, %v2385
        %v2424 = vsub.f32 %v2328, %v2388
        %v2425 = vsub.f32 %v2330, %v2388
        %v2426 = vsub.f32 %v2332, %v2391
        %v2427 = vsub.f32 %v2334, %v2391
        %v2428 = vsub.f32 %v2338, %v2394
        %v2429 = vsub.f32 %v2340, %v2394
        %v2430 = vsub.f32 %v2342, %v2397
        %v2431 = vsub.f32 %v2344, %v2397
        %v2432 = vsub.f32 %v2348, %v2400
        %v2433 = vsub.f32 %v2350, %v2400
        %v2434 = vsub.f32 %v2352, %v2403
        %v2435 = vsub.f32 %v2354, %v2403
        %v2436 = vmul.f32 %v2404, 1.442695
        %v2437 = vpow.pop %v2436
        %v2438 = vmul.f32 %v2405, 1.442695
        %v2439 = vpow.pop %v2438
        %v2440 = vmul.f32 %v2406, 1.442695
        %v2441 = vpow.pop %v2440
        %v2442 = vmul.f32 %v2407, 1.442695
        %v2443 = vpow.pop %v2442
        %v2444 = vmul.f32 %v2408, 1.442695
        %v2445 = vpow.pop %v2444
        %v2446 = vmul.f32 %v2409, 1.442695
        %v2447 = vpow.pop %v2446
        %v2448 = vmul.f32 %v2410, 1.442695
        %v2449 = vpow.pop %v2448
        %v2450 = vmul.f32 %v2411, 1.442695
        %v2451 = vpow.pop %v2450
        %v2452 = vmul.f32 %v2412, 1.442695
        %v2453 = vpow.pop %v2452
        %v2454 = vmul.f32 %v2413, 1.442695
        %v2455 = vpow.pop %v2454
        %v2456 = vmul.f32 %v2414, 1.442695
        %v2457 = vpow.pop %v2456
        %v2458 = vmul.f32 %v2415, 1.442695
        %v2459 = vpow.pop %v2458
        %v2460 = vmul.f32 %v2416, 1.442695
        %v2461 = vpow.pop %v2460
        %v2462 = vmul.f32 %v2417, 1.442695
        %v2463 = vpow.pop %v2462
        %v2464 = vmul.f32 %v2418, 1.442695
        %v2465 = vpow.pop %v2464
        %v2466 = vmul.f32 %v2419, 1.442695
        %v2467 = vpow.pop %v2466
        %v2468 = vmul.f32 %v2420, 1.442695
        %v2469 = vpow.pop %v2468
        %v2470 = vmul.f32 %v2421, 1.442695
        %v2471 = vpow.pop %v2470
        %v2472 = vmul.f32 %v2422, 1.442695
        %v2473 = vpow.pop %v2472
        %v2474 = vmul.f32 %v2423, 1.442695
        %v2475 = vpow.pop %v2474
        %v2476 = vmul.f32 %v2424, 1.442695
        %v2477 = vpow.pop %v2476
        %v2478 = vmul.f32 %v2425, 1.442695
        %v2479 = vpow.pop %v2478
        %v2480 = vmul.f32 %v2426, 1.442695
        %v2481 = vpow.pop %v2480
        %v2482 = vmul.f32 %v2427, 1.442695
        %v2483 = vpow.pop %v2482
        %v2484 = vmul.f32 %v2428, 1.442695
        %v2485 = vpow.pop %v2484
        %v2486 = vmul.f32 %v2429, 1.442695
        %v2487 = vpow.pop %v2486
        %v2488 = vmul.f32 %v2430, 1.442695
        %v2489 = vpow.pop %v2488
        %v2490 = vmul.f32 %v2431, 1.442695
        %v2491 = vpow.pop %v2490
        %v2492 = vmul.f32 %v2432, 1.442695
        %v2493 = vpow.pop %v2492
        %v2494 = vmul.f32 %v2433, 1.442695
        %v2495 = vpow.pop %v2494
        %v2496 = vmul.f32 %v2434, 1.442695
        %v2497 = vpow.pop %v2496
        %v2498 = vmul.f32 %v2435, 1.442695
        %v2499 = vpow.pop %v2498
        %v2500 = vadd.f32 %v2437, %v2439
        %2501 = vadd.xlane.f32.xlu0 %v2500
        %v2502 = vpop.xlane.xlu0 %2501
        %v2503 = vadd.f32 %v2441, %v2443
        %2504 = vadd.xlane.f32.xlu0 %v2503
        %v2505 = vpop.xlane.xlu0 %2504
        %v2506 = vadd.f32 %v2445, %v2447
        %2507 = vadd.xlane.f32.xlu0 %v2506
        %v2508 = vpop.xlane.xlu0 %2507
        %v2509 = vadd.f32 %v2449, %v2451
        %2510 = vadd.xlane.f32.xlu0 %v2509
        %v2511 = vpop.xlane.xlu0 %2510
        %v2512 = vadd.f32 %v2453, %v2455
        %2513 = vadd.xlane.f32.xlu0 %v2512
        %v2514 = vpop.xlane.xlu0 %2513
        %v2515 = vadd.f32 %v2457, %v2459
        %2516 = vadd.xlane.f32.xlu0 %v2515
        %v2517 = vpop.xlane.xlu0 %2516
        %v2518 = vadd.f32 %v2461, %v2463
        %2519 = vadd.xlane.f32.xlu0 %v2518
        %v2520 = vpop.xlane.xlu0 %2519
        %v2521 = vadd.f32 %v2465, %v2467
        %2522 = vadd.xlane.f32.xlu0 %v2521
        %v2523 = vpop.xlane.xlu0 %2522
        %v2524 = vadd.f32 %v2469, %v2471
        %2525 = vadd.xlane.f32.xlu0 %v2524
        %v2526 = vpop.xlane.xlu0 %2525
        %v2527 = vadd.f32 %v2473, %v2475
        %2528 = vadd.xlane.f32.xlu0 %v2527
        %v2529 = vpop.xlane.xlu0 %2528
        %v2530 = vadd.f32 %v2477, %v2479
        %2531 = vadd.xlane.f32.xlu0 %v2530
        %v2532 = vpop.xlane.xlu0 %2531
        %v2533 = vadd.f32 %v2481, %v2483
        %2534 = vadd.xlane.f32.xlu0 %v2533
        %v2535 = vpop.xlane.xlu0 %2534
        %v2536 = vadd.f32 %v2485, %v2487
        %2537 = vadd.xlane.f32.xlu0 %v2536
        %v2538 = vpop.xlane.xlu0 %2537
        %v2539 = vadd.f32 %v2489, %v2491
        %2540 = vadd.xlane.f32.xlu0 %v2539
        %v2541 = vpop.xlane.xlu0 %2540
        %v2542 = vadd.f32 %v2493, %v2495
        %2543 = vadd.xlane.f32.xlu0 %v2542
        %v2544 = vpop.xlane.xlu0 %2543
        %v2545 = vadd.f32 %v2497, %v2499
        %2546 = vadd.xlane.f32.xlu0 %v2545
        %v2547 = vpop.xlane.xlu0 %2546
        %v2548 = vrcp.pop %v2502
        %v2549 = vrcp.pop %v2505
        %v2550 = vrcp.pop %v2508
        %v2551 = vrcp.pop %v2511
        %v2552 = vrcp.pop %v2514
        %v2553 = vrcp.pop %v2517
        %v2554 = vrcp.pop %v2520
        %v2555 = vrcp.pop %v2523
        %v2556 = vrcp.pop %v2526
        %v2557 = vrcp.pop %v2529
        %v2558 = vrcp.pop %v2532
        %v2559 = vrcp.pop %v2535
        %v2560 = vrcp.pop %v2538
        %v2561 = vrcp.pop %v2541
        %v2562 = vrcp.pop %v2544
        %v2563 = vrcp.pop %v2547
        %v2564 = vmul.f32 %v2437, %v2548
        %v2565 = vmul.f32 %v2439, %v2548
        %v2566 = vmul.f32 %v2441, %v2549
        %v2567 = vmul.f32 %v2443, %v2549
        %v2568 = vmul.f32 %v2445, %v2550
        %v2569 = vmul.f32 %v2447, %v2550
        %v2570 = vmul.f32 %v2449, %v2551
        %v2571 = vmul.f32 %v2451, %v2551
        %v2572 = vmul.f32 %v2453, %v2552
        %v2573 = vmul.f32 %v2455, %v2552
        %v2574 = vmul.f32 %v2457, %v2553
        %v2575 = vmul.f32 %v2459, %v2553
        %v2576 = vmul.f32 %v2461, %v2554
        %v2577 = vmul.f32 %v2463, %v2554
        %v2578 = vmul.f32 %v2465, %v2555
        %v2579 = vmul.f32 %v2467, %v2555
        %v2580 = vmul.f32 %v2469, %v2556
        %v2581 = vmul.f32 %v2471, %v2556
        %v2582 = vmul.f32 %v2473, %v2557
        %v2583 = vmul.f32 %v2475, %v2557
        %v2584 = vmul.f32 %v2477, %v2558
        %v2585 = vmul.f32 %v2479, %v2558
        %v2586 = vmul.f32 %v2481, %v2559
        %v2587 = vmul.f32 %v2483, %v2559
        %v2588 = vmul.f32 %v2485, %v2560
        %v2589 = vmul.f32 %v2487, %v2560
        %v2590 = vmul.f32 %v2489, %v2561
        %v2591 = vmul.f32 %v2491, %v2561
        %v2592 = vmul.f32 %v2493, %v2562
        %v2593 = vmul.f32 %v2495, %v2562
        %v2594 = vmul.f32 %v2497, %v2563
        %v2595 = vmul.f32 %v2499, %v2563
        %v2596 = vpack.c.bf16 %v2566, %v2564
        %v2597 = vpack.c.bf16 %v2567, %v2565
        %v2598 = vpack.c.bf16 %v2570, %v2568
        %v2599 = vpack.c.bf16 %v2571, %v2569
        %v2600 = vpack.c.bf16 %v2574, %v2572
        %v2601 = vpack.c.bf16 %v2575, %v2573
        %v2602 = vpack.c.bf16 %v2578, %v2576
        %v2603 = vpack.c.bf16 %v2579, %v2577
        %v2604 = vpack.c.bf16 %v2582, %v2580
        %v2605 = vpack.c.bf16 %v2583, %v2581
        %v2606 = vpack.c.bf16 %v2586, %v2584
        %v2607 = vpack.c.bf16 %v2587, %v2585
        %v2608 = vpack.c.bf16 %v2590, %v2588
        %v2609 = vpack.c.bf16 %v2591, %v2589
        %v2610 = vpack.c.bf16 %v2594, %v2592
        %v2611 = vpack.c.bf16 %v2595, %v2593
        %2612 = vmatprep.subr.bf16.mxu0 0
        %2613 = vmatpush1.bf16.msra.mxu0 %v2154
        %2614 = vmatprep.subr.bf16.mxu0 0
        %2615 = vmatpush1.bf16.msra.mxu0 %v2155
        %2616 = vmatprep.subr.bf16.mxu0 0
        %2617 = vmatpush1.bf16.msra.mxu0 %v2156
        %2618 = vmatprep.subr.bf16.mxu0 0
        %2619 = vmatpush1.bf16.msra.mxu0 %v2157
        %2620 = vmatprep.subr.bf16.mxu0 0
        %2621 = vmatpush1.bf16.msra.mxu0 %v2158
        %2622 = vmatprep.subr.bf16.mxu0 0
        %2623 = vmatpush1.bf16.msra.mxu0 %v2159
        %2624 = vmatprep.subr.bf16.mxu0 0
        %2625 = vmatpush1.bf16.msra.mxu0 %v2160
        %2626 = vmatprep.subr.bf16.mxu0 0
        %2627 = vmatpush1.bf16.msra.mxu0 %v2161
        %2628 = vmatprep.subr.bf16.mxu0 0
        %2629 = vmatpush1.bf16.msra.mxu0 %v2162
        %2630 = vmatprep.subr.bf16.mxu0 0
        %2631 = vmatpush1.bf16.msra.mxu0 %v2163
        %2632 = vmatprep.subr.bf16.mxu0 0
        %2633 = vmatpush1.bf16.msra.mxu0 %v2164
        %2634 = vmatprep.subr.bf16.mxu0 0
        %2635 = vmatpush1.bf16.msra.mxu0 %v2165
        %2636 = vmatprep.subr.bf16.mxu0 0
        %2637 = vmatpush1.bf16.msra.mxu0 %v2166
        %2638 = vmatprep.subr.bf16.mxu0 0
        %2639 = vmatpush1.bf16.msra.mxu0 %v2167
        %2640 = vmatprep.subr.bf16.mxu0 0
        %2641 = vmatpush1.bf16.msra.mxu0 %v2168
        %2642 = vmatprep.subr.bf16.mxu0 0
        %2643 = vmatpush1.bf16.msra.mxu0 %v2169
        %2644 = vmatprep.mubr.bf16.mxu0 %v2597
        %2645 = vmatmul.mubr.bf16.gmra.mrb[0].mxu0 %v2596
        %v2646 = vpop.f32.mrb[0].mxu0
        %v2647 = vadd.f32 0.0, %v2646
        %v2648 = vpop.f32.mrb[0].mxu0
        %v2649 = vpop.f32.mrb[0].mxu0
        %v2650 = vadd.f32 0.0, %v2649
        %v2651 = vpop.f32.mrb[0].mxu0
        %2652 = vmatprep.mubr.bf16.mxu0 %v2599
        %2653 = vmatmul.mubr.bf16.gmra.mrb[0].mxu0 %v2598
        %v2654 = vpop.f32.mrb[0].mxu0
        %v2655 = vadd.f32 0.0, %v2654
        %v2656 = vpop.f32.mrb[0].mxu0
        %v2657 = vpop.f32.mrb[0].mxu0
        %v2658 = vadd.f32 0.0, %v2657
        %v2659 = vpop.f32.mrb[0].mxu0
        %2660 = vmatprep.mubr.bf16.mxu0 %v2601
        %2661 = vmatmul.mubr.bf16.gmra.mrb[0].mxu0 %v2600
        %v2662 = vpop.f32.mrb[0].mxu0
        %v2663 = vadd.f32 0.0, %v2662
        %v2664 = vpop.f32.mrb[0].mxu0
        %v2665 = vpop.f32.mrb[0].mxu0
        %v2666 = vadd.f32 0.0, %v2665
        %v2667 = vpop.f32.mrb[0].mxu0
        %2668 = vmatprep.mubr.bf16.mxu0 %v2603
        %2669 = vmatmul.mubr.bf16.gmra.mrb[0].mxu0 %v2602
        %v2670 = vpop.f32.mrb[0].mxu0
        %v2671 = vadd.f32 0.0, %v2670
        %v2672 = vpop.f32.mrb[0].mxu0
        %v2673 = vpop.f32.mrb[0].mxu0
        %v2674 = vadd.f32 0.0, %v2673
        %v2675 = vpop.f32.mrb[0].mxu0
        %2676 = vmatprep.mubr.bf16.mxu0 %v2605
        %2677 = vmatmul.mubr.bf16.gmra.mrb[0].mxu0 %v2604
        %v2678 = vpop.f32.mrb[0].mxu0
        %v2679 = vadd.f32 0.0, %v2678
        %v2680 = vpop.f32.mrb[0].mxu0
        %v2681 = vpop.f32.mrb[0].mxu0
        %v2682 = vadd.f32 0.0, %v2681
        %v2683 = vpop.f32.mrb[0].mxu0
        %2684 = vmatprep.mubr.bf16.mxu0 %v2607
        %2685 = vmatmul.mubr.bf16.gmra.mrb[0].mxu0 %v2606
        %v2686 = vpop.f32.mrb[0].mxu0
        %v2687 = vadd.f32 0.0, %v2686
        %v2688 = vpop.f32.mrb[0].mxu0
        %v2689 = vpop.f32.mrb[0].mxu0
        %v2690 = vadd.f32 0.0, %v2689
        %v2691 = vpop.f32.mrb[0].mxu0
        %2692 = vmatprep.mubr.bf16.mxu0 %v2609
        %2693 = vmatmul.mubr.bf16.gmra.mrb[0].mxu0 %v2608
        %v2694 = vpop.f32.mrb[0].mxu0
        %v2695 = vadd.f32 0.0, %v2694
        %v2696 = vpop.f32.mrb[0].mxu0
        %v2697 = vpop.f32.mrb[0].mxu0
        %v2698 = vadd.f32 0.0, %v2697
        %v2699 = vpop.f32.mrb[0].mxu0
        %2700 = vmatprep.mubr.bf16.mxu0 %v2611
        %2701 = vmatmul.mubr.bf16.gmra.mrb[0].mxu0 %v2610
        %v2702 = vpop.f32.mrb[0].mxu0
        %v2703 = vadd.f32 0.0, %v2702
        %v2704 = vpop.f32.mrb[0].mxu0
        %v2705 = vpop.f32.mrb[0].mxu0
        %v2706 = vadd.f32 0.0, %v2705
        %v2707 = vpop.f32.mrb[0].mxu0
        %2708 = vdwg.mxu0
        %v2709 = vpack.c.bf16 %v2650, %v2647
        %v2710 = vpack.c.bf16 %v2658, %v2655
        %v2711 = vpack.c.bf16 %v2666, %v2663
        %v2712 = vpack.c.bf16 %v2674, %v2671
        %v2713 = vpack.c.bf16 %v2682, %v2679
        %v2714 = vpack.c.bf16 %v2690, %v2687
        %v2715 = vpack.c.bf16 %v2698, %v2695
        %v2716 = vpack.c.bf16 %v2706, %v2703
        %2717 = vst.msk [vmem:[#allocation4] sm:$0xff] %vm2170, %v2709
        %2718 = vst.msk [vmem:[#allocation4 + $0x8] sm:$0xff] %vm2170, %v2710
        %2719 = vst.msk [vmem:[#allocation4 + $0x10] sm:$0xff] %vm2170, %v2711
        %2720 = vst.msk [vmem:[#allocation4 + $0x18] sm:$0xff] %vm2170, %v2712
        %2721 = vst.msk [vmem:[#allocation4 + $0x20] sm:$0xff] %vm2170, %v2713
        %2722 = vst.msk [vmem:[#allocation4 + $0x28] sm:$0xff] %vm2170, %v2714
        %2723 = vst.msk [vmem:[#allocation4 + $0x30] sm:$0xff] %vm2170, %v2715
        %2724 = vst.msk [vmem:[#allocation4 + $0x38] sm:$0xff] %vm2170, %v2716
        %v2725 = vld [vmem:[#allocation2] sm:$0xff]
        %v2726 = vld [vmem:[#allocation2 + $0x8] sm:$0xff]
        %v2727 = vld [vmem:[#allocation2 + $0x10] sm:$0xff]
        %v2728 = vld [vmem:[#allocation2 + $0x18] sm:$0xff]
        %v2729 = vld [vmem:[#allocation2 + $0x20] sm:$0xff]
        %v2730 = vld [vmem:[#allocation2 + $0x28] sm:$0xff]
        %v2731 = vld [vmem:[#allocation2 + $0x30] sm:$0xff]
        %v2732 = vld [vmem:[#allocation2 + $0x38] sm:$0xff]
        %v2733 = vld [vmem:[#allocation2 + $0x40] sm:$0xff]
        %v2734 = vld [vmem:[#allocation2 + $0x48] sm:$0xff]
        %v2735 = vld [vmem:[#allocation2 + $0x50] sm:$0xff]
        %v2736 = vld [vmem:[#allocation2 + $0x58] sm:$0xff]
        %v2737 = vld [vmem:[#allocation2 + $0x60] sm:$0xff]
        %v2738 = vld [vmem:[#allocation2 + $0x68] sm:$0xff]
        %v2739 = vld [vmem:[#allocation2 + $0x70] sm:$0xff]
        %v2740 = vld [vmem:[#allocation2 + $0x78] sm:$0xff]
        %v2741 = vld [vmem:[#allocation3] sm:$0xff]
        %v2742 = vld [vmem:[#allocation3 + $0x8] sm:$0xff]
        %v2743 = vld [vmem:[#allocation3 + $0x10] sm:$0xff]
        %v2744 = vld [vmem:[#allocation3 + $0x18] sm:$0xff]
        %v2745 = vld [vmem:[#allocation3 + $0x20] sm:$0xff]
        %v2746 = vld [vmem:[#allocation3 + $0x28] sm:$0xff]
        %v2747 = vld [vmem:[#allocation3 + $0x30] sm:$0xff]
        %v2748 = vld [vmem:[#allocation3 + $0x38] sm:$0xff]
        %v2749 = vld [vmem:[#allocation3 + $0x40] sm:$0xff]
        %v2750 = vld [vmem:[#allocation3 + $0x48] sm:$0xff]
        %v2751 = vld [vmem:[#allocation3 + $0x50] sm:$0xff]
        %v2752 = vld [vmem:[#allocation3 + $0x58] sm:$0xff]
        %v2753 = vld [vmem:[#allocation3 + $0x60] sm:$0xff]
        %v2754 = vld [vmem:[#allocation3 + $0x68] sm:$0xff]
        %v2755 = vld [vmem:[#allocation3 + $0x70] sm:$0xff]
        %v2756 = vld [vmem:[#allocation3 + $0x78] sm:$0xff]
        %2765 = vrot.lane.b32.xlu0 %v2130, 96
        %v2766 = vpop.permute.xlu0 %2765
        %2767 = vrot.lane.b32.xlu0 %v2131, 96
        %v2768 = vpop.permute.xlu0 %2767
        %2769 = vrot.lane.b32.xlu0 %v2132, 96
        %v2770 = vpop.permute.xlu0 %2769
        %2771 = vrot.lane.b32.xlu0 %v2133, 96
        %v2772 = vpop.permute.xlu0 %2771
        %2773 = vrot.lane.b32.xlu0 %v2134, 96
        %v2774 = vpop.permute.xlu0 %2773
        %2775 = vrot.lane.b32.xlu0 %v2135, 96
        %v2776 = vpop.permute.xlu0 %2775
        %2777 = vrot.lane.b32.xlu0 %v2136, 96
        %v2778 = vpop.permute.xlu0 %2777
        %2779 = vrot.lane.b32.xlu0 %v2137, 96
        %v2780 = vpop.permute.xlu0 %2779
        %2797 = vrot.lane.b32.xlu0 %v2725, 96
        %v2798 = vpop.permute.xlu0 %2797
        %2799 = vrot.lane.b32.xlu0 %v2726, 96
        %v2800 = vpop.permute.xlu0 %2799
        %2801 = vrot.lane.b32.xlu0 %v2727, 96
        %v2802 = vpop.permute.xlu0 %2801
        %2803 = vrot.lane.b32.xlu0 %v2728, 96
        %v2804 = vpop.permute.xlu0 %2803
        %2805 = vrot.lane.b32.xlu0 %v2729, 96
        %v2806 = vpop.permute.xlu0 %2805
        %2807 = vrot.lane.b32.xlu0 %v2730, 96
        %v2808 = vpop.permute.xlu0 %2807
        %2809 = vrot.lane.b32.xlu0 %v2731, 96
        %v2810 = vpop.permute.xlu0 %2809
        %2811 = vrot.lane.b32.xlu0 %v2732, 96
        %v2812 = vpop.permute.xlu0 %2811
        %2813 = vrot.lane.b32.xlu0 %v2733, 96
        %v2814 = vpop.permute.xlu0 %2813
        %2815 = vrot.lane.b32.xlu0 %v2734, 96
        %v2816 = vpop.permute.xlu0 %2815
        %2817 = vrot.lane.b32.xlu0 %v2735, 96
        %v2818 = vpop.permute.xlu0 %2817
        %2819 = vrot.lane.b32.xlu0 %v2736, 96
        %v2820 = vpop.permute.xlu0 %2819
        %2821 = vrot.lane.b32.xlu0 %v2737, 96
        %v2822 = vpop.permute.xlu0 %2821
        %2823 = vrot.lane.b32.xlu0 %v2738, 96
        %v2824 = vpop.permute.xlu0 %2823
        %2825 = vrot.lane.b32.xlu0 %v2739, 96
        %v2826 = vpop.permute.xlu0 %2825
        %2827 = vrot.lane.b32.xlu0 %v2740, 96
        %v2828 = vpop.permute.xlu0 %2827
        %v2830 = vsel %vm2170, %v2766, 0
        %v2833 = vsel %vm2170, %v2768, 0
        %v2836 = vsel %vm2170, %v2770, 0
        %v2839 = vsel %vm2170, %v2772, 0
        %v2842 = vsel %vm2170, %v2774, 0
        %v2845 = vsel %vm2170, %v2776, 0
        %v2848 = vsel %vm2170, %v2778, 0
        %v2851 = vsel %vm2170, %v2780, 0
        %v2854 = vsel %vm2170, %v2798, 0
        %v2857 = vsel %vm2170, %v2800, 0
        %v2860 = vsel %vm2170, %v2802, 0
        %v2863 = vsel %vm2170, %v2804, 0
        %v2866 = vsel %vm2170, %v2806, 0
        %v2869 = vsel %vm2170, %v2808, 0
        %v2872 = vsel %vm2170, %v2810, 0
        %v2875 = vsel %vm2170, %v2812, 0
        %v2878 = vsel %vm2170, %v2814, 0
        %v2881 = vsel %vm2170, %v2816, 0
        %v2884 = vsel %vm2170, %v2818, 0
        %v2887 = vsel %vm2170, %v2820, 0
        %v2890 = vsel %vm2170, %v2822, 0
        %v2893 = vsel %vm2170, %v2824, 0
        %v2896 = vsel %vm2170, %v2826, 0
        %v2899 = vsel %vm2170, %v2828, 0
        %2901 = vmatprep.subr.bf16.mxu0 0
        %2902 = vmatpush1.bf16.xpose.msra.mxu0 %v2854
        %2903 = vmatprep.subr.bf16.mxu0 0
        %2904 = vmatpush1.bf16.xpose.msra.mxu0 %v2857
        %2905 = vmatprep.subr.bf16.mxu0 0
        %2906 = vmatpush1.bf16.xpose.msra.mxu0 %v2860
        %2907 = vmatprep.subr.bf16.mxu0 0
        %2908 = vmatpush1.bf16.xpose.msra.mxu0 %v2863
        %2909 = vmatprep.subr.bf16.mxu0 0
        %2910 = vmatpush1.bf16.xpose.msra.mxu0 %v2866
        %2911 = vmatprep.subr.bf16.mxu0 0
        %2912 = vmatpush1.bf16.xpose.msra.mxu0 %v2869
        %2913 = vmatprep.subr.bf16.mxu0 0
        %2914 = vmatpush1.bf16.xpose.msra.mxu0 %v2872
        %2915 = vmatprep.subr.bf16.mxu0 0
        %2916 = vmatpush1.bf16.xpose.msra.mxu0 %v2875
        %2917 = vmatprep.subr.bf16.mxu0 0
        %2918 = vmatpush1.bf16.xpose.msra.mxu0 %v2878
        %2919 = vmatprep.subr.bf16.mxu0 0
        %2920 = vmatpush1.bf16.xpose.msra.mxu0 %v2881
        %2921 = vmatprep.subr.bf16.mxu0 0
        %2922 = vmatpush1.bf16.xpose.msra.mxu0 %v2884
        %2923 = vmatprep.subr.bf16.mxu0 0
        %2924 = vmatpush1.bf16.xpose.msra.mxu0 %v2887
        %2925 = vmatprep.subr.bf16.mxu0 0
        %2926 = vmatpush1.bf16.xpose.msra.mxu0 %v2890
        %2927 = vmatprep.subr.bf16.mxu0 0
        %2928 = vmatpush1.bf16.xpose.msra.mxu0 %v2893
        %2929 = vmatprep.subr.bf16.mxu0 0
        %2930 = vmatpush1.bf16.xpose.msra.mxu0 %v2896
        %2931 = vmatprep.subr.bf16.mxu0 0
        %2932 = vmatpush1.bf16.xpose.msra.mxu0 %v2899
        %2933 = vmatprep.mubr.bf16.mxu0 0
        %2934 = vmatmul.mubr.bf16.gmra.mrb[0].mxu0 %v2830
        %v2935 = vpop.f32.mrb[0].mxu0
        %v2936 = vadd.f32 0.0, %v2935
        %v2937 = vpop.f32.mrb[0].mxu0
        %v2938 = vadd.f32 0.0, %v2937
        %v2939 = vpop.f32.mrb[0].mxu0
        %v2940 = vadd.f32 0.0, %v2939
        %v2941 = vpop.f32.mrb[0].mxu0
        %v2942 = vadd.f32 0.0, %v2941
        %2943 = vmatprep.mubr.bf16.mxu0 0
        %2944 = vmatmul.mubr.bf16.gmra.mrb[0].mxu0 %v2833
        %v2945 = vpop.f32.mrb[0].mxu0
        %v2946 = vadd.f32 0.0, %v2945
        %v2947 = vpop.f32.mrb[0].mxu0
        %v2948 = vadd.f32 0.0, %v2947
        %v2949 = vpop.f32.mrb[0].mxu0
        %v2950 = vadd.f32 0.0, %v2949
        %v2951 = vpop.f32.mrb[0].mxu0
        %v2952 = vadd.f32 0.0, %v2951
        %2953 = vmatprep.mubr.bf16.mxu0 0
        %2954 = vmatmul.mubr.bf16.gmra.mrb[0].mxu0 %v2836
        %v2955 = vpop.f32.mrb[0].mxu0
        %v2956 = vadd.f32 0.0, %v2955
        %v2957 = vpop.f32.mrb[0].mxu0
        %v2958 = vadd.f32 0.0, %v2957
        %v2959 = vpop.f32.mrb[0].mxu0
        %v2960 = vadd.f32 0.0, %v2959
        %v2961 = vpop.f32.mrb[0].mxu0
        %v2962 = vadd.f32 0.0, %v2961
        %2963 = vmatprep.mubr.bf16.mxu0 0
        %2964 = vmatmul.mubr.bf16.gmra.mrb[0].mxu0 %v2839
        %v2965 = vpop.f32.mrb[0].mxu0
        %v2966 = vadd.f32 0.0, %v2965
        %v2967 = vpop.f32.mrb[0].mxu0
        %v2968 = vadd.f32 0.0, %v2967
        %v2969 = vpop.f32.mrb[0].mxu0
        %v2970 = vadd.f32 0.0, %v2969
        %v2971 = vpop.f32.mrb[0].mxu0
        %v2972 = vadd.f32 0.0, %v2971
        %2973 = vmatprep.mubr.bf16.mxu0 0
        %2974 = vmatmul.mubr.bf16.gmra.mrb[0].mxu0 %v2842
        %v2975 = vpop.f32.mrb[0].mxu0
        %v2976 = vadd.f32 0.0, %v2975
        %v2977 = vpop.f32.mrb[0].mxu0
        %v2978 = vadd.f32 0.0, %v2977
        %v2979 = vpop.f32.mrb[0].mxu0
        %v2980 = vadd.f32 0.0, %v2979
        %v2981 = vpop.f32.mrb[0].mxu0
        %v2982 = vadd.f32 0.0, %v2981
        %2983 = vmatprep.mubr.bf16.mxu0 0
        %2984 = vmatmul.mubr.bf16.gmra.mrb[0].mxu0 %v2845
        %v2985 = vpop.f32.mrb[0].mxu0
        %v2986 = vadd.f32 0.0, %v2985
        %v2987 = vpop.f32.mrb[0].mxu0
        %v2988 = vadd.f32 0.0, %v2987
        %v2989 = vpop.f32.mrb[0].mxu0
        %v2990 = vadd.f32 0.0, %v2989
        %v2991 = vpop.f32.mrb[0].mxu0
        %v2992 = vadd.f32 0.0, %v2991
        %2993 = vmatprep.mubr.bf16.mxu0 0
        %2994 = vmatmul.mubr.bf16.gmra.mrb[0].mxu0 %v2848
        %v2995 = vpop.f32.mrb[0].mxu0
        %v2996 = vadd.f32 0.0, %v2995
        %v2997 = vpop.f32.mrb[0].mxu0
        %v2998 = vadd.f32 0.0, %v2997
        %v2999 = vpop.f32.mrb[0].mxu0
        %v3000 = vadd.f32 0.0, %v2999
        %v3001 = vpop.f32.mrb[0].mxu0
        %v3002 = vadd.f32 0.0, %v3001
        %3003 = vmatprep.mubr.bf16.mxu0 0
        %3004 = vmatmul.mubr.bf16.gmra.mrb[0].mxu0 %v2851
        %v3005 = vpop.f32.mrb[0].mxu0
        %v3006 = vadd.f32 0.0, %v3005
        %v3007 = vpop.f32.mrb[0].mxu0
        %v3008 = vadd.f32 0.0, %v3007
        %v3009 = vpop.f32.mrb[0].mxu0
        %v3010 = vadd.f32 0.0, %v3009
        %v3011 = vpop.f32.mrb[0].mxu0
        %v3012 = vadd.f32 0.0, %v3011
        %3013 = vdwg.mxu0
        %v3014 = vmax.f32 %v2936, %v2938
        %3015 = vmax.xlane.f32.xlu0 %v3014
        %v3016 = vpop.xlane.xlu0 %3015
        %v3017 = vmax.f32 %v2940, %v2942
        %3018 = vmax.xlane.f32.xlu0 %v3017
        %v3019 = vpop.xlane.xlu0 %3018
        %v3020 = vmax.f32 %v2946, %v2948
        %3021 = vmax.xlane.f32.xlu0 %v3020
        %v3022 = vpop.xlane.xlu0 %3021
        %v3023 = vmax.f32 %v2950, %v2952
        %3024 = vmax.xlane.f32.xlu0 %v3023
        %v3025 = vpop.xlane.xlu0 %3024
        %v3026 = vmax.f32 %v2956, %v2958
        %3027 = vmax.xlane.f32.xlu0 %v3026
        %v3028 = vpop.xlane.xlu0 %3027
        %v3029 = vmax.f32 %v2960, %v2962
        %3030 = vmax.xlane.f32.xlu0 %v3029
        %v3031 = vpop.xlane.xlu0 %3030
        %v3032 = vmax.f32 %v2966, %v2968
        %3033 = vmax.xlane.f32.xlu0 %v3032
        %v3034 = vpop.xlane.xlu0 %3033
        %v3035 = vmax.f32 %v2970, %v2972
        %3036 = vmax.xlane.f32.xlu0 %v3035
        %v3037 = vpop.xlane.xlu0 %3036
        %v3038 = vmax.f32 %v2976, %v2978
        %3039 = vmax.xlane.f32.xlu0 %v3038
        %v3040 = vpop.xlane.xlu0 %3039
        %v3041 = vmax.f32 %v2980, %v2982
        %3042 = vmax.xlane.f32.xlu0 %v3041
        %v3043 = vpop.xlane.xlu0 %3042
        %v3044 = vmax.f32 %v2986, %v2988
        %3045 = vmax.xlane.f32.xlu0 %v3044
        %v3046 = vpop.xlane.xlu0 %3045
        %v3047 = vmax.f32 %v2990, %v2992
        %3048 = vmax.xlane.f32.xlu0 %v3047
        %v3049 = vpop.xlane.xlu0 %3048
        %v3050 = vmax.f32 %v2996, %v2998
        %3051 = vmax.xlane.f32.xlu0 %v3050
        %v3052 = vpop.xlane.xlu0 %3051
        %v3053 = vmax.f32 %v3000, %v3002
        %3054 = vmax.xlane.f32.xlu0 %v3053
        %v3055 = vpop.xlane.xlu0 %3054
        %v3056 = vmax.f32 %v3006, %v3008
        %3057 = vmax.xlane.f32.xlu0 %v3056
        %v3058 = vpop.xlane.xlu0 %3057
        %v3059 = vmax.f32 %v3010, %v3012
        %3060 = vmax.xlane.f32.xlu0 %v3059
        %v3061 = vpop.xlane.xlu0 %3060
        %v3062 = vsub.f32 %v2936, %v3016
        %v3063 = vsub.f32 %v2938, %v3016
        %v3064 = vsub.f32 %v2940, %v3019
        %v3065 = vsub.f32 %v2942, %v3019
        %v3066 = vsub.f32 %v2946, %v3022
        %v3067 = vsub.f32 %v2948, %v3022
        %v3068 = vsub.f32 %v2950, %v3025
        %v3069 = vsub.f32 %v2952, %v3025
        %v3070 = vsub.f32 %v2956, %v3028
        %v3071 = vsub.f32 %v2958, %v3028
        %v3072 = vsub.f32 %v2960, %v3031
        %v3073 = vsub.f32 %v2962, %v3031
        %v3074 = vsub.f32 %v2966, %v3034
        %v3075 = vsub.f32 %v2968, %v3034
        %v3076 = vsub.f32 %v2970, %v3037
        %v3077 = vsub.f32 %v2972, %v3037
        %v3078 = vsub.f32 %v2976, %v3040
        %v3079 = vsub.f32 %v2978, %v3040
        %v3080 = vsub.f32 %v2980, %v3043
        %v3081 = vsub.f32 %v2982, %v3043
        %v3082 = vsub.f32 %v2986, %v3046
        %v3083 = vsub.f32 %v2988, %v3046
        %v3084 = vsub.f32 %v2990, %v3049
        %v3085 = vsub.f32 %v2992, %v3049
        %v3086 = vsub.f32 %v2996, %v3052
        %v3087 = vsub.f32 %v2998, %v3052
        %v3088 = vsub.f32 %v3000, %v3055
        %v3089 = vsub.f32 %v3002, %v3055
        %v3090 = vsub.f32 %v3006, %v3058
        %v3091 = vsub.f32 %v3008, %v3058
        %v3092 = vsub.f32 %v3010, %v3061
        %v3093 = vsub.f32 %v3012, %v3061
        %v3094 = vmul.f32 %v3062, 1.442695
        %v3095 = vpow.pop %v3094
        %v3096 = vmul.f32 %v3063, 1.442695
        %v3097 = vpow.pop %v3096
        %v3098 = vmul.f32 %v3064, 1.442695
        %v3099 = vpow.pop %v3098
        %v3100 = vmul.f32 %v3065, 1.442695
        %v3101 = vpow.pop %v3100
        %v3102 = vmul.f32 %v3066, 1.442695
        %v3103 = vpow.pop %v3102
        %v3104 = vmul.f32 %v3067, 1.442695
        %v3105 = vpow.pop %v3104
        %v3106 = vmul.f32 %v3068, 1.442695
        %v3107 = vpow.pop %v3106
        %v3108 = vmul.f32 %v3069, 1.442695
        %v3109 = vpow.pop %v3108
        %v3110 = vmul.f32 %v3070, 1.442695
        %v3111 = vpow.pop %v3110
        %v3112 = vmul.f32 %v3071, 1.442695
        %v3113 = vpow.pop %v3112
        %v3114 = vmul.f32 %v3072, 1.442695
        %v3115 = vpow.pop %v3114
        %v3116 = vmul.f32 %v3073, 1.442695
        %v3117 = vpow.pop %v3116
        %v3118 = vmul.f32 %v3074, 1.442695
        %v3119 = vpow.pop %v3118
        %v3120 = vmul.f32 %v3075, 1.442695
        %v3121 = vpow.pop %v3120
        %v3122 = vmul.f32 %v3076, 1.442695
        %v3123 = vpow.pop %v3122
        %v3124 = vmul.f32 %v3077, 1.442695
        %v3125 = vpow.pop %v3124
        %v3126 = vmul.f32 %v3078, 1.442695
        %v3127 = vpow.pop %v3126
        %v3128 = vmul.f32 %v3079, 1.442695
        %v3129 = vpow.pop %v3128
        %v3130 = vmul.f32 %v3080, 1.442695
        %v3131 = vpow.pop %v3130
        %v3132 = vmul.f32 %v3081, 1.442695
        %v3133 = vpow.pop %v3132
        %v3134 = vmul.f32 %v3082, 1.442695
        %v3135 = vpow.pop %v3134
        %v3136 = vmul.f32 %v3083, 1.442695
        %v3137 = vpow.pop %v3136
        %v3138 = vmul.f32 %v3084, 1.442695
        %v3139 = vpow.pop %v3138
        %v3140 = vmul.f32 %v3085, 1.442695
        %v3141 = vpow.pop %v3140
        %v3142 = vmul.f32 %v3086, 1.442695
        %v3143 = vpow.pop %v3142
        %v3144 = vmul.f32 %v3087, 1.442695
        %v3145 = vpow.pop %v3144
        %v3146 = vmul.f32 %v3088, 1.442695
        %v3147 = vpow.pop %v3146
        %v3148 = vmul.f32 %v3089, 1.442695
        %v3149 = vpow.pop %v3148
        %v3150 = vmul.f32 %v3090, 1.442695
        %v3151 = vpow.pop %v3150
        %v3152 = vmul.f32 %v3091, 1.442695
        %v3153 = vpow.pop %v3152
        %v3154 = vmul.f32 %v3092, 1.442695
        %v3155 = vpow.pop %v3154
        %v3156 = vmul.f32 %v3093, 1.442695
        %v3157 = vpow.pop %v3156
        %v3158 = vadd.f32 %v3095, %v3097
        %3159 = vadd.xlane.f32.xlu0 %v3158
        %v3160 = vpop.xlane.xlu0 %3159
        %v3161 = vadd.f32 %v3099, %v3101
        %3162 = vadd.xlane.f32.xlu0 %v3161
        %v3163 = vpop.xlane.xlu0 %3162
        %v3164 = vadd.f32 %v3103, %v3105
        %3165 = vadd.xlane.f32.xlu0 %v3164
        %v3166 = vpop.xlane.xlu0 %3165
        %v3167 = vadd.f32 %v3107, %v3109
        %3168 = vadd.xlane.f32.xlu0 %v3167
        %v3169 = vpop.xlane.xlu0 %3168
        %v3170 = vadd.f32 %v3111, %v3113
        %3171 = vadd.xlane.f32.xlu0 %v3170
        %v3172 = vpop.xlane.xlu0 %3171
        %v3173 = vadd.f32 %v3115, %v3117
        %3174 = vadd.xlane.f32.xlu0 %v3173
        %v3175 = vpop.xlane.xlu0 %3174
        %v3176 = vadd.f32 %v3119, %v3121
        %3177 = vadd.xlane.f32.xlu0 %v3176
        %v3178 = vpop.xlane.xlu0 %3177
        %v3179 = vadd.f32 %v3123, %v3125
        %3180 = vadd.xlane.f32.xlu0 %v3179
        %v3181 = vpop.xlane.xlu0 %3180
        %v3182 = vadd.f32 %v3127, %v3129
        %3183 = vadd.xlane.f32.xlu0 %v3182
        %v3184 = vpop.xlane.xlu0 %3183
        %v3185 = vadd.f32 %v3131, %v3133
        %3186 = vadd.xlane.f32.xlu0 %v3185
        %v3187 = vpop.xlane.xlu0 %3186
        %v3188 = vadd.f32 %v3135, %v3137
        %3189 = vadd.xlane.f32.xlu0 %v3188
        %v3190 = vpop.xlane.xlu0 %3189
        %v3191 = vadd.f32 %v3139, %v3141
        %3192 = vadd.xlane.f32.xlu0 %v3191
        %v3193 = vpop.xlane.xlu0 %3192
        %v3194 = vadd.f32 %v3143, %v3145
        %3195 = vadd.xlane.f32.xlu0 %v3194
        %v3196 = vpop.xlane.xlu0 %3195
        %v3197 = vadd.f32 %v3147, %v3149
        %3198 = vadd.xlane.f32.xlu0 %v3197
        %v3199 = vpop.xlane.xlu0 %3198
        %v3200 = vadd.f32 %v3151, %v3153
        %3201 = vadd.xlane.f32.xlu0 %v3200
        %v3202 = vpop.xlane.xlu0 %3201
        %v3203 = vadd.f32 %v3155, %v3157
        %3204 = vadd.xlane.f32.xlu0 %v3203
        %v3205 = vpop.xlane.xlu0 %3204
        %v3206 = vrcp.pop %v3160
        %v3207 = vrcp.pop %v3163
        %v3208 = vrcp.pop %v3166
        %v3209 = vrcp.pop %v3169
        %v3210 = vrcp.pop %v3172
        %v3211 = vrcp.pop %v3175
        %v3212 = vrcp.pop %v3178
        %v3213 = vrcp.pop %v3181
        %v3214 = vrcp.pop %v3184
        %v3215 = vrcp.pop %v3187
        %v3216 = vrcp.pop %v3190
        %v3217 = vrcp.pop %v3193
        %v3218 = vrcp.pop %v3196
        %v3219 = vrcp.pop %v3199
        %v3220 = vrcp.pop %v3202
        %v3221 = vrcp.pop %v3205
        %v3222 = vmul.f32 %v3095, %v3206
        %v3223 = vmul.f32 %v3097, %v3206
        %v3224 = vmul.f32 %v3099, %v3207
        %v3225 = vmul.f32 %v3101, %v3207
        %v3226 = vmul.f32 %v3103, %v3208
        %v3227 = vmul.f32 %v3105, %v3208
        %v3228 = vmul.f32 %v3107, %v3209
        %v3229 = vmul.f32 %v3109, %v3209
        %v3230 = vmul.f32 %v3111, %v3210
        %v3231 = vmul.f32 %v3113, %v3210
        %v3232 = vmul.f32 %v3115, %v3211
        %v3233 = vmul.f32 %v3117, %v3211
        %v3234 = vmul.f32 %v3119, %v3212
        %v3235 = vmul.f32 %v3121, %v3212
        %v3236 = vmul.f32 %v3123, %v3213
        %v3237 = vmul.f32 %v3125, %v3213
        %v3238 = vmul.f32 %v3127, %v3214
        %v3239 = vmul.f32 %v3129, %v3214
        %v3240 = vmul.f32 %v3131, %v3215
        %v3241 = vmul.f32 %v3133, %v3215
        %v3242 = vmul.f32 %v3135, %v3216
        %v3243 = vmul.f32 %v3137, %v3216
        %v3244 = vmul.f32 %v3139, %v3217
        %v3245 = vmul.f32 %v3141, %v3217
        %v3246 = vmul.f32 %v3143, %v3218
        %v3247 = vmul.f32 %v3145, %v3218
        %v3248 = vmul.f32 %v3147, %v3219
        %v3249 = vmul.f32 %v3149, %v3219
        %v3250 = vmul.f32 %v3151, %v3220
        %v3251 = vmul.f32 %v3153, %v3220
        %v3252 = vmul.f32 %v3155, %v3221
        %v3253 = vmul.f32 %v3157, %v3221
        %v3254 = vpack.c.bf16 %v3224, %v3222
        %v3255 = vpack.c.bf16 %v3225, %v3223
        %v3256 = vpack.c.bf16 %v3228, %v3226
        %v3257 = vpack.c.bf16 %v3229, %v3227
        %v3258 = vpack.c.bf16 %v3232, %v3230
        %v3259 = vpack.c.bf16 %v3233, %v3231
        %v3260 = vpack.c.bf16 %v3236, %v3234
        %v3261 = vpack.c.bf16 %v3237, %v3235
        %v3262 = vpack.c.bf16 %v3240, %v3238
        %v3263 = vpack.c.bf16 %v3241, %v3239
        %v3264 = vpack.c.bf16 %v3244, %v3242
        %v3265 = vpack.c.bf16 %v3245, %v3243
        %v3266 = vpack.c.bf16 %v3248, %v3246
        %v3267 = vpack.c.bf16 %v3249, %v3247
        %v3268 = vpack.c.bf16 %v3252, %v3250
        %v3269 = vpack.c.bf16 %v3253, %v3251
        %3286 = vrot.lane.b32.xlu0 %v2741, 96
        %v3287 = vpop.permute.xlu0 %3286
        %3288 = vrot.lane.b32.xlu0 %v2742, 96
        %v3289 = vpop.permute.xlu0 %3288
        %3290 = vrot.lane.b32.xlu0 %v2743, 96
        %v3291 = vpop.permute.xlu0 %3290
        %3292 = vrot.lane.b32.xlu0 %v2744, 96
        %v3293 = vpop.permute.xlu0 %3292
        %3294 = vrot.lane.b32.xlu0 %v2745, 96
        %v3295 = vpop.permute.xlu0 %3294
        %3296 = vrot.lane.b32.xlu0 %v2746, 96
        %v3297 = vpop.permute.xlu0 %3296
        %3298 = vrot.lane.b32.xlu0 %v2747, 96
        %v3299 = vpop.permute.xlu0 %3298
        %3300 = vrot.lane.b32.xlu0 %v2748, 96
        %v3301 = vpop.permute.xlu0 %3300
        %3302 = vrot.lane.b32.xlu0 %v2749, 96
        %v3303 = vpop.permute.xlu0 %3302
        %3304 = vrot.lane.b32.xlu0 %v2750, 96
        %v3305 = vpop.permute.xlu0 %3304
        %3306 = vrot.lane.b32.xlu0 %v2751, 96
        %v3307 = vpop.permute.xlu0 %3306
        %3308 = vrot.lane.b32.xlu0 %v2752, 96
        %v3309 = vpop.permute.xlu0 %3308
        %3310 = vrot.lane.b32.xlu0 %v2753, 96
        %v3311 = vpop.permute.xlu0 %3310
        %3312 = vrot.lane.b32.xlu0 %v2754, 96
        %v3313 = vpop.permute.xlu0 %3312
        %3314 = vrot.lane.b32.xlu0 %v2755, 96
        %v3315 = vpop.permute.xlu0 %3314
        %3316 = vrot.lane.b32.xlu0 %v2756, 96
        %v3317 = vpop.permute.xlu0 %3316
        %3334 = vmatprep.subr.bf16.mxu0 0
        %3335 = vmatpush1.bf16.msra.mxu0 %v3287
        %3336 = vmatprep.subr.bf16.mxu0 0
        %3337 = vmatpush1.bf16.msra.mxu0 %v3289
        %3338 = vmatprep.subr.bf16.mxu0 0
        %3339 = vmatpush1.bf16.msra.mxu0 %v3291
        %3340 = vmatprep.subr.bf16.mxu0 0
        %3341 = vmatpush1.bf16.msra.mxu0 %v3293
        %3342 = vmatprep.subr.bf16.mxu0 0
        %3343 = vmatpush1.bf16.msra.mxu0 %v3295
        %3344 = vmatprep.subr.bf16.mxu0 0
        %3345 = vmatpush1.bf16.msra.mxu0 %v3297
        %3346 = vmatprep.subr.bf16.mxu0 0
        %3347 = vmatpush1.bf16.msra.mxu0 %v3299
        %3348 = vmatprep.subr.bf16.mxu0 0
        %3349 = vmatpush1.bf16.msra.mxu0 %v3301
        %3350 = vmatprep.subr.bf16.mxu0 0
        %3351 = vmatpush1.bf16.msra.mxu0 %v3303
        %3352 = vmatprep.subr.bf16.mxu0 0
        %3353 = vmatpush1.bf16.msra.mxu0 %v3305
        %3354 = vmatprep.subr.bf16.mxu0 0
        %3355 = vmatpush1.bf16.msra.mxu0 %v3307
        %3356 = vmatprep.subr.bf16.mxu0 0
        %3357 = vmatpush1.bf16.msra.mxu0 %v3309
        %3358 = vmatprep.subr.bf16.mxu0 0
        %3359 = vmatpush1.bf16.msra.mxu0 %v3311
        %3360 = vmatprep.subr.bf16.mxu0 0
        %3361 = vmatpush1.bf16.msra.mxu0 %v3313
        %3362 = vmatprep.subr.bf16.mxu0 0
        %3363 = vmatpush1.bf16.msra.mxu0 %v3315
        %3364 = vmatprep.subr.bf16.mxu0 0
        %3365 = vmatpush1.bf16.msra.mxu0 %v3317
        %3366 = vmatprep.mubr.bf16.mxu0 %v3255
        %3367 = vmatmul.mubr.bf16.gmra.mrb[0].mxu0 %v3254
        %v3368 = vpop.f32.mrb[0].mxu0
        %v3369 = vadd.f32 0.0, %v3368
        %v3370 = vpop.f32.mrb[0].mxu0
        %v3371 = vpop.f32.mrb[0].mxu0
        %v3372 = vadd.f32 0.0, %v3371
        %v3373 = vpop.f32.mrb[0].mxu0
        %3374 = vmatprep.mubr.bf16.mxu0 %v3257
        %3375 = vmatmul.mubr.bf16.gmra.mrb[0].mxu0 %v3256
        %v3376 = vpop.f32.mrb[0].mxu0
        %v3377 = vadd.f32 0.0, %v3376
        %v3378 = vpop.f32.mrb[0].mxu0
        %v3379 = vpop.f32.mrb[0].mxu0
        %v3380 = vadd.f32 0.0, %v3379
        %v3381 = vpop.f32.mrb[0].mxu0
        %3382 = vmatprep.mubr.bf16.mxu0 %v3259
        %3383 = vmatmul.mubr.bf16.gmra.mrb[0].mxu0 %v3258
        %v3384 = vpop.f32.mrb[0].mxu0
        %v3385 = vadd.f32 0.0, %v3384
        %v3386 = vpop.f32.mrb[0].mxu0
        %v3387 = vpop.f32.mrb[0].mxu0
        %v3388 = vadd.f32 0.0, %v3387
        %v3389 = vpop.f32.mrb[0].mxu0
        %3390 = vmatprep.mubr.bf16.mxu0 %v3261
        %3391 = vmatmul.mubr.bf16.gmra.mrb[0].mxu0 %v3260
        %v3392 = vpop.f32.mrb[0].mxu0
        %v3393 = vadd.f32 0.0, %v3392
        %v3394 = vpop.f32.mrb[0].mxu0
        %v3395 = vpop.f32.mrb[0].mxu0
        %v3396 = vadd.f32 0.0, %v3395
        %v3397 = vpop.f32.mrb[0].mxu0
        %3398 = vmatprep.mubr.bf16.mxu0 %v3263
        %3399 = vmatmul.mubr.bf16.gmra.mrb[0].mxu0 %v3262
        %v3400 = vpop.f32.mrb[0].mxu0
        %v3401 = vadd.f32 0.0, %v3400
        %v3402 = vpop.f32.mrb[0].mxu0
        %v3403 = vpop.f32.mrb[0].mxu0
        %v3404 = vadd.f32 0.0, %v3403
        %v3405 = vpop.f32.mrb[0].mxu0
        %3406 = vmatprep.mubr.bf16.mxu0 %v3265
        %3407 = vmatmul.mubr.bf16.gmra.mrb[0].mxu0 %v3264
        %v3408 = vpop.f32.mrb[0].mxu0
        %v3409 = vadd.f32 0.0, %v3408
        %v3410 = vpop.f32.mrb[0].mxu0
        %v3411 = vpop.f32.mrb[0].mxu0
        %v3412 = vadd.f32 0.0, %v3411
        %v3413 = vpop.f32.mrb[0].mxu0
        %3414 = vmatprep.mubr.bf16.mxu0 %v3267
        %3415 = vmatmul.mubr.bf16.gmra.mrb[0].mxu0 %v3266
        %v3416 = vpop.f32.mrb[0].mxu0
        %v3417 = vadd.f32 0.0, %v3416
        %v3418 = vpop.f32.mrb[0].mxu0
        %v3419 = vpop.f32.mrb[0].mxu0
        %v3420 = vadd.f32 0.0, %v3419
        %v3421 = vpop.f32.mrb[0].mxu0
        %3422 = vmatprep.mubr.bf16.mxu0 %v3269
        %3423 = vmatmul.mubr.bf16.gmra.mrb[0].mxu0 %v3268
        %v3424 = vpop.f32.mrb[0].mxu0
        %v3425 = vadd.f32 0.0, %v3424
        %v3426 = vpop.f32.mrb[0].mxu0
        %v3427 = vpop.f32.mrb[0].mxu0
        %v3428 = vadd.f32 0.0, %v3427
        %v3429 = vpop.f32.mrb[0].mxu0
        %3430 = vdwg.mxu0
        %v3431 = vpack.c.bf16 %v3372, %v3369
        %v3432 = vpack.c.bf16 %v3380, %v3377
        %v3433 = vpack.c.bf16 %v3388, %v3385
        %v3434 = vpack.c.bf16 %v3396, %v3393
        %v3435 = vpack.c.bf16 %v3404, %v3401
        %v3436 = vpack.c.bf16 %v3412, %v3409
        %v3437 = vpack.c.bf16 %v3420, %v3417
        %v3438 = vpack.c.bf16 %v3428, %v3425
        %3447 = vrot.lane.b32.xlu0 %v3431, 32
        %v3448 = vpop.permute.xlu0 %3447
        %3449 = vrot.lane.b32.xlu0 %v3432, 32
        %v3450 = vpop.permute.xlu0 %3449
        %3451 = vrot.lane.b32.xlu0 %v3433, 32
        %v3452 = vpop.permute.xlu0 %3451
        %3453 = vrot.lane.b32.xlu0 %v3434, 32
        %v3454 = vpop.permute.xlu0 %3453
        %3455 = vrot.lane.b32.xlu0 %v3435, 32
        %v3456 = vpop.permute.xlu0 %3455
        %3457 = vrot.lane.b32.xlu0 %v3436, 32
        %v3458 = vpop.permute.xlu0 %3457
        %3459 = vrot.lane.b32.xlu0 %v3437, 32
        %v3460 = vpop.permute.xlu0 %3459
        %3461 = vrot.lane.b32.xlu0 %v3438, 32
        %v3462 = vpop.permute.xlu0 %3461
        %vm3471 = vcmask 523520
        %3472 = vst.msk [vmem:[#allocation4] sm:$0xff] %vm3471, %v3448
        %3473 = vst.msk [vmem:[#allocation4 + $0x8] sm:$0xff] %vm3471, %v3450
        %3474 = vst.msk [vmem:[#allocation4 + $0x10] sm:$0xff] %vm3471, %v3452
        %3475 = vst.msk [vmem:[#allocation4 + $0x18] sm:$0xff] %vm3471, %v3454
        %3476 = vst.msk [vmem:[#allocation4 + $0x20] sm:$0xff] %vm3471, %v3456
        %3477 = vst.msk [vmem:[#allocation4 + $0x28] sm:$0xff] %vm3471, %v3458
        %3478 = vst.msk [vmem:[#allocation4 + $0x30] sm:$0xff] %vm3471, %v3460
        %3479 = vst.msk [vmem:[#allocation4 + $0x38] sm:$0xff] %vm3471, %v3462
        %v3480 = vld [vmem:[#allocation2] sm:$0xff]
        %v3481 = vld [vmem:[#allocation2 + $0x8] sm:$0xff]
        %v3482 = vld [vmem:[#allocation2 + $0x10] sm:$0xff]
        %v3483 = vld [vmem:[#allocation2 + $0x18] sm:$0xff]
        %v3484 = vld [vmem:[#allocation2 + $0x20] sm:$0xff]
        %v3485 = vld [vmem:[#allocation2 + $0x28] sm:$0xff]
        %v3486 = vld [vmem:[#allocation2 + $0x30] sm:$0xff]
        %v3487 = vld [vmem:[#allocation2 + $0x38] sm:$0xff]
        %v3488 = vld [vmem:[#allocation2 + $0x40] sm:$0xff]
        %v3489 = vld [vmem:[#allocation2 + $0x48] sm:$0xff]
        %v3490 = vld [vmem:[#allocation2 + $0x50] sm:$0xff]
        %v3491 = vld [vmem:[#allocation2 + $0x58] sm:$0xff]
        %v3492 = vld [vmem:[#allocation2 + $0x60] sm:$0xff]
        %v3493 = vld [vmem:[#allocation2 + $0x68] sm:$0xff]
        %v3494 = vld [vmem:[#allocation2 + $0x70] sm:$0xff]
        %v3495 = vld [vmem:[#allocation2 + $0x78] sm:$0xff]
        %v3496 = vld [vmem:[#allocation3] sm:$0xff]
        %v3497 = vld [vmem:[#allocation3 + $0x8] sm:$0xff]
        %v3498 = vld [vmem:[#allocation3 + $0x10] sm:$0xff]
        %v3499 = vld [vmem:[#allocation3 + $0x18] sm:$0xff]
        %v3500 = vld [vmem:[#allocation3 + $0x20] sm:$0xff]
        %v3501 = vld [vmem:[#allocation3 + $0x28] sm:$0xff]
        %v3502 = vld [vmem:[#allocation3 + $0x30] sm:$0xff]
        %v3503 = vld [vmem:[#allocation3 + $0x38] sm:$0xff]
        %v3504 = vld [vmem:[#allocation3 + $0x40] sm:$0xff]
        %v3505 = vld [vmem:[#allocation3 + $0x48] sm:$0xff]
        %v3506 = vld [vmem:[#allocation3 + $0x50] sm:$0xff]
        %v3507 = vld [vmem:[#allocation3 + $0x58] sm:$0xff]
        %v3508 = vld [vmem:[#allocation3 + $0x60] sm:$0xff]
        %v3509 = vld [vmem:[#allocation3 + $0x68] sm:$0xff]
        %v3510 = vld [vmem:[#allocation3 + $0x70] sm:$0xff]
        %v3511 = vld [vmem:[#allocation3 + $0x78] sm:$0xff]
        %3512 = vrot.lane.b32.xlu0 %v2130, 64
        %v3513 = vpop.permute.xlu0 %3512
        %3514 = vrot.lane.b32.xlu0 %v2131, 64
        %v3515 = vpop.permute.xlu0 %3514
        %3516 = vrot.lane.b32.xlu0 %v2132, 64
        %v3517 = vpop.permute.xlu0 %3516
        %3518 = vrot.lane.b32.xlu0 %v2133, 64
        %v3519 = vpop.permute.xlu0 %3518
        %3520 = vrot.lane.b32.xlu0 %v2134, 64
        %v3521 = vpop.permute.xlu0 %3520
        %3522 = vrot.lane.b32.xlu0 %v2135, 64
        %v3523 = vpop.permute.xlu0 %3522
        %3524 = vrot.lane.b32.xlu0 %v2136, 64
        %v3525 = vpop.permute.xlu0 %3524
        %3526 = vrot.lane.b32.xlu0 %v2137, 64
        %v3527 = vpop.permute.xlu0 %3526
        %3544 = vrot.lane.b32.xlu0 %v3480, 64
        %v3545 = vpop.permute.xlu0 %3544
        %3546 = vrot.lane.b32.xlu0 %v3481, 64
        %v3547 = vpop.permute.xlu0 %3546
        %3548 = vrot.lane.b32.xlu0 %v3482, 64
        %v3549 = vpop.permute.xlu0 %3548
        %3550 = vrot.lane.b32.xlu0 %v3483, 64
        %v3551 = vpop.permute.xlu0 %3550
        %3552 = vrot.lane.b32.xlu0 %v3484, 64
        %v3553 = vpop.permute.xlu0 %3552
        %3554 = vrot.lane.b32.xlu0 %v3485, 64
        %v3555 = vpop.permute.xlu0 %3554
        %3556 = vrot.lane.b32.xlu0 %v3486, 64
        %v3557 = vpop.permute.xlu0 %3556
        %3558 = vrot.lane.b32.xlu0 %v3487, 64
        %v3559 = vpop.permute.xlu0 %3558
        %3560 = vrot.lane.b32.xlu0 %v3488, 64
        %v3561 = vpop.permute.xlu0 %3560
        %3562 = vrot.lane.b32.xlu0 %v3489, 64
        %v3563 = vpop.permute.xlu0 %3562
        %3564 = vrot.lane.b32.xlu0 %v3490, 64
        %v3565 = vpop.permute.xlu0 %3564
        %3566 = vrot.lane.b32.xlu0 %v3491, 64
        %v3567 = vpop.permute.xlu0 %3566
        %3568 = vrot.lane.b32.xlu0 %v3492, 64
        %v3569 = vpop.permute.xlu0 %3568
        %3570 = vrot.lane.b32.xlu0 %v3493, 64
        %v3571 = vpop.permute.xlu0 %3570
        %3572 = vrot.lane.b32.xlu0 %v3494, 64
        %v3573 = vpop.permute.xlu0 %3572
        %3574 = vrot.lane.b32.xlu0 %v3495, 64
        %v3575 = vpop.permute.xlu0 %3574
        %v3577 = vsel %vm2170, %v3513, 0
        %v3580 = vsel %vm2170, %v3515, 0
        %v3583 = vsel %vm2170, %v3517, 0
        %v3586 = vsel %vm2170, %v3519, 0
        %v3589 = vsel %vm2170, %v3521, 0
        %v3592 = vsel %vm2170, %v3523, 0
        %v3595 = vsel %vm2170, %v3525, 0
        %v3598 = vsel %vm2170, %v3527, 0
        %v3601 = vsel %vm2170, %v3545, 0
        %v3604 = vsel %vm2170, %v3547, 0
        %v3607 = vsel %vm2170, %v3549, 0
        %v3610 = vsel %vm2170, %v3551, 0
        %v3613 = vsel %vm2170, %v3553, 0
        %v3616 = vsel %vm2170, %v3555, 0
        %v3619 = vsel %vm2170, %v3557, 0
        %v3622 = vsel %vm2170, %v3559, 0
        %v3625 = vsel %vm2170, %v3561, 0
        %v3628 = vsel %vm2170, %v3563, 0
        %v3631 = vsel %vm2170, %v3565, 0
        %v3634 = vsel %vm2170, %v3567, 0
        %v3637 = vsel %vm2170, %v3569, 0
        %v3640 = vsel %vm2170, %v3571, 0
        %v3643 = vsel %vm2170, %v3573, 0
        %v3646 = vsel %vm2170, %v3575, 0
        %3648 = vmatprep.subr.bf16.mxu0 0
        %3649 = vmatpush1.bf16.xpose.msra.mxu0 %v3601
        %3650 = vmatprep.subr.bf16.mxu0 0
        %3651 = vmatpush1.bf16.xpose.msra.mxu0 %v3604
        %3652 = vmatprep.subr.bf16.mxu0 0
        %3653 = vmatpush1.bf16.xpose.msra.mxu0 %v3607
        %3654 = vmatprep.subr.bf16.mxu0 0
        %3655 = vmatpush1.bf16.xpose.msra.mxu0 %v3610
        %3656 = vmatprep.subr.bf16.mxu0 0
        %3657 = vmatpush1.bf16.xpose.msra.mxu0 %v3613
        %3658 = vmatprep.subr.bf16.mxu0 0
        %3659 = vmatpush1.bf16.xpose.msra.mxu0 %v3616
        %3660 = vmatprep.subr.bf16.mxu0 0
        %3661 = vmatpush1.bf16.xpose.msra.mxu0 %v3619
        %3662 = vmatprep.subr.bf16.mxu0 0
        %3663 = vmatpush1.bf16.xpose.msra.mxu0 %v3622
        %3664 = vmatprep.subr.bf16.mxu0 0
        %3665 = vmatpush1.bf16.xpose.msra.mxu0 %v3625
        %3666 = vmatprep.subr.bf16.mxu0 0
        %3667 = vmatpush1.bf16.xpose.msra.mxu0 %v3628
        %3668 = vmatprep.subr.bf16.mxu0 0
        %3669 = vmatpush1.bf16.xpose.msra.mxu0 %v3631
        %3670 = vmatprep.subr.bf16.mxu0 0
        %3671 = vmatpush1.bf16.xpose.msra.mxu0 %v3634
        %3672 = vmatprep.subr.bf16.mxu0 0
        %3673 = vmatpush1.bf16.xpose.msra.mxu0 %v3637
        %3674 = vmatprep.subr.bf16.mxu0 0
        %3675 = vmatpush1.bf16.xpose.msra.mxu0 %v3640
        %3676 = vmatprep.subr.bf16.mxu0 0
        %3677 = vmatpush1.bf16.xpose.msra.mxu0 %v3643
        %3678 = vmatprep.subr.bf16.mxu0 0
        %3679 = vmatpush1.bf16.xpose.msra.mxu0 %v3646
        %3680 = vmatprep.mubr.bf16.mxu0 0
        %3681 = vmatmul.mubr.bf16.gmra.mrb[0].mxu0 %v3577
        %v3682 = vpop.f32.mrb[0].mxu0
        %v3683 = vadd.f32 0.0, %v3682
        %v3684 = vpop.f32.mrb[0].mxu0
        %v3685 = vadd.f32 0.0, %v3684
        %v3686 = vpop.f32.mrb[0].mxu0
        %v3687 = vadd.f32 0.0, %v3686
        %v3688 = vpop.f32.mrb[0].mxu0
        %v3689 = vadd.f32 0.0, %v3688
        %3690 = vmatprep.mubr.bf16.mxu0 0
        %3691 = vmatmul.mubr.bf16.gmra.mrb[0].mxu0 %v3580
        %v3692 = vpop.f32.mrb[0].mxu0
        %v3693 = vadd.f32 0.0, %v3692
        %v3694 = vpop.f32.mrb[0].mxu0
        %v3695 = vadd.f32 0.0, %v3694
        %v3696 = vpop.f32.mrb[0].mxu0
        %v3697 = vadd.f32 0.0, %v3696
        %v3698 = vpop.f32.mrb[0].mxu0
        %v3699 = vadd.f32 0.0, %v3698
        %3700 = vmatprep.mubr.bf16.mxu0 0
        %3701 = vmatmul.mubr.bf16.gmra.mrb[0].mxu0 %v3583
        %v3702 = vpop.f32.mrb[0].mxu0
        %v3703 = vadd.f32 0.0, %v3702
        %v3704 = vpop.f32.mrb[0].mxu0
        %v3705 = vadd.f32 0.0, %v3704
        %v3706 = vpop.f32.mrb[0].mxu0
        %v3707 = vadd.f32 0.0, %v3706
        %v3708 = vpop.f32.mrb[0].mxu0
        %v3709 = vadd.f32 0.0, %v3708
        %3710 = vmatprep.mubr.bf16.mxu0 0
        %3711 = vmatmul.mubr.bf16.gmra.mrb[0].mxu0 %v3586
        %v3712 = vpop.f32.mrb[0].mxu0
        %v3713 = vadd.f32 0.0, %v3712
        %v3714 = vpop.f32.mrb[0].mxu0
        %v3715 = vadd.f32 0.0, %v3714
        %v3716 = vpop.f32.mrb[0].mxu0
        %v3717 = vadd.f32 0.0, %v3716
        %v3718 = vpop.f32.mrb[0].mxu0
        %v3719 = vadd.f32 0.0, %v3718
        %3720 = vmatprep.mubr.bf16.mxu0 0
        %3721 = vmatmul.mubr.bf16.gmra.mrb[0].mxu0 %v3589
        %v3722 = vpop.f32.mrb[0].mxu0
        %v3723 = vadd.f32 0.0, %v3722
        %v3724 = vpop.f32.mrb[0].mxu0
        %v3725 = vadd.f32 0.0, %v3724
        %v3726 = vpop.f32.mrb[0].mxu0
        %v3727 = vadd.f32 0.0, %v3726
        %v3728 = vpop.f32.mrb[0].mxu0
        %v3729 = vadd.f32 0.0, %v3728
        %3730 = vmatprep.mubr.bf16.mxu0 0
        %3731 = vmatmul.mubr.bf16.gmra.mrb[0].mxu0 %v3592
        %v3732 = vpop.f32.mrb[0].mxu0
        %v3733 = vadd.f32 0.0, %v3732
        %v3734 = vpop.f32.mrb[0].mxu0
        %v3735 = vadd.f32 0.0, %v3734
        %v3736 = vpop.f32.mrb[0].mxu0
        %v3737 = vadd.f32 0.0, %v3736
        %v3738 = vpop.f32.mrb[0].mxu0
        %v3739 = vadd.f32 0.0, %v3738
        %3740 = vmatprep.mubr.bf16.mxu0 0
        %3741 = vmatmul.mubr.bf16.gmra.mrb[0].mxu0 %v3595
        %v3742 = vpop.f32.mrb[0].mxu0
        %v3743 = vadd.f32 0.0, %v3742
        %v3744 = vpop.f32.mrb[0].mxu0
        %v3745 = vadd.f32 0.0, %v3744
        %v3746 = vpop.f32.mrb[0].mxu0
        %v3747 = vadd.f32 0.0, %v3746
        %v3748 = vpop.f32.mrb[0].mxu0
        %v3749 = vadd.f32 0.0, %v3748
        %3750 = vmatprep.mubr.bf16.mxu0 0
        %3751 = vmatmul.mubr.bf16.gmra.mrb[0].mxu0 %v3598
        %v3752 = vpop.f32.mrb[0].mxu0
        %v3753 = vadd.f32 0.0, %v3752
        %v3754 = vpop.f32.mrb[0].mxu0
        %v3755 = vadd.f32 0.0, %v3754
        %v3756 = vpop.f32.mrb[0].mxu0
        %v3757 = vadd.f32 0.0, %v3756
        %v3758 = vpop.f32.mrb[0].mxu0
        %v3759 = vadd.f32 0.0, %v3758
        %3760 = vdwg.mxu0
        %v3761 = vmax.f32 %v3683, %v3685
        %3762 = vmax.xlane.f32.xlu0 %v3761
        %v3763 = vpop.xlane.xlu0 %3762
        %v3764 = vmax.f32 %v3687, %v3689
        %3765 = vmax.xlane.f32.xlu0 %v3764
        %v3766 = vpop.xlane.xlu0 %3765
        %v3767 = vmax.f32 %v3693, %v3695
        %3768 = vmax.xlane.f32.xlu0 %v3767
        %v3769 = vpop.xlane.xlu0 %3768
        %v3770 = vmax.f32 %v3697, %v3699
        %3771 = vmax.xlane.f32.xlu0 %v3770
        %v3772 = vpop.xlane.xlu0 %3771
        %v3773 = vmax.f32 %v3703, %v3705
        %3774 = vmax.xlane.f32.xlu0 %v3773
        %v3775 = vpop.xlane.xlu0 %3774
        %v3776 = vmax.f32 %v3707, %v3709
        %3777 = vmax.xlane.f32.xlu0 %v3776
        %v3778 = vpop.xlane.xlu0 %3777
        %v3779 = vmax.f32 %v3713, %v3715
        %3780 = vmax.xlane.f32.xlu0 %v3779
        %v3781 = vpop.xlane.xlu0 %3780
        %v3782 = vmax.f32 %v3717, %v3719
        %3783 = vmax.xlane.f32.xlu0 %v3782
        %v3784 = vpop.xlane.xlu0 %3783
        %v3785 = vmax.f32 %v3723, %v3725
        %3786 = vmax.xlane.f32.xlu0 %v3785
        %v3787 = vpop.xlane.xlu0 %3786
        %v3788 = vmax.f32 %v3727, %v3729
        %3789 = vmax.xlane.f32.xlu0 %v3788
        %v3790 = vpop.xlane.xlu0 %3789
        %v3791 = vmax.f32 %v3733, %v3735
        %3792 = vmax.xlane.f32.xlu0 %v3791
        %v3793 = vpop.xlane.xlu0 %3792
        %v3794 = vmax.f32 %v3737, %v3739
        %3795 = vmax.xlane.f32.xlu0 %v3794
        %v3796 = vpop.xlane.xlu0 %3795
        %v3797 = vmax.f32 %v3743, %v3745
        %3798 = vmax.xlane.f32.xlu0 %v3797
        %v3799 = vpop.xlane.xlu0 %3798
        %v3800 = vmax.f32 %v3747, %v3749
        %3801 = vmax.xlane.f32.xlu0 %v3800
        %v3802 = vpop.xlane.xlu0 %3801
        %v3803 = vmax.f32 %v3753, %v3755
        %3804 = vmax.xlane.f32.xlu0 %v3803
        %v3805 = vpop.xlane.xlu0 %3804
        %v3806 = vmax.f32 %v3757, %v3759
        %3807 = vmax.xlane.f32.xlu0 %v3806
        %v3808 = vpop.xlane.xlu0 %3807
        %v3809 = vsub.f32 %v3683, %v3763
        %v3810 = vsub.f32 %v3685, %v3763
        %v3811 = vsub.f32 %v3687, %v3766
        %v3812 = vsub.f32 %v3689, %v3766
        %v3813 = vsub.f32 %v3693, %v3769
        %v3814 = vsub.f32 %v3695, %v3769
        %v3815 = vsub.f32 %v3697, %v3772
        %v3816 = vsub.f32 %v3699, %v3772
        %v3817 = vsub.f32 %v3703, %v3775
        %v3818 = vsub.f32 %v3705, %v3775
        %v3819 = vsub.f32 %v3707, %v3778
        %v3820 = vsub.f32 %v3709, %v3778
        %v3821 = vsub.f32 %v3713, %v3781
        %v3822 = vsub.f32 %v3715, %v3781
        %v3823 = vsub.f32 %v3717, %v3784
        %v3824 = vsub.f32 %v3719, %v3784
        %v3825 = vsub.f32 %v3723, %v3787
        %v3826 = vsub.f32 %v3725, %v3787
        %v3827 = vsub.f32 %v3727, %v3790
        %v3828 = vsub.f32 %v3729, %v3790
        %v3829 = vsub.f32 %v3733, %v3793
        %v3830 = vsub.f32 %v3735, %v3793
        %v3831 = vsub.f32 %v3737, %v3796
        %v3832 = vsub.f32 %v3739, %v3796
        %v3833 = vsub.f32 %v3743, %v3799
        %v3834 = vsub.f32 %v3745, %v3799
        %v3835 = vsub.f32 %v3747, %v3802
        %v3836 = vsub.f32 %v3749, %v3802
        %v3837 = vsub.f32 %v3753, %v3805
        %v3838 = vsub.f32 %v3755, %v3805
        %v3839 = vsub.f32 %v3757, %v3808
        %v3840 = vsub.f32 %v3759, %v3808
        %v3841 = vmul.f32 %v3809, 1.442695
        %v3842 = vpow.pop %v3841
        %v3843 = vmul.f32 %v3810, 1.442695
        %v3844 = vpow.pop %v3843
        %v3845 = vmul.f32 %v3811, 1.442695
        %v3846 = vpow.pop %v3845
        %v3847 = vmul.f32 %v3812, 1.442695
        %v3848 = vpow.pop %v3847
        %v3849 = vmul.f32 %v3813, 1.442695
        %v3850 = vpow.pop %v3849
        %v3851 = vmul.f32 %v3814, 1.442695
        %v3852 = vpow.pop %v3851
        %v3853 = vmul.f32 %v3815, 1.442695
        %v3854 = vpow.pop %v3853
        %v3855 = vmul.f32 %v3816, 1.442695
        %v3856 = vpow.pop %v3855
        %v3857 = vmul.f32 %v3817, 1.442695
        %v3858 = vpow.pop %v3857
        %v3859 = vmul.f32 %v3818, 1.442695
        %v3860 = vpow.pop %v3859
        %v3861 = vmul.f32 %v3819, 1.442695
        %v3862 = vpow.pop %v3861
        %v3863 = vmul.f32 %v3820, 1.442695
        %v3864 = vpow.pop %v3863
        %v3865 = vmul.f32 %v3821, 1.442695
        %v3866 = vpow.pop %v3865
        %v3867 = vmul.f32 %v3822, 1.442695
        %v3868 = vpow.pop %v3867
        %v3869 = vmul.f32 %v3823, 1.442695
        %v3870 = vpow.pop %v3869
        %v3871 = vmul.f32 %v3824, 1.442695
        %v3872 = vpow.pop %v3871
        %v3873 = vmul.f32 %v3825, 1.442695
        %v3874 = vpow.pop %v3873
        %v3875 = vmul.f32 %v3826, 1.442695
        %v3876 = vpow.pop %v3875
        %v3877 = vmul.f32 %v3827, 1.442695
        %v3878 = vpow.pop %v3877
        %v3879 = vmul.f32 %v3828, 1.442695
        %v3880 = vpow.pop %v3879
        %v3881 = vmul.f32 %v3829, 1.442695
        %v3882 = vpow.pop %v3881
        %v3883 = vmul.f32 %v3830, 1.442695
        %v3884 = vpow.pop %v3883
        %v3885 = vmul.f32 %v3831, 1.442695
        %v3886 = vpow.pop %v3885
        %v3887 = vmul.f32 %v3832, 1.442695
        %v3888 = vpow.pop %v3887
        %v3889 = vmul.f32 %v3833, 1.442695
        %v3890 = vpow.pop %v3889
        %v3891 = vmul.f32 %v3834, 1.442695
        %v3892 = vpow.pop %v3891
        %v3893 = vmul.f32 %v3835, 1.442695
        %v3894 = vpow.pop %v3893
        %v3895 = vmul.f32 %v3836, 1.442695
        %v3896 = vpow.pop %v3895
        %v3897 = vmul.f32 %v3837, 1.442695
        %v3898 = vpow.pop %v3897
        %v3899 = vmul.f32 %v3838, 1.442695
        %v3900 = vpow.pop %v3899
        %v3901 = vmul.f32 %v3839, 1.442695
        %v3902 = vpow.pop %v3901
        %v3903 = vmul.f32 %v3840, 1.442695
        %v3904 = vpow.pop %v3903
        %v3905 = vadd.f32 %v3842, %v3844
        %3906 = vadd.xlane.f32.xlu0 %v3905
        %v3907 = vpop.xlane.xlu0 %3906
        %v3908 = vadd.f32 %v3846, %v3848
        %3909 = vadd.xlane.f32.xlu0 %v3908
        %v3910 = vpop.xlane.xlu0 %3909
        %v3911 = vadd.f32 %v3850, %v3852
        %3912 = vadd.xlane.f32.xlu0 %v3911
        %v3913 = vpop.xlane.xlu0 %3912
        %v3914 = vadd.f32 %v3854, %v3856
        %3915 = vadd.xlane.f32.xlu0 %v3914
        %v3916 = vpop.xlane.xlu0 %3915
        %v3917 = vadd.f32 %v3858, %v3860
        %3918 = vadd.xlane.f32.xlu0 %v3917
        %v3919 = vpop.xlane.xlu0 %3918
        %v3920 = vadd.f32 %v3862, %v3864
        %3921 = vadd.xlane.f32.xlu0 %v3920
        %v3922 = vpop.xlane.xlu0 %3921
        %v3923 = vadd.f32 %v3866, %v3868
        %3924 = vadd.xlane.f32.xlu0 %v3923
        %v3925 = vpop.xlane.xlu0 %3924
        %v3926 = vadd.f32 %v3870, %v3872
        %3927 = vadd.xlane.f32.xlu0 %v3926
        %v3928 = vpop.xlane.xlu0 %3927
        %v3929 = vadd.f32 %v3874, %v3876
        %3930 = vadd.xlane.f32.xlu0 %v3929
        %v3931 = vpop.xlane.xlu0 %3930
        %v3932 = vadd.f32 %v3878, %v3880
        %3933 = vadd.xlane.f32.xlu0 %v3932
        %v3934 = vpop.xlane.xlu0 %3933
        %v3935 = vadd.f32 %v3882, %v3884
        %3936 = vadd.xlane.f32.xlu0 %v3935
        %v3937 = vpop.xlane.xlu0 %3936
        %v3938 = vadd.f32 %v3886, %v3888
        %3939 = vadd.xlane.f32.xlu0 %v3938
        %v3940 = vpop.xlane.xlu0 %3939
        %v3941 = vadd.f32 %v3890, %v3892
        %3942 = vadd.xlane.f32.xlu0 %v3941
        %v3943 = vpop.xlane.xlu0 %3942
        %v3944 = vadd.f32 %v3894, %v3896
        %3945 = vadd.xlane.f32.xlu0 %v3944
        %v3946 = vpop.xlane.xlu0 %3945
        %v3947 = vadd.f32 %v3898, %v3900
        %3948 = vadd.xlane.f32.xlu0 %v3947
        %v3949 = vpop.xlane.xlu0 %3948
        %v3950 = vadd.f32 %v3902, %v3904
        %3951 = vadd.xlane.f32.xlu0 %v3950
        %v3952 = vpop.xlane.xlu0 %3951
        %v3953 = vrcp.pop %v3907
        %v3954 = vrcp.pop %v3910
        %v3955 = vrcp.pop %v3913
        %v3956 = vrcp.pop %v3916
        %v3957 = vrcp.pop %v3919
        %v3958 = vrcp.pop %v3922
        %v3959 = vrcp.pop %v3925
        %v3960 = vrcp.pop %v3928
        %v3961 = vrcp.pop %v3931
        %v3962 = vrcp.pop %v3934
        %v3963 = vrcp.pop %v3937
        %v3964 = vrcp.pop %v3940
        %v3965 = vrcp.pop %v3943
        %v3966 = vrcp.pop %v3946
        %v3967 = vrcp.pop %v3949
        %v3968 = vrcp.pop %v3952
        %v3969 = vmul.f32 %v3842, %v3953
        %v3970 = vmul.f32 %v3844, %v3953
        %v3971 = vmul.f32 %v3846, %v3954
        %v3972 = vmul.f32 %v3848, %v3954
        %v3973 = vmul.f32 %v3850, %v3955
        %v3974 = vmul.f32 %v3852, %v3955
        %v3975 = vmul.f32 %v3854, %v3956
        %v3976 = vmul.f32 %v3856, %v3956
        %v3977 = vmul.f32 %v3858, %v3957
        %v3978 = vmul.f32 %v3860, %v3957
        %v3979 = vmul.f32 %v3862, %v3958
        %v3980 = vmul.f32 %v3864, %v3958
        %v3981 = vmul.f32 %v3866, %v3959
        %v3982 = vmul.f32 %v3868, %v3959
        %v3983 = vmul.f32 %v3870, %v3960
        %v3984 = vmul.f32 %v3872, %v3960
        %v3985 = vmul.f32 %v3874, %v3961
        %v3986 = vmul.f32 %v3876, %v3961
        %v3987 = vmul.f32 %v3878, %v3962
        %v3988 = vmul.f32 %v3880, %v3962
        %v3989 = vmul.f32 %v3882, %v3963
        %v3990 = vmul.f32 %v3884, %v3963
        %v3991 = vmul.f32 %v3886, %v3964
        %v3992 = vmul.f32 %v3888, %v3964
        %v3993 = vmul.f32 %v3890, %v3965
        %v3994 = vmul.f32 %v3892, %v3965
        %v3995 = vmul.f32 %v3894, %v3966
        %v3996 = vmul.f32 %v3896, %v3966
        %v3997 = vmul.f32 %v3898, %v3967
        %v3998 = vmul.f32 %v3900, %v3967
        %v3999 = vmul.f32 %v3902, %v3968
        %v4000 = vmul.f32 %v3904, %v3968
        %v4001 = vpack.c.bf16 %v3971, %v3969
        %v4002 = vpack.c.bf16 %v3972, %v3970
        %v4003 = vpack.c.bf16 %v3975, %v3973
        %v4004 = vpack.c.bf16 %v3976, %v3974
        %v4005 = vpack.c.bf16 %v3979, %v3977
        %v4006 = vpack.c.bf16 %v3980, %v3978
        %v4007 = vpack.c.bf16 %v3983, %v3981
        %v4008 = vpack.c.bf16 %v3984, %v3982
        %v4009 = vpack.c.bf16 %v3987, %v3985
        %v4010 = vpack.c.bf16 %v3988, %v3986
        %v4011 = vpack.c.bf16 %v3991, %v3989
        %v4012 = vpack.c.bf16 %v3992, %v3990
        %v4013 = vpack.c.bf16 %v3995, %v3993
        %v4014 = vpack.c.bf16 %v3996, %v3994
        %v4015 = vpack.c.bf16 %v3999, %v3997
        %v4016 = vpack.c.bf16 %v4000, %v3998
        %4033 = vrot.lane.b32.xlu0 %v3496, 64
        %v4034 = vpop.permute.xlu0 %4033
        %4035 = vrot.lane.b32.xlu0 %v3497, 64
        %v4036 = vpop.permute.xlu0 %4035
        %4037 = vrot.lane.b32.xlu0 %v3498, 64
        %v4038 = vpop.permute.xlu0 %4037
        %4039 = vrot.lane.b32.xlu0 %v3499, 64
        %v4040 = vpop.permute.xlu0 %4039
        %4041 = vrot.lane.b32.xlu0 %v3500, 64
        %v4042 = vpop.permute.xlu0 %4041
        %4043 = vrot.lane.b32.xlu0 %v3501, 64
        %v4044 = vpop.permute.xlu0 %4043
        %4045 = vrot.lane.b32.xlu0 %v3502, 64
        %v4046 = vpop.permute.xlu0 %4045
        %4047 = vrot.lane.b32.xlu0 %v3503, 64
        %v4048 = vpop.permute.xlu0 %4047
        %4049 = vrot.lane.b32.xlu0 %v3504, 64
        %v4050 = vpop.permute.xlu0 %4049
        %4051 = vrot.lane.b32.xlu0 %v3505, 64
        %v4052 = vpop.permute.xlu0 %4051
        %4053 = vrot.lane.b32.xlu0 %v3506, 64
        %v4054 = vpop.permute.xlu0 %4053
        %4055 = vrot.lane.b32.xlu0 %v3507, 64
        %v4056 = vpop.permute.xlu0 %4055
        %4057 = vrot.lane.b32.xlu0 %v3508, 64
        %v4058 = vpop.permute.xlu0 %4057
        %4059 = vrot.lane.b32.xlu0 %v3509, 64
        %v4060 = vpop.permute.xlu0 %4059
        %4061 = vrot.lane.b32.xlu0 %v3510, 64
        %v4062 = vpop.permute.xlu0 %4061
        %4063 = vrot.lane.b32.xlu0 %v3511, 64
        %v4064 = vpop.permute.xlu0 %4063
        %4081 = vmatprep.subr.bf16.mxu0 0
        %4082 = vmatpush1.bf16.msra.mxu0 %v4034
        %4083 = vmatprep.subr.bf16.mxu0 0
        %4084 = vmatpush1.bf16.msra.mxu0 %v4036
        %4085 = vmatprep.subr.bf16.mxu0 0
        %4086 = vmatpush1.bf16.msra.mxu0 %v4038
        %4087 = vmatprep.subr.bf16.mxu0 0
        %4088 = vmatpush1.bf16.msra.mxu0 %v4040
        %4089 = vmatprep.subr.bf16.mxu0 0
        %4090 = vmatpush1.bf16.msra.mxu0 %v4042
        %4091 = vmatprep.subr.bf16.mxu0 0
        %4092 = vmatpush1.bf16.msra.mxu0 %v4044
        %4093 = vmatprep.subr.bf16.mxu0 0
        %4094 = vmatpush1.bf16.msra.mxu0 %v4046
        %4095 = vmatprep.subr.bf16.mxu0 0
        %4096 = vmatpush1.bf16.msra.mxu0 %v4048
        %4097 = vmatprep.subr.bf16.mxu0 0
        %4098 = vmatpush1.bf16.msra.mxu0 %v4050
        %4099 = vmatprep.subr.bf16.mxu0 0
        %4100 = vmatpush1.bf16.msra.mxu0 %v4052
        %4101 = vmatprep.subr.bf16.mxu0 0
        %4102 = vmatpush1.bf16.msra.mxu0 %v4054
        %4103 = vmatprep.subr.bf16.mxu0 0
        %4104 = vmatpush1.bf16.msra.mxu0 %v4056
        %4105 = vmatprep.subr.bf16.mxu0 0
        %4106 = vmatpush1.bf16.msra.mxu0 %v4058
        %4107 = vmatprep.subr.bf16.mxu0 0
        %4108 = vmatpush1.bf16.msra.mxu0 %v4060
        %4109 = vmatprep.subr.bf16.mxu0 0
        %4110 = vmatpush1.bf16.msra.mxu0 %v4062
        %4111 = vmatprep.subr.bf16.mxu0 0
        %4112 = vmatpush1.bf16.msra.mxu0 %v4064
        %4113 = vmatprep.mubr.bf16.mxu0 %v4002
        %4114 = vmatmul.mubr.bf16.gmra.mrb[0].mxu0 %v4001
        %v4115 = vpop.f32.mrb[0].mxu0
        %v4116 = vadd.f32 0.0, %v4115
        %v4117 = vpop.f32.mrb[0].mxu0
        %v4118 = vpop.f32.mrb[0].mxu0
        %v4119 = vadd.f32 0.0, %v4118
        %v4120 = vpop.f32.mrb[0].mxu0
        %4121 = vmatprep.mubr.bf16.mxu0 %v4004
        %4122 = vmatmul.mubr.bf16.gmra.mrb[0].mxu0 %v4003
        %v4123 = vpop.f32.mrb[0].mxu0
        %v4124 = vadd.f32 0.0, %v4123
        %v4125 = vpop.f32.mrb[0].mxu0
        %v4126 = vpop.f32.mrb[0].mxu0
        %v4127 = vadd.f32 0.0, %v4126
        %v4128 = vpop.f32.mrb[0].mxu0
        %4129 = vmatprep.mubr.bf16.mxu0 %v4006
        %4130 = vmatmul.mubr.bf16.gmra.mrb[0].mxu0 %v4005
        %v4131 = vpop.f32.mrb[0].mxu0
        %v4132 = vadd.f32 0.0, %v4131
        %v4133 = vpop.f32.mrb[0].mxu0
        %v4134 = vpop.f32.mrb[0].mxu0
        %v4135 = vadd.f32 0.0, %v4134
        %v4136 = vpop.f32.mrb[0].mxu0
        %4137 = vmatprep.mubr.bf16.mxu0 %v4008
        %4138 = vmatmul.mubr.bf16.gmra.mrb[0].mxu0 %v4007
        %v4139 = vpop.f32.mrb[0].mxu0
        %v4140 = vadd.f32 0.0, %v4139
        %v4141 = vpop.f32.mrb[0].mxu0
        %v4142 = vpop.f32.mrb[0].mxu0
        %v4143 = vadd.f32 0.0, %v4142
        %v4144 = vpop.f32.mrb[0].mxu0
        %4145 = vmatprep.mubr.bf16.mxu0 %v4010
        %4146 = vmatmul.mubr.bf16.gmra.mrb[0].mxu0 %v4009
        %v4147 = vpop.f32.mrb[0].mxu0
        %v4148 = vadd.f32 0.0, %v4147
        %v4149 = vpop.f32.mrb[0].mxu0
        %v4150 = vpop.f32.mrb[0].mxu0
        %v4151 = vadd.f32 0.0, %v4150
        %v4152 = vpop.f32.mrb[0].mxu0
        %4153 = vmatprep.mubr.bf16.mxu0 %v4012
        %4154 = vmatmul.mubr.bf16.gmra.mrb[0].mxu0 %v4011
        %v4155 = vpop.f32.mrb[0].mxu0
        %v4156 = vadd.f32 0.0, %v4155
        %v4157 = vpop.f32.mrb[0].mxu0
        %v4158 = vpop.f32.mrb[0].mxu0
        %v4159 = vadd.f32 0.0, %v4158
        %v4160 = vpop.f32.mrb[0].mxu0
        %4161 = vmatprep.mubr.bf16.mxu0 %v4014
        %4162 = vmatmul.mubr.bf16.gmra.mrb[0].mxu0 %v4013
        %v4163 = vpop.f32.mrb[0].mxu0
        %v4164 = vadd.f32 0.0, %v4163
        %v4165 = vpop.f32.mrb[0].mxu0
        %v4166 = vpop.f32.mrb[0].mxu0
        %v4167 = vadd.f32 0.0, %v4166
        %v4168 = vpop.f32.mrb[0].mxu0
        %4169 = vmatprep.mubr.bf16.mxu0 %v4016
        %4170 = vmatmul.mubr.bf16.gmra.mrb[0].mxu0 %v4015
        %v4171 = vpop.f32.mrb[0].mxu0
        %v4172 = vadd.f32 0.0, %v4171
        %v4173 = vpop.f32.mrb[0].mxu0
        %v4174 = vpop.f32.mrb[0].mxu0
        %v4175 = vadd.f32 0.0, %v4174
        %v4176 = vpop.f32.mrb[0].mxu0
        %4177 = vdwg.mxu0
        %v4178 = vpack.c.bf16 %v4119, %v4116
        %v4179 = vpack.c.bf16 %v4127, %v4124
        %v4180 = vpack.c.bf16 %v4135, %v4132
        %v4181 = vpack.c.bf16 %v4143, %v4140
        %v4182 = vpack.c.bf16 %v4151, %v4148
        %v4183 = vpack.c.bf16 %v4159, %v4156
        %v4184 = vpack.c.bf16 %v4167, %v4164
        %v4185 = vpack.c.bf16 %v4175, %v4172
        %4194 = vrot.lane.b32.xlu0 %v4178, 64
        %v4195 = vpop.permute.xlu0 %4194
        %4196 = vrot.lane.b32.xlu0 %v4179, 64
        %v4197 = vpop.permute.xlu0 %4196
        %4198 = vrot.lane.b32.xlu0 %v4180, 64
        %v4199 = vpop.permute.xlu0 %4198
        %4200 = vrot.lane.b32.xlu0 %v4181, 64
        %v4201 = vpop.permute.xlu0 %4200
        %4202 = vrot.lane.b32.xlu0 %v4182, 64
        %v4203 = vpop.permute.xlu0 %4202
        %4204 = vrot.lane.b32.xlu0 %v4183, 64
        %v4205 = vpop.permute.xlu0 %4204
        %4206 = vrot.lane.b32.xlu0 %v4184, 64
        %v4207 = vpop.permute.xlu0 %4206
        %4208 = vrot.lane.b32.xlu0 %v4185, 64
        %v4209 = vpop.permute.xlu0 %4208
        %vm4218 = vcmask 785920
        %4219 = vst.msk [vmem:[#allocation4] sm:$0xff] %vm4218, %v4195
        %4220 = vst.msk [vmem:[#allocation4 + $0x8] sm:$0xff] %vm4218, %v4197
        %4221 = vst.msk [vmem:[#allocation4 + $0x10] sm:$0xff] %vm4218, %v4199
        %4222 = vst.msk [vmem:[#allocation4 + $0x18] sm:$0xff] %vm4218, %v4201
        %4223 = vst.msk [vmem:[#allocation4 + $0x20] sm:$0xff] %vm4218, %v4203
        %4224 = vst.msk [vmem:[#allocation4 + $0x28] sm:$0xff] %vm4218, %v4205
        %4225 = vst.msk [vmem:[#allocation4 + $0x30] sm:$0xff] %vm4218, %v4207
        %4226 = vst.msk [vmem:[#allocation4 + $0x38] sm:$0xff] %vm4218, %v4209
        %v4227 = vld [vmem:[#allocation2] sm:$0xff]
        %v4228 = vld [vmem:[#allocation2 + $0x8] sm:$0xff]
        %v4229 = vld [vmem:[#allocation2 + $0x10] sm:$0xff]
        %v4230 = vld [vmem:[#allocation2 + $0x18] sm:$0xff]
        %v4231 = vld [vmem:[#allocation2 + $0x20] sm:$0xff]
        %v4232 = vld [vmem:[#allocation2 + $0x28] sm:$0xff]
        %v4233 = vld [vmem:[#allocation2 + $0x30] sm:$0xff]
        %v4234 = vld [vmem:[#allocation2 + $0x38] sm:$0xff]
        %v4235 = vld [vmem:[#allocation2 + $0x40] sm:$0xff]
        %v4236 = vld [vmem:[#allocation2 + $0x48] sm:$0xff]
        %v4237 = vld [vmem:[#allocation2 + $0x50] sm:$0xff]
        %v4238 = vld [vmem:[#allocation2 + $0x58] sm:$0xff]
        %v4239 = vld [vmem:[#allocation2 + $0x60] sm:$0xff]
        %v4240 = vld [vmem:[#allocation2 + $0x68] sm:$0xff]
        %v4241 = vld [vmem:[#allocation2 + $0x70] sm:$0xff]
        %v4242 = vld [vmem:[#allocation2 + $0x78] sm:$0xff]
        %v4243 = vld [vmem:[#allocation3] sm:$0xff]
        %v4244 = vld [vmem:[#allocation3 + $0x8] sm:$0xff]
        %v4245 = vld [vmem:[#allocation3 + $0x10] sm:$0xff]
        %v4246 = vld [vmem:[#allocation3 + $0x18] sm:$0xff]
        %v4247 = vld [vmem:[#allocation3 + $0x20] sm:$0xff]
        %v4248 = vld [vmem:[#allocation3 + $0x28] sm:$0xff]
        %v4249 = vld [vmem:[#allocation3 + $0x30] sm:$0xff]
        %v4250 = vld [vmem:[#allocation3 + $0x38] sm:$0xff]
        %v4251 = vld [vmem:[#allocation3 + $0x40] sm:$0xff]
        %v4252 = vld [vmem:[#allocation3 + $0x48] sm:$0xff]
        %v4253 = vld [vmem:[#allocation3 + $0x50] sm:$0xff]
        %v4254 = vld [vmem:[#allocation3 + $0x58] sm:$0xff]
        %v4255 = vld [vmem:[#allocation3 + $0x60] sm:$0xff]
        %v4256 = vld [vmem:[#allocation3 + $0x68] sm:$0xff]
        %v4257 = vld [vmem:[#allocation3 + $0x70] sm:$0xff]
        %v4258 = vld [vmem:[#allocation3 + $0x78] sm:$0xff]
        %4259 = vrot.lane.b32.xlu0 %v2130, 32
        %v4260 = vpop.permute.xlu0 %4259
        %4261 = vrot.lane.b32.xlu0 %v2131, 32
        %v4262 = vpop.permute.xlu0 %4261
        %4263 = vrot.lane.b32.xlu0 %v2132, 32
        %v4264 = vpop.permute.xlu0 %4263
        %4265 = vrot.lane.b32.xlu0 %v2133, 32
        %v4266 = vpop.permute.xlu0 %4265
        %4267 = vrot.lane.b32.xlu0 %v2134, 32
        %v4268 = vpop.permute.xlu0 %4267
        %4269 = vrot.lane.b32.xlu0 %v2135, 32
        %v4270 = vpop.permute.xlu0 %4269
        %4271 = vrot.lane.b32.xlu0 %v2136, 32
        %v4272 = vpop.permute.xlu0 %4271
        %4273 = vrot.lane.b32.xlu0 %v2137, 32
        %v4274 = vpop.permute.xlu0 %4273
        %4291 = vrot.lane.b32.xlu0 %v4227, 32
        %v4292 = vpop.permute.xlu0 %4291
        %4293 = vrot.lane.b32.xlu0 %v4228, 32
        %v4294 = vpop.permute.xlu0 %4293
        %4295 = vrot.lane.b32.xlu0 %v4229, 32
        %v4296 = vpop.permute.xlu0 %4295
        %4297 = vrot.lane.b32.xlu0 %v4230, 32
        %v4298 = vpop.permute.xlu0 %4297
        %4299 = vrot.lane.b32.xlu0 %v4231, 32
        %v4300 = vpop.permute.xlu0 %4299
        %4301 = vrot.lane.b32.xlu0 %v4232, 32
        %v4302 = vpop.permute.xlu0 %4301
        %4303 = vrot.lane.b32.xlu0 %v4233, 32
        %v4304 = vpop.permute.xlu0 %4303
        %4305 = vrot.lane.b32.xlu0 %v4234, 32
        %v4306 = vpop.permute.xlu0 %4305
        %4307 = vrot.lane.b32.xlu0 %v4235, 32
        %v4308 = vpop.permute.xlu0 %4307
        %4309 = vrot.lane.b32.xlu0 %v4236, 32
        %v4310 = vpop.permute.xlu0 %4309
        %4311 = vrot.lane.b32.xlu0 %v4237, 32
        %v4312 = vpop.permute.xlu0 %4311
        %4313 = vrot.lane.b32.xlu0 %v4238, 32
        %v4314 = vpop.permute.xlu0 %4313
        %4315 = vrot.lane.b32.xlu0 %v4239, 32
        %v4316 = vpop.permute.xlu0 %4315
        %4317 = vrot.lane.b32.xlu0 %v4240, 32
        %v4318 = vpop.permute.xlu0 %4317
        %4319 = vrot.lane.b32.xlu0 %v4241, 32
        %v4320 = vpop.permute.xlu0 %4319
        %4321 = vrot.lane.b32.xlu0 %v4242, 32
        %v4322 = vpop.permute.xlu0 %4321
        %v4324 = vsel %vm2170, %v4260, 0
        %v4327 = vsel %vm2170, %v4262, 0
        %v4330 = vsel %vm2170, %v4264, 0
        %v4333 = vsel %vm2170, %v4266, 0
        %v4336 = vsel %vm2170, %v4268, 0
        %v4339 = vsel %vm2170, %v4270, 0
        %v4342 = vsel %vm2170, %v4272, 0
        %v4345 = vsel %vm2170, %v4274, 0
        %v4348 = vsel %vm2170, %v4292, 0
        %v4351 = vsel %vm2170, %v4294, 0
        %v4354 = vsel %vm2170, %v4296, 0
        %v4357 = vsel %vm2170, %v4298, 0
        %v4360 = vsel %vm2170, %v4300, 0
        %v4363 = vsel %vm2170, %v4302, 0
        %v4366 = vsel %vm2170, %v4304, 0
        %v4369 = vsel %vm2170, %v4306, 0
        %v4372 = vsel %vm2170, %v4308, 0
        %v4375 = vsel %vm2170, %v4310, 0
        %v4378 = vsel %vm2170, %v4312, 0
        %v4381 = vsel %vm2170, %v4314, 0
        %v4384 = vsel %vm2170, %v4316, 0
        %v4387 = vsel %vm2170, %v4318, 0
        %v4390 = vsel %vm2170, %v4320, 0
        %v4393 = vsel %vm2170, %v4322, 0
        %4395 = vmatprep.subr.bf16.mxu0 0
        %4396 = vmatpush1.bf16.xpose.msra.mxu0 %v4348
        %4397 = vmatprep.subr.bf16.mxu0 0
        %4398 = vmatpush1.bf16.xpose.msra.mxu0 %v4351
        %4399 = vmatprep.subr.bf16.mxu0 0
        %4400 = vmatpush1.bf16.xpose.msra.mxu0 %v4354
        %4401 = vmatprep.subr.bf16.mxu0 0
        %4402 = vmatpush1.bf16.xpose.msra.mxu0 %v4357
        %4403 = vmatprep.subr.bf16.mxu0 0
        %4404 = vmatpush1.bf16.xpose.msra.mxu0 %v4360
        %4405 = vmatprep.subr.bf16.mxu0 0
        %4406 = vmatpush1.bf16.xpose.msra.mxu0 %v4363
        %4407 = vmatprep.subr.bf16.mxu0 0
        %4408 = vmatpush1.bf16.xpose.msra.mxu0 %v4366
        %4409 = vmatprep.subr.bf16.mxu0 0
        %4410 = vmatpush1.bf16.xpose.msra.mxu0 %v4369
        %4411 = vmatprep.subr.bf16.mxu0 0
        %4412 = vmatpush1.bf16.xpose.msra.mxu0 %v4372
        %4413 = vmatprep.subr.bf16.mxu0 0
        %4414 = vmatpush1.bf16.xpose.msra.mxu0 %v4375
        %4415 = vmatprep.subr.bf16.mxu0 0
        %4416 = vmatpush1.bf16.xpose.msra.mxu0 %v4378
        %4417 = vmatprep.subr.bf16.mxu0 0
        %4418 = vmatpush1.bf16.xpose.msra.mxu0 %v4381
        %4419 = vmatprep.subr.bf16.mxu0 0
        %4420 = vmatpush1.bf16.xpose.msra.mxu0 %v4384
        %4421 = vmatprep.subr.bf16.mxu0 0
        %4422 = vmatpush1.bf16.xpose.msra.mxu0 %v4387
        %4423 = vmatprep.subr.bf16.mxu0 0
        %4424 = vmatpush1.bf16.xpose.msra.mxu0 %v4390
        %4425 = vmatprep.subr.bf16.mxu0 0
        %4426 = vmatpush1.bf16.xpose.msra.mxu0 %v4393
        %4427 = vmatprep.mubr.bf16.mxu0 0
        %4428 = vmatmul.mubr.bf16.gmra.mrb[0].mxu0 %v4324
        %v4429 = vpop.f32.mrb[0].mxu0
        %v4430 = vadd.f32 0.0, %v4429
        %v4431 = vpop.f32.mrb[0].mxu0
        %v4432 = vadd.f32 0.0, %v4431
        %v4433 = vpop.f32.mrb[0].mxu0
        %v4434 = vadd.f32 0.0, %v4433
        %v4435 = vpop.f32.mrb[0].mxu0
        %v4436 = vadd.f32 0.0, %v4435
        %4437 = vmatprep.mubr.bf16.mxu0 0
        %4438 = vmatmul.mubr.bf16.gmra.mrb[0].mxu0 %v4327
        %v4439 = vpop.f32.mrb[0].mxu0
        %v4440 = vadd.f32 0.0, %v4439
        %v4441 = vpop.f32.mrb[0].mxu0
        %v4442 = vadd.f32 0.0, %v4441
        %v4443 = vpop.f32.mrb[0].mxu0
        %v4444 = vadd.f32 0.0, %v4443
        %v4445 = vpop.f32.mrb[0].mxu0
        %v4446 = vadd.f32 0.0, %v4445
        %4447 = vmatprep.mubr.bf16.mxu0 0
        %4448 = vmatmul.mubr.bf16.gmra.mrb[0].mxu0 %v4330
        %v4449 = vpop.f32.mrb[0].mxu0
        %v4450 = vadd.f32 0.0, %v4449
        %v4451 = vpop.f32.mrb[0].mxu0
        %v4452 = vadd.f32 0.0, %v4451
        %v4453 = vpop.f32.mrb[0].mxu0
        %v4454 = vadd.f32 0.0, %v4453
        %v4455 = vpop.f32.mrb[0].mxu0
        %v4456 = vadd.f32 0.0, %v4455
        %4457 = vmatprep.mubr.bf16.mxu0 0
        %4458 = vmatmul.mubr.bf16.gmra.mrb[0].mxu0 %v4333
        %v4459 = vpop.f32.mrb[0].mxu0
        %v4460 = vadd.f32 0.0, %v4459
        %v4461 = vpop.f32.mrb[0].mxu0
        %v4462 = vadd.f32 0.0, %v4461
        %v4463 = vpop.f32.mrb[0].mxu0
        %v4464 = vadd.f32 0.0, %v4463
        %v4465 = vpop.f32.mrb[0].mxu0
        %v4466 = vadd.f32 0.0, %v4465
        %4467 = vmatprep.mubr.bf16.mxu0 0
        %4468 = vmatmul.mubr.bf16.gmra.mrb[0].mxu0 %v4336
        %v4469 = vpop.f32.mrb[0].mxu0
        %v4470 = vadd.f32 0.0, %v4469
        %v4471 = vpop.f32.mrb[0].mxu0
        %v4472 = vadd.f32 0.0, %v4471
        %v4473 = vpop.f32.mrb[0].mxu0
        %v4474 = vadd.f32 0.0, %v4473
        %v4475 = vpop.f32.mrb[0].mxu0
        %v4476 = vadd.f32 0.0, %v4475
        %4477 = vmatprep.mubr.bf16.mxu0 0
        %4478 = vmatmul.mubr.bf16.gmra.mrb[0].mxu0 %v4339
        %v4479 = vpop.f32.mrb[0].mxu0
        %v4480 = vadd.f32 0.0, %v4479
        %v4481 = vpop.f32.mrb[0].mxu0
        %v4482 = vadd.f32 0.0, %v4481
        %v4483 = vpop.f32.mrb[0].mxu0
        %v4484 = vadd.f32 0.0, %v4483
        %v4485 = vpop.f32.mrb[0].mxu0
        %v4486 = vadd.f32 0.0, %v4485
        %4487 = vmatprep.mubr.bf16.mxu0 0
        %4488 = vmatmul.mubr.bf16.gmra.mrb[0].mxu0 %v4342
        %v4489 = vpop.f32.mrb[0].mxu0
        %v4490 = vadd.f32 0.0, %v4489
        %v4491 = vpop.f32.mrb[0].mxu0
        %v4492 = vadd.f32 0.0, %v4491
        %v4493 = vpop.f32.mrb[0].mxu0
        %v4494 = vadd.f32 0.0, %v4493
        %v4495 = vpop.f32.mrb[0].mxu0
        %v4496 = vadd.f32 0.0, %v4495
        %4497 = vmatprep.mubr.bf16.mxu0 0
        %4498 = vmatmul.mubr.bf16.gmra.mrb[0].mxu0 %v4345
        %v4499 = vpop.f32.mrb[0].mxu0
        %v4500 = vadd.f32 0.0, %v4499
        %v4501 = vpop.f32.mrb[0].mxu0
        %v4502 = vadd.f32 0.0, %v4501
        %v4503 = vpop.f32.mrb[0].mxu0
        %v4504 = vadd.f32 0.0, %v4503
        %v4505 = vpop.f32.mrb[0].mxu0
        %v4506 = vadd.f32 0.0, %v4505
        %4507 = vdwg.mxu0
        %v4508 = vmax.f32 %v4430, %v4432
        %4509 = vmax.xlane.f32.xlu0 %v4508
        %v4510 = vpop.xlane.xlu0 %4509
        %v4511 = vmax.f32 %v4434, %v4436
        %4512 = vmax.xlane.f32.xlu0 %v4511
        %v4513 = vpop.xlane.xlu0 %4512
        %v4514 = vmax.f32 %v4440, %v4442
        %4515 = vmax.xlane.f32.xlu0 %v4514
        %v4516 = vpop.xlane.xlu0 %4515
        %v4517 = vmax.f32 %v4444, %v4446
        %4518 = vmax.xlane.f32.xlu0 %v4517
        %v4519 = vpop.xlane.xlu0 %4518
        %v4520 = vmax.f32 %v4450, %v4452
        %4521 = vmax.xlane.f32.xlu0 %v4520
        %v4522 = vpop.xlane.xlu0 %4521
        %v4523 = vmax.f32 %v4454, %v4456
        %4524 = vmax.xlane.f32.xlu0 %v4523
        %v4525 = vpop.xlane.xlu0 %4524
        %v4526 = vmax.f32 %v4460, %v4462
        %4527 = vmax.xlane.f32.xlu0 %v4526
        %v4528 = vpop.xlane.xlu0 %4527
        %v4529 = vmax.f32 %v4464, %v4466
        %4530 = vmax.xlane.f32.xlu0 %v4529
        %v4531 = vpop.xlane.xlu0 %4530
        %v4532 = vmax.f32 %v4470, %v4472
        %4533 = vmax.xlane.f32.xlu0 %v4532
        %v4534 = vpop.xlane.xlu0 %4533
        %v4535 = vmax.f32 %v4474, %v4476
        %4536 = vmax.xlane.f32.xlu0 %v4535
        %v4537 = vpop.xlane.xlu0 %4536
        %v4538 = vmax.f32 %v4480, %v4482
        %4539 = vmax.xlane.f32.xlu0 %v4538
        %v4540 = vpop.xlane.xlu0 %4539
        %v4541 = vmax.f32 %v4484, %v4486
        %4542 = vmax.xlane.f32.xlu0 %v4541
        %v4543 = vpop.xlane.xlu0 %4542
        %v4544 = vmax.f32 %v4490, %v4492
        %4545 = vmax.xlane.f32.xlu0 %v4544
        %v4546 = vpop.xlane.xlu0 %4545
        %v4547 = vmax.f32 %v4494, %v4496
        %4548 = vmax.xlane.f32.xlu0 %v4547
        %v4549 = vpop.xlane.xlu0 %4548
        %v4550 = vmax.f32 %v4500, %v4502
        %4551 = vmax.xlane.f32.xlu0 %v4550
        %v4552 = vpop.xlane.xlu0 %4551
        %v4553 = vmax.f32 %v4504, %v4506
        %4554 = vmax.xlane.f32.xlu0 %v4553
        %v4555 = vpop.xlane.xlu0 %4554
        %v4556 = vsub.f32 %v4430, %v4510
        %v4557 = vsub.f32 %v4432, %v4510
        %v4558 = vsub.f32 %v4434, %v4513
        %v4559 = vsub.f32 %v4436, %v4513
        %v4560 = vsub.f32 %v4440, %v4516
        %v4561 = vsub.f32 %v4442, %v4516
        %v4562 = vsub.f32 %v4444, %v4519
        %v4563 = vsub.f32 %v4446, %v4519
        %v4564 = vsub.f32 %v4450, %v4522
        %v4565 = vsub.f32 %v4452, %v4522
        %v4566 = vsub.f32 %v4454, %v4525
        %v4567 = vsub.f32 %v4456, %v4525
        %v4568 = vsub.f32 %v4460, %v4528
        %v4569 = vsub.f32 %v4462, %v4528
        %v4570 = vsub.f32 %v4464, %v4531
        %v4571 = vsub.f32 %v4466, %v4531
        %v4572 = vsub.f32 %v4470, %v4534
        %v4573 = vsub.f32 %v4472, %v4534
        %v4574 = vsub.f32 %v4474, %v4537
        %v4575 = vsub.f32 %v4476, %v4537
        %v4576 = vsub.f32 %v4480, %v4540
        %v4577 = vsub.f32 %v4482, %v4540
        %v4578 = vsub.f32 %v4484, %v4543
        %v4579 = vsub.f32 %v4486, %v4543
        %v4580 = vsub.f32 %v4490, %v4546
        %v4581 = vsub.f32 %v4492, %v4546
        %v4582 = vsub.f32 %v4494, %v4549
        %v4583 = vsub.f32 %v4496, %v4549
        %v4584 = vsub.f32 %v4500, %v4552
        %v4585 = vsub.f32 %v4502, %v4552
        %v4586 = vsub.f32 %v4504, %v4555
        %v4587 = vsub.f32 %v4506, %v4555
        %v4588 = vmul.f32 %v4556, 1.442695
        %v4589 = vpow.pop %v4588
        %v4590 = vmul.f32 %v4557, 1.442695
        %v4591 = vpow.pop %v4590
        %v4592 = vmul.f32 %v4558, 1.442695
        %v4593 = vpow.pop %v4592
        %v4594 = vmul.f32 %v4559, 1.442695
        %v4595 = vpow.pop %v4594
        %v4596 = vmul.f32 %v4560, 1.442695
        %v4597 = vpow.pop %v4596
        %v4598 = vmul.f32 %v4561, 1.442695
        %v4599 = vpow.pop %v4598
        %v4600 = vmul.f32 %v4562, 1.442695
        %v4601 = vpow.pop %v4600
        %v4602 = vmul.f32 %v4563, 1.442695
        %v4603 = vpow.pop %v4602
        %v4604 = vmul.f32 %v4564, 1.442695
        %v4605 = vpow.pop %v4604
        %v4606 = vmul.f32 %v4565, 1.442695
        %v4607 = vpow.pop %v4606
        %v4608 = vmul.f32 %v4566, 1.442695
        %v4609 = vpow.pop %v4608
        %v4610 = vmul.f32 %v4567, 1.442695
        %v4611 = vpow.pop %v4610
        %v4612 = vmul.f32 %v4568, 1.442695
        %v4613 = vpow.pop %v4612
        %v4614 = vmul.f32 %v4569, 1.442695
        %v4615 = vpow.pop %v4614
        %v4616 = vmul.f32 %v4570, 1.442695
        %v4617 = vpow.pop %v4616
        %v4618 = vmul.f32 %v4571, 1.442695
        %v4619 = vpow.pop %v4618
        %v4620 = vmul.f32 %v4572, 1.442695
        %v4621 = vpow.pop %v4620
        %v4622 = vmul.f32 %v4573, 1.442695
        %v4623 = vpow.pop %v4622
        %v4624 = vmul.f32 %v4574, 1.442695
        %v4625 = vpow.pop %v4624
        %v4626 = vmul.f32 %v4575, 1.442695
        %v4627 = vpow.pop %v4626
        %v4628 = vmul.f32 %v4576, 1.442695
        %v4629 = vpow.pop %v4628
        %v4630 = vmul.f32 %v4577, 1.442695
        %v4631 = vpow.pop %v4630
        %v4632 = vmul.f32 %v4578, 1.442695
        %v4633 = vpow.pop %v4632
        %v4634 = vmul.f32 %v4579, 1.442695
        %v4635 = vpow.pop %v4634
        %v4636 = vmul.f32 %v4580, 1.442695
        %v4637 = vpow.pop %v4636
        %v4638 = vmul.f32 %v4581, 1.442695
        %v4639 = vpow.pop %v4638
        %v4640 = vmul.f32 %v4582, 1.442695
        %v4641 = vpow.pop %v4640
        %v4642 = vmul.f32 %v4583, 1.442695
        %v4643 = vpow.pop %v4642
        %v4644 = vmul.f32 %v4584, 1.442695
        %v4645 = vpow.pop %v4644
        %v4646 = vmul.f32 %v4585, 1.442695
        %v4647 = vpow.pop %v4646
        %v4648 = vmul.f32 %v4586, 1.442695
        %v4649 = vpow.pop %v4648
        %v4650 = vmul.f32 %v4587, 1.442695
        %v4651 = vpow.pop %v4650
        %v4652 = vadd.f32 %v4589, %v4591
        %4653 = vadd.xlane.f32.xlu0 %v4652
        %v4654 = vpop.xlane.xlu0 %4653
        %v4655 = vadd.f32 %v4593, %v4595
        %4656 = vadd.xlane.f32.xlu0 %v4655
        %v4657 = vpop.xlane.xlu0 %4656
        %v4658 = vadd.f32 %v4597, %v4599
        %4659 = vadd.xlane.f32.xlu0 %v4658
        %v4660 = vpop.xlane.xlu0 %4659
        %v4661 = vadd.f32 %v4601, %v4603
        %4662 = vadd.xlane.f32.xlu0 %v4661
        %v4663 = vpop.xlane.xlu0 %4662
        %v4664 = vadd.f32 %v4605, %v4607
        %4665 = vadd.xlane.f32.xlu0 %v4664
        %v4666 = vpop.xlane.xlu0 %4665
        %v4667 = vadd.f32 %v4609, %v4611
        %4668 = vadd.xlane.f32.xlu0 %v4667
        %v4669 = vpop.xlane.xlu0 %4668
        %v4670 = vadd.f32 %v4613, %v4615
        %4671 = vadd.xlane.f32.xlu0 %v4670
        %v4672 = vpop.xlane.xlu0 %4671
        %v4673 = vadd.f32 %v4617, %v4619
        %4674 = vadd.xlane.f32.xlu0 %v4673
        %v4675 = vpop.xlane.xlu0 %4674
        %v4676 = vadd.f32 %v4621, %v4623
        %4677 = vadd.xlane.f32.xlu0 %v4676
        %v4678 = vpop.xlane.xlu0 %4677
        %v4679 = vadd.f32 %v4625, %v4627
        %4680 = vadd.xlane.f32.xlu0 %v4679
        %v4681 = vpop.xlane.xlu0 %4680
        %v4682 = vadd.f32 %v4629, %v4631
        %4683 = vadd.xlane.f32.xlu0 %v4682
        %v4684 = vpop.xlane.xlu0 %4683
        %v4685 = vadd.f32 %v4633, %v4635
        %4686 = vadd.xlane.f32.xlu0 %v4685
        %v4687 = vpop.xlane.xlu0 %4686
        %v4688 = vadd.f32 %v4637, %v4639
        %4689 = vadd.xlane.f32.xlu0 %v4688
        %v4690 = vpop.xlane.xlu0 %4689
        %v4691 = vadd.f32 %v4641, %v4643
        %4692 = vadd.xlane.f32.xlu0 %v4691
        %v4693 = vpop.xlane.xlu0 %4692
        %v4694 = vadd.f32 %v4645, %v4647
        %4695 = vadd.xlane.f32.xlu0 %v4694
        %v4696 = vpop.xlane.xlu0 %4695
        %v4697 = vadd.f32 %v4649, %v4651
        %4698 = vadd.xlane.f32.xlu0 %v4697
        %v4699 = vpop.xlane.xlu0 %4698
        %v4700 = vrcp.pop %v4654
        %v4701 = vrcp.pop %v4657
        %v4702 = vrcp.pop %v4660
        %v4703 = vrcp.pop %v4663
        %v4704 = vrcp.pop %v4666
        %v4705 = vrcp.pop %v4669
        %v4706 = vrcp.pop %v4672
        %v4707 = vrcp.pop %v4675
        %v4708 = vrcp.pop %v4678
        %v4709 = vrcp.pop %v4681
        %v4710 = vrcp.pop %v4684
        %v4711 = vrcp.pop %v4687
        %v4712 = vrcp.pop %v4690
        %v4713 = vrcp.pop %v4693
        %v4714 = vrcp.pop %v4696
        %v4715 = vrcp.pop %v4699
        %v4716 = vmul.f32 %v4589, %v4700
        %v4717 = vmul.f32 %v4591, %v4700
        %v4718 = vmul.f32 %v4593, %v4701
        %v4719 = vmul.f32 %v4595, %v4701
        %v4720 = vmul.f32 %v4597, %v4702
        %v4721 = vmul.f32 %v4599, %v4702
        %v4722 = vmul.f32 %v4601, %v4703
        %v4723 = vmul.f32 %v4603, %v4703
        %v4724 = vmul.f32 %v4605, %v4704
        %v4725 = vmul.f32 %v4607, %v4704
        %v4726 = vmul.f32 %v4609, %v4705
        %v4727 = vmul.f32 %v4611, %v4705
        %v4728 = vmul.f32 %v4613, %v4706
        %v4729 = vmul.f32 %v4615, %v4706
        %v4730 = vmul.f32 %v4617, %v4707
        %v4731 = vmul.f32 %v4619, %v4707
        %v4732 = vmul.f32 %v4621, %v4708
        %v4733 = vmul.f32 %v4623, %v4708
        %v4734 = vmul.f32 %v4625, %v4709
        %v4735 = vmul.f32 %v4627, %v4709
        %v4736 = vmul.f32 %v4629, %v4710
        %v4737 = vmul.f32 %v4631, %v4710
        %v4738 = vmul.f32 %v4633, %v4711
        %v4739 = vmul.f32 %v4635, %v4711
        %v4740 = vmul.f32 %v4637, %v4712
        %v4741 = vmul.f32 %v4639, %v4712
        %v4742 = vmul.f32 %v4641, %v4713
        %v4743 = vmul.f32 %v4643, %v4713
        %v4744 = vmul.f32 %v4645, %v4714
        %v4745 = vmul.f32 %v4647, %v4714
        %v4746 = vmul.f32 %v4649, %v4715
        %v4747 = vmul.f32 %v4651, %v4715
        %v4748 = vpack.c.bf16 %v4718, %v4716
        %v4749 = vpack.c.bf16 %v4719, %v4717
        %v4750 = vpack.c.bf16 %v4722, %v4720
        %v4751 = vpack.c.bf16 %v4723, %v4721
        %v4752 = vpack.c.bf16 %v4726, %v4724
        %v4753 = vpack.c.bf16 %v4727, %v4725
        %v4754 = vpack.c.bf16 %v4730, %v4728
        %v4755 = vpack.c.bf16 %v4731, %v4729
        %v4756 = vpack.c.bf16 %v4734, %v4732
        %v4757 = vpack.c.bf16 %v4735, %v4733
        %v4758 = vpack.c.bf16 %v4738, %v4736
        %v4759 = vpack.c.bf16 %v4739, %v4737
        %v4760 = vpack.c.bf16 %v4742, %v4740
        %v4761 = vpack.c.bf16 %v4743, %v4741
        %v4762 = vpack.c.bf16 %v4746, %v4744
        %v4763 = vpack.c.bf16 %v4747, %v4745
        %4780 = vrot.lane.b32.xlu0 %v4243, 32
        %v4781 = vpop.permute.xlu0 %4780
        %4782 = vrot.lane.b32.xlu0 %v4244, 32
        %v4783 = vpop.permute.xlu0 %4782
        %4784 = vrot.lane.b32.xlu0 %v4245, 32
        %v4785 = vpop.permute.xlu0 %4784
        %4786 = vrot.lane.b32.xlu0 %v4246, 32
        %v4787 = vpop.permute.xlu0 %4786
        %4788 = vrot.lane.b32.xlu0 %v4247, 32
        %v4789 = vpop.permute.xlu0 %4788
        %4790 = vrot.lane.b32.xlu0 %v4248, 32
        %v4791 = vpop.permute.xlu0 %4790
        %4792 = vrot.lane.b32.xlu0 %v4249, 32
        %v4793 = vpop.permute.xlu0 %4792
        %4794 = vrot.lane.b32.xlu0 %v4250, 32
        %v4795 = vpop.permute.xlu0 %4794
        %4796 = vrot.lane.b32.xlu0 %v4251, 32
        %v4797 = vpop.permute.xlu0 %4796
        %4798 = vrot.lane.b32.xlu0 %v4252, 32
        %v4799 = vpop.permute.xlu0 %4798
        %4800 = vrot.lane.b32.xlu0 %v4253, 32
        %v4801 = vpop.permute.xlu0 %4800
        %4802 = vrot.lane.b32.xlu0 %v4254, 32
        %v4803 = vpop.permute.xlu0 %4802
        %4804 = vrot.lane.b32.xlu0 %v4255, 32
        %v4805 = vpop.permute.xlu0 %4804
        %4806 = vrot.lane.b32.xlu0 %v4256, 32
        %v4807 = vpop.permute.xlu0 %4806
        %4808 = vrot.lane.b32.xlu0 %v4257, 32
        %v4809 = vpop.permute.xlu0 %4808
        %4810 = vrot.lane.b32.xlu0 %v4258, 32
        %v4811 = vpop.permute.xlu0 %4810
        %4828 = vmatprep.subr.bf16.mxu0 0
        %4829 = vmatpush1.bf16.msra.mxu0 %v4781
        %4830 = vmatprep.subr.bf16.mxu0 0
        %4831 = vmatpush1.bf16.msra.mxu0 %v4783
        %4832 = vmatprep.subr.bf16.mxu0 0
        %4833 = vmatpush1.bf16.msra.mxu0 %v4785
        %4834 = vmatprep.subr.bf16.mxu0 0
        %4835 = vmatpush1.bf16.msra.mxu0 %v4787
        %4836 = vmatprep.subr.bf16.mxu0 0
        %4837 = vmatpush1.bf16.msra.mxu0 %v4789
        %4838 = vmatprep.subr.bf16.mxu0 0
        %4839 = vmatpush1.bf16.msra.mxu0 %v4791
        %4840 = vmatprep.subr.bf16.mxu0 0
        %4841 = vmatpush1.bf16.msra.mxu0 %v4793
        %4842 = vmatprep.subr.bf16.mxu0 0
        %4843 = vmatpush1.bf16.msra.mxu0 %v4795
        %4844 = vmatprep.subr.bf16.mxu0 0
        %4845 = vmatpush1.bf16.msra.mxu0 %v4797
        %4846 = vmatprep.subr.bf16.mxu0 0
        %4847 = vmatpush1.bf16.msra.mxu0 %v4799
        %4848 = vmatprep.subr.bf16.mxu0 0
        %4849 = vmatpush1.bf16.msra.mxu0 %v4801
        %4850 = vmatprep.subr.bf16.mxu0 0
        %4851 = vmatpush1.bf16.msra.mxu0 %v4803
        %4852 = vmatprep.subr.bf16.mxu0 0
        %4853 = vmatpush1.bf16.msra.mxu0 %v4805
        %4854 = vmatprep.subr.bf16.mxu0 0
        %4855 = vmatpush1.bf16.msra.mxu0 %v4807
        %4856 = vmatprep.subr.bf16.mxu0 0
        %4857 = vmatpush1.bf16.msra.mxu0 %v4809
        %4858 = vmatprep.subr.bf16.mxu0 0
        %4859 = vmatpush1.bf16.msra.mxu0 %v4811
        %4860 = vmatprep.mubr.bf16.mxu0 %v4749
        %4861 = vmatmul.mubr.bf16.gmra.mrb[0].mxu0 %v4748
        %v4862 = vpop.f32.mrb[0].mxu0
        %v4863 = vadd.f32 0.0, %v4862
        %v4864 = vpop.f32.mrb[0].mxu0
        %v4865 = vpop.f32.mrb[0].mxu0
        %v4866 = vadd.f32 0.0, %v4865
        %v4867 = vpop.f32.mrb[0].mxu0
        %4868 = vmatprep.mubr.bf16.mxu0 %v4751
        %4869 = vmatmul.mubr.bf16.gmra.mrb[0].mxu0 %v4750
        %v4870 = vpop.f32.mrb[0].mxu0
        %v4871 = vadd.f32 0.0, %v4870
        %v4872 = vpop.f32.mrb[0].mxu0
        %v4873 = vpop.f32.mrb[0].mxu0
        %v4874 = vadd.f32 0.0, %v4873
        %v4875 = vpop.f32.mrb[0].mxu0
        %4876 = vmatprep.mubr.bf16.mxu0 %v4753
        %4877 = vmatmul.mubr.bf16.gmra.mrb[0].mxu0 %v4752
        %v4878 = vpop.f32.mrb[0].mxu0
        %v4879 = vadd.f32 0.0, %v4878
        %v4880 = vpop.f32.mrb[0].mxu0
        %v4881 = vpop.f32.mrb[0].mxu0
        %v4882 = vadd.f32 0.0, %v4881
        %v4883 = vpop.f32.mrb[0].mxu0
        %4884 = vmatprep.mubr.bf16.mxu0 %v4755
        %4885 = vmatmul.mubr.bf16.gmra.mrb[0].mxu0 %v4754
        %v4886 = vpop.f32.mrb[0].mxu0
        %v4887 = vadd.f32 0.0, %v4886
        %v4888 = vpop.f32.mrb[0].mxu0
        %v4889 = vpop.f32.mrb[0].mxu0
        %v4890 = vadd.f32 0.0, %v4889
        %v4891 = vpop.f32.mrb[0].mxu0
        %4892 = vmatprep.mubr.bf16.mxu0 %v4757
        %4893 = vmatmul.mubr.bf16.gmra.mrb[0].mxu0 %v4756
        %v4894 = vpop.f32.mrb[0].mxu0
        %v4895 = vadd.f32 0.0, %v4894
        %v4896 = vpop.f32.mrb[0].mxu0
        %v4897 = vpop.f32.mrb[0].mxu0
        %v4898 = vadd.f32 0.0, %v4897
        %v4899 = vpop.f32.mrb[0].mxu0
        %4900 = vmatprep.mubr.bf16.mxu0 %v4759
        %4901 = vmatmul.mubr.bf16.gmra.mrb[0].mxu0 %v4758
        %v4902 = vpop.f32.mrb[0].mxu0
        %v4903 = vadd.f32 0.0, %v4902
        %v4904 = vpop.f32.mrb[0].mxu0
        %v4905 = vpop.f32.mrb[0].mxu0
        %v4906 = vadd.f32 0.0, %v4905
        %v4907 = vpop.f32.mrb[0].mxu0
        %4908 = vmatprep.mubr.bf16.mxu0 %v4761
        %4909 = vmatmul.mubr.bf16.gmra.mrb[0].mxu0 %v4760
        %v4910 = vpop.f32.mrb[0].mxu0
        %v4911 = vadd.f32 0.0, %v4910
        %v4912 = vpop.f32.mrb[0].mxu0
        %v4913 = vpop.f32.mrb[0].mxu0
        %v4914 = vadd.f32 0.0, %v4913
        %v4915 = vpop.f32.mrb[0].mxu0
        %4916 = vmatprep.mubr.bf16.mxu0 %v4763
        %4917 = vmatmul.mubr.bf16.gmra.mrb[0].mxu0 %v4762
        %v4918 = vpop.f32.mrb[0].mxu0
        %v4919 = vadd.f32 0.0, %v4918
        %v4920 = vpop.f32.mrb[0].mxu0
        %v4921 = vpop.f32.mrb[0].mxu0
        %v4922 = vadd.f32 0.0, %v4921
        %v4923 = vpop.f32.mrb[0].mxu0
        %4924 = vdwg.mxu0
        %v4925 = vpack.c.bf16 %v4866, %v4863
        %v4926 = vpack.c.bf16 %v4874, %v4871
        %v4927 = vpack.c.bf16 %v4882, %v4879
        %v4928 = vpack.c.bf16 %v4890, %v4887
        %v4929 = vpack.c.bf16 %v4898, %v4895
        %v4930 = vpack.c.bf16 %v4906, %v4903
        %v4931 = vpack.c.bf16 %v4914, %v4911
        %v4932 = vpack.c.bf16 %v4922, %v4919
        %4941 = vrot.lane.b32.xlu0 %v4925, 96
        %v4942 = vpop.permute.xlu0 %4941
        %4943 = vrot.lane.b32.xlu0 %v4926, 96
        %v4944 = vpop.permute.xlu0 %4943
        %4945 = vrot.lane.b32.xlu0 %v4927, 96
        %v4946 = vpop.permute.xlu0 %4945
        %4947 = vrot.lane.b32.xlu0 %v4928, 96
        %v4948 = vpop.permute.xlu0 %4947
        %4949 = vrot.lane.b32.xlu0 %v4929, 96
        %v4950 = vpop.permute.xlu0 %4949
        %4951 = vrot.lane.b32.xlu0 %v4930, 96
        %v4952 = vpop.permute.xlu0 %4951
        %4953 = vrot.lane.b32.xlu0 %v4931, 96
        %v4954 = vpop.permute.xlu0 %4953
        %4955 = vrot.lane.b32.xlu0 %v4932, 96
        %v4956 = vpop.permute.xlu0 %4955
        %vm4965 = vcmask 1048320
        %4966 = vst.msk [vmem:[#allocation4] sm:$0xff] %vm4965, %v4942
        %4967 = vst.msk [vmem:[#allocation4 + $0x8] sm:$0xff] %vm4965, %v4944
        %4968 = vst.msk [vmem:[#allocation4 + $0x10] sm:$0xff] %vm4965, %v4946
        %4969 = vst.msk [vmem:[#allocation4 + $0x18] sm:$0xff] %vm4965, %v4948
        %4970 = vst.msk [vmem:[#allocation4 + $0x20] sm:$0xff] %vm4965, %v4950
        %4971 = vst.msk [vmem:[#allocation4 + $0x28] sm:$0xff] %vm4965, %v4952
        %4972 = vst.msk [vmem:[#allocation4 + $0x30] sm:$0xff] %vm4965, %v4954
        %4973 = vst.msk [vmem:[#allocation4 + $0x38] sm:$0xff] %vm4965, %v4956
        %v4974 = vld [vmem:[#allocation4] sm:$0xff]
        %v4975 = vld [vmem:[#allocation4 + $0x8] sm:$0xff]
        %v4976 = vld [vmem:[#allocation4 + $0x10] sm:$0xff]
        %v4977 = vld [vmem:[#allocation4 + $0x18] sm:$0xff]
        %v4978 = vld [vmem:[#allocation4 + $0x20] sm:$0xff]
        %v4979 = vld [vmem:[#allocation4 + $0x28] sm:$0xff]
        %v4980 = vld [vmem:[#allocation4 + $0x30] sm:$0xff]
        %v4981 = vld [vmem:[#allocation4 + $0x38] sm:$0xff]
        %v4982 = vld [vmem:[#allocation16] sm:$0xf]
        %v4983 = vld [vmem:[#allocation16 + $0x4] sm:$0xf]
        %v4984 = vld [vmem:[#allocation16 + $0x8] sm:$0xf]
        %v4985 = vld [vmem:[#allocation16 + $0xc] sm:$0xf]
        %v4986 = vld [vmem:[#allocation16 + $0x10] sm:$0xf]
        %v4987 = vld [vmem:[#allocation16 + $0x14] sm:$0xf]
        %v4988 = vld [vmem:[#allocation16 + $0x18] sm:$0xf]
        %v4989 = vld [vmem:[#allocation16 + $0x1c] sm:$0xf]
        %v4990 = vld [vmem:[#allocation16 + $0x20] sm:$0xf]
        %v4991 = vld [vmem:[#allocation16 + $0x24] sm:$0xf]
        %v4992 = vld [vmem:[#allocation16 + $0x28] sm:$0xf]
        %v4993 = vld [vmem:[#allocation16 + $0x2c] sm:$0xf]
        %v4994 = vld [vmem:[#allocation16 + $0x30] sm:$0xf]
        %v4995 = vld [vmem:[#allocation16 + $0x34] sm:$0xf]
        %v4996 = vld [vmem:[#allocation16 + $0x38] sm:$0xf]
        %v4997 = vld [vmem:[#allocation16 + $0x3c] sm:$0xf]
        %v4998 = vld [vmem:[%s15] sm:$0x1]
        %v5000 = vlaneseq
        %v5001 = vshrl.u32 %v5000, 7
        %v5002 = vsub.s32 0, %v5001
        %v5003 = vrot.slane %v4998, %v5002
        %v5021 = vunpack.c.l.b16 %v4982
        %v5022 = vunpack.c.l.b16 %v4983
        %v5023 = vunpack.c.l.b16 %v4984
        %v5024 = vunpack.c.l.b16 %v4985
        %v5025 = vunpack.c.l.b16 %v4986
        %v5026 = vunpack.c.l.b16 %v4987
        %v5027 = vunpack.c.l.b16 %v4988
        %v5028 = vunpack.c.l.b16 %v4989
        %v5029 = vunpack.c.l.b16 %v4990
        %v5030 = vunpack.c.l.b16 %v4991
        %v5031 = vunpack.c.l.b16 %v4992
        %v5032 = vunpack.c.l.b16 %v4993
        %v5033 = vunpack.c.l.b16 %v4994
        %v5034 = vunpack.c.l.b16 %v4995
        %v5035 = vunpack.c.l.b16 %v4996
        %v5036 = vunpack.c.l.b16 %v4997
        %v5037 = vpack.c.b16 %v5022, %v5021
        %v5038 = vpack.c.b16 %v5024, %v5023
        %v5039 = vpack.c.b16 %v5026, %v5025
        %v5040 = vpack.c.b16 %v5028, %v5027
        %v5041 = vpack.c.b16 %v5030, %v5029
        %v5042 = vpack.c.b16 %v5032, %v5031
        %v5043 = vpack.c.b16 %v5034, %v5033
        %v5044 = vpack.c.b16 %v5036, %v5035
        %5053 = vmatprep.subr.bf16.mxu0 0
        %5054 = vmatpush1.bf16.msra.mxu0 %v5037
        %5055 = vmatprep.subr.bf16.mxu0 0
        %5056 = vmatpush1.bf16.msra.mxu0 %v5038
        %5057 = vmatprep.subr.bf16.mxu0 0
        %5058 = vmatpush1.bf16.msra.mxu0 %v5039
        %5059 = vmatprep.subr.bf16.mxu0 0
        %5060 = vmatpush1.bf16.msra.mxu0 %v5040
        %5061 = vmatprep.subr.bf16.mxu0 0
        %5062 = vmatpush1.bf16.msra.mxu0 %v5041
        %5063 = vmatprep.subr.bf16.mxu0 0
        %5064 = vmatpush1.bf16.msra.mxu0 %v5042
        %5065 = vmatprep.subr.bf16.mxu0 0
        %5066 = vmatpush1.bf16.msra.mxu0 %v5043
        %5067 = vmatprep.subr.bf16.mxu0 0
        %5068 = vmatpush1.bf16.msra.mxu0 %v5044
        %5069 = vmatprep.subr.bf16.mxu0 0
        %5070 = vmatpush1.bf16.msra.mxu0 0
        %5071 = vmatprep.subr.bf16.mxu0 0
        %5072 = vmatpush1.bf16.msra.mxu0 0
        %5073 = vmatprep.subr.bf16.mxu0 0
        %5074 = vmatpush1.bf16.msra.mxu0 0
        %5075 = vmatprep.subr.bf16.mxu0 0
        %5076 = vmatpush1.bf16.msra.mxu0 0
        %5077 = vmatprep.subr.bf16.mxu0 0
        %5078 = vmatpush1.bf16.msra.mxu0 0
        %5079 = vmatprep.subr.bf16.mxu0 0
        %5080 = vmatpush1.bf16.msra.mxu0 0
        %5081 = vmatprep.subr.bf16.mxu0 0
        %5082 = vmatpush1.bf16.msra.mxu0 0
        %5083 = vmatprep.subr.bf16.mxu0 0
        %5084 = vmatpush1.bf16.msra.mxu0 0
        %5085 = vmatprep.mubr.bf16.mxu0 0
        %5086 = vmatmul.mubr.bf16.gmra.mrb[0].mxu0 %v4974
        %v5087 = vpop.f32.mrb[0].mxu0
        %v5088 = vadd.f32 %v5003, %v5087
        %v5089 = vpop.f32.mrb[0].mxu0
        %v5090 = vpop.f32.mrb[0].mxu0
        %v5091 = vadd.f32 %v5003, %v5090
        %v5092 = vpop.f32.mrb[0].mxu0
        %5093 = vmatprep.mubr.bf16.mxu0 0
        %5094 = vmatmul.mubr.bf16.gmra.mrb[0].mxu0 %v4975
        %v5095 = vpop.f32.mrb[0].mxu0
        %v5096 = vadd.f32 %v5003, %v5095
        %v5097 = vpop.f32.mrb[0].mxu0
        %v5098 = vpop.f32.mrb[0].mxu0
        %v5099 = vadd.f32 %v5003, %v5098
        %v5100 = vpop.f32.mrb[0].mxu0
        %5101 = vmatprep.mubr.bf16.mxu0 0
        %5102 = vmatmul.mubr.bf16.gmra.mrb[0].mxu0 %v4976
        %v5103 = vpop.f32.mrb[0].mxu0
        %v5104 = vadd.f32 %v5003, %v5103
        %v5105 = vpop.f32.mrb[0].mxu0
        %v5106 = vpop.f32.mrb[0].mxu0
        %v5107 = vadd.f32 %v5003, %v5106
        %v5108 = vpop.f32.mrb[0].mxu0
        %5109 = vmatprep.mubr.bf16.mxu0 0
        %5110 = vmatmul.mubr.bf16.gmra.mrb[0].mxu0 %v4977
        %v5111 = vpop.f32.mrb[0].mxu0
        %v5112 = vadd.f32 %v5003, %v5111
        %v5113 = vpop.f32.mrb[0].mxu0
        %v5114 = vpop.f32.mrb[0].mxu0
        %v5115 = vadd.f32 %v5003, %v5114
        %v5116 = vpop.f32.mrb[0].mxu0
        %5117 = vmatprep.mubr.bf16.mxu0 0
        %5118 = vmatmul.mubr.bf16.gmra.mrb[0].mxu0 %v4978
        %v5119 = vpop.f32.mrb[0].mxu0
        %v5120 = vadd.f32 %v5003, %v5119
        %v5121 = vpop.f32.mrb[0].mxu0
        %v5122 = vpop.f32.mrb[0].mxu0
        %v5123 = vadd.f32 %v5003, %v5122
        %v5124 = vpop.f32.mrb[0].mxu0
        %5125 = vmatprep.mubr.bf16.mxu0 0
        %5126 = vmatmul.mubr.bf16.gmra.mrb[0].mxu0 %v4979
        %v5127 = vpop.f32.mrb[0].mxu0
        %v5128 = vadd.f32 %v5003, %v5127
        %v5129 = vpop.f32.mrb[0].mxu0
        %v5130 = vpop.f32.mrb[0].mxu0
        %v5131 = vadd.f32 %v5003, %v5130
        %v5132 = vpop.f32.mrb[0].mxu0
        %5133 = vmatprep.mubr.bf16.mxu0 0
        %5134 = vmatmul.mubr.bf16.gmra.mrb[0].mxu0 %v4980
        %v5135 = vpop.f32.mrb[0].mxu0
        %v5136 = vadd.f32 %v5003, %v5135
        %v5137 = vpop.f32.mrb[0].mxu0
        %v5138 = vpop.f32.mrb[0].mxu0
        %v5139 = vadd.f32 %v5003, %v5138
        %v5140 = vpop.f32.mrb[0].mxu0
        %5141 = vmatprep.mubr.bf16.mxu0 0
        %5142 = vmatmul.mubr.bf16.gmra.mrb[0].mxu0 %v4981
        %v5143 = vpop.f32.mrb[0].mxu0
        %v5144 = vadd.f32 %v5003, %v5143
        %v5145 = vpop.f32.mrb[0].mxu0
        %v5146 = vpop.f32.mrb[0].mxu0
        %v5147 = vadd.f32 %v5003, %v5146
        %v5148 = vpop.f32.mrb[0].mxu0
        %5149 = vdwg.mxu0
        %v5150 = vadd.f32 %v5088, %v1900
        %v5151 = vadd.f32 %v5091, %v1903
        %v5152 = vadd.f32 %v5096, %v1908
        %v5153 = vadd.f32 %v5099, %v1911
        %v5154 = vadd.f32 %v5104, %v1916
        %v5155 = vadd.f32 %v5107, %v1919
        %v5156 = vadd.f32 %v5112, %v1924
        %v5157 = vadd.f32 %v5115, %v1927
        %v5158 = vadd.f32 %v5120, %v1932
        %v5159 = vadd.f32 %v5123, %v1935
        %v5160 = vadd.f32 %v5128, %v1940
        %v5161 = vadd.f32 %v5131, %v1943
        %v5162 = vadd.f32 %v5136, %v1948
        %v5163 = vadd.f32 %v5139, %v1951
        %v5164 = vadd.f32 %v5144, %v1956
        %v5165 = vadd.f32 %v5147, %v1959
        %v5166 = vld [vmem:[%s4] sm:$0x1]
        %v5167 = vld [vmem:[%s5] sm:$0x1]
        %5168 = vadd.xlane.f32.xlu0 %v5150
        %v5169 = vpop.xlane.xlu0 %5168
        %5170 = vadd.xlane.f32.xlu0 %v5151
        %v5171 = vpop.xlane.xlu0 %5170
        %5172 = vadd.xlane.f32.xlu0 %v5152
        %v5173 = vpop.xlane.xlu0 %5172
        %5174 = vadd.xlane.f32.xlu0 %v5153
        %v5175 = vpop.xlane.xlu0 %5174
        %5176 = vadd.xlane.f32.xlu0 %v5154
        %v5177 = vpop.xlane.xlu0 %5176
        %5178 = vadd.xlane.f32.xlu0 %v5155
        %v5179 = vpop.xlane.xlu0 %5178
        %5180 = vadd.xlane.f32.xlu0 %v5156
        %v5181 = vpop.xlane.xlu0 %5180
        %5182 = vadd.xlane.f32.xlu0 %v5157
        %v5183 = vpop.xlane.xlu0 %5182
        %5184 = vadd.xlane.f32.xlu0 %v5158
        %v5185 = vpop.xlane.xlu0 %5184
        %5186 = vadd.xlane.f32.xlu0 %v5159
        %v5187 = vpop.xlane.xlu0 %5186
        %5188 = vadd.xlane.f32.xlu0 %v5160
        %v5189 = vpop.xlane.xlu0 %5188
        %5190 = vadd.xlane.f32.xlu0 %v5161
        %v5191 = vpop.xlane.xlu0 %5190
        %5192 = vadd.xlane.f32.xlu0 %v5162
        %v5193 = vpop.xlane.xlu0 %5192
        %5194 = vadd.xlane.f32.xlu0 %v5163
        %v5195 = vpop.xlane.xlu0 %5194
        %5196 = vadd.xlane.f32.xlu0 %v5164
        %v5197 = vpop.xlane.xlu0 %5196
        %5198 = vadd.xlane.f32.xlu0 %v5165
        %v5199 = vpop.xlane.xlu0 %5198
        %v5200 = vmul.f32 %v5169, %v1597
        %v5201 = vmul.f32 %v5171, %v1597
        %v5202 = vmul.f32 %v5173, %v1597
        %v5203 = vmul.f32 %v5175, %v1597
        %v5204 = vmul.f32 %v5177, %v1597
        %v5205 = vmul.f32 %v5179, %v1597
        %v5206 = vmul.f32 %v5181, %v1597
        %v5207 = vmul.f32 %v5183, %v1597
        %v5208 = vmul.f32 %v5185, %v1597
        %v5209 = vmul.f32 %v5187, %v1597
        %v5210 = vmul.f32 %v5189, %v1597
        %v5211 = vmul.f32 %v5191, %v1597
        %v5212 = vmul.f32 %v5193, %v1597
        %v5213 = vmul.f32 %v5195, %v1597
        %v5214 = vmul.f32 %v5197, %v1597
        %v5215 = vmul.f32 %v5199, %v1597
        %v5216 = vsub.f32 %v5150, %v5200
        %v5217 = vsub.f32 %v5151, %v5201
        %v5218 = vsub.f32 %v5152, %v5202
        %v5219 = vsub.f32 %v5153, %v5203
        %v5220 = vsub.f32 %v5154, %v5204
        %v5221 = vsub.f32 %v5155, %v5205
        %v5222 = vsub.f32 %v5156, %v5206
        %v5223 = vsub.f32 %v5157, %v5207
        %v5224 = vsub.f32 %v5158, %v5208
        %v5225 = vsub.f32 %v5159, %v5209
        %v5226 = vsub.f32 %v5160, %v5210
        %v5227 = vsub.f32 %v5161, %v5211
        %v5228 = vsub.f32 %v5162, %v5212
        %v5229 = vsub.f32 %v5163, %v5213
        %v5230 = vsub.f32 %v5164, %v5214
        %v5231 = vsub.f32 %v5165, %v5215
        %v5232 = vmul.f32 %v5216, %v5216
        %v5233 = vmul.f32 %v5217, %v5217
        %v5234 = vmul.f32 %v5218, %v5218
        %v5235 = vmul.f32 %v5219, %v5219
        %v5236 = vmul.f32 %v5220, %v5220
        %v5237 = vmul.f32 %v5221, %v5221
        %v5238 = vmul.f32 %v5222, %v5222
        %v5239 = vmul.f32 %v5223, %v5223
        %v5240 = vmul.f32 %v5224, %v5224
        %v5241 = vmul.f32 %v5225, %v5225
        %v5242 = vmul.f32 %v5226, %v5226
        %v5243 = vmul.f32 %v5227, %v5227
        %v5244 = vmul.f32 %v5228, %v5228
        %v5245 = vmul.f32 %v5229, %v5229
        %v5246 = vmul.f32 %v5230, %v5230
        %v5247 = vmul.f32 %v5231, %v5231
        %5248 = vadd.xlane.f32.xlu0 %v5232
        %v5249 = vpop.xlane.xlu0 %5248
        %5250 = vadd.xlane.f32.xlu0 %v5233
        %v5251 = vpop.xlane.xlu0 %5250
        %5252 = vadd.xlane.f32.xlu0 %v5234
        %v5253 = vpop.xlane.xlu0 %5252
        %5254 = vadd.xlane.f32.xlu0 %v5235
        %v5255 = vpop.xlane.xlu0 %5254
        %5256 = vadd.xlane.f32.xlu0 %v5236
        %v5257 = vpop.xlane.xlu0 %5256
        %5258 = vadd.xlane.f32.xlu0 %v5237
        %v5259 = vpop.xlane.xlu0 %5258
        %5260 = vadd.xlane.f32.xlu0 %v5238
        %v5261 = vpop.xlane.xlu0 %5260
        %5262 = vadd.xlane.f32.xlu0 %v5239
        %v5263 = vpop.xlane.xlu0 %5262
        %5264 = vadd.xlane.f32.xlu0 %v5240
        %v5265 = vpop.xlane.xlu0 %5264
        %5266 = vadd.xlane.f32.xlu0 %v5241
        %v5267 = vpop.xlane.xlu0 %5266
        %5268 = vadd.xlane.f32.xlu0 %v5242
        %v5269 = vpop.xlane.xlu0 %5268
        %5270 = vadd.xlane.f32.xlu0 %v5243
        %v5271 = vpop.xlane.xlu0 %5270
        %5272 = vadd.xlane.f32.xlu0 %v5244
        %v5273 = vpop.xlane.xlu0 %5272
        %5274 = vadd.xlane.f32.xlu0 %v5245
        %v5275 = vpop.xlane.xlu0 %5274
        %5276 = vadd.xlane.f32.xlu0 %v5246
        %v5277 = vpop.xlane.xlu0 %5276
        %5278 = vadd.xlane.f32.xlu0 %v5247
        %v5279 = vpop.xlane.xlu0 %5278
        %v5280 = vmul.f32 %v5249, %v1597
        %v5281 = vmul.f32 %v5251, %v1597
        %v5282 = vmul.f32 %v5253, %v1597
        %v5283 = vmul.f32 %v5255, %v1597
        %v5284 = vmul.f32 %v5257, %v1597
        %v5285 = vmul.f32 %v5259, %v1597
        %v5286 = vmul.f32 %v5261, %v1597
        %v5287 = vmul.f32 %v5263, %v1597
        %v5288 = vmul.f32 %v5265, %v1597
        %v5289 = vmul.f32 %v5267, %v1597
        %v5290 = vmul.f32 %v5269, %v1597
        %v5291 = vmul.f32 %v5271, %v1597
        %v5292 = vmul.f32 %v5273, %v1597
        %v5293 = vmul.f32 %v5275, %v1597
        %v5294 = vmul.f32 %v5277, %v1597
        %v5295 = vmul.f32 %v5279, %v1597
        %v5296 = vadd.f32 %v5280, 1e-05
        %v5297 = vadd.f32 %v5281, 1e-05
        %v5298 = vadd.f32 %v5282, 1e-05
        %v5299 = vadd.f32 %v5283, 1e-05
        %v5300 = vadd.f32 %v5284, 1e-05
        %v5301 = vadd.f32 %v5285, 1e-05
        %v5302 = vadd.f32 %v5286, 1e-05
        %v5303 = vadd.f32 %v5287, 1e-05
        %v5304 = vadd.f32 %v5288, 1e-05
        %v5305 = vadd.f32 %v5289, 1e-05
        %v5306 = vadd.f32 %v5290, 1e-05
        %v5307 = vadd.f32 %v5291, 1e-05
        %v5308 = vadd.f32 %v5292, 1e-05
        %v5309 = vadd.f32 %v5293, 1e-05
        %v5310 = vadd.f32 %v5294, 1e-05
        %v5311 = vadd.f32 %v5295, 1e-05
        %v5312 = vrsqrt.pop %v5296
        %v5313 = vrsqrt.pop %v5297
        %v5314 = vrsqrt.pop %v5298
        %v5315 = vrsqrt.pop %v5299
        %v5316 = vrsqrt.pop %v5300
        %v5317 = vrsqrt.pop %v5301
        %v5318 = vrsqrt.pop %v5302
        %v5319 = vrsqrt.pop %v5303
        %v5320 = vrsqrt.pop %v5304
        %v5321 = vrsqrt.pop %v5305
        %v5322 = vrsqrt.pop %v5306
        %v5323 = vrsqrt.pop %v5307
        %v5324 = vrsqrt.pop %v5308
        %v5325 = vrsqrt.pop %v5309
        %v5326 = vrsqrt.pop %v5310
        %v5327 = vrsqrt.pop %v5311
        %v5328 = vmul.f32 %v5216, %v5312
        %v5329 = vmul.f32 %v5217, %v5313
        %v5330 = vmul.f32 %v5218, %v5314
        %v5331 = vmul.f32 %v5219, %v5315
        %v5332 = vmul.f32 %v5220, %v5316
        %v5333 = vmul.f32 %v5221, %v5317
        %v5334 = vmul.f32 %v5222, %v5318
        %v5335 = vmul.f32 %v5223, %v5319
        %v5336 = vmul.f32 %v5224, %v5320
        %v5337 = vmul.f32 %v5225, %v5321
        %v5338 = vmul.f32 %v5226, %v5322
        %v5339 = vmul.f32 %v5227, %v5323
        %v5340 = vmul.f32 %v5228, %v5324
        %v5341 = vmul.f32 %v5229, %v5325
        %v5342 = vmul.f32 %v5230, %v5326
        %v5343 = vmul.f32 %v5231, %v5327
        %v5345 = vlaneseq
        %v5346 = vshrl.u32 %v5345, 7
        %v5347 = vsub.s32 0, %v5346
        %v5348 = vrot.slane %v5166, %v5347
        %v5350 = vmul.f32 %v5328, %v5348
        %v5351 = vmul.f32 %v5329, %v5348
        %v5352 = vmul.f32 %v5330, %v5348
        %v5353 = vmul.f32 %v5331, %v5348
        %v5354 = vmul.f32 %v5332, %v5348
        %v5355 = vmul.f32 %v5333, %v5348
        %v5356 = vmul.f32 %v5334, %v5348
        %v5357 = vmul.f32 %v5335, %v5348
        %v5358 = vmul.f32 %v5336, %v5348
        %v5359 = vmul.f32 %v5337, %v5348
        %v5360 = vmul.f32 %v5338, %v5348
        %v5361 = vmul.f32 %v5339, %v5348
        %v5362 = vmul.f32 %v5340, %v5348
        %v5363 = vmul.f32 %v5341, %v5348
        %v5364 = vmul.f32 %v5342, %v5348
        %v5365 = vmul.f32 %v5343, %v5348
        %v5367 = vlaneseq
        %v5368 = vshrl.u32 %v5367, 7
        %v5369 = vsub.s32 0, %v5368
        %v5370 = vrot.slane %v5167, %v5369
        %v5372 = vadd.f32 %v5350, %v5370
        %v5373 = vadd.f32 %v5351, %v5370
        %v5374 = vadd.f32 %v5352, %v5370
        %v5375 = vadd.f32 %v5353, %v5370
        %v5376 = vadd.f32 %v5354, %v5370
        %v5377 = vadd.f32 %v5355, %v5370
        %v5378 = vadd.f32 %v5356, %v5370
        %v5379 = vadd.f32 %v5357, %v5370
        %v5380 = vadd.f32 %v5358, %v5370
        %v5381 = vadd.f32 %v5359, %v5370
        %v5382 = vadd.f32 %v5360, %v5370
        %v5383 = vadd.f32 %v5361, %v5370
        %v5384 = vadd.f32 %v5362, %v5370
        %v5385 = vadd.f32 %v5363, %v5370
        %v5386 = vadd.f32 %v5364, %v5370
        %v5387 = vadd.f32 %v5365, %v5370
        %v5388 = vpack.c.bf16 %v5373, %v5372
        %v5389 = vpack.c.bf16 %v5375, %v5374
        %v5390 = vpack.c.bf16 %v5377, %v5376
        %v5391 = vpack.c.bf16 %v5379, %v5378
        %v5392 = vpack.c.bf16 %v5381, %v5380
        %v5393 = vpack.c.bf16 %v5383, %v5382
        %v5394 = vpack.c.bf16 %v5385, %v5384
        %v5395 = vpack.c.bf16 %v5387, %v5386
        %v5396 = vld [vmem:[#allocation17] sm:$0xff]
        %v5397 = vld [vmem:[#allocation17 + $0x8] sm:$0xff]
        %v5398 = vld [vmem:[#allocation17 + $0x10] sm:$0xff]
        %v5399 = vld [vmem:[#allocation17 + $0x18] sm:$0xff]
        %v5400 = vld [vmem:[#allocation17 + $0x20] sm:$0xff]
        %v5401 = vld [vmem:[#allocation17 + $0x28] sm:$0xff]
        %v5402 = vld [vmem:[#allocation17 + $0x30] sm:$0xff]
        %v5403 = vld [vmem:[#allocation17 + $0x38] sm:$0xff]
        %v5404 = vld [vmem:[#allocation17 + $0x40] sm:$0xff]
        %v5405 = vld [vmem:[#allocation17 + $0x48] sm:$0xff]
        %v5406 = vld [vmem:[#allocation17 + $0x50] sm:$0xff]
        %v5407 = vld [vmem:[#allocation17 + $0x58] sm:$0xff]
        %v5408 = vld [vmem:[#allocation17 + $0x60] sm:$0xff]
        %v5409 = vld [vmem:[#allocation17 + $0x68] sm:$0xff]
        %v5410 = vld [vmem:[#allocation17 + $0x70] sm:$0xff]
        %v5411 = vld [vmem:[#allocation17 + $0x78] sm:$0xff]
        %v5412 = vld [vmem:[#allocation17 + $0x80] sm:$0xff]
        %v5413 = vld [vmem:[#allocation17 + $0x88] sm:$0xff]
        %v5414 = vld [vmem:[#allocation17 + $0x90] sm:$0xff]
        %v5415 = vld [vmem:[#allocation17 + $0x98] sm:$0xff]
        %v5416 = vld [vmem:[#allocation17 + $0xa0] sm:$0xff]
        %v5417 = vld [vmem:[#allocation17 + $0xa8] sm:$0xff]
        %v5418 = vld [vmem:[#allocation17 + $0xb0] sm:$0xff]
        %v5419 = vld [vmem:[#allocation17 + $0xb8] sm:$0xff]
        %v5420 = vld [vmem:[#allocation17 + $0xc0] sm:$0xff]
        %v5421 = vld [vmem:[#allocation17 + $0xc8] sm:$0xff]
        %v5422 = vld [vmem:[#allocation17 + $0xd0] sm:$0xff]
        %v5423 = vld [vmem:[#allocation17 + $0xd8] sm:$0xff]
        %v5424 = vld [vmem:[#allocation17 + $0xe0] sm:$0xff]
        %v5425 = vld [vmem:[#allocation17 + $0xe8] sm:$0xff]
        %v5426 = vld [vmem:[#allocation17 + $0xf0] sm:$0xff]
        %v5427 = vld [vmem:[#allocation17 + $0xf8] sm:$0xff]
        %v5428 = vld [vmem:[%s17] sm:$0xf]
        %v5430 = vlaneseq
        %v5431 = vshrl.u32 %v5430, 7
        %v5432 = vsub.s32 0, %v5431
        %v5433 = vrot.slane %v5428, %v5432
        %v5434 = vlaneseq
        %v5435 = vshrl.u32 %v5434, 7
        %v5436 = vsub.s32 1, %v5435
        %v5437 = vrot.slane %v5428, %v5436
        %v5438 = vlaneseq
        %v5439 = vshrl.u32 %v5438, 7
        %v5440 = vsub.s32 2, %v5439
        %v5441 = vrot.slane %v5428, %v5440
        %v5442 = vlaneseq
        %v5443 = vshrl.u32 %v5442, 7
        %v5444 = vsub.s32 3, %v5443
        %v5445 = vrot.slane %v5428, %v5444
        %v5482 = vunpack.c.l.b16 %v5396
        %v5483 = vunpack.c.h.b16 %v5396
        %v5484 = vunpack.c.l.b16 %v5397
        %v5485 = vunpack.c.h.b16 %v5397
        %v5486 = vunpack.c.l.b16 %v5398
        %v5487 = vunpack.c.h.b16 %v5398
        %v5488 = vunpack.c.l.b16 %v5399
        %v5489 = vunpack.c.h.b16 %v5399
        %v5490 = vunpack.c.l.b16 %v5400
        %v5491 = vunpack.c.h.b16 %v5400
        %v5492 = vunpack.c.l.b16 %v5401
        %v5493 = vunpack.c.h.b16 %v5401
        %v5494 = vunpack.c.l.b16 %v5402
        %v5495 = vunpack.c.h.b16 %v5402
        %v5496 = vunpack.c.l.b16 %v5403
        %v5497 = vunpack.c.h.b16 %v5403
        %v5498 = vunpack.c.l.b16 %v5404
        %v5499 = vunpack.c.h.b16 %v5404
        %v5500 = vunpack.c.l.b16 %v5405
        %v5501 = vunpack.c.h.b16 %v5405
        %v5502 = vunpack.c.l.b16 %v5406
        %v5503 = vunpack.c.h.b16 %v5406
        %v5504 = vunpack.c.l.b16 %v5407
        %v5505 = vunpack.c.h.b16 %v5407
        %v5506 = vunpack.c.l.b16 %v5408
        %v5507 = vunpack.c.h.b16 %v5408
        %v5508 = vunpack.c.l.b16 %v5409
        %v5509 = vunpack.c.h.b16 %v5409
        %v5510 = vunpack.c.l.b16 %v5410
        %v5511 = vunpack.c.h.b16 %v5410
        %v5512 = vunpack.c.l.b16 %v5411
        %v5513 = vunpack.c.h.b16 %v5411
        %v5514 = vunpack.c.l.b16 %v5412
        %v5515 = vunpack.c.h.b16 %v5412
        %v5516 = vunpack.c.l.b16 %v5413
        %v5517 = vunpack.c.h.b16 %v5413
        %v5518 = vunpack.c.l.b16 %v5414
        %v5519 = vunpack.c.h.b16 %v5414
        %v5520 = vunpack.c.l.b16 %v5415
        %v5521 = vunpack.c.h.b16 %v5415
        %v5522 = vunpack.c.l.b16 %v5416
        %v5523 = vunpack.c.h.b16 %v5416
        %v5524 = vunpack.c.l.b16 %v5417
        %v5525 = vunpack.c.h.b16 %v5417
        %v5526 = vunpack.c.l.b16 %v5418
        %v5527 = vunpack.c.h.b16 %v5418
        %v5528 = vunpack.c.l.b16 %v5419
        %v5529 = vunpack.c.h.b16 %v5419
        %v5530 = vunpack.c.l.b16 %v5420
        %v5531 = vunpack.c.h.b16 %v5420
        %v5532 = vunpack.c.l.b16 %v5421
        %v5533 = vunpack.c.h.b16 %v5421
        %v5534 = vunpack.c.l.b16 %v5422
        %v5535 = vunpack.c.h.b16 %v5422
        %v5536 = vunpack.c.l.b16 %v5423
        %v5537 = vunpack.c.h.b16 %v5423
        %v5538 = vunpack.c.l.b16 %v5424
        %v5539 = vunpack.c.h.b16 %v5424
        %v5540 = vunpack.c.l.b16 %v5425
        %v5541 = vunpack.c.h.b16 %v5425
        %v5542 = vunpack.c.l.b16 %v5426
        %v5543 = vunpack.c.h.b16 %v5426
        %v5544 = vunpack.c.l.b16 %v5427
        %v5545 = vunpack.c.h.b16 %v5427
        %v5546 = vpack.c.b16 %v5486, %v5482
        %v5547 = vpack.c.b16 %v5487, %v5483
        %v5548 = vpack.c.b16 %v5488, %v5484
        %v5549 = vpack.c.b16 %v5489, %v5485
        %v5550 = vpack.c.b16 %v5494, %v5490
        %v5551 = vpack.c.b16 %v5495, %v5491
        %v5552 = vpack.c.b16 %v5496, %v5492
        %v5553 = vpack.c.b16 %v5497, %v5493
        %v5554 = vpack.c.b16 %v5502, %v5498
        %v5555 = vpack.c.b16 %v5503, %v5499
        %v5556 = vpack.c.b16 %v5504, %v5500
        %v5557 = vpack.c.b16 %v5505, %v5501
        %v5558 = vpack.c.b16 %v5510, %v5506
        %v5559 = vpack.c.b16 %v5511, %v5507
        %v5560 = vpack.c.b16 %v5512, %v5508
        %v5561 = vpack.c.b16 %v5513, %v5509
        %v5562 = vpack.c.b16 %v5518, %v5514
        %v5563 = vpack.c.b16 %v5519, %v5515
        %v5564 = vpack.c.b16 %v5520, %v5516
        %v5565 = vpack.c.b16 %v5521, %v5517
        %v5566 = vpack.c.b16 %v5526, %v5522
        %v5567 = vpack.c.b16 %v5527, %v5523
        %v5568 = vpack.c.b16 %v5528, %v5524
        %v5569 = vpack.c.b16 %v5529, %v5525
        %v5570 = vpack.c.b16 %v5534, %v5530
        %v5571 = vpack.c.b16 %v5535, %v5531
        %v5572 = vpack.c.b16 %v5536, %v5532
        %v5573 = vpack.c.b16 %v5537, %v5533
        %v5574 = vpack.c.b16 %v5542, %v5538
        %v5575 = vpack.c.b16 %v5543, %v5539
        %v5576 = vpack.c.b16 %v5544, %v5540
        %v5577 = vpack.c.b16 %v5545, %v5541
        %5610 = vmatprep.subr.bf16.mxu0 %v5547
        %5611 = vmatpush1.bf16.msra.mxu0 %v5546
        %5612 = vmatprep.subr.bf16.mxu0 %v5551
        %5613 = vmatpush1.bf16.msra.mxu0 %v5550
        %5614 = vmatprep.subr.bf16.mxu0 %v5555
        %5615 = vmatpush1.bf16.msra.mxu0 %v5554
        %5616 = vmatprep.subr.bf16.mxu0 %v5559
        %5617 = vmatpush1.bf16.msra.mxu0 %v5558
        %5618 = vmatprep.subr.bf16.mxu0 %v5563
        %5619 = vmatpush1.bf16.msra.mxu0 %v5562
        %5620 = vmatprep.subr.bf16.mxu0 %v5567
        %5621 = vmatpush1.bf16.msra.mxu0 %v5566
        %5622 = vmatprep.subr.bf16.mxu0 %v5571
        %5623 = vmatpush1.bf16.msra.mxu0 %v5570
        %5624 = vmatprep.subr.bf16.mxu0 %v5575
        %5625 = vmatpush1.bf16.msra.mxu0 %v5574
        %5626 = vmatprep.subr.bf16.mxu0 0
        %5627 = vmatpush1.bf16.msra.mxu0 0
        %5628 = vmatprep.subr.bf16.mxu0 0
        %5629 = vmatpush1.bf16.msra.mxu0 0
        %5630 = vmatprep.subr.bf16.mxu0 0
        %5631 = vmatpush1.bf16.msra.mxu0 0
        %5632 = vmatprep.subr.bf16.mxu0 0
        %5633 = vmatpush1.bf16.msra.mxu0 0
        %5634 = vmatprep.subr.bf16.mxu0 0
        %5635 = vmatpush1.bf16.msra.mxu0 0
        %5636 = vmatprep.subr.bf16.mxu0 0
        %5637 = vmatpush1.bf16.msra.mxu0 0
        %5638 = vmatprep.subr.bf16.mxu0 0
        %5639 = vmatpush1.bf16.msra.mxu0 0
        %5640 = vmatprep.subr.bf16.mxu0 0
        %5641 = vmatpush1.bf16.msra.mxu0 0
        %5642 = vmatprep.mubr.bf16.mxu0 0
        %5643 = vmatmul.mubr.bf16.gmra.mrb[0].mxu0 %v5388
        %v5644 = vpop.f32.mrb[0].mxu0
        %v5645 = vadd.f32 %v5433, %v5644
        %v5646 = vpop.f32.mrb[0].mxu0
        %v5647 = vadd.f32 %v5437, %v5646
        %v5648 = vpop.f32.mrb[0].mxu0
        %v5649 = vadd.f32 %v5433, %v5648
        %v5650 = vpop.f32.mrb[0].mxu0
        %v5651 = vadd.f32 %v5437, %v5650
        %5652 = vmatprep.mubr.bf16.mxu0 0
        %5653 = vmatmul.mubr.bf16.gmra.mrb[0].mxu0 %v5389
        %v5654 = vpop.f32.mrb[0].mxu0
        %v5655 = vadd.f32 %v5433, %v5654
        %v5656 = vpop.f32.mrb[0].mxu0
        %v5657 = vadd.f32 %v5437, %v5656
        %v5658 = vpop.f32.mrb[0].mxu0
        %v5659 = vadd.f32 %v5433, %v5658
        %v5660 = vpop.f32.mrb[0].mxu0
        %v5661 = vadd.f32 %v5437, %v5660
        %5662 = vmatprep.mubr.bf16.mxu0 0
        %5663 = vmatmul.mubr.bf16.gmra.mrb[0].mxu0 %v5390
        %v5664 = vpop.f32.mrb[0].mxu0
        %v5665 = vadd.f32 %v5433, %v5664
        %v5666 = vpop.f32.mrb[0].mxu0
        %v5667 = vadd.f32 %v5437, %v5666
        %v5668 = vpop.f32.mrb[0].mxu0
        %v5669 = vadd.f32 %v5433, %v5668
        %v5670 = vpop.f32.mrb[0].mxu0
        %v5671 = vadd.f32 %v5437, %v5670
        %5672 = vmatprep.mubr.bf16.mxu0 0
        %5673 = vmatmul.mubr.bf16.gmra.mrb[0].mxu0 %v5391
        %v5674 = vpop.f32.mrb[0].mxu0
        %v5675 = vadd.f32 %v5433, %v5674
        %v5676 = vpop.f32.mrb[0].mxu0
        %v5677 = vadd.f32 %v5437, %v5676
        %v5678 = vpop.f32.mrb[0].mxu0
        %v5679 = vadd.f32 %v5433, %v5678
        %v5680 = vpop.f32.mrb[0].mxu0
        %v5681 = vadd.f32 %v5437, %v5680
        %5682 = vmatprep.mubr.bf16.mxu0 0
        %5683 = vmatmul.mubr.bf16.gmra.mrb[0].mxu0 %v5392
        %v5684 = vpop.f32.mrb[0].mxu0
        %v5685 = vadd.f32 %v5433, %v5684
        %v5686 = vpop.f32.mrb[0].mxu0
        %v5687 = vadd.f32 %v5437, %v5686
        %v5688 = vpop.f32.mrb[0].mxu0
        %v5689 = vadd.f32 %v5433, %v5688
        %v5690 = vpop.f32.mrb[0].mxu0
        %v5691 = vadd.f32 %v5437, %v5690
        %5692 = vmatprep.mubr.bf16.mxu0 0
        %5693 = vmatmul.mubr.bf16.gmra.mrb[0].mxu0 %v5393
        %v5694 = vpop.f32.mrb[0].mxu0
        %v5695 = vadd.f32 %v5433, %v5694
        %v5696 = vpop.f32.mrb[0].mxu0
        %v5697 = vadd.f32 %v5437, %v5696
        %v5698 = vpop.f32.mrb[0].mxu0
        %v5699 = vadd.f32 %v5433, %v5698
        %v5700 = vpop.f32.mrb[0].mxu0
        %v5701 = vadd.f32 %v5437, %v5700
        %5702 = vmatprep.mubr.bf16.mxu0 0
        %5703 = vmatmul.mubr.bf16.gmra.mrb[0].mxu0 %v5394
        %v5704 = vpop.f32.mrb[0].mxu0
        %v5705 = vadd.f32 %v5433, %v5704
        %v5706 = vpop.f32.mrb[0].mxu0
        %v5707 = vadd.f32 %v5437, %v5706
        %v5708 = vpop.f32.mrb[0].mxu0
        %v5709 = vadd.f32 %v5433, %v5708
        %v5710 = vpop.f32.mrb[0].mxu0
        %v5711 = vadd.f32 %v5437, %v5710
        %5712 = vmatprep.mubr.bf16.mxu0 0
        %5713 = vmatmul.mubr.bf16.gmra.mrb[0].mxu0 %v5395
        %v5714 = vpop.f32.mrb[0].mxu0
        %v5715 = vadd.f32 %v5433, %v5714
        %v5716 = vpop.f32.mrb[0].mxu0
        %v5717 = vadd.f32 %v5437, %v5716
        %v5718 = vpop.f32.mrb[0].mxu0
        %v5719 = vadd.f32 %v5433, %v5718
        %v5720 = vpop.f32.mrb[0].mxu0
        %v5721 = vadd.f32 %v5437, %v5720
        %5722 = vdwg.mxu0
        %5723 = vmatprep.subr.bf16.mxu0 %v5549
        %5724 = vmatpush1.bf16.msra.mxu0 %v5548
        %5725 = vmatprep.subr.bf16.mxu0 %v5553
        %5726 = vmatpush1.bf16.msra.mxu0 %v5552
        %5727 = vmatprep.subr.bf16.mxu0 %v5557
        %5728 = vmatpush1.bf16.msra.mxu0 %v5556
        %5729 = vmatprep.subr.bf16.mxu0 %v5561
        %5730 = vmatpush1.bf16.msra.mxu0 %v5560
        %5731 = vmatprep.subr.bf16.mxu0 %v5565
        %5732 = vmatpush1.bf16.msra.mxu0 %v5564
        %5733 = vmatprep.subr.bf16.mxu0 %v5569
        %5734 = vmatpush1.bf16.msra.mxu0 %v5568
        %5735 = vmatprep.subr.bf16.mxu0 %v5573
        %5736 = vmatpush1.bf16.msra.mxu0 %v5572
        %5737 = vmatprep.subr.bf16.mxu0 %v5577
        %5738 = vmatpush1.bf16.msra.mxu0 %v5576
        %5739 = vmatprep.subr.bf16.mxu0 0
        %5740 = vmatpush1.bf16.msra.mxu0 0
        %5741 = vmatprep.subr.bf16.mxu0 0
        %5742 = vmatpush1.bf16.msra.mxu0 0
        %5743 = vmatprep.subr.bf16.mxu0 0
        %5744 = vmatpush1.bf16.msra.mxu0 0
        %5745 = vmatprep.subr.bf16.mxu0 0
        %5746 = vmatpush1.bf16.msra.mxu0 0
        %5747 = vmatprep.subr.bf16.mxu0 0
        %5748 = vmatpush1.bf16.msra.mxu0 0
        %5749 = vmatprep.subr.bf16.mxu0 0
        %5750 = vmatpush1.bf16.msra.mxu0 0
        %5751 = vmatprep.subr.bf16.mxu0 0
        %5752 = vmatpush1.bf16.msra.mxu0 0
        %5753 = vmatprep.subr.bf16.mxu0 0
        %5754 = vmatpush1.bf16.msra.mxu0 0
        %5755 = vmatprep.mubr.bf16.mxu0 0
        %5756 = vmatmul.mubr.bf16.gmra.mrb[0].mxu0 %v5388
        %v5757 = vpop.f32.mrb[0].mxu0
        %v5758 = vadd.f32 %v5441, %v5757
        %v5759 = vpop.f32.mrb[0].mxu0
        %v5760 = vadd.f32 %v5445, %v5759
        %v5761 = vpop.f32.mrb[0].mxu0
        %v5762 = vadd.f32 %v5441, %v5761
        %v5763 = vpop.f32.mrb[0].mxu0
        %v5764 = vadd.f32 %v5445, %v5763
        %5765 = vmatprep.mubr.bf16.mxu0 0
        %5766 = vmatmul.mubr.bf16.gmra.mrb[0].mxu0 %v5389
        %v5767 = vpop.f32.mrb[0].mxu0
        %v5768 = vadd.f32 %v5441, %v5767
        %v5769 = vpop.f32.mrb[0].mxu0
        %v5770 = vadd.f32 %v5445, %v5769
        %v5771 = vpop.f32.mrb[0].mxu0
        %v5772 = vadd.f32 %v5441, %v5771
        %v5773 = vpop.f32.mrb[0].mxu0
        %v5774 = vadd.f32 %v5445, %v5773
        %5775 = vmatprep.mubr.bf16.mxu0 0
        %5776 = vmatmul.mubr.bf16.gmra.mrb[0].mxu0 %v5390
        %v5777 = vpop.f32.mrb[0].mxu0
        %v5778 = vadd.f32 %v5441, %v5777
        %v5779 = vpop.f32.mrb[0].mxu0
        %v5780 = vadd.f32 %v5445, %v5779
        %v5781 = vpop.f32.mrb[0].mxu0
        %v5782 = vadd.f32 %v5441, %v5781
        %v5783 = vpop.f32.mrb[0].mxu0
        %v5784 = vadd.f32 %v5445, %v5783
        %5785 = vmatprep.mubr.bf16.mxu0 0
        %5786 = vmatmul.mubr.bf16.gmra.mrb[0].mxu0 %v5391
        %v5787 = vpop.f32.mrb[0].mxu0
        %v5788 = vadd.f32 %v5441, %v5787
        %v5789 = vpop.f32.mrb[0].mxu0
        %v5790 = vadd.f32 %v5445, %v5789
        %v5791 = vpop.f32.mrb[0].mxu0
        %v5792 = vadd.f32 %v5441, %v5791
        %v5793 = vpop.f32.mrb[0].mxu0
        %v5794 = vadd.f32 %v5445, %v5793
        %5795 = vmatprep.mubr.bf16.mxu0 0
        %5796 = vmatmul.mubr.bf16.gmra.mrb[0].mxu0 %v5392
        %v5797 = vpop.f32.mrb[0].mxu0
        %v5798 = vadd.f32 %v5441, %v5797
        %v5799 = vpop.f32.mrb[0].mxu0
        %v5800 = vadd.f32 %v5445, %v5799
        %v5801 = vpop.f32.mrb[0].mxu0
        %v5802 = vadd.f32 %v5441, %v5801
        %v5803 = vpop.f32.mrb[0].mxu0
        %v5804 = vadd.f32 %v5445, %v5803
        %5805 = vmatprep.mubr.bf16.mxu0 0
        %5806 = vmatmul.mubr.bf16.gmra.mrb[0].mxu0 %v5393
        %v5807 = vpop.f32.mrb[0].mxu0
        %v5808 = vadd.f32 %v5441, %v5807
        %v5809 = vpop.f32.mrb[0].mxu0
        %v5810 = vadd.f32 %v5445, %v5809
        %v5811 = vpop.f32.mrb[0].mxu0
        %v5812 = vadd.f32 %v5441, %v5811
        %v5813 = vpop.f32.mrb[0].mxu0
        %v5814 = vadd.f32 %v5445, %v5813
        %5815 = vmatprep.mubr.bf16.mxu0 0
        %5816 = vmatmul.mubr.bf16.gmra.mrb[0].mxu0 %v5394
        %v5817 = vpop.f32.mrb[0].mxu0
        %v5818 = vadd.f32 %v5441, %v5817
        %v5819 = vpop.f32.mrb[0].mxu0
        %v5820 = vadd.f32 %v5445, %v5819
        %v5821 = vpop.f32.mrb[0].mxu0
        %v5822 = vadd.f32 %v5441, %v5821
        %v5823 = vpop.f32.mrb[0].mxu0
        %v5824 = vadd.f32 %v5445, %v5823
        %5825 = vmatprep.mubr.bf16.mxu0 0
        %5826 = vmatmul.mubr.bf16.gmra.mrb[0].mxu0 %v5395
        %v5827 = vpop.f32.mrb[0].mxu0
        %v5828 = vadd.f32 %v5441, %v5827
        %v5829 = vpop.f32.mrb[0].mxu0
        %v5830 = vadd.f32 %v5445, %v5829
        %v5831 = vpop.f32.mrb[0].mxu0
        %v5832 = vadd.f32 %v5441, %v5831
        %v5833 = vpop.f32.mrb[0].mxu0
        %v5834 = vadd.f32 %v5445, %v5833
        %5835 = vdwg.mxu0
        %v5836 = vmul.f32 %v5645, 0.5
        %v5837 = vmul.f32 %v5647, 0.5
        %v5838 = vmul.f32 %v5758, 0.5
        %v5839 = vmul.f32 %v5760, 0.5
        %v5840 = vmul.f32 %v5649, 0.5
        %v5841 = vmul.f32 %v5651, 0.5
        %v5842 = vmul.f32 %v5762, 0.5
        %v5843 = vmul.f32 %v5764, 0.5
        %v5844 = vmul.f32 %v5655, 0.5
        %v5845 = vmul.f32 %v5657, 0.5
        %v5846 = vmul.f32 %v5768, 0.5
        %v5847 = vmul.f32 %v5770, 0.5
        %v5848 = vmul.f32 %v5659, 0.5
        %v5849 = vmul.f32 %v5661, 0.5
        %v5850 = vmul.f32 %v5772, 0.5
        %v5851 = vmul.f32 %v5774, 0.5
        %v5852 = vmul.f32 %v5665, 0.5
        %v5853 = vmul.f32 %v5667, 0.5
        %v5854 = vmul.f32 %v5778, 0.5
        %v5855 = vmul.f32 %v5780, 0.5
        %v5856 = vmul.f32 %v5669, 0.5
        %v5857 = vmul.f32 %v5671, 0.5
        %v5858 = vmul.f32 %v5782, 0.5
        %v5859 = vmul.f32 %v5784, 0.5
        %v5860 = vmul.f32 %v5675, 0.5
        %v5861 = vmul.f32 %v5677, 0.5
        %v5862 = vmul.f32 %v5788, 0.5
        %v5863 = vmul.f32 %v5790, 0.5
        %v5864 = vmul.f32 %v5679, 0.5
        %v5865 = vmul.f32 %v5681, 0.5
        %v5866 = vmul.f32 %v5792, 0.5
        %v5867 = vmul.f32 %v5794, 0.5
        %v5868 = vmul.f32 %v5685, 0.5
        %v5869 = vmul.f32 %v5687, 0.5
        %v5870 = vmul.f32 %v5798, 0.5
        %v5871 = vmul.f32 %v5800, 0.5
        %v5872 = vmul.f32 %v5689, 0.5
        %v5873 = vmul.f32 %v5691, 0.5
        %v5874 = vmul.f32 %v5802, 0.5
        %v5875 = vmul.f32 %v5804, 0.5
        %v5876 = vmul.f32 %v5695, 0.5
        %v5877 = vmul.f32 %v5697, 0.5
        %v5878 = vmul.f32 %v5808, 0.5
        %v5879 = vmul.f32 %v5810, 0.5
        %v5880 = vmul.f32 %v5699, 0.5
        %v5881 = vmul.f32 %v5701, 0.5
        %v5882 = vmul.f32 %v5812, 0.5
        %v5883 = vmul.f32 %v5814, 0.5
        %v5884 = vmul.f32 %v5705, 0.5
        %v5885 = vmul.f32 %v5707, 0.5
        %v5886 = vmul.f32 %v5818, 0.5
        %v5887 = vmul.f32 %v5820, 0.5
        %v5888 = vmul.f32 %v5709, 0.5
        %v5889 = vmul.f32 %v5711, 0.5
        %v5890 = vmul.f32 %v5822, 0.5
        %v5891 = vmul.f32 %v5824, 0.5
        %v5892 = vmul.f32 %v5715, 0.5
        %v5893 = vmul.f32 %v5717, 0.5
        %v5894 = vmul.f32 %v5828, 0.5
        %v5895 = vmul.f32 %v5830, 0.5
        %v5896 = vmul.f32 %v5719, 0.5
        %v5897 = vmul.f32 %v5721, 0.5
        %v5898 = vmul.f32 %v5832, 0.5
        %v5899 = vmul.f32 %v5834, 0.5
        %v5900 = vmul.f32 %v5645, 0.70710677
        %v5901 = vmul.f32 %v5647, 0.70710677
        %v5902 = vmul.f32 %v5758, 0.70710677
        %v5903 = vmul.f32 %v5760, 0.70710677
        %v5904 = vmul.f32 %v5649, 0.70710677
        %v5905 = vmul.f32 %v5651, 0.70710677
        %v5906 = vmul.f32 %v5762, 0.70710677
        %v5907 = vmul.f32 %v5764, 0.70710677
        %v5908 = vmul.f32 %v5655, 0.70710677
        %v5909 = vmul.f32 %v5657, 0.70710677
        %v5910 = vmul.f32 %v5768, 0.70710677
        %v5911 = vmul.f32 %v5770, 0.70710677
        %v5912 = vmul.f32 %v5659, 0.70710677
        %v5913 = vmul.f32 %v5661, 0.70710677
        %v5914 = vmul.f32 %v5772, 0.70710677
        %v5915 = vmul.f32 %v5774, 0.70710677
        %v5916 = vmul.f32 %v5665, 0.70710677
        %v5917 = vmul.f32 %v5667, 0.70710677
        %v5918 = vmul.f32 %v5778, 0.70710677
        %v5919 = vmul.f32 %v5780, 0.70710677
        %v5920 = vmul.f32 %v5669, 0.70710677
        %v5921 = vmul.f32 %v5671, 0.70710677
        %v5922 = vmul.f32 %v5782, 0.70710677
        %v5923 = vmul.f32 %v5784, 0.70710677
        %v5924 = vmul.f32 %v5675, 0.70710677
        %v5925 = vmul.f32 %v5677, 0.70710677
        %v5926 = vmul.f32 %v5788, 0.70710677
        %v5927 = vmul.f32 %v5790, 0.70710677
        %v5928 = vmul.f32 %v5679, 0.70710677
        %v5929 = vmul.f32 %v5681, 0.70710677
        %v5930 = vmul.f32 %v5792, 0.70710677
        %v5931 = vmul.f32 %v5794, 0.70710677
        %v5932 = vmul.f32 %v5685, 0.70710677
        %v5933 = vmul.f32 %v5687, 0.70710677
        %v5934 = vmul.f32 %v5798, 0.70710677
        %v5935 = vmul.f32 %v5800, 0.70710677
        %v5936 = vmul.f32 %v5689, 0.70710677
        %v5937 = vmul.f32 %v5691, 0.70710677
        %v5938 = vmul.f32 %v5802, 0.70710677
        %v5939 = vmul.f32 %v5804, 0.70710677
        %v5940 = vmul.f32 %v5695, 0.70710677
        %v5941 = vmul.f32 %v5697, 0.70710677
        %v5942 = vmul.f32 %v5808, 0.70710677
        %v5943 = vmul.f32 %v5810, 0.70710677
        %v5944 = vmul.f32 %v5699, 0.70710677
        %v5945 = vmul.f32 %v5701, 0.70710677
        %v5946 = vmul.f32 %v5812, 0.70710677
        %v5947 = vmul.f32 %v5814, 0.70710677
        %v5948 = vmul.f32 %v5705, 0.70710677
        %v5949 = vmul.f32 %v5707, 0.70710677
        %v5950 = vmul.f32 %v5818, 0.70710677
        %v5951 = vmul.f32 %v5820, 0.70710677
        %v5952 = vmul.f32 %v5709, 0.70710677
        %v5953 = vmul.f32 %v5711, 0.70710677
        %v5954 = vmul.f32 %v5822, 0.70710677
        %v5955 = vmul.f32 %v5824, 0.70710677
        %v5956 = vmul.f32 %v5715, 0.70710677
        %v5957 = vmul.f32 %v5717, 0.70710677
        %v5958 = vmul.f32 %v5828, 0.70710677
        %v5959 = vmul.f32 %v5830, 0.70710677
        %v5960 = vmul.f32 %v5719, 0.70710677
        %v5961 = vmul.f32 %v5721, 0.70710677
        %v5962 = vmul.f32 %v5832, 0.70710677
        %v5963 = vmul.f32 %v5834, 0.70710677
        %v5964 = verf.f32.pop %v5900
        %v5965 = verf.f32.pop %v5901
        %v5966 = verf.f32.pop %v5902
        %v5967 = verf.f32.pop %v5903
        %v5968 = verf.f32.pop %v5904
        %v5969 = verf.f32.pop %v5905
        %v5970 = verf.f32.pop %v5906
        %v5971 = verf.f32.pop %v5907
        %v5972 = verf.f32.pop %v5908
        %v5973 = verf.f32.pop %v5909
        %v5974 = verf.f32.pop %v5910
        %v5975 = verf.f32.pop %v5911
        %v5976 = verf.f32.pop %v5912
        %v5977 = verf.f32.pop %v5913
        %v5978 = verf.f32.pop %v5914
        %v5979 = verf.f32.pop %v5915
        %v5980 = verf.f32.pop %v5916
        %v5981 = verf.f32.pop %v5917
        %v5982 = verf.f32.pop %v5918
        %v5983 = verf.f32.pop %v5919
        %v5984 = verf.f32.pop %v5920
        %v5985 = verf.f32.pop %v5921
        %v5986 = verf.f32.pop %v5922
        %v5987 = verf.f32.pop %v5923
        %v5988 = verf.f32.pop %v5924
        %v5989 = verf.f32.pop %v5925
        %v5990 = verf.f32.pop %v5926
        %v5991 = verf.f32.pop %v5927
        %v5992 = verf.f32.pop %v5928
        %v5993 = verf.f32.pop %v5929
        %v5994 = verf.f32.pop %v5930
        %v5995 = verf.f32.pop %v5931
        %v5996 = verf.f32.pop %v5932
        %v5997 = verf.f32.pop %v5933
        %v5998 = verf.f32.pop %v5934
        %v5999 = verf.f32.pop %v5935
        %v6000 = verf.f32.pop %v5936
        %v6001 = verf.f32.pop %v5937
        %v6002 = verf.f32.pop %v5938
        %v6003 = verf.f32.pop %v5939
        %v6004 = verf.f32.pop %v5940
        %v6005 = verf.f32.pop %v5941
        %v6006 = verf.f32.pop %v5942
        %v6007 = verf.f32.pop %v5943
        %v6008 = verf.f32.pop %v5944
        %v6009 = verf.f32.pop %v5945
        %v6010 = verf.f32.pop %v5946
        %v6011 = verf.f32.pop %v5947
        %v6012 = verf.f32.pop %v5948
        %v6013 = verf.f32.pop %v5949
        %v6014 = verf.f32.pop %v5950
        %v6015 = verf.f32.pop %v5951
        %v6016 = verf.f32.pop %v5952
        %v6017 = verf.f32.pop %v5953
        %v6018 = verf.f32.pop %v5954
        %v6019 = verf.f32.pop %v5955
        %v6020 = verf.f32.pop %v5956
        %v6021 = verf.f32.pop %v5957
        %v6022 = verf.f32.pop %v5958
        %v6023 = verf.f32.pop %v5959
        %v6024 = verf.f32.pop %v5960
        %v6025 = verf.f32.pop %v5961
        %v6026 = verf.f32.pop %v5962
        %v6027 = verf.f32.pop %v5963
        %v6028 = vadd.f32 %v5964, 1.0
        %v6029 = vadd.f32 %v5965, 1.0
        %v6030 = vadd.f32 %v5966, 1.0
        %v6031 = vadd.f32 %v5967, 1.0
        %v6032 = vadd.f32 %v5968, 1.0
        %v6033 = vadd.f32 %v5969, 1.0
        %v6034 = vadd.f32 %v5970, 1.0
        %v6035 = vadd.f32 %v5971, 1.0
        %v6036 = vadd.f32 %v5972, 1.0
        %v6037 = vadd.f32 %v5973, 1.0
        %v6038 = vadd.f32 %v5974, 1.0
        %v6039 = vadd.f32 %v5975, 1.0
        %v6040 = vadd.f32 %v5976, 1.0
        %v6041 = vadd.f32 %v5977, 1.0
        %v6042 = vadd.f32 %v5978, 1.0
        %v6043 = vadd.f32 %v5979, 1.0
        %v6044 = vadd.f32 %v5980, 1.0
        %v6045 = vadd.f32 %v5981, 1.0
        %v6046 = vadd.f32 %v5982, 1.0
        %v6047 = vadd.f32 %v5983, 1.0
        %v6048 = vadd.f32 %v5984, 1.0
        %v6049 = vadd.f32 %v5985, 1.0
        %v6050 = vadd.f32 %v5986, 1.0
        %v6051 = vadd.f32 %v5987, 1.0
        %v6052 = vadd.f32 %v5988, 1.0
        %v6053 = vadd.f32 %v5989, 1.0
        %v6054 = vadd.f32 %v5990, 1.0
        %v6055 = vadd.f32 %v5991, 1.0
        %v6056 = vadd.f32 %v5992, 1.0
        %v6057 = vadd.f32 %v5993, 1.0
        %v6058 = vadd.f32 %v5994, 1.0
        %v6059 = vadd.f32 %v5995, 1.0
        %v6060 = vadd.f32 %v5996, 1.0
        %v6061 = vadd.f32 %v5997, 1.0
        %v6062 = vadd.f32 %v5998, 1.0
        %v6063 = vadd.f32 %v5999, 1.0
        %v6064 = vadd.f32 %v6000, 1.0
        %v6065 = vadd.f32 %v6001, 1.0
        %v6066 = vadd.f32 %v6002, 1.0
        %v6067 = vadd.f32 %v6003, 1.0
        %v6068 = vadd.f32 %v6004, 1.0
        %v6069 = vadd.f32 %v6005, 1.0
        %v6070 = vadd.f32 %v6006, 1.0
        %v6071 = vadd.f32 %v6007, 1.0
        %v6072 = vadd.f32 %v6008, 1.0
        %v6073 = vadd.f32 %v6009, 1.0
        %v6074 = vadd.f32 %v6010, 1.0
        %v6075 = vadd.f32 %v6011, 1.0
        %v6076 = vadd.f32 %v6012, 1.0
        %v6077 = vadd.f32 %v6013, 1.0
        %v6078 = vadd.f32 %v6014, 1.0
        %v6079 = vadd.f32 %v6015, 1.0
        %v6080 = vadd.f32 %v6016, 1.0
        %v6081 = vadd.f32 %v6017, 1.0
        %v6082 = vadd.f32 %v6018, 1.0
        %v6083 = vadd.f32 %v6019, 1.0
        %v6084 = vadd.f32 %v6020, 1.0
        %v6085 = vadd.f32 %v6021, 1.0
        %v6086 = vadd.f32 %v6022, 1.0
        %v6087 = vadd.f32 %v6023, 1.0
        %v6088 = vadd.f32 %v6024, 1.0
        %v6089 = vadd.f32 %v6025, 1.0
        %v6090 = vadd.f32 %v6026, 1.0
        %v6091 = vadd.f32 %v6027, 1.0
        %v6092 = vmul.f32 %v5836, %v6028
        %v6093 = vmul.f32 %v5837, %v6029
        %v6094 = vmul.f32 %v5838, %v6030
        %v6095 = vmul.f32 %v5839, %v6031
        %v6096 = vmul.f32 %v5840, %v6032
        %v6097 = vmul.f32 %v5841, %v6033
        %v6098 = vmul.f32 %v5842, %v6034
        %v6099 = vmul.f32 %v5843, %v6035
        %v6100 = vmul.f32 %v5844, %v6036
        %v6101 = vmul.f32 %v5845, %v6037
        %v6102 = vmul.f32 %v5846, %v6038
        %v6103 = vmul.f32 %v5847, %v6039
        %v6104 = vmul.f32 %v5848, %v6040
        %v6105 = vmul.f32 %v5849, %v6041
        %v6106 = vmul.f32 %v5850, %v6042
        %v6107 = vmul.f32 %v5851, %v6043
        %v6108 = vmul.f32 %v5852, %v6044
        %v6109 = vmul.f32 %v5853, %v6045
        %v6110 = vmul.f32 %v5854, %v6046
        %v6111 = vmul.f32 %v5855, %v6047
        %v6112 = vmul.f32 %v5856, %v6048
        %v6113 = vmul.f32 %v5857, %v6049
        %v6114 = vmul.f32 %v5858, %v6050
        %v6115 = vmul.f32 %v5859, %v6051
        %v6116 = vmul.f32 %v5860, %v6052
        %v6117 = vmul.f32 %v5861, %v6053
        %v6118 = vmul.f32 %v5862, %v6054
        %v6119 = vmul.f32 %v5863, %v6055
        %v6120 = vmul.f32 %v5864, %v6056
        %v6121 = vmul.f32 %v5865, %v6057
        %v6122 = vmul.f32 %v5866, %v6058
        %v6123 = vmul.f32 %v5867, %v6059
        %v6124 = vmul.f32 %v5868, %v6060
        %v6125 = vmul.f32 %v5869, %v6061
        %v6126 = vmul.f32 %v5870, %v6062
        %v6127 = vmul.f32 %v5871, %v6063
        %v6128 = vmul.f32 %v5872, %v6064
        %v6129 = vmul.f32 %v5873, %v6065
        %v6130 = vmul.f32 %v5874, %v6066
        %v6131 = vmul.f32 %v5875, %v6067
        %v6132 = vmul.f32 %v5876, %v6068
        %v6133 = vmul.f32 %v5877, %v6069
        %v6134 = vmul.f32 %v5878, %v6070
        %v6135 = vmul.f32 %v5879, %v6071
        %v6136 = vmul.f32 %v5880, %v6072
        %v6137 = vmul.f32 %v5881, %v6073
        %v6138 = vmul.f32 %v5882, %v6074
        %v6139 = vmul.f32 %v5883, %v6075
        %v6140 = vmul.f32 %v5884, %v6076
        %v6141 = vmul.f32 %v5885, %v6077
        %v6142 = vmul.f32 %v5886, %v6078
        %v6143 = vmul.f32 %v5887, %v6079
        %v6144 = vmul.f32 %v5888, %v6080
        %v6145 = vmul.f32 %v5889, %v6081
        %v6146 = vmul.f32 %v5890, %v6082
        %v6147 = vmul.f32 %v5891, %v6083
        %v6148 = vmul.f32 %v5892, %v6084
        %v6149 = vmul.f32 %v5893, %v6085
        %v6150 = vmul.f32 %v5894, %v6086
        %v6151 = vmul.f32 %v5895, %v6087
        %v6152 = vmul.f32 %v5896, %v6088
        %v6153 = vmul.f32 %v5897, %v6089
        %v6154 = vmul.f32 %v5898, %v6090
        %v6155 = vmul.f32 %v5899, %v6091
        %v6156 = vpack.c.bf16 %v6096, %v6092
        %v6157 = vpack.c.bf16 %v6097, %v6093
        %v6158 = vpack.c.bf16 %v6098, %v6094
        %v6159 = vpack.c.bf16 %v6099, %v6095
        %v6160 = vpack.c.bf16 %v6104, %v6100
        %v6161 = vpack.c.bf16 %v6105, %v6101
        %v6162 = vpack.c.bf16 %v6106, %v6102
        %v6163 = vpack.c.bf16 %v6107, %v6103
        %v6164 = vpack.c.bf16 %v6112, %v6108
        %v6165 = vpack.c.bf16 %v6113, %v6109
        %v6166 = vpack.c.bf16 %v6114, %v6110
        %v6167 = vpack.c.bf16 %v6115, %v6111
        %v6168 = vpack.c.bf16 %v6120, %v6116
        %v6169 = vpack.c.bf16 %v6121, %v6117
        %v6170 = vpack.c.bf16 %v6122, %v6118
        %v6171 = vpack.c.bf16 %v6123, %v6119
        %v6172 = vpack.c.bf16 %v6128, %v6124
        %v6173 = vpack.c.bf16 %v6129, %v6125
        %v6174 = vpack.c.bf16 %v6130, %v6126
        %v6175 = vpack.c.bf16 %v6131, %v6127
        %v6176 = vpack.c.bf16 %v6136, %v6132
        %v6177 = vpack.c.bf16 %v6137, %v6133
        %v6178 = vpack.c.bf16 %v6138, %v6134
        %v6179 = vpack.c.bf16 %v6139, %v6135
        %v6180 = vpack.c.bf16 %v6144, %v6140
        %v6181 = vpack.c.bf16 %v6145, %v6141
        %v6182 = vpack.c.bf16 %v6146, %v6142
        %v6183 = vpack.c.bf16 %v6147, %v6143
        %v6184 = vpack.c.bf16 %v6152, %v6148
        %v6185 = vpack.c.bf16 %v6153, %v6149
        %v6186 = vpack.c.bf16 %v6154, %v6150
        %v6187 = vpack.c.bf16 %v6155, %v6151
        %v6188 = vld [vmem:[#allocation19] sm:$0xff]
        %v6189 = vld [vmem:[#allocation19 + $0x8] sm:$0xff]
        %v6190 = vld [vmem:[#allocation19 + $0x10] sm:$0xff]
        %v6191 = vld [vmem:[#allocation19 + $0x18] sm:$0xff]
        %v6192 = vld [vmem:[#allocation19 + $0x20] sm:$0xff]
        %v6193 = vld [vmem:[#allocation19 + $0x28] sm:$0xff]
        %v6194 = vld [vmem:[#allocation19 + $0x30] sm:$0xff]
        %v6195 = vld [vmem:[#allocation19 + $0x38] sm:$0xff]
        %v6196 = vld [vmem:[#allocation19 + $0x40] sm:$0xff]
        %v6197 = vld [vmem:[#allocation19 + $0x48] sm:$0xff]
        %v6198 = vld [vmem:[#allocation19 + $0x50] sm:$0xff]
        %v6199 = vld [vmem:[#allocation19 + $0x58] sm:$0xff]
        %v6200 = vld [vmem:[#allocation19 + $0x60] sm:$0xff]
        %v6201 = vld [vmem:[#allocation19 + $0x68] sm:$0xff]
        %v6202 = vld [vmem:[#allocation19 + $0x70] sm:$0xff]
        %v6203 = vld [vmem:[#allocation19 + $0x78] sm:$0xff]
        %v6204 = vld [vmem:[#allocation19 + $0x80] sm:$0xff]
        %v6205 = vld [vmem:[#allocation19 + $0x88] sm:$0xff]
        %v6206 = vld [vmem:[#allocation19 + $0x90] sm:$0xff]
        %v6207 = vld [vmem:[#allocation19 + $0x98] sm:$0xff]
        %v6208 = vld [vmem:[#allocation19 + $0xa0] sm:$0xff]
        %v6209 = vld [vmem:[#allocation19 + $0xa8] sm:$0xff]
        %v6210 = vld [vmem:[#allocation19 + $0xb0] sm:$0xff]
        %v6211 = vld [vmem:[#allocation19 + $0xb8] sm:$0xff]
        %v6212 = vld [vmem:[#allocation19 + $0xc0] sm:$0xff]
        %v6213 = vld [vmem:[#allocation19 + $0xc8] sm:$0xff]
        %v6214 = vld [vmem:[#allocation19 + $0xd0] sm:$0xff]
        %v6215 = vld [vmem:[#allocation19 + $0xd8] sm:$0xff]
        %v6216 = vld [vmem:[#allocation19 + $0xe0] sm:$0xff]
        %v6217 = vld [vmem:[#allocation19 + $0xe8] sm:$0xff]
        %v6218 = vld [vmem:[#allocation19 + $0xf0] sm:$0xff]
        %v6219 = vld [vmem:[#allocation19 + $0xf8] sm:$0xff]
        %v6220 = vld [vmem:[#allocation19 + $0x100] sm:$0xff]
        %v6221 = vld [vmem:[#allocation19 + $0x108] sm:$0xff]
        %v6222 = vld [vmem:[#allocation19 + $0x110] sm:$0xff]
        %v6223 = vld [vmem:[#allocation19 + $0x118] sm:$0xff]
        %v6224 = vld [vmem:[#allocation19 + $0x120] sm:$0xff]
        %v6225 = vld [vmem:[#allocation19 + $0x128] sm:$0xff]
        %v6226 = vld [vmem:[#allocation19 + $0x130] sm:$0xff]
        %v6227 = vld [vmem:[#allocation19 + $0x138] sm:$0xff]
        %v6228 = vld [vmem:[#allocation19 + $0x140] sm:$0xff]
        %v6229 = vld [vmem:[#allocation19 + $0x148] sm:$0xff]
        %v6230 = vld [vmem:[#allocation19 + $0x150] sm:$0xff]
        %v6231 = vld [vmem:[#allocation19 + $0x158] sm:$0xff]
        %v6232 = vld [vmem:[#allocation19 + $0x160] sm:$0xff]
        %v6233 = vld [vmem:[#allocation19 + $0x168] sm:$0xff]
        %v6234 = vld [vmem:[#allocation19 + $0x170] sm:$0xff]
        %v6235 = vld [vmem:[#allocation19 + $0x178] sm:$0xff]
        %v6236 = vld [vmem:[#allocation19 + $0x180] sm:$0xff]
        %v6237 = vld [vmem:[#allocation19 + $0x188] sm:$0xff]
        %v6238 = vld [vmem:[#allocation19 + $0x190] sm:$0xff]
        %v6239 = vld [vmem:[#allocation19 + $0x198] sm:$0xff]
        %v6240 = vld [vmem:[#allocation19 + $0x1a0] sm:$0xff]
        %v6241 = vld [vmem:[#allocation19 + $0x1a8] sm:$0xff]
        %v6242 = vld [vmem:[#allocation19 + $0x1b0] sm:$0xff]
        %v6243 = vld [vmem:[#allocation19 + $0x1b8] sm:$0xff]
        %v6244 = vld [vmem:[#allocation19 + $0x1c0] sm:$0xff]
        %v6245 = vld [vmem:[#allocation19 + $0x1c8] sm:$0xff]
        %v6246 = vld [vmem:[#allocation19 + $0x1d0] sm:$0xff]
        %v6247 = vld [vmem:[#allocation19 + $0x1d8] sm:$0xff]
        %v6248 = vld [vmem:[#allocation19 + $0x1e0] sm:$0xff]
        %v6249 = vld [vmem:[#allocation19 + $0x1e8] sm:$0xff]
        %v6250 = vld [vmem:[#allocation19 + $0x1f0] sm:$0xff]
        %v6251 = vld [vmem:[#allocation19 + $0x1f8] sm:$0xff]
        %v6252 = vld [vmem:[#allocation19 + $0x200] sm:$0xff]
        %v6253 = vld [vmem:[#allocation19 + $0x208] sm:$0xff]
        %v6254 = vld [vmem:[#allocation19 + $0x210] sm:$0xff]
        %v6255 = vld [vmem:[#allocation19 + $0x218] sm:$0xff]
        %v6256 = vld [vmem:[#allocation19 + $0x220] sm:$0xff]
        %v6257 = vld [vmem:[#allocation19 + $0x228] sm:$0xff]
        %v6258 = vld [vmem:[#allocation19 + $0x230] sm:$0xff]
        %v6259 = vld [vmem:[#allocation19 + $0x238] sm:$0xff]
        %v6260 = vld [vmem:[#allocation19 + $0x240] sm:$0xff]
        %v6261 = vld [vmem:[#allocation19 + $0x248] sm:$0xff]
        %v6262 = vld [vmem:[#allocation19 + $0x250] sm:$0xff]
        %v6263 = vld [vmem:[#allocation19 + $0x258] sm:$0xff]
        %v6264 = vld [vmem:[#allocation19 + $0x260] sm:$0xff]
        %v6265 = vld [vmem:[#allocation19 + $0x268] sm:$0xff]
        %v6266 = vld [vmem:[#allocation19 + $0x270] sm:$0xff]
        %v6267 = vld [vmem:[#allocation19 + $0x278] sm:$0xff]
        %v6268 = vld [vmem:[#allocation19 + $0x280] sm:$0xff]
        %v6269 = vld [vmem:[#allocation19 + $0x288] sm:$0xff]
        %v6270 = vld [vmem:[#allocation19 + $0x290] sm:$0xff]
        %v6271 = vld [vmem:[#allocation19 + $0x298] sm:$0xff]
        %v6272 = vld [vmem:[#allocation19 + $0x2a0] sm:$0xff]
        %v6273 = vld [vmem:[#allocation19 + $0x2a8] sm:$0xff]
        %v6274 = vld [vmem:[#allocation19 + $0x2b0] sm:$0xff]
        %v6275 = vld [vmem:[#allocation19 + $0x2b8] sm:$0xff]
        %v6276 = vld [vmem:[#allocation19 + $0x2c0] sm:$0xff]
        %v6277 = vld [vmem:[#allocation19 + $0x2c8] sm:$0xff]
        %v6278 = vld [vmem:[#allocation19 + $0x2d0] sm:$0xff]
        %v6279 = vld [vmem:[#allocation19 + $0x2d8] sm:$0xff]
        %v6280 = vld [vmem:[#allocation19 + $0x2e0] sm:$0xff]
        %v6281 = vld [vmem:[#allocation19 + $0x2e8] sm:$0xff]
        %v6282 = vld [vmem:[#allocation19 + $0x2f0] sm:$0xff]
        %v6283 = vld [vmem:[#allocation19 + $0x2f8] sm:$0xff]
        %v6284 = vld [vmem:[#allocation19 + $0x300] sm:$0xff]
        %v6285 = vld [vmem:[#allocation19 + $0x308] sm:$0xff]
        %v6286 = vld [vmem:[#allocation19 + $0x310] sm:$0xff]
        %v6287 = vld [vmem:[#allocation19 + $0x318] sm:$0xff]
        %v6288 = vld [vmem:[#allocation19 + $0x320] sm:$0xff]
        %v6289 = vld [vmem:[#allocation19 + $0x328] sm:$0xff]
        %v6290 = vld [vmem:[#allocation19 + $0x330] sm:$0xff]
        %v6291 = vld [vmem:[#allocation19 + $0x338] sm:$0xff]
        %v6292 = vld [vmem:[#allocation19 + $0x340] sm:$0xff]
        %v6293 = vld [vmem:[#allocation19 + $0x348] sm:$0xff]
        %v6294 = vld [vmem:[#allocation19 + $0x350] sm:$0xff]
        %v6295 = vld [vmem:[#allocation19 + $0x358] sm:$0xff]
        %v6296 = vld [vmem:[#allocation19 + $0x360] sm:$0xff]
        %v6297 = vld [vmem:[#allocation19 + $0x368] sm:$0xff]
        %v6298 = vld [vmem:[#allocation19 + $0x370] sm:$0xff]
        %v6299 = vld [vmem:[#allocation19 + $0x378] sm:$0xff]
        %v6300 = vld [vmem:[#allocation19 + $0x380] sm:$0xff]
        %v6301 = vld [vmem:[#allocation19 + $0x388] sm:$0xff]
        %v6302 = vld [vmem:[#allocation19 + $0x390] sm:$0xff]
        %v6303 = vld [vmem:[#allocation19 + $0x398] sm:$0xff]
        %v6304 = vld [vmem:[#allocation19 + $0x3a0] sm:$0xff]
        %v6305 = vld [vmem:[#allocation19 + $0x3a8] sm:$0xff]
        %v6306 = vld [vmem:[#allocation19 + $0x3b0] sm:$0xff]
        %v6307 = vld [vmem:[#allocation19 + $0x3b8] sm:$0xff]
        %v6308 = vld [vmem:[#allocation19 + $0x3c0] sm:$0xff]
        %v6309 = vld [vmem:[#allocation19 + $0x3c8] sm:$0xff]
        %v6310 = vld [vmem:[#allocation19 + $0x3d0] sm:$0xff]
        %v6311 = vld [vmem:[#allocation19 + $0x3d8] sm:$0xff]
        %v6312 = vld [vmem:[#allocation19 + $0x3e0] sm:$0xff]
        %v6313 = vld [vmem:[#allocation19 + $0x3e8] sm:$0xff]
        %v6314 = vld [vmem:[#allocation19 + $0x3f0] sm:$0xff]
        %v6315 = vld [vmem:[#allocation19 + $0x3f8] sm:$0xff]
        %v6316 = vld [vmem:[%s19] sm:$0xf]
        %v6318 = vlaneseq
        %v6319 = vshrl.u32 %v6318, 7
        %v6320 = vsub.s32 0, %v6319
        %v6321 = vrot.slane %v6316, %v6320
        %v6322 = vlaneseq
        %v6323 = vshrl.u32 %v6322, 7
        %v6324 = vsub.s32 1, %v6323
        %v6325 = vrot.slane %v6316, %v6324
        %v6326 = vlaneseq
        %v6327 = vshrl.u32 %v6326, 7
        %v6328 = vsub.s32 2, %v6327
        %v6329 = vrot.slane %v6316, %v6328
        %v6330 = vlaneseq
        %v6331 = vshrl.u32 %v6330, 7
        %v6332 = vsub.s32 3, %v6331
        %v6333 = vrot.slane %v6316, %v6332
        %v6466 = vunpack.c.l.b16 %v6188
        %v6467 = vunpack.c.h.b16 %v6188
        %v6468 = vunpack.c.l.b16 %v6189
        %v6469 = vunpack.c.h.b16 %v6189
        %v6470 = vunpack.c.l.b16 %v6190
        %v6471 = vunpack.c.h.b16 %v6190
        %v6472 = vunpack.c.l.b16 %v6191
        %v6473 = vunpack.c.h.b16 %v6191
        %v6474 = vunpack.c.l.b16 %v6192
        %v6475 = vunpack.c.h.b16 %v6192
        %v6476 = vunpack.c.l.b16 %v6193
        %v6477 = vunpack.c.h.b16 %v6193
        %v6478 = vunpack.c.l.b16 %v6194
        %v6479 = vunpack.c.h.b16 %v6194
        %v6480 = vunpack.c.l.b16 %v6195
        %v6481 = vunpack.c.h.b16 %v6195
        %v6482 = vunpack.c.l.b16 %v6196
        %v6483 = vunpack.c.h.b16 %v6196
        %v6484 = vunpack.c.l.b16 %v6197
        %v6485 = vunpack.c.h.b16 %v6197
        %v6486 = vunpack.c.l.b16 %v6198
        %v6487 = vunpack.c.h.b16 %v6198
        %v6488 = vunpack.c.l.b16 %v6199
        %v6489 = vunpack.c.h.b16 %v6199
        %v6490 = vunpack.c.l.b16 %v6200
        %v6491 = vunpack.c.h.b16 %v6200
        %v6492 = vunpack.c.l.b16 %v6201
        %v6493 = vunpack.c.h.b16 %v6201
        %v6494 = vunpack.c.l.b16 %v6202
        %v6495 = vunpack.c.h.b16 %v6202
        %v6496 = vunpack.c.l.b16 %v6203
        %v6497 = vunpack.c.h.b16 %v6203
        %v6498 = vunpack.c.l.b16 %v6204
        %v6499 = vunpack.c.h.b16 %v6204
        %v6500 = vunpack.c.l.b16 %v6205
        %v6501 = vunpack.c.h.b16 %v6205
        %v6502 = vunpack.c.l.b16 %v6206
        %v6503 = vunpack.c.h.b16 %v6206
        %v6504 = vunpack.c.l.b16 %v6207
        %v6505 = vunpack.c.h.b16 %v6207
        %v6506 = vunpack.c.l.b16 %v6208
        %v6507 = vunpack.c.h.b16 %v6208
        %v6508 = vunpack.c.l.b16 %v6209
        %v6509 = vunpack.c.h.b16 %v6209
        %v6510 = vunpack.c.l.b16 %v6210
        %v6511 = vunpack.c.h.b16 %v6210
        %v6512 = vunpack.c.l.b16 %v6211
        %v6513 = vunpack.c.h.b16 %v6211
        %v6514 = vunpack.c.l.b16 %v6212
        %v6515 = vunpack.c.h.b16 %v6212
        %v6516 = vunpack.c.l.b16 %v6213
        %v6517 = vunpack.c.h.b16 %v6213
        %v6518 = vunpack.c.l.b16 %v6214
        %v6519 = vunpack.c.h.b16 %v6214
        %v6520 = vunpack.c.l.b16 %v6215
        %v6521 = vunpack.c.h.b16 %v6215
        %v6522 = vunpack.c.l.b16 %v6216
        %v6523 = vunpack.c.h.b16 %v6216
        %v6524 = vunpack.c.l.b16 %v6217
        %v6525 = vunpack.c.h.b16 %v6217
        %v6526 = vunpack.c.l.b16 %v6218
        %v6527 = vunpack.c.h.b16 %v6218
        %v6528 = vunpack.c.l.b16 %v6219
        %v6529 = vunpack.c.h.b16 %v6219
        %v6530 = vunpack.c.l.b16 %v6220
        %v6531 = vunpack.c.h.b16 %v6220
        %v6532 = vunpack.c.l.b16 %v6221
        %v6533 = vunpack.c.h.b16 %v6221
        %v6534 = vunpack.c.l.b16 %v6222
        %v6535 = vunpack.c.h.b16 %v6222
        %v6536 = vunpack.c.l.b16 %v6223
        %v6537 = vunpack.c.h.b16 %v6223
        %v6538 = vunpack.c.l.b16 %v6224
        %v6539 = vunpack.c.h.b16 %v6224
        %v6540 = vunpack.c.l.b16 %v6225
        %v6541 = vunpack.c.h.b16 %v6225
        %v6542 = vunpack.c.l.b16 %v6226
        %v6543 = vunpack.c.h.b16 %v6226
        %v6544 = vunpack.c.l.b16 %v6227
        %v6545 = vunpack.c.h.b16 %v6227
        %v6546 = vunpack.c.l.b16 %v6228
        %v6547 = vunpack.c.h.b16 %v6228
        %v6548 = vunpack.c.l.b16 %v6229
        %v6549 = vunpack.c.h.b16 %v6229
        %v6550 = vunpack.c.l.b16 %v6230
        %v6551 = vunpack.c.h.b16 %v6230
        %v6552 = vunpack.c.l.b16 %v6231
        %v6553 = vunpack.c.h.b16 %v6231
        %v6554 = vunpack.c.l.b16 %v6232
        %v6555 = vunpack.c.h.b16 %v6232
        %v6556 = vunpack.c.l.b16 %v6233
        %v6557 = vunpack.c.h.b16 %v6233
        %v6558 = vunpack.c.l.b16 %v6234
        %v6559 = vunpack.c.h.b16 %v6234
        %v6560 = vunpack.c.l.b16 %v6235
        %v6561 = vunpack.c.h.b16 %v6235
        %v6562 = vunpack.c.l.b16 %v6236
        %v6563 = vunpack.c.h.b16 %v6236
        %v6564 = vunpack.c.l.b16 %v6237
        %v6565 = vunpack.c.h.b16 %v6237
        %v6566 = vunpack.c.l.b16 %v6238
        %v6567 = vunpack.c.h.b16 %v6238
        %v6568 = vunpack.c.l.b16 %v6239
        %v6569 = vunpack.c.h.b16 %v6239
        %v6570 = vunpack.c.l.b16 %v6240
        %v6571 = vunpack.c.h.b16 %v6240
        %v6572 = vunpack.c.l.b16 %v6241
        %v6573 = vunpack.c.h.b16 %v6241
        %v6574 = vunpack.c.l.b16 %v6242
        %v6575 = vunpack.c.h.b16 %v6242
        %v6576 = vunpack.c.l.b16 %v6243
        %v6577 = vunpack.c.h.b16 %v6243
        %v6578 = vunpack.c.l.b16 %v6244
        %v6579 = vunpack.c.h.b16 %v6244
        %v6580 = vunpack.c.l.b16 %v6245
        %v6581 = vunpack.c.h.b16 %v6245
        %v6582 = vunpack.c.l.b16 %v6246
        %v6583 = vunpack.c.h.b16 %v6246
        %v6584 = vunpack.c.l.b16 %v6247
        %v6585 = vunpack.c.h.b16 %v6247
        %v6586 = vunpack.c.l.b16 %v6248
        %v6587 = vunpack.c.h.b16 %v6248
        %v6588 = vunpack.c.l.b16 %v6249
        %v6589 = vunpack.c.h.b16 %v6249
        %v6590 = vunpack.c.l.b16 %v6250
        %v6591 = vunpack.c.h.b16 %v6250
        %v6592 = vunpack.c.l.b16 %v6251
        %v6593 = vunpack.c.h.b16 %v6251
        %v6594 = vunpack.c.l.b16 %v6252
        %v6595 = vunpack.c.h.b16 %v6252
        %v6596 = vunpack.c.l.b16 %v6253
        %v6597 = vunpack.c.h.b16 %v6253
        %v6598 = vunpack.c.l.b16 %v6254
        %v6599 = vunpack.c.h.b16 %v6254
        %v6600 = vunpack.c.l.b16 %v6255
        %v6601 = vunpack.c.h.b16 %v6255
        %v6602 = vunpack.c.l.b16 %v6256
        %v6603 = vunpack.c.h.b16 %v6256
        %v6604 = vunpack.c.l.b16 %v6257
        %v6605 = vunpack.c.h.b16 %v6257
        %v6606 = vunpack.c.l.b16 %v6258
        %v6607 = vunpack.c.h.b16 %v6258
        %v6608 = vunpack.c.l.b16 %v6259
        %v6609 = vunpack.c.h.b16 %v6259
        %v6610 = vunpack.c.l.b16 %v6260
        %v6611 = vunpack.c.h.b16 %v6260
        %v6612 = vunpack.c.l.b16 %v6261
        %v6613 = vunpack.c.h.b16 %v6261
        %v6614 = vunpack.c.l.b16 %v6262
        %v6615 = vunpack.c.h.b16 %v6262
        %v6616 = vunpack.c.l.b16 %v6263
        %v6617 = vunpack.c.h.b16 %v6263
        %v6618 = vunpack.c.l.b16 %v6264
        %v6619 = vunpack.c.h.b16 %v6264
        %v6620 = vunpack.c.l.b16 %v6265
        %v6621 = vunpack.c.h.b16 %v6265
        %v6622 = vunpack.c.l.b16 %v6266
        %v6623 = vunpack.c.h.b16 %v6266
        %v6624 = vunpack.c.l.b16 %v6267
        %v6625 = vunpack.c.h.b16 %v6267
        %v6626 = vunpack.c.l.b16 %v6268
        %v6627 = vunpack.c.h.b16 %v6268
        %v6628 = vunpack.c.l.b16 %v6269
        %v6629 = vunpack.c.h.b16 %v6269
        %v6630 = vunpack.c.l.b16 %v6270
        %v6631 = vunpack.c.h.b16 %v6270
        %v6632 = vunpack.c.l.b16 %v6271
        %v6633 = vunpack.c.h.b16 %v6271
        %v6634 = vunpack.c.l.b16 %v6272
        %v6635 = vunpack.c.h.b16 %v6272
        %v6636 = vunpack.c.l.b16 %v6273
        %v6637 = vunpack.c.h.b16 %v6273
        %v6638 = vunpack.c.l.b16 %v6274
        %v6639 = vunpack.c.h.b16 %v6274
        %v6640 = vunpack.c.l.b16 %v6275
        %v6641 = vunpack.c.h.b16 %v6275
        %v6642 = vunpack.c.l.b16 %v6276
        %v6643 = vunpack.c.h.b16 %v6276
        %v6644 = vunpack.c.l.b16 %v6277
        %v6645 = vunpack.c.h.b16 %v6277
        %v6646 = vunpack.c.l.b16 %v6278
        %v6647 = vunpack.c.h.b16 %v6278
        %v6648 = vunpack.c.l.b16 %v6279
        %v6649 = vunpack.c.h.b16 %v6279
        %v6650 = vunpack.c.l.b16 %v6280
        %v6651 = vunpack.c.h.b16 %v6280
        %v6652 = vunpack.c.l.b16 %v6281
        %v6653 = vunpack.c.h.b16 %v6281
        %v6654 = vunpack.c.l.b16 %v6282
        %v6655 = vunpack.c.h.b16 %v6282
        %v6656 = vunpack.c.l.b16 %v6283
        %v6657 = vunpack.c.h.b16 %v6283
        %v6658 = vunpack.c.l.b16 %v6284
        %v6659 = vunpack.c.h.b16 %v6284
        %v6660 = vunpack.c.l.b16 %v6285
        %v6661 = vunpack.c.h.b16 %v6285
        %v6662 = vunpack.c.l.b16 %v6286
        %v6663 = vunpack.c.h.b16 %v6286
        %v6664 = vunpack.c.l.b16 %v6287
        %v6665 = vunpack.c.h.b16 %v6287
        %v6666 = vunpack.c.l.b16 %v6288
        %v6667 = vunpack.c.h.b16 %v6288
        %v6668 = vunpack.c.l.b16 %v6289
        %v6669 = vunpack.c.h.b16 %v6289
        %v6670 = vunpack.c.l.b16 %v6290
        %v6671 = vunpack.c.h.b16 %v6290
        %v6672 = vunpack.c.l.b16 %v6291
        %v6673 = vunpack.c.h.b16 %v6291
        %v6674 = vunpack.c.l.b16 %v6292
        %v6675 = vunpack.c.h.b16 %v6292
        %v6676 = vunpack.c.l.b16 %v6293
        %v6677 = vunpack.c.h.b16 %v6293
        %v6678 = vunpack.c.l.b16 %v6294
        %v6679 = vunpack.c.h.b16 %v6294
        %v6680 = vunpack.c.l.b16 %v6295
        %v6681 = vunpack.c.h.b16 %v6295
        %v6682 = vunpack.c.l.b16 %v6296
        %v6683 = vunpack.c.h.b16 %v6296
        %v6684 = vunpack.c.l.b16 %v6297
        %v6685 = vunpack.c.h.b16 %v6297
        %v6686 = vunpack.c.l.b16 %v6298
        %v6687 = vunpack.c.h.b16 %v6298
        %v6688 = vunpack.c.l.b16 %v6299
        %v6689 = vunpack.c.h.b16 %v6299
        %v6690 = vunpack.c.l.b16 %v6300
        %v6691 = vunpack.c.h.b16 %v6300
        %v6692 = vunpack.c.l.b16 %v6301
        %v6693 = vunpack.c.h.b16 %v6301
        %v6694 = vunpack.c.l.b16 %v6302
        %v6695 = vunpack.c.h.b16 %v6302
        %v6696 = vunpack.c.l.b16 %v6303
        %v6697 = vunpack.c.h.b16 %v6303
        %v6698 = vunpack.c.l.b16 %v6304
        %v6699 = vunpack.c.h.b16 %v6304
        %v6700 = vunpack.c.l.b16 %v6305
        %v6701 = vunpack.c.h.b16 %v6305
        %v6702 = vunpack.c.l.b16 %v6306
        %v6703 = vunpack.c.h.b16 %v6306
        %v6704 = vunpack.c.l.b16 %v6307
        %v6705 = vunpack.c.h.b16 %v6307
        %v6706 = vunpack.c.l.b16 %v6308
        %v6707 = vunpack.c.h.b16 %v6308
        %v6708 = vunpack.c.l.b16 %v6309
        %v6709 = vunpack.c.h.b16 %v6309
        %v6710 = vunpack.c.l.b16 %v6310
        %v6711 = vunpack.c.h.b16 %v6310
        %v6712 = vunpack.c.l.b16 %v6311
        %v6713 = vunpack.c.h.b16 %v6311
        %v6714 = vunpack.c.l.b16 %v6312
        %v6715 = vunpack.c.h.b16 %v6312
        %v6716 = vunpack.c.l.b16 %v6313
        %v6717 = vunpack.c.h.b16 %v6313
        %v6718 = vunpack.c.l.b16 %v6314
        %v6719 = vunpack.c.h.b16 %v6314
        %v6720 = vunpack.c.l.b16 %v6315
        %v6721 = vunpack.c.h.b16 %v6315
        %v6722 = vpack.c.b16 %v6470, %v6466
        %v6723 = vpack.c.b16 %v6471, %v6467
        %v6724 = vpack.c.b16 %v6472, %v6468
        %v6725 = vpack.c.b16 %v6473, %v6469
        %v6726 = vpack.c.b16 %v6478, %v6474
        %v6727 = vpack.c.b16 %v6479, %v6475
        %v6728 = vpack.c.b16 %v6480, %v6476
        %v6729 = vpack.c.b16 %v6481, %v6477
        %v6730 = vpack.c.b16 %v6486, %v6482
        %v6731 = vpack.c.b16 %v6487, %v6483
        %v6732 = vpack.c.b16 %v6488, %v6484
        %v6733 = vpack.c.b16 %v6489, %v6485
        %v6734 = vpack.c.b16 %v6494, %v6490
        %v6735 = vpack.c.b16 %v6495, %v6491
        %v6736 = vpack.c.b16 %v6496, %v6492
        %v6737 = vpack.c.b16 %v6497, %v6493
        %v6738 = vpack.c.b16 %v6502, %v6498
        %v6739 = vpack.c.b16 %v6503, %v6499
        %v6740 = vpack.c.b16 %v6504, %v6500
        %v6741 = vpack.c.b16 %v6505, %v6501
        %v6742 = vpack.c.b16 %v6510, %v6506
        %v6743 = vpack.c.b16 %v6511, %v6507
        %v6744 = vpack.c.b16 %v6512, %v6508
        %v6745 = vpack.c.b16 %v6513, %v6509
        %v6746 = vpack.c.b16 %v6518, %v6514
        %v6747 = vpack.c.b16 %v6519, %v6515
        %v6748 = vpack.c.b16 %v6520, %v6516
        %v6749 = vpack.c.b16 %v6521, %v6517
        %v6750 = vpack.c.b16 %v6526, %v6522
        %v6751 = vpack.c.b16 %v6527, %v6523
        %v6752 = vpack.c.b16 %v6528, %v6524
        %v6753 = vpack.c.b16 %v6529, %v6525
        %v6754 = vpack.c.b16 %v6534, %v6530
        %v6755 = vpack.c.b16 %v6535, %v6531
        %v6756 = vpack.c.b16 %v6536, %v6532
        %v6757 = vpack.c.b16 %v6537, %v6533
        %v6758 = vpack.c.b16 %v6542, %v6538
        %v6759 = vpack.c.b16 %v6543, %v6539
        %v6760 = vpack.c.b16 %v6544, %v6540
        %v6761 = vpack.c.b16 %v6545, %v6541
        %v6762 = vpack.c.b16 %v6550, %v6546
        %v6763 = vpack.c.b16 %v6551, %v6547
        %v6764 = vpack.c.b16 %v6552, %v6548
        %v6765 = vpack.c.b16 %v6553, %v6549
        %v6766 = vpack.c.b16 %v6558, %v6554
        %v6767 = vpack.c.b16 %v6559, %v6555
        %v6768 = vpack.c.b16 %v6560, %v6556
        %v6769 = vpack.c.b16 %v6561, %v6557
        %v6770 = vpack.c.b16 %v6566, %v6562
        %v6771 = vpack.c.b16 %v6567, %v6563
        %v6772 = vpack.c.b16 %v6568, %v6564
        %v6773 = vpack.c.b16 %v6569, %v6565
        %v6774 = vpack.c.b16 %v6574, %v6570
        %v6775 = vpack.c.b16 %v6575, %v6571
        %v6776 = vpack.c.b16 %v6576, %v6572
        %v6777 = vpack.c.b16 %v6577, %v6573
        %v6778 = vpack.c.b16 %v6582, %v6578
        %v6779 = vpack.c.b16 %v6583, %v6579
        %v6780 = vpack.c.b16 %v6584, %v6580
        %v6781 = vpack.c.b16 %v6585, %v6581
        %v6782 = vpack.c.b16 %v6590, %v6586
        %v6783 = vpack.c.b16 %v6591, %v6587
        %v6784 = vpack.c.b16 %v6592, %v6588
        %v6785 = vpack.c.b16 %v6593, %v6589
        %v6786 = vpack.c.b16 %v6598, %v6594
        %v6787 = vpack.c.b16 %v6599, %v6595
        %v6788 = vpack.c.b16 %v6600, %v6596
        %v6789 = vpack.c.b16 %v6601, %v6597
        %v6790 = vpack.c.b16 %v6606, %v6602
        %v6791 = vpack.c.b16 %v6607, %v6603
        %v6792 = vpack.c.b16 %v6608, %v6604
        %v6793 = vpack.c.b16 %v6609, %v6605
        %v6794 = vpack.c.b16 %v6614, %v6610
        %v6795 = vpack.c.b16 %v6615, %v6611
        %v6796 = vpack.c.b16 %v6616, %v6612
        %v6797 = vpack.c.b16 %v6617, %v6613
        %v6798 = vpack.c.b16 %v6622, %v6618
        %v6799 = vpack.c.b16 %v6623, %v6619
        %v6800 = vpack.c.b16 %v6624, %v6620
        %v6801 = vpack.c.b16 %v6625, %v6621
        %v6802 = vpack.c.b16 %v6630, %v6626
        %v6803 = vpack.c.b16 %v6631, %v6627
        %v6804 = vpack.c.b16 %v6632, %v6628
        %v6805 = vpack.c.b16 %v6633, %v6629
        %v6806 = vpack.c.b16 %v6638, %v6634
        %v6807 = vpack.c.b16 %v6639, %v6635
        %v6808 = vpack.c.b16 %v6640, %v6636
        %v6809 = vpack.c.b16 %v6641, %v6637
        %v6810 = vpack.c.b16 %v6646, %v6642
        %v6811 = vpack.c.b16 %v6647, %v6643
        %v6812 = vpack.c.b16 %v6648, %v6644
        %v6813 = vpack.c.b16 %v6649, %v6645
        %v6814 = vpack.c.b16 %v6654, %v6650
        %v6815 = vpack.c.b16 %v6655, %v6651
        %v6816 = vpack.c.b16 %v6656, %v6652
        %v6817 = vpack.c.b16 %v6657, %v6653
        %v6818 = vpack.c.b16 %v6662, %v6658
        %v6819 = vpack.c.b16 %v6663, %v6659
        %v6820 = vpack.c.b16 %v6664, %v6660
        %v6821 = vpack.c.b16 %v6665, %v6661
        %v6822 = vpack.c.b16 %v6670, %v6666
        %v6823 = vpack.c.b16 %v6671, %v6667
        %v6824 = vpack.c.b16 %v6672, %v6668
        %v6825 = vpack.c.b16 %v6673, %v6669
        %v6826 = vpack.c.b16 %v6678, %v6674
        %v6827 = vpack.c.b16 %v6679, %v6675
        %v6828 = vpack.c.b16 %v6680, %v6676
        %v6829 = vpack.c.b16 %v6681, %v6677
        %v6830 = vpack.c.b16 %v6686, %v6682
        %v6831 = vpack.c.b16 %v6687, %v6683
        %v6832 = vpack.c.b16 %v6688, %v6684
        %v6833 = vpack.c.b16 %v6689, %v6685
        %v6834 = vpack.c.b16 %v6694, %v6690
        %v6835 = vpack.c.b16 %v6695, %v6691
        %v6836 = vpack.c.b16 %v6696, %v6692
        %v6837 = vpack.c.b16 %v6697, %v6693
        %v6838 = vpack.c.b16 %v6702, %v6698
        %v6839 = vpack.c.b16 %v6703, %v6699
        %v6840 = vpack.c.b16 %v6704, %v6700
        %v6841 = vpack.c.b16 %v6705, %v6701
        %v6842 = vpack.c.b16 %v6710, %v6706
        %v6843 = vpack.c.b16 %v6711, %v6707
        %v6844 = vpack.c.b16 %v6712, %v6708
        %v6845 = vpack.c.b16 %v6713, %v6709
        %v6846 = vpack.c.b16 %v6718, %v6714
        %v6847 = vpack.c.b16 %v6719, %v6715
        %v6848 = vpack.c.b16 %v6720, %v6716
        %v6849 = vpack.c.b16 %v6721, %v6717
        %6978 = vmatprep.subr.bf16.mxu0 %v6723
        %6979 = vmatpush1.bf16.msra.mxu0 %v6722
        %6980 = vmatprep.subr.bf16.mxu0 %v6727
        %6981 = vmatpush1.bf16.msra.mxu0 %v6726
        %6982 = vmatprep.subr.bf16.mxu0 %v6731
        %6983 = vmatpush1.bf16.msra.mxu0 %v6730
        %6984 = vmatprep.subr.bf16.mxu0 %v6735
        %6985 = vmatpush1.bf16.msra.mxu0 %v6734
        %6986 = vmatprep.subr.bf16.mxu0 %v6739
        %6987 = vmatpush1.bf16.msra.mxu0 %v6738
        %6988 = vmatprep.subr.bf16.mxu0 %v6743
        %6989 = vmatpush1.bf16.msra.mxu0 %v6742
        %6990 = vmatprep.subr.bf16.mxu0 %v6747
        %6991 = vmatpush1.bf16.msra.mxu0 %v6746
        %6992 = vmatprep.subr.bf16.mxu0 %v6751
        %6993 = vmatpush1.bf16.msra.mxu0 %v6750
        %6994 = vmatprep.subr.bf16.mxu0 %v6755
        %6995 = vmatpush1.bf16.msra.mxu0 %v6754
        %6996 = vmatprep.subr.bf16.mxu0 %v6759
        %6997 = vmatpush1.bf16.msra.mxu0 %v6758
        %6998 = vmatprep.subr.bf16.mxu0 %v6763
        %6999 = vmatpush1.bf16.msra.mxu0 %v6762
        %7000 = vmatprep.subr.bf16.mxu0 %v6767
        %7001 = vmatpush1.bf16.msra.mxu0 %v6766
        %7002 = vmatprep.subr.bf16.mxu0 %v6771
        %7003 = vmatpush1.bf16.msra.mxu0 %v6770
        %7004 = vmatprep.subr.bf16.mxu0 %v6775
        %7005 = vmatpush1.bf16.msra.mxu0 %v6774
        %7006 = vmatprep.subr.bf16.mxu0 %v6779
        %7007 = vmatpush1.bf16.msra.mxu0 %v6778
        %7008 = vmatprep.subr.bf16.mxu0 %v6783
        %7009 = vmatpush1.bf16.msra.mxu0 %v6782
        %7010 = vmatprep.mubr.bf16.mxu0 %v6157
        %7011 = vmatmul.mubr.bf16.gmra.mrb[0].mxu0 %v6156
        %v7012 = vpop.f32.mrb[0].mxu0
        %v7013 = vadd.f32 %v6321, %v7012
        %v7014 = vpop.f32.mrb[0].mxu0
        %v7015 = vadd.f32 %v6325, %v7014
        %v7016 = vpop.f32.mrb[0].mxu0
        %v7017 = vadd.f32 %v6321, %v7016
        %v7018 = vpop.f32.mrb[0].mxu0
        %v7019 = vadd.f32 %v6325, %v7018
        %7020 = vmatprep.mubr.bf16.mxu0 %v6161
        %7021 = vmatmul.mubr.bf16.gmra.mrb[0].mxu0 %v6160
        %v7022 = vpop.f32.mrb[0].mxu0
        %v7023 = vadd.f32 %v6321, %v7022
        %v7024 = vpop.f32.mrb[0].mxu0
        %v7025 = vadd.f32 %v6325, %v7024
        %v7026 = vpop.f32.mrb[0].mxu0
        %v7027 = vadd.f32 %v6321, %v7026
        %v7028 = vpop.f32.mrb[0].mxu0
        %v7029 = vadd.f32 %v6325, %v7028
        %7030 = vmatprep.mubr.bf16.mxu0 %v6165
        %7031 = vmatmul.mubr.bf16.gmra.mrb[0].mxu0 %v6164
        %v7032 = vpop.f32.mrb[0].mxu0
        %v7033 = vadd.f32 %v6321, %v7032
        %v7034 = vpop.f32.mrb[0].mxu0
        %v7035 = vadd.f32 %v6325, %v7034
        %v7036 = vpop.f32.mrb[0].mxu0
        %v7037 = vadd.f32 %v6321, %v7036
        %v7038 = vpop.f32.mrb[0].mxu0
        %v7039 = vadd.f32 %v6325, %v7038
        %7040 = vmatprep.mubr.bf16.mxu0 %v6169
        %7041 = vmatmul.mubr.bf16.gmra.mrb[0].mxu0 %v6168
        %v7042 = vpop.f32.mrb[0].mxu0
        %v7043 = vadd.f32 %v6321, %v7042
        %v7044 = vpop.f32.mrb[0].mxu0
        %v7045 = vadd.f32 %v6325, %v7044
        %v7046 = vpop.f32.mrb[0].mxu0
        %v7047 = vadd.f32 %v6321, %v7046
        %v7048 = vpop.f32.mrb[0].mxu0
        %v7049 = vadd.f32 %v6325, %v7048
        %7050 = vmatprep.mubr.bf16.mxu0 %v6173
        %7051 = vmatmul.mubr.bf16.gmra.mrb[0].mxu0 %v6172
        %v7052 = vpop.f32.mrb[0].mxu0
        %v7053 = vadd.f32 %v6321, %v7052
        %v7054 = vpop.f32.mrb[0].mxu0
        %v7055 = vadd.f32 %v6325, %v7054
        %v7056 = vpop.f32.mrb[0].mxu0
        %v7057 = vadd.f32 %v6321, %v7056
        %v7058 = vpop.f32.mrb[0].mxu0
        %v7059 = vadd.f32 %v6325, %v7058
        %7060 = vmatprep.mubr.bf16.mxu0 %v6177
        %7061 = vmatmul.mubr.bf16.gmra.mrb[0].mxu0 %v6176
        %v7062 = vpop.f32.mrb[0].mxu0
        %v7063 = vadd.f32 %v6321, %v7062
        %v7064 = vpop.f32.mrb[0].mxu0
        %v7065 = vadd.f32 %v6325, %v7064
        %v7066 = vpop.f32.mrb[0].mxu0
        %v7067 = vadd.f32 %v6321, %v7066
        %v7068 = vpop.f32.mrb[0].mxu0
        %v7069 = vadd.f32 %v6325, %v7068
        %7070 = vmatprep.mubr.bf16.mxu0 %v6181
        %7071 = vmatmul.mubr.bf16.gmra.mrb[0].mxu0 %v6180
        %v7072 = vpop.f32.mrb[0].mxu0
        %v7073 = vadd.f32 %v6321, %v7072
        %v7074 = vpop.f32.mrb[0].mxu0
        %v7075 = vadd.f32 %v6325, %v7074
        %v7076 = vpop.f32.mrb[0].mxu0
        %v7077 = vadd.f32 %v6321, %v7076
        %v7078 = vpop.f32.mrb[0].mxu0
        %v7079 = vadd.f32 %v6325, %v7078
        %7080 = vmatprep.mubr.bf16.mxu0 %v6185
        %7081 = vmatmul.mubr.bf16.gmra.mrb[0].mxu0 %v6184
        %v7082 = vpop.f32.mrb[0].mxu0
        %v7083 = vadd.f32 %v6321, %v7082
        %v7084 = vpop.f32.mrb[0].mxu0
        %v7085 = vadd.f32 %v6325, %v7084
        %v7086 = vpop.f32.mrb[0].mxu0
        %v7087 = vadd.f32 %v6321, %v7086
        %v7088 = vpop.f32.mrb[0].mxu0
        %v7089 = vadd.f32 %v6325, %v7088
        %7090 = vdwg.mxu0
        %7091 = vmatprep.subr.bf16.mxu0 %v6787
        %7092 = vmatpush1.bf16.msra.mxu0 %v6786
        %7093 = vmatprep.subr.bf16.mxu0 %v6791
        %7094 = vmatpush1.bf16.msra.mxu0 %v6790
        %7095 = vmatprep.subr.bf16.mxu0 %v6795
        %7096 = vmatpush1.bf16.msra.mxu0 %v6794
        %7097 = vmatprep.subr.bf16.mxu0 %v6799
        %7098 = vmatpush1.bf16.msra.mxu0 %v6798
        %7099 = vmatprep.subr.bf16.mxu0 %v6803
        %7100 = vmatpush1.bf16.msra.mxu0 %v6802
        %7101 = vmatprep.subr.bf16.mxu0 %v6807
        %7102 = vmatpush1.bf16.msra.mxu0 %v6806
        %7103 = vmatprep.subr.bf16.mxu0 %v6811
        %7104 = vmatpush1.bf16.msra.mxu0 %v6810
        %7105 = vmatprep.subr.bf16.mxu0 %v6815
        %7106 = vmatpush1.bf16.msra.mxu0 %v6814
        %7107 = vmatprep.subr.bf16.mxu0 %v6819
        %7108 = vmatpush1.bf16.msra.mxu0 %v6818
        %7109 = vmatprep.subr.bf16.mxu0 %v6823
        %7110 = vmatpush1.bf16.msra.mxu0 %v6822
        %7111 = vmatprep.subr.bf16.mxu0 %v6827
        %7112 = vmatpush1.bf16.msra.mxu0 %v6826
        %7113 = vmatprep.subr.bf16.mxu0 %v6831
        %7114 = vmatpush1.bf16.msra.mxu0 %v6830
        %7115 = vmatprep.subr.bf16.mxu0 %v6835
        %7116 = vmatpush1.bf16.msra.mxu0 %v6834
        %7117 = vmatprep.subr.bf16.mxu0 %v6839
        %7118 = vmatpush1.bf16.msra.mxu0 %v6838
        %7119 = vmatprep.subr.bf16.mxu0 %v6843
        %7120 = vmatpush1.bf16.msra.mxu0 %v6842
        %7121 = vmatprep.subr.bf16.mxu0 %v6847
        %7122 = vmatpush1.bf16.msra.mxu0 %v6846
        %7123 = vmatprep.mubr.bf16.mxu0 %v6159
        %7124 = vmatmul.mubr.bf16.gmra.mrb[0].mxu0 %v6158
        %v7125 = vpop.f32.mrb[0].mxu0
        %v7126 = vadd.f32 %v7013, %v7125
        %v7127 = vpop.f32.mrb[0].mxu0
        %v7128 = vadd.f32 %v7015, %v7127
        %v7129 = vpop.f32.mrb[0].mxu0
        %v7130 = vadd.f32 %v7017, %v7129
        %v7131 = vpop.f32.mrb[0].mxu0
        %v7132 = vadd.f32 %v7019, %v7131
        %7133 = vmatprep.mubr.bf16.mxu0 %v6163
        %7134 = vmatmul.mubr.bf16.gmra.mrb[0].mxu0 %v6162
        %v7135 = vpop.f32.mrb[0].mxu0
        %v7136 = vadd.f32 %v7023, %v7135
        %v7137 = vpop.f32.mrb[0].mxu0
        %v7138 = vadd.f32 %v7025, %v7137
        %v7139 = vpop.f32.mrb[0].mxu0
        %v7140 = vadd.f32 %v7027, %v7139
        %v7141 = vpop.f32.mrb[0].mxu0
        %v7142 = vadd.f32 %v7029, %v7141
        %7143 = vmatprep.mubr.bf16.mxu0 %v6167
        %7144 = vmatmul.mubr.bf16.gmra.mrb[0].mxu0 %v6166
        %v7145 = vpop.f32.mrb[0].mxu0
        %v7146 = vadd.f32 %v7033, %v7145
        %v7147 = vpop.f32.mrb[0].mxu0
        %v7148 = vadd.f32 %v7035, %v7147
        %v7149 = vpop.f32.mrb[0].mxu0
        %v7150 = vadd.f32 %v7037, %v7149
        %v7151 = vpop.f32.mrb[0].mxu0
        %v7152 = vadd.f32 %v7039, %v7151
        %7153 = vmatprep.mubr.bf16.mxu0 %v6171
        %7154 = vmatmul.mubr.bf16.gmra.mrb[0].mxu0 %v6170
        %v7155 = vpop.f32.mrb[0].mxu0
        %v7156 = vadd.f32 %v7043, %v7155
        %v7157 = vpop.f32.mrb[0].mxu0
        %v7158 = vadd.f32 %v7045, %v7157
        %v7159 = vpop.f32.mrb[0].mxu0
        %v7160 = vadd.f32 %v7047, %v7159
        %v7161 = vpop.f32.mrb[0].mxu0
        %v7162 = vadd.f32 %v7049, %v7161
        %7163 = vmatprep.mubr.bf16.mxu0 %v6175
        %7164 = vmatmul.mubr.bf16.gmra.mrb[0].mxu0 %v6174
        %v7165 = vpop.f32.mrb[0].mxu0
        %v7166 = vadd.f32 %v7053, %v7165
        %v7167 = vpop.f32.mrb[0].mxu0
        %v7168 = vadd.f32 %v7055, %v7167
        %v7169 = vpop.f32.mrb[0].mxu0
        %v7170 = vadd.f32 %v7057, %v7169
        %v7171 = vpop.f32.mrb[0].mxu0
        %v7172 = vadd.f32 %v7059, %v7171
        %7173 = vmatprep.mubr.bf16.mxu0 %v6179
        %7174 = vmatmul.mubr.bf16.gmra.mrb[0].mxu0 %v6178
        %v7175 = vpop.f32.mrb[0].mxu0
        %v7176 = vadd.f32 %v7063, %v7175
        %v7177 = vpop.f32.mrb[0].mxu0
        %v7178 = vadd.f32 %v7065, %v7177
        %v7179 = vpop.f32.mrb[0].mxu0
        %v7180 = vadd.f32 %v7067, %v7179
        %v7181 = vpop.f32.mrb[0].mxu0
        %v7182 = vadd.f32 %v7069, %v7181
        %7183 = vmatprep.mubr.bf16.mxu0 %v6183
        %7184 = vmatmul.mubr.bf16.gmra.mrb[0].mxu0 %v6182
        %v7185 = vpop.f32.mrb[0].mxu0
        %v7186 = vadd.f32 %v7073, %v7185
        %v7187 = vpop.f32.mrb[0].mxu0
        %v7188 = vadd.f32 %v7075, %v7187
        %v7189 = vpop.f32.mrb[0].mxu0
        %v7190 = vadd.f32 %v7077, %v7189
        %v7191 = vpop.f32.mrb[0].mxu0
        %v7192 = vadd.f32 %v7079, %v7191
        %7193 = vmatprep.mubr.bf16.mxu0 %v6187
        %7194 = vmatmul.mubr.bf16.gmra.mrb[0].mxu0 %v6186
        %v7195 = vpop.f32.mrb[0].mxu0
        %v7196 = vadd.f32 %v7083, %v7195
        %v7197 = vpop.f32.mrb[0].mxu0
        %v7198 = vadd.f32 %v7085, %v7197
        %v7199 = vpop.f32.mrb[0].mxu0
        %v7200 = vadd.f32 %v7087, %v7199
        %v7201 = vpop.f32.mrb[0].mxu0
        %v7202 = vadd.f32 %v7089, %v7201
        %7203 = vdwg.mxu0
        %7204 = vmatprep.subr.bf16.mxu0 %v6725
        %7205 = vmatpush1.bf16.msra.mxu0 %v6724
        %7206 = vmatprep.subr.bf16.mxu0 %v6729
        %7207 = vmatpush1.bf16.msra.mxu0 %v6728
        %7208 = vmatprep.subr.bf16.mxu0 %v6733
        %7209 = vmatpush1.bf16.msra.mxu0 %v6732
        %7210 = vmatprep.subr.bf16.mxu0 %v6737
        %7211 = vmatpush1.bf16.msra.mxu0 %v6736
        %7212 = vmatprep.subr.bf16.mxu0 %v6741
        %7213 = vmatpush1.bf16.msra.mxu0 %v6740
        %7214 = vmatprep.subr.bf16.mxu0 %v6745
        %7215 = vmatpush1.bf16.msra.mxu0 %v6744
        %7216 = vmatprep.subr.bf16.mxu0 %v6749
        %7217 = vmatpush1.bf16.msra.mxu0 %v6748
        %7218 = vmatprep.subr.bf16.mxu0 %v6753
        %7219 = vmatpush1.bf16.msra.mxu0 %v6752
        %7220 = vmatprep.subr.bf16.mxu0 %v6757
        %7221 = vmatpush1.bf16.msra.mxu0 %v6756
        %7222 = vmatprep.subr.bf16.mxu0 %v6761
        %7223 = vmatpush1.bf16.msra.mxu0 %v6760
        %7224 = vmatprep.subr.bf16.mxu0 %v6765
        %7225 = vmatpush1.bf16.msra.mxu0 %v6764
        %7226 = vmatprep.subr.bf16.mxu0 %v6769
        %7227 = vmatpush1.bf16.msra.mxu0 %v6768
        %7228 = vmatprep.subr.bf16.mxu0 %v6773
        %7229 = vmatpush1.bf16.msra.mxu0 %v6772
        %7230 = vmatprep.subr.bf16.mxu0 %v6777
        %7231 = vmatpush1.bf16.msra.mxu0 %v6776
        %7232 = vmatprep.subr.bf16.mxu0 %v6781
        %7233 = vmatpush1.bf16.msra.mxu0 %v6780
        %7234 = vmatprep.subr.bf16.mxu0 %v6785
        %7235 = vmatpush1.bf16.msra.mxu0 %v6784
        %7236 = vmatprep.mubr.bf16.mxu0 %v6157
        %7237 = vmatmul.mubr.bf16.gmra.mrb[0].mxu0 %v6156
        %v7238 = vpop.f32.mrb[0].mxu0
        %v7239 = vadd.f32 %v6329, %v7238
        %v7240 = vpop.f32.mrb[0].mxu0
        %v7241 = vadd.f32 %v6333, %v7240
        %v7242 = vpop.f32.mrb[0].mxu0
        %v7243 = vadd.f32 %v6329, %v7242
        %v7244 = vpop.f32.mrb[0].mxu0
        %v7245 = vadd.f32 %v6333, %v7244
        %7246 = vmatprep.mubr.bf16.mxu0 %v6161
        %7247 = vmatmul.mubr.bf16.gmra.mrb[0].mxu0 %v6160
        %v7248 = vpop.f32.mrb[0].mxu0
        %v7249 = vadd.f32 %v6329, %v7248
        %v7250 = vpop.f32.mrb[0].mxu0
        %v7251 = vadd.f32 %v6333, %v7250
        %v7252 = vpop.f32.mrb[0].mxu0
        %v7253 = vadd.f32 %v6329, %v7252
        %v7254 = vpop.f32.mrb[0].mxu0
        %v7255 = vadd.f32 %v6333, %v7254
        %7256 = vmatprep.mubr.bf16.mxu0 %v6165
        %7257 = vmatmul.mubr.bf16.gmra.mrb[0].mxu0 %v6164
        %v7258 = vpop.f32.mrb[0].mxu0
        %v7259 = vadd.f32 %v6329, %v7258
        %v7260 = vpop.f32.mrb[0].mxu0
        %v7261 = vadd.f32 %v6333, %v7260
        %v7262 = vpop.f32.mrb[0].mxu0
        %v7263 = vadd.f32 %v6329, %v7262
        %v7264 = vpop.f32.mrb[0].mxu0
        %v7265 = vadd.f32 %v6333, %v7264
        %7266 = vmatprep.mubr.bf16.mxu0 %v6169
        %7267 = vmatmul.mubr.bf16.gmra.mrb[0].mxu0 %v6168
        %v7268 = vpop.f32.mrb[0].mxu0
        %v7269 = vadd.f32 %v6329, %v7268
        %v7270 = vpop.f32.mrb[0].mxu0
        %v7271 = vadd.f32 %v6333, %v7270
        %v7272 = vpop.f32.mrb[0].mxu0
        %v7273 = vadd.f32 %v6329, %v7272
        %v7274 = vpop.f32.mrb[0].mxu0
        %v7275 = vadd.f32 %v6333, %v7274
        %7276 = vmatprep.mubr.bf16.mxu0 %v6173
        %7277 = vmatmul.mubr.bf16.gmra.mrb[0].mxu0 %v6172
        %v7278 = vpop.f32.mrb[0].mxu0
        %v7279 = vadd.f32 %v6329, %v7278
        %v7280 = vpop.f32.mrb[0].mxu0
        %v7281 = vadd.f32 %v6333, %v7280
        %v7282 = vpop.f32.mrb[0].mxu0
        %v7283 = vadd.f32 %v6329, %v7282
        %v7284 = vpop.f32.mrb[0].mxu0
        %v7285 = vadd.f32 %v6333, %v7284
        %7286 = vmatprep.mubr.bf16.mxu0 %v6177
        %7287 = vmatmul.mubr.bf16.gmra.mrb[0].mxu0 %v6176
        %v7288 = vpop.f32.mrb[0].mxu0
        %v7289 = vadd.f32 %v6329, %v7288
        %v7290 = vpop.f32.mrb[0].mxu0
        %v7291 = vadd.f32 %v6333, %v7290
        %v7292 = vpop.f32.mrb[0].mxu0
        %v7293 = vadd.f32 %v6329, %v7292
        %v7294 = vpop.f32.mrb[0].mxu0
        %v7295 = vadd.f32 %v6333, %v7294
        %7296 = vmatprep.mubr.bf16.mxu0 %v6181
        %7297 = vmatmul.mubr.bf16.gmra.mrb[0].mxu0 %v6180
        %v7298 = vpop.f32.mrb[0].mxu0
        %v7299 = vadd.f32 %v6329, %v7298
        %v7300 = vpop.f32.mrb[0].mxu0
        %v7301 = vadd.f32 %v6333, %v7300
        %v7302 = vpop.f32.mrb[0].mxu0
        %v7303 = vadd.f32 %v6329, %v7302
        %v7304 = vpop.f32.mrb[0].mxu0
        %v7305 = vadd.f32 %v6333, %v7304
        %7306 = vmatprep.mubr.bf16.mxu0 %v6185
        %7307 = vmatmul.mubr.bf16.gmra.mrb[0].mxu0 %v6184
        %v7308 = vpop.f32.mrb[0].mxu0
        %v7309 = vadd.f32 %v6329, %v7308
        %v7310 = vpop.f32.mrb[0].mxu0
        %v7311 = vadd.f32 %v6333, %v7310
        %v7312 = vpop.f32.mrb[0].mxu0
        %v7313 = vadd.f32 %v6329, %v7312
        %v7314 = vpop.f32.mrb[0].mxu0
        %v7315 = vadd.f32 %v6333, %v7314
        %7316 = vdwg.mxu0
        %7317 = vmatprep.subr.bf16.mxu0 %v6789
        %7318 = vmatpush1.bf16.msra.mxu0 %v6788
        %7319 = vmatprep.subr.bf16.mxu0 %v6793
        %7320 = vmatpush1.bf16.msra.mxu0 %v6792
        %7321 = vmatprep.subr.bf16.mxu0 %v6797
        %7322 = vmatpush1.bf16.msra.mxu0 %v6796
        %7323 = vmatprep.subr.bf16.mxu0 %v6801
        %7324 = vmatpush1.bf16.msra.mxu0 %v6800
        %7325 = vmatprep.subr.bf16.mxu0 %v6805
        %7326 = vmatpush1.bf16.msra.mxu0 %v6804
        %7327 = vmatprep.subr.bf16.mxu0 %v6809
        %7328 = vmatpush1.bf16.msra.mxu0 %v6808
        %7329 = vmatprep.subr.bf16.mxu0 %v6813
        %7330 = vmatpush1.bf16.msra.mxu0 %v6812
        %7331 = vmatprep.subr.bf16.mxu0 %v6817
        %7332 = vmatpush1.bf16.msra.mxu0 %v6816
        %7333 = vmatprep.subr.bf16.mxu0 %v6821
        %7334 = vmatpush1.bf16.msra.mxu0 %v6820
        %7335 = vmatprep.subr.bf16.mxu0 %v6825
        %7336 = vmatpush1.bf16.msra.mxu0 %v6824
        %7337 = vmatprep.subr.bf16.mxu0 %v6829
        %7338 = vmatpush1.bf16.msra.mxu0 %v6828
        %7339 = vmatprep.subr.bf16.mxu0 %v6833
        %7340 = vmatpush1.bf16.msra.mxu0 %v6832
        %7341 = vmatprep.subr.bf16.mxu0 %v6837
        %7342 = vmatpush1.bf16.msra.mxu0 %v6836
        %7343 = vmatprep.subr.bf16.mxu0 %v6841
        %7344 = vmatpush1.bf16.msra.mxu0 %v6840
        %7345 = vmatprep.subr.bf16.mxu0 %v6845
        %7346 = vmatpush1.bf16.msra.mxu0 %v6844
        %7347 = vmatprep.subr.bf16.mxu0 %v6849
        %7348 = vmatpush1.bf16.msra.mxu0 %v6848
        %7349 = vmatprep.mubr.bf16.mxu0 %v6159
        %7350 = vmatmul.mubr.bf16.gmra.mrb[0].mxu0 %v6158
        %v7351 = vpop.f32.mrb[0].mxu0
        %v7352 = vadd.f32 %v7239, %v7351
        %v7353 = vpop.f32.mrb[0].mxu0
        %v7354 = vadd.f32 %v7241, %v7353
        %v7355 = vpop.f32.mrb[0].mxu0
        %v7356 = vadd.f32 %v7243, %v7355
        %v7357 = vpop.f32.mrb[0].mxu0
        %v7358 = vadd.f32 %v7245, %v7357
        %7359 = vmatprep.mubr.bf16.mxu0 %v6163
        %7360 = vmatmul.mubr.bf16.gmra.mrb[0].mxu0 %v6162
        %v7361 = vpop.f32.mrb[0].mxu0
        %v7362 = vadd.f32 %v7249, %v7361
        %v7363 = vpop.f32.mrb[0].mxu0
        %v7364 = vadd.f32 %v7251, %v7363
        %v7365 = vpop.f32.mrb[0].mxu0
        %v7366 = vadd.f32 %v7253, %v7365
        %v7367 = vpop.f32.mrb[0].mxu0
        %v7368 = vadd.f32 %v7255, %v7367
        %7369 = vmatprep.mubr.bf16.mxu0 %v6167
        %7370 = vmatmul.mubr.bf16.gmra.mrb[0].mxu0 %v6166
        %v7371 = vpop.f32.mrb[0].mxu0
        %v7372 = vadd.f32 %v7259, %v7371
        %v7373 = vpop.f32.mrb[0].mxu0
        %v7374 = vadd.f32 %v7261, %v7373
        %v7375 = vpop.f32.mrb[0].mxu0
        %v7376 = vadd.f32 %v7263, %v7375
        %v7377 = vpop.f32.mrb[0].mxu0
        %v7378 = vadd.f32 %v7265, %v7377
        %7379 = vmatprep.mubr.bf16.mxu0 %v6171
        %7380 = vmatmul.mubr.bf16.gmra.mrb[0].mxu0 %v6170
        %v7381 = vpop.f32.mrb[0].mxu0
        %v7382 = vadd.f32 %v7269, %v7381
        %v7383 = vpop.f32.mrb[0].mxu0
        %v7384 = vadd.f32 %v7271, %v7383
        %v7385 = vpop.f32.mrb[0].mxu0
        %v7386 = vadd.f32 %v7273, %v7385
        %v7387 = vpop.f32.mrb[0].mxu0
        %v7388 = vadd.f32 %v7275, %v7387
        %7389 = vmatprep.mubr.bf16.mxu0 %v6175
        %7390 = vmatmul.mubr.bf16.gmra.mrb[0].mxu0 %v6174
        %v7391 = vpop.f32.mrb[0].mxu0
        %v7392 = vadd.f32 %v7279, %v7391
        %v7393 = vpop.f32.mrb[0].mxu0
        %v7394 = vadd.f32 %v7281, %v7393
        %v7395 = vpop.f32.mrb[0].mxu0
        %v7396 = vadd.f32 %v7283, %v7395
        %v7397 = vpop.f32.mrb[0].mxu0
        %v7398 = vadd.f32 %v7285, %v7397
        %7399 = vmatprep.mubr.bf16.mxu0 %v6179
        %7400 = vmatmul.mubr.bf16.gmra.mrb[0].mxu0 %v6178
        %v7401 = vpop.f32.mrb[0].mxu0
        %v7402 = vadd.f32 %v7289, %v7401
        %v7403 = vpop.f32.mrb[0].mxu0
        %v7404 = vadd.f32 %v7291, %v7403
        %v7405 = vpop.f32.mrb[0].mxu0
        %v7406 = vadd.f32 %v7293, %v7405
        %v7407 = vpop.f32.mrb[0].mxu0
        %v7408 = vadd.f32 %v7295, %v7407
        %7409 = vmatprep.mubr.bf16.mxu0 %v6183
        %7410 = vmatmul.mubr.bf16.gmra.mrb[0].mxu0 %v6182
        %v7411 = vpop.f32.mrb[0].mxu0
        %v7412 = vadd.f32 %v7299, %v7411
        %v7413 = vpop.f32.mrb[0].mxu0
        %v7414 = vadd.f32 %v7301, %v7413
        %v7415 = vpop.f32.mrb[0].mxu0
        %v7416 = vadd.f32 %v7303, %v7415
        %v7417 = vpop.f32.mrb[0].mxu0
        %v7418 = vadd.f32 %v7305, %v7417
        %7419 = vmatprep.mubr.bf16.mxu0 %v6187
        %7420 = vmatmul.mubr.bf16.gmra.mrb[0].mxu0 %v6186
        %v7421 = vpop.f32.mrb[0].mxu0
        %v7422 = vadd.f32 %v7309, %v7421
        %v7423 = vpop.f32.mrb[0].mxu0
        %v7424 = vadd.f32 %v7311, %v7423
        %v7425 = vpop.f32.mrb[0].mxu0
        %v7426 = vadd.f32 %v7313, %v7425
        %v7427 = vpop.f32.mrb[0].mxu0
        %v7428 = vadd.f32 %v7315, %v7427
        %7429 = vdwg.mxu0
        %v7430 = vmul.f32 %v7126, 0.5
        %v7431 = vmul.f32 %v7128, 0.5
        %v7432 = vmul.f32 %v7352, 0.5
        %v7433 = vmul.f32 %v7354, 0.5
        %v7434 = vmul.f32 %v7130, 0.5
        %v7435 = vmul.f32 %v7132, 0.5
        %v7436 = vmul.f32 %v7356, 0.5
        %v7437 = vmul.f32 %v7358, 0.5
        %v7438 = vmul.f32 %v7136, 0.5
        %v7439 = vmul.f32 %v7138, 0.5
        %v7440 = vmul.f32 %v7362, 0.5
        %v7441 = vmul.f32 %v7364, 0.5
        %v7442 = vmul.f32 %v7140, 0.5
        %v7443 = vmul.f32 %v7142, 0.5
        %v7444 = vmul.f32 %v7366, 0.5
        %v7445 = vmul.f32 %v7368, 0.5
        %v7446 = vmul.f32 %v7146, 0.5
        %v7447 = vmul.f32 %v7148, 0.5
        %v7448 = vmul.f32 %v7372, 0.5
        %v7449 = vmul.f32 %v7374, 0.5
        %v7450 = vmul.f32 %v7150, 0.5
        %v7451 = vmul.f32 %v7152, 0.5
        %v7452 = vmul.f32 %v7376, 0.5
        %v7453 = vmul.f32 %v7378, 0.5
        %v7454 = vmul.f32 %v7156, 0.5
        %v7455 = vmul.f32 %v7158, 0.5
        %v7456 = vmul.f32 %v7382, 0.5
        %v7457 = vmul.f32 %v7384, 0.5
        %v7458 = vmul.f32 %v7160, 0.5
        %v7459 = vmul.f32 %v7162, 0.5
        %v7460 = vmul.f32 %v7386, 0.5
        %v7461 = vmul.f32 %v7388, 0.5
        %v7462 = vmul.f32 %v7166, 0.5
        %v7463 = vmul.f32 %v7168, 0.5
        %v7464 = vmul.f32 %v7392, 0.5
        %v7465 = vmul.f32 %v7394, 0.5
        %v7466 = vmul.f32 %v7170, 0.5
        %v7467 = vmul.f32 %v7172, 0.5
        %v7468 = vmul.f32 %v7396, 0.5
        %v7469 = vmul.f32 %v7398, 0.5
        %v7470 = vmul.f32 %v7176, 0.5
        %v7471 = vmul.f32 %v7178, 0.5
        %v7472 = vmul.f32 %v7402, 0.5
        %v7473 = vmul.f32 %v7404, 0.5
        %v7474 = vmul.f32 %v7180, 0.5
        %v7475 = vmul.f32 %v7182, 0.5
        %v7476 = vmul.f32 %v7406, 0.5
        %v7477 = vmul.f32 %v7408, 0.5
        %v7478 = vmul.f32 %v7186, 0.5
        %v7479 = vmul.f32 %v7188, 0.5
        %v7480 = vmul.f32 %v7412, 0.5
        %v7481 = vmul.f32 %v7414, 0.5
        %v7482 = vmul.f32 %v7190, 0.5
        %v7483 = vmul.f32 %v7192, 0.5
        %v7484 = vmul.f32 %v7416, 0.5
        %v7485 = vmul.f32 %v7418, 0.5
        %v7486 = vmul.f32 %v7196, 0.5
        %v7487 = vmul.f32 %v7198, 0.5
        %v7488 = vmul.f32 %v7422, 0.5
        %v7489 = vmul.f32 %v7424, 0.5
        %v7490 = vmul.f32 %v7200, 0.5
        %v7491 = vmul.f32 %v7202, 0.5
        %v7492 = vmul.f32 %v7426, 0.5
        %v7493 = vmul.f32 %v7428, 0.5
        %v7494 = vmul.f32 %v7126, 0.70710677
        %v7495 = vmul.f32 %v7128, 0.70710677
        %v7496 = vmul.f32 %v7352, 0.70710677
        %v7497 = vmul.f32 %v7354, 0.70710677
        %v7498 = vmul.f32 %v7130, 0.70710677
        %v7499 = vmul.f32 %v7132, 0.70710677
        %v7500 = vmul.f32 %v7356, 0.70710677
        %v7501 = vmul.f32 %v7358, 0.70710677
        %v7502 = vmul.f32 %v7136, 0.70710677
        %v7503 = vmul.f32 %v7138, 0.70710677
        %v7504 = vmul.f32 %v7362, 0.70710677
        %v7505 = vmul.f32 %v7364, 0.70710677
        %v7506 = vmul.f32 %v7140, 0.70710677
        %v7507 = vmul.f32 %v7142, 0.70710677
        %v7508 = vmul.f32 %v7366, 0.70710677
        %v7509 = vmul.f32 %v7368, 0.70710677
        %v7510 = vmul.f32 %v7146, 0.70710677
        %v7511 = vmul.f32 %v7148, 0.70710677
        %v7512 = vmul.f32 %v7372, 0.70710677
        %v7513 = vmul.f32 %v7374, 0.70710677
        %v7514 = vmul.f32 %v7150, 0.70710677
        %v7515 = vmul.f32 %v7152, 0.70710677
        %v7516 = vmul.f32 %v7376, 0.70710677
        %v7517 = vmul.f32 %v7378, 0.70710677
        %v7518 = vmul.f32 %v7156, 0.70710677
        %v7519 = vmul.f32 %v7158, 0.70710677
        %v7520 = vmul.f32 %v7382, 0.70710677
        %v7521 = vmul.f32 %v7384, 0.70710677
        %v7522 = vmul.f32 %v7160, 0.70710677
        %v7523 = vmul.f32 %v7162, 0.70710677
        %v7524 = vmul.f32 %v7386, 0.70710677
        %v7525 = vmul.f32 %v7388, 0.70710677
        %v7526 = vmul.f32 %v7166, 0.70710677
        %v7527 = vmul.f32 %v7168, 0.70710677
        %v7528 = vmul.f32 %v7392, 0.70710677
        %v7529 = vmul.f32 %v7394, 0.70710677
        %v7530 = vmul.f32 %v7170, 0.70710677
        %v7531 = vmul.f32 %v7172, 0.70710677
        %v7532 = vmul.f32 %v7396, 0.70710677
        %v7533 = vmul.f32 %v7398, 0.70710677
        %v7534 = vmul.f32 %v7176, 0.70710677
        %v7535 = vmul.f32 %v7178, 0.70710677
        %v7536 = vmul.f32 %v7402, 0.70710677
        %v7537 = vmul.f32 %v7404, 0.70710677
        %v7538 = vmul.f32 %v7180, 0.70710677
        %v7539 = vmul.f32 %v7182, 0.70710677
        %v7540 = vmul.f32 %v7406, 0.70710677
        %v7541 = vmul.f32 %v7408, 0.70710677
        %v7542 = vmul.f32 %v7186, 0.70710677
        %v7543 = vmul.f32 %v7188, 0.70710677
        %v7544 = vmul.f32 %v7412, 0.70710677
        %v7545 = vmul.f32 %v7414, 0.70710677
        %v7546 = vmul.f32 %v7190, 0.70710677
        %v7547 = vmul.f32 %v7192, 0.70710677
        %v7548 = vmul.f32 %v7416, 0.70710677
        %v7549 = vmul.f32 %v7418, 0.70710677
        %v7550 = vmul.f32 %v7196, 0.70710677
        %v7551 = vmul.f32 %v7198, 0.70710677
        %v7552 = vmul.f32 %v7422, 0.70710677
        %v7553 = vmul.f32 %v7424, 0.70710677
        %v7554 = vmul.f32 %v7200, 0.70710677
        %v7555 = vmul.f32 %v7202, 0.70710677
        %v7556 = vmul.f32 %v7426, 0.70710677
        %v7557 = vmul.f32 %v7428, 0.70710677
        %v7558 = verf.f32.pop %v7494
        %v7559 = verf.f32.pop %v7495
        %v7560 = verf.f32.pop %v7496
        %v7561 = verf.f32.pop %v7497
        %v7562 = verf.f32.pop %v7498
        %v7563 = verf.f32.pop %v7499
        %v7564 = verf.f32.pop %v7500
        %v7565 = verf.f32.pop %v7501
        %v7566 = verf.f32.pop %v7502
        %v7567 = verf.f32.pop %v7503
        %v7568 = verf.f32.pop %v7504
        %v7569 = verf.f32.pop %v7505
        %v7570 = verf.f32.pop %v7506
        %v7571 = verf.f32.pop %v7507
        %v7572 = verf.f32.pop %v7508
        %v7573 = verf.f32.pop %v7509
        %v7574 = verf.f32.pop %v7510
        %v7575 = verf.f32.pop %v7511
        %v7576 = verf.f32.pop %v7512
        %v7577 = verf.f32.pop %v7513
        %v7578 = verf.f32.pop %v7514
        %v7579 = verf.f32.pop %v7515
        %v7580 = verf.f32.pop %v7516
        %v7581 = verf.f32.pop %v7517
        %v7582 = verf.f32.pop %v7518
        %v7583 = verf.f32.pop %v7519
        %v7584 = verf.f32.pop %v7520
        %v7585 = verf.f32.pop %v7521
        %v7586 = verf.f32.pop %v7522
        %v7587 = verf.f32.pop %v7523
        %v7588 = verf.f32.pop %v7524
        %v7589 = verf.f32.pop %v7525
        %v7590 = verf.f32.pop %v7526
        %v7591 = verf.f32.pop %v7527
        %v7592 = verf.f32.pop %v7528
        %v7593 = verf.f32.pop %v7529
        %v7594 = verf.f32.pop %v7530
        %v7595 = verf.f32.pop %v7531
        %v7596 = verf.f32.pop %v7532
        %v7597 = verf.f32.pop %v7533
        %v7598 = verf.f32.pop %v7534
        %v7599 = verf.f32.pop %v7535
        %v7600 = verf.f32.pop %v7536
        %v7601 = verf.f32.pop %v7537
        %v7602 = verf.f32.pop %v7538
        %v7603 = verf.f32.pop %v7539
        %v7604 = verf.f32.pop %v7540
        %v7605 = verf.f32.pop %v7541
        %v7606 = verf.f32.pop %v7542
        %v7607 = verf.f32.pop %v7543
        %v7608 = verf.f32.pop %v7544
        %v7609 = verf.f32.pop %v7545
        %v7610 = verf.f32.pop %v7546
        %v7611 = verf.f32.pop %v7547
        %v7612 = verf.f32.pop %v7548
        %v7613 = verf.f32.pop %v7549
        %v7614 = verf.f32.pop %v7550
        %v7615 = verf.f32.pop %v7551
        %v7616 = verf.f32.pop %v7552
        %v7617 = verf.f32.pop %v7553
        %v7618 = verf.f32.pop %v7554
        %v7619 = verf.f32.pop %v7555
        %v7620 = verf.f32.pop %v7556
        %v7621 = verf.f32.pop %v7557
        %v7622 = vadd.f32 %v7558, 1.0
        %v7623 = vadd.f32 %v7559, 1.0
        %v7624 = vadd.f32 %v7560, 1.0
        %v7625 = vadd.f32 %v7561, 1.0
        %v7626 = vadd.f32 %v7562, 1.0
        %v7627 = vadd.f32 %v7563, 1.0
        %v7628 = vadd.f32 %v7564, 1.0
        %v7629 = vadd.f32 %v7565, 1.0
        %v7630 = vadd.f32 %v7566, 1.0
        %v7631 = vadd.f32 %v7567, 1.0
        %v7632 = vadd.f32 %v7568, 1.0
        %v7633 = vadd.f32 %v7569, 1.0
        %v7634 = vadd.f32 %v7570, 1.0
        %v7635 = vadd.f32 %v7571, 1.0
        %v7636 = vadd.f32 %v7572, 1.0
        %v7637 = vadd.f32 %v7573, 1.0
        %v7638 = vadd.f32 %v7574, 1.0
        %v7639 = vadd.f32 %v7575, 1.0
        %v7640 = vadd.f32 %v7576, 1.0
        %v7641 = vadd.f32 %v7577, 1.0
        %v7642 = vadd.f32 %v7578, 1.0
        %v7643 = vadd.f32 %v7579, 1.0
        %v7644 = vadd.f32 %v7580, 1.0
        %v7645 = vadd.f32 %v7581, 1.0
        %v7646 = vadd.f32 %v7582, 1.0
        %v7647 = vadd.f32 %v7583, 1.0
        %v7648 = vadd.f32 %v7584, 1.0
        %v7649 = vadd.f32 %v7585, 1.0
        %v7650 = vadd.f32 %v7586, 1.0
        %v7651 = vadd.f32 %v7587, 1.0
        %v7652 = vadd.f32 %v7588, 1.0
        %v7653 = vadd.f32 %v7589, 1.0
        %v7654 = vadd.f32 %v7590, 1.0
        %v7655 = vadd.f32 %v7591, 1.0
        %v7656 = vadd.f32 %v7592, 1.0
        %v7657 = vadd.f32 %v7593, 1.0
        %v7658 = vadd.f32 %v7594, 1.0
        %v7659 = vadd.f32 %v7595, 1.0
        %v7660 = vadd.f32 %v7596, 1.0
        %v7661 = vadd.f32 %v7597, 1.0
        %v7662 = vadd.f32 %v7598, 1.0
        %v7663 = vadd.f32 %v7599, 1.0
        %v7664 = vadd.f32 %v7600, 1.0
        %v7665 = vadd.f32 %v7601, 1.0
        %v7666 = vadd.f32 %v7602, 1.0
        %v7667 = vadd.f32 %v7603, 1.0
        %v7668 = vadd.f32 %v7604, 1.0
        %v7669 = vadd.f32 %v7605, 1.0
        %v7670 = vadd.f32 %v7606, 1.0
        %v7671 = vadd.f32 %v7607, 1.0
        %v7672 = vadd.f32 %v7608, 1.0
        %v7673 = vadd.f32 %v7609, 1.0
        %v7674 = vadd.f32 %v7610, 1.0
        %v7675 = vadd.f32 %v7611, 1.0
        %v7676 = vadd.f32 %v7612, 1.0
        %v7677 = vadd.f32 %v7613, 1.0
        %v7678 = vadd.f32 %v7614, 1.0
        %v7679 = vadd.f32 %v7615, 1.0
        %v7680 = vadd.f32 %v7616, 1.0
        %v7681 = vadd.f32 %v7617, 1.0
        %v7682 = vadd.f32 %v7618, 1.0
        %v7683 = vadd.f32 %v7619, 1.0
        %v7684 = vadd.f32 %v7620, 1.0
        %v7685 = vadd.f32 %v7621, 1.0
        %v7686 = vmul.f32 %v7430, %v7622
        %v7687 = vmul.f32 %v7431, %v7623
        %v7688 = vmul.f32 %v7432, %v7624
        %v7689 = vmul.f32 %v7433, %v7625
        %v7690 = vmul.f32 %v7434, %v7626
        %v7691 = vmul.f32 %v7435, %v7627
        %v7692 = vmul.f32 %v7436, %v7628
        %v7693 = vmul.f32 %v7437, %v7629
        %v7694 = vmul.f32 %v7438, %v7630
        %v7695 = vmul.f32 %v7439, %v7631
        %v7696 = vmul.f32 %v7440, %v7632
        %v7697 = vmul.f32 %v7441, %v7633
        %v7698 = vmul.f32 %v7442, %v7634
        %v7699 = vmul.f32 %v7443, %v7635
        %v7700 = vmul.f32 %v7444, %v7636
        %v7701 = vmul.f32 %v7445, %v7637
        %v7702 = vmul.f32 %v7446, %v7638
        %v7703 = vmul.f32 %v7447, %v7639
        %v7704 = vmul.f32 %v7448, %v7640
        %v7705 = vmul.f32 %v7449, %v7641
        %v7706 = vmul.f32 %v7450, %v7642
        %v7707 = vmul.f32 %v7451, %v7643
        %v7708 = vmul.f32 %v7452, %v7644
        %v7709 = vmul.f32 %v7453, %v7645
        %v7710 = vmul.f32 %v7454, %v7646
        %v7711 = vmul.f32 %v7455, %v7647
        %v7712 = vmul.f32 %v7456, %v7648
        %v7713 = vmul.f32 %v7457, %v7649
        %v7714 = vmul.f32 %v7458, %v7650
        %v7715 = vmul.f32 %v7459, %v7651
        %v7716 = vmul.f32 %v7460, %v7652
        %v7717 = vmul.f32 %v7461, %v7653
        %v7718 = vmul.f32 %v7462, %v7654
        %v7719 = vmul.f32 %v7463, %v7655
        %v7720 = vmul.f32 %v7464, %v7656
        %v7721 = vmul.f32 %v7465, %v7657
        %v7722 = vmul.f32 %v7466, %v7658
        %v7723 = vmul.f32 %v7467, %v7659
        %v7724 = vmul.f32 %v7468, %v7660
        %v7725 = vmul.f32 %v7469, %v7661
        %v7726 = vmul.f32 %v7470, %v7662
        %v7727 = vmul.f32 %v7471, %v7663
        %v7728 = vmul.f32 %v7472, %v7664
        %v7729 = vmul.f32 %v7473, %v7665
        %v7730 = vmul.f32 %v7474, %v7666
        %v7731 = vmul.f32 %v7475, %v7667
        %v7732 = vmul.f32 %v7476, %v7668
        %v7733 = vmul.f32 %v7477, %v7669
        %v7734 = vmul.f32 %v7478, %v7670
        %v7735 = vmul.f32 %v7479, %v7671
        %v7736 = vmul.f32 %v7480, %v7672
        %v7737 = vmul.f32 %v7481, %v7673
        %v7738 = vmul.f32 %v7482, %v7674
        %v7739 = vmul.f32 %v7483, %v7675
        %v7740 = vmul.f32 %v7484, %v7676
        %v7741 = vmul.f32 %v7485, %v7677
        %v7742 = vmul.f32 %v7486, %v7678
        %v7743 = vmul.f32 %v7487, %v7679
        %v7744 = vmul.f32 %v7488, %v7680
        %v7745 = vmul.f32 %v7489, %v7681
        %v7746 = vmul.f32 %v7490, %v7682
        %v7747 = vmul.f32 %v7491, %v7683
        %v7748 = vmul.f32 %v7492, %v7684
        %v7749 = vmul.f32 %v7493, %v7685
        %v7750 = vpack.c.bf16 %v7690, %v7686
        %v7751 = vpack.c.bf16 %v7691, %v7687
        %v7752 = vpack.c.bf16 %v7692, %v7688
        %v7753 = vpack.c.bf16 %v7693, %v7689
        %v7754 = vpack.c.bf16 %v7698, %v7694
        %v7755 = vpack.c.bf16 %v7699, %v7695
        %v7756 = vpack.c.bf16 %v7700, %v7696
        %v7757 = vpack.c.bf16 %v7701, %v7697
        %v7758 = vpack.c.bf16 %v7706, %v7702
        %v7759 = vpack.c.bf16 %v7707, %v7703
        %v7760 = vpack.c.bf16 %v7708, %v7704
        %v7761 = vpack.c.bf16 %v7709, %v7705
        %v7762 = vpack.c.bf16 %v7714, %v7710
        %v7763 = vpack.c.bf16 %v7715, %v7711
        %v7764 = vpack.c.bf16 %v7716, %v7712
        %v7765 = vpack.c.bf16 %v7717, %v7713
        %v7766 = vpack.c.bf16 %v7722, %v7718
        %v7767 = vpack.c.bf16 %v7723, %v7719
        %v7768 = vpack.c.bf16 %v7724, %v7720
        %v7769 = vpack.c.bf16 %v7725, %v7721
        %v7770 = vpack.c.bf16 %v7730, %v7726
        %v7771 = vpack.c.bf16 %v7731, %v7727
        %v7772 = vpack.c.bf16 %v7732, %v7728
        %v7773 = vpack.c.bf16 %v7733, %v7729
        %v7774 = vpack.c.bf16 %v7738, %v7734
        %v7775 = vpack.c.bf16 %v7739, %v7735
        %v7776 = vpack.c.bf16 %v7740, %v7736
        %v7777 = vpack.c.bf16 %v7741, %v7737
        %v7778 = vpack.c.bf16 %v7746, %v7742
        %v7779 = vpack.c.bf16 %v7747, %v7743
        %v7780 = vpack.c.bf16 %v7748, %v7744
        %v7781 = vpack.c.bf16 %v7749, %v7745
        %v7782 = vld [vmem:[#allocation20] sm:$0xf]
        %v7783 = vld [vmem:[#allocation20 + $0x4] sm:$0xf]
        %v7784 = vld [vmem:[#allocation20 + $0x8] sm:$0xf]
        %v7785 = vld [vmem:[#allocation20 + $0xc] sm:$0xf]
        %v7786 = vld [vmem:[#allocation20 + $0x10] sm:$0xf]
        %v7787 = vld [vmem:[#allocation20 + $0x14] sm:$0xf]
        %v7788 = vld [vmem:[#allocation20 + $0x18] sm:$0xf]
        %v7789 = vld [vmem:[#allocation20 + $0x1c] sm:$0xf]
        %v7790 = vld [vmem:[#allocation20 + $0x20] sm:$0xf]
        %v7791 = vld [vmem:[#allocation20 + $0x24] sm:$0xf]
        %v7792 = vld [vmem:[#allocation20 + $0x28] sm:$0xf]
        %v7793 = vld [vmem:[#allocation20 + $0x2c] sm:$0xf]
        %v7794 = vld [vmem:[#allocation20 + $0x30] sm:$0xf]
        %v7795 = vld [vmem:[#allocation20 + $0x34] sm:$0xf]
        %v7796 = vld [vmem:[#allocation20 + $0x38] sm:$0xf]
        %v7797 = vld [vmem:[#allocation20 + $0x3c] sm:$0xf]
        %v7798 = vld [vmem:[#allocation20 + $0x40] sm:$0xf]
        %v7799 = vld [vmem:[#allocation20 + $0x44] sm:$0xf]
        %v7800 = vld [vmem:[#allocation20 + $0x48] sm:$0xf]
        %v7801 = vld [vmem:[#allocation20 + $0x4c] sm:$0xf]
        %v7802 = vld [vmem:[#allocation20 + $0x50] sm:$0xf]
        %v7803 = vld [vmem:[#allocation20 + $0x54] sm:$0xf]
        %v7804 = vld [vmem:[#allocation20 + $0x58] sm:$0xf]
        %v7805 = vld [vmem:[#allocation20 + $0x5c] sm:$0xf]
        %v7806 = vld [vmem:[#allocation20 + $0x60] sm:$0xf]
        %v7807 = vld [vmem:[#allocation20 + $0x64] sm:$0xf]
        %v7808 = vld [vmem:[#allocation20 + $0x68] sm:$0xf]
        %v7809 = vld [vmem:[#allocation20 + $0x6c] sm:$0xf]
        %v7810 = vld [vmem:[#allocation20 + $0x70] sm:$0xf]
        %v7811 = vld [vmem:[#allocation20 + $0x74] sm:$0xf]
        %v7812 = vld [vmem:[#allocation20 + $0x78] sm:$0xf]
        %v7813 = vld [vmem:[#allocation20 + $0x7c] sm:$0xf]
        %v7814 = vld [vmem:[#allocation20 + $0x80] sm:$0xf]
        %v7815 = vld [vmem:[#allocation20 + $0x84] sm:$0xf]
        %v7816 = vld [vmem:[#allocation20 + $0x88] sm:$0xf]
        %v7817 = vld [vmem:[#allocation20 + $0x8c] sm:$0xf]
        %v7818 = vld [vmem:[#allocation20 + $0x90] sm:$0xf]
        %v7819 = vld [vmem:[#allocation20 + $0x94] sm:$0xf]
        %v7820 = vld [vmem:[#allocation20 + $0x98] sm:$0xf]
        %v7821 = vld [vmem:[#allocation20 + $0x9c] sm:$0xf]
        %v7822 = vld [vmem:[#allocation20 + $0xa0] sm:$0xf]
        %v7823 = vld [vmem:[#allocation20 + $0xa4] sm:$0xf]
        %v7824 = vld [vmem:[#allocation20 + $0xa8] sm:$0xf]
        %v7825 = vld [vmem:[#allocation20 + $0xac] sm:$0xf]
        %v7826 = vld [vmem:[#allocation20 + $0xb0] sm:$0xf]
        %v7827 = vld [vmem:[#allocation20 + $0xb4] sm:$0xf]
        %v7828 = vld [vmem:[#allocation20 + $0xb8] sm:$0xf]
        %v7829 = vld [vmem:[#allocation20 + $0xbc] sm:$0xf]
        %v7830 = vld [vmem:[#allocation20 + $0xc0] sm:$0xf]
        %v7831 = vld [vmem:[#allocation20 + $0xc4] sm:$0xf]
        %v7832 = vld [vmem:[#allocation20 + $0xc8] sm:$0xf]
        %v7833 = vld [vmem:[#allocation20 + $0xcc] sm:$0xf]
        %v7834 = vld [vmem:[#allocation20 + $0xd0] sm:$0xf]
        %v7835 = vld [vmem:[#allocation20 + $0xd4] sm:$0xf]
        %v7836 = vld [vmem:[#allocation20 + $0xd8] sm:$0xf]
        %v7837 = vld [vmem:[#allocation20 + $0xdc] sm:$0xf]
        %v7838 = vld [vmem:[#allocation20 + $0xe0] sm:$0xf]
        %v7839 = vld [vmem:[#allocation20 + $0xe4] sm:$0xf]
        %v7840 = vld [vmem:[#allocation20 + $0xe8] sm:$0xf]
        %v7841 = vld [vmem:[#allocation20 + $0xec] sm:$0xf]
        %v7842 = vld [vmem:[#allocation20 + $0xf0] sm:$0xf]
        %v7843 = vld [vmem:[#allocation20 + $0xf4] sm:$0xf]
        %v7844 = vld [vmem:[#allocation20 + $0xf8] sm:$0xf]
        %v7845 = vld [vmem:[#allocation20 + $0xfc] sm:$0xf]
        %v7846 = vld [vmem:[%s21] sm:$0x1]
        %v7848 = vlaneseq
        %v7849 = vshrl.u32 %v7848, 7
        %v7850 = vsub.s32 0, %v7849
        %v7851 = vrot.slane %v7846, %v7850
        %v7917 = vunpack.c.l.b16 %v7782
        %v7918 = vunpack.c.l.b16 %v7783
        %v7919 = vunpack.c.l.b16 %v7784
        %v7920 = vunpack.c.l.b16 %v7785
        %v7921 = vunpack.c.l.b16 %v7786
        %v7922 = vunpack.c.l.b16 %v7787
        %v7923 = vunpack.c.l.b16 %v7788
        %v7924 = vunpack.c.l.b16 %v7789
        %v7925 = vunpack.c.l.b16 %v7790
        %v7926 = vunpack.c.l.b16 %v7791
        %v7927 = vunpack.c.l.b16 %v7792
        %v7928 = vunpack.c.l.b16 %v7793
        %v7929 = vunpack.c.l.b16 %v7794
        %v7930 = vunpack.c.l.b16 %v7795
        %v7931 = vunpack.c.l.b16 %v7796
        %v7932 = vunpack.c.l.b16 %v7797
        %v7933 = vunpack.c.l.b16 %v7798
        %v7934 = vunpack.c.l.b16 %v7799
        %v7935 = vunpack.c.l.b16 %v7800
        %v7936 = vunpack.c.l.b16 %v7801
        %v7937 = vunpack.c.l.b16 %v7802
        %v7938 = vunpack.c.l.b16 %v7803
        %v7939 = vunpack.c.l.b16 %v7804
        %v7940 = vunpack.c.l.b16 %v7805
        %v7941 = vunpack.c.l.b16 %v7806
        %v7942 = vunpack.c.l.b16 %v7807
        %v7943 = vunpack.c.l.b16 %v7808
        %v7944 = vunpack.c.l.b16 %v7809
        %v7945 = vunpack.c.l.b16 %v7810
        %v7946 = vunpack.c.l.b16 %v7811
        %v7947 = vunpack.c.l.b16 %v7812
        %v7948 = vunpack.c.l.b16 %v7813
        %v7949 = vunpack.c.l.b16 %v7814
        %v7950 = vunpack.c.l.b16 %v7815
        %v7951 = vunpack.c.l.b16 %v7816
        %v7952 = vunpack.c.l.b16 %v7817
        %v7953 = vunpack.c.l.b16 %v7818
        %v7954 = vunpack.c.l.b16 %v7819
        %v7955 = vunpack.c.l.b16 %v7820
        %v7956 = vunpack.c.l.b16 %v7821
        %v7957 = vunpack.c.l.b16 %v7822
        %v7958 = vunpack.c.l.b16 %v7823
        %v7959 = vunpack.c.l.b16 %v7824
        %v7960 = vunpack.c.l.b16 %v7825
        %v7961 = vunpack.c.l.b16 %v7826
        %v7962 = vunpack.c.l.b16 %v7827
        %v7963 = vunpack.c.l.b16 %v7828
        %v7964 = vunpack.c.l.b16 %v7829
        %v7965 = vunpack.c.l.b16 %v7830
        %v7966 = vunpack.c.l.b16 %v7831
        %v7967 = vunpack.c.l.b16 %v7832
        %v7968 = vunpack.c.l.b16 %v7833
        %v7969 = vunpack.c.l.b16 %v7834
        %v7970 = vunpack.c.l.b16 %v7835
        %v7971 = vunpack.c.l.b16 %v7836
        %v7972 = vunpack.c.l.b16 %v7837
        %v7973 = vunpack.c.l.b16 %v7838
        %v7974 = vunpack.c.l.b16 %v7839
        %v7975 = vunpack.c.l.b16 %v7840
        %v7976 = vunpack.c.l.b16 %v7841
        %v7977 = vunpack.c.l.b16 %v7842
        %v7978 = vunpack.c.l.b16 %v7843
        %v7979 = vunpack.c.l.b16 %v7844
        %v7980 = vunpack.c.l.b16 %v7845
        %v7981 = vpack.c.b16 %v7918, %v7917
        %v7982 = vpack.c.b16 %v7920, %v7919
        %v7983 = vpack.c.b16 %v7922, %v7921
        %v7984 = vpack.c.b16 %v7924, %v7923
        %v7985 = vpack.c.b16 %v7926, %v7925
        %v7986 = vpack.c.b16 %v7928, %v7927
        %v7987 = vpack.c.b16 %v7930, %v7929
        %v7988 = vpack.c.b16 %v7932, %v7931
        %v7989 = vpack.c.b16 %v7934, %v7933
        %v7990 = vpack.c.b16 %v7936, %v7935
        %v7991 = vpack.c.b16 %v7938, %v7937
        %v7992 = vpack.c.b16 %v7940, %v7939
        %v7993 = vpack.c.b16 %v7942, %v7941
        %v7994 = vpack.c.b16 %v7944, %v7943
        %v7995 = vpack.c.b16 %v7946, %v7945
        %v7996 = vpack.c.b16 %v7948, %v7947
        %v7997 = vpack.c.b16 %v7950, %v7949
        %v7998 = vpack.c.b16 %v7952, %v7951
        %v7999 = vpack.c.b16 %v7954, %v7953
        %v8000 = vpack.c.b16 %v7956, %v7955
        %v8001 = vpack.c.b16 %v7958, %v7957
        %v8002 = vpack.c.b16 %v7960, %v7959
        %v8003 = vpack.c.b16 %v7962, %v7961
        %v8004 = vpack.c.b16 %v7964, %v7963
        %v8005 = vpack.c.b16 %v7966, %v7965
        %v8006 = vpack.c.b16 %v7968, %v7967
        %v8007 = vpack.c.b16 %v7970, %v7969
        %v8008 = vpack.c.b16 %v7972, %v7971
        %v8009 = vpack.c.b16 %v7974, %v7973
        %v8010 = vpack.c.b16 %v7976, %v7975
        %v8011 = vpack.c.b16 %v7978, %v7977
        %v8012 = vpack.c.b16 %v7980, %v7979
        %8045 = vmatprep.subr.bf16.mxu0 0
        %8046 = vmatpush1.bf16.msra.mxu0 %v7981
        %8047 = vmatprep.subr.bf16.mxu0 0
        %8048 = vmatpush1.bf16.msra.mxu0 %v7982
        %8049 = vmatprep.subr.bf16.mxu0 0
        %8050 = vmatpush1.bf16.msra.mxu0 %v7983
        %8051 = vmatprep.subr.bf16.mxu0 0
        %8052 = vmatpush1.bf16.msra.mxu0 %v7984
        %8053 = vmatprep.subr.bf16.mxu0 0
        %8054 = vmatpush1.bf16.msra.mxu0 %v7985
        %8055 = vmatprep.subr.bf16.mxu0 0
        %8056 = vmatpush1.bf16.msra.mxu0 %v7986
        %8057 = vmatprep.subr.bf16.mxu0 0
        %8058 = vmatpush1.bf16.msra.mxu0 %v7987
        %8059 = vmatprep.subr.bf16.mxu0 0
        %8060 = vmatpush1.bf16.msra.mxu0 %v7988
        %8061 = vmatprep.subr.bf16.mxu0 0
        %8062 = vmatpush1.bf16.msra.mxu0 %v7989
        %8063 = vmatprep.subr.bf16.mxu0 0
        %8064 = vmatpush1.bf16.msra.mxu0 %v7990
        %8065 = vmatprep.subr.bf16.mxu0 0
        %8066 = vmatpush1.bf16.msra.mxu0 %v7991
        %8067 = vmatprep.subr.bf16.mxu0 0
        %8068 = vmatpush1.bf16.msra.mxu0 %v7992
        %8069 = vmatprep.subr.bf16.mxu0 0
        %8070 = vmatpush1.bf16.msra.mxu0 %v7993
        %8071 = vmatprep.subr.bf16.mxu0 0
        %8072 = vmatpush1.bf16.msra.mxu0 %v7994
        %8073 = vmatprep.subr.bf16.mxu0 0
        %8074 = vmatpush1.bf16.msra.mxu0 %v7995
        %8075 = vmatprep.subr.bf16.mxu0 0
        %8076 = vmatpush1.bf16.msra.mxu0 %v7996
        %8077 = vmatprep.mubr.bf16.mxu0 %v7751
        %8078 = vmatmul.mubr.bf16.gmra.mrb[0].mxu0 %v7750
        %v8079 = vpop.f32.mrb[0].mxu0
        %v8080 = vadd.f32 %v7851, %v8079
        %v8081 = vpop.f32.mrb[0].mxu0
        %v8082 = vpop.f32.mrb[0].mxu0
        %v8083 = vadd.f32 %v7851, %v8082
        %v8084 = vpop.f32.mrb[0].mxu0
        %8085 = vmatprep.mubr.bf16.mxu0 %v7755
        %8086 = vmatmul.mubr.bf16.gmra.mrb[0].mxu0 %v7754
        %v8087 = vpop.f32.mrb[0].mxu0
        %v8088 = vadd.f32 %v7851, %v8087
        %v8089 = vpop.f32.mrb[0].mxu0
        %v8090 = vpop.f32.mrb[0].mxu0
        %v8091 = vadd.f32 %v7851, %v8090
        %v8092 = vpop.f32.mrb[0].mxu0
        %8093 = vmatprep.mubr.bf16.mxu0 %v7759
        %8094 = vmatmul.mubr.bf16.gmra.mrb[0].mxu0 %v7758
        %v8095 = vpop.f32.mrb[0].mxu0
        %v8096 = vadd.f32 %v7851, %v8095
        %v8097 = vpop.f32.mrb[0].mxu0
        %v8098 = vpop.f32.mrb[0].mxu0
        %v8099 = vadd.f32 %v7851, %v8098
        %v8100 = vpop.f32.mrb[0].mxu0
        %8101 = vmatprep.mubr.bf16.mxu0 %v7763
        %8102 = vmatmul.mubr.bf16.gmra.mrb[0].mxu0 %v7762
        %v8103 = vpop.f32.mrb[0].mxu0
        %v8104 = vadd.f32 %v7851, %v8103
        %v8105 = vpop.f32.mrb[0].mxu0
        %v8106 = vpop.f32.mrb[0].mxu0
        %v8107 = vadd.f32 %v7851, %v8106
        %v8108 = vpop.f32.mrb[0].mxu0
        %8109 = vmatprep.mubr.bf16.mxu0 %v7767
        %8110 = vmatmul.mubr.bf16.gmra.mrb[0].mxu0 %v7766
        %v8111 = vpop.f32.mrb[0].mxu0
        %v8112 = vadd.f32 %v7851, %v8111
        %v8113 = vpop.f32.mrb[0].mxu0
        %v8114 = vpop.f32.mrb[0].mxu0
        %v8115 = vadd.f32 %v7851, %v8114
        %v8116 = vpop.f32.mrb[0].mxu0
        %8117 = vmatprep.mubr.bf16.mxu0 %v7771
        %8118 = vmatmul.mubr.bf16.gmra.mrb[0].mxu0 %v7770
        %v8119 = vpop.f32.mrb[0].mxu0
        %v8120 = vadd.f32 %v7851, %v8119
        %v8121 = vpop.f32.mrb[0].mxu0
        %v8122 = vpop.f32.mrb[0].mxu0
        %v8123 = vadd.f32 %v7851, %v8122
        %v8124 = vpop.f32.mrb[0].mxu0
        %8125 = vmatprep.mubr.bf16.mxu0 %v7775
        %8126 = vmatmul.mubr.bf16.gmra.mrb[0].mxu0 %v7774
        %v8127 = vpop.f32.mrb[0].mxu0
        %v8128 = vadd.f32 %v7851, %v8127
        %v8129 = vpop.f32.mrb[0].mxu0
        %v8130 = vpop.f32.mrb[0].mxu0
        %v8131 = vadd.f32 %v7851, %v8130
        %v8132 = vpop.f32.mrb[0].mxu0
        %8133 = vmatprep.mubr.bf16.mxu0 %v7779
        %8134 = vmatmul.mubr.bf16.gmra.mrb[0].mxu0 %v7778
        %v8135 = vpop.f32.mrb[0].mxu0
        %v8136 = vadd.f32 %v7851, %v8135
        %v8137 = vpop.f32.mrb[0].mxu0
        %v8138 = vpop.f32.mrb[0].mxu0
        %v8139 = vadd.f32 %v7851, %v8138
        %v8140 = vpop.f32.mrb[0].mxu0
        %8141 = vdwg.mxu0
        %8142 = vmatprep.subr.bf16.mxu0 0
        %8143 = vmatpush1.bf16.msra.mxu0 %v7997
        %8144 = vmatprep.subr.bf16.mxu0 0
        %8145 = vmatpush1.bf16.msra.mxu0 %v7998
        %8146 = vmatprep.subr.bf16.mxu0 0
        %8147 = vmatpush1.bf16.msra.mxu0 %v7999
        %8148 = vmatprep.subr.bf16.mxu0 0
        %8149 = vmatpush1.bf16.msra.mxu0 %v8000
        %8150 = vmatprep.subr.bf16.mxu0 0
        %8151 = vmatpush1.bf16.msra.mxu0 %v8001
        %8152 = vmatprep.subr.bf16.mxu0 0
        %8153 = vmatpush1.bf16.msra.mxu0 %v8002
        %8154 = vmatprep.subr.bf16.mxu0 0
        %8155 = vmatpush1.bf16.msra.mxu0 %v8003
        %8156 = vmatprep.subr.bf16.mxu0 0
        %8157 = vmatpush1.bf16.msra.mxu0 %v8004
        %8158 = vmatprep.subr.bf16.mxu0 0
        %8159 = vmatpush1.bf16.msra.mxu0 %v8005
        %8160 = vmatprep.subr.bf16.mxu0 0
        %8161 = vmatpush1.bf16.msra.mxu0 %v8006
        %8162 = vmatprep.subr.bf16.mxu0 0
        %8163 = vmatpush1.bf16.msra.mxu0 %v8007
        %8164 = vmatprep.subr.bf16.mxu0 0
        %8165 = vmatpush1.bf16.msra.mxu0 %v8008
        %8166 = vmatprep.subr.bf16.mxu0 0
        %8167 = vmatpush1.bf16.msra.mxu0 %v8009
        %8168 = vmatprep.subr.bf16.mxu0 0
        %8169 = vmatpush1.bf16.msra.mxu0 %v8010
        %8170 = vmatprep.subr.bf16.mxu0 0
        %8171 = vmatpush1.bf16.msra.mxu0 %v8011
        %8172 = vmatprep.subr.bf16.mxu0 0
        %8173 = vmatpush1.bf16.msra.mxu0 %v8012
        %8174 = vmatprep.mubr.bf16.mxu0 %v7753
        %8175 = vmatmul.mubr.bf16.gmra.mrb[0].mxu0 %v7752
        %v8176 = vpop.f32.mrb[0].mxu0
        %v8177 = vadd.f32 %v8080, %v8176
        %v8178 = vpop.f32.mrb[0].mxu0
        %v8179 = vpop.f32.mrb[0].mxu0
        %v8180 = vadd.f32 %v8083, %v8179
        %v8181 = vpop.f32.mrb[0].mxu0
        %8182 = vmatprep.mubr.bf16.mxu0 %v7757
        %8183 = vmatmul.mubr.bf16.gmra.mrb[0].mxu0 %v7756
        %v8184 = vpop.f32.mrb[0].mxu0
        %v8185 = vadd.f32 %v8088, %v8184
        %v8186 = vpop.f32.mrb[0].mxu0
        %v8187 = vpop.f32.mrb[0].mxu0
        %v8188 = vadd.f32 %v8091, %v8187
        %v8189 = vpop.f32.mrb[0].mxu0
        %8190 = vmatprep.mubr.bf16.mxu0 %v7761
        %8191 = vmatmul.mubr.bf16.gmra.mrb[0].mxu0 %v7760
        %v8192 = vpop.f32.mrb[0].mxu0
        %v8193 = vadd.f32 %v8096, %v8192
        %v8194 = vpop.f32.mrb[0].mxu0
        %v8195 = vpop.f32.mrb[0].mxu0
        %v8196 = vadd.f32 %v8099, %v8195
        %v8197 = vpop.f32.mrb[0].mxu0
        %8198 = vmatprep.mubr.bf16.mxu0 %v7765
        %8199 = vmatmul.mubr.bf16.gmra.mrb[0].mxu0 %v7764
        %v8200 = vpop.f32.mrb[0].mxu0
        %v8201 = vadd.f32 %v8104, %v8200
        %v8202 = vpop.f32.mrb[0].mxu0
        %v8203 = vpop.f32.mrb[0].mxu0
        %v8204 = vadd.f32 %v8107, %v8203
        %v8205 = vpop.f32.mrb[0].mxu0
        %8206 = vmatprep.mubr.bf16.mxu0 %v7769
        %8207 = vmatmul.mubr.bf16.gmra.mrb[0].mxu0 %v7768
        %v8208 = vpop.f32.mrb[0].mxu0
        %v8209 = vadd.f32 %v8112, %v8208
        %v8210 = vpop.f32.mrb[0].mxu0
        %v8211 = vpop.f32.mrb[0].mxu0
        %v8212 = vadd.f32 %v8115, %v8211
        %v8213 = vpop.f32.mrb[0].mxu0
        %8214 = vmatprep.mubr.bf16.mxu0 %v7773
        %8215 = vmatmul.mubr.bf16.gmra.mrb[0].mxu0 %v7772
        %v8216 = vpop.f32.mrb[0].mxu0
        %v8217 = vadd.f32 %v8120, %v8216
        %v8218 = vpop.f32.mrb[0].mxu0
        %v8219 = vpop.f32.mrb[0].mxu0
        %v8220 = vadd.f32 %v8123, %v8219
        %v8221 = vpop.f32.mrb[0].mxu0
        %8222 = vmatprep.mubr.bf16.mxu0 %v7777
        %8223 = vmatmul.mubr.bf16.gmra.mrb[0].mxu0 %v7776
        %v8224 = vpop.f32.mrb[0].mxu0
        %v8225 = vadd.f32 %v8128, %v8224
        %v8226 = vpop.f32.mrb[0].mxu0
        %v8227 = vpop.f32.mrb[0].mxu0
        %v8228 = vadd.f32 %v8131, %v8227
        %v8229 = vpop.f32.mrb[0].mxu0
        %8230 = vmatprep.mubr.bf16.mxu0 %v7781
        %8231 = vmatmul.mubr.bf16.gmra.mrb[0].mxu0 %v7780
        %v8232 = vpop.f32.mrb[0].mxu0
        %v8233 = vadd.f32 %v8136, %v8232
        %v8234 = vpop.f32.mrb[0].mxu0
        %v8235 = vpop.f32.mrb[0].mxu0
        %v8236 = vadd.f32 %v8139, %v8235
        %v8237 = vpop.f32.mrb[0].mxu0
        %8238 = vdwg.mxu0
        %v8239 = vadd.f32 %v5150, %v8177
        %v8240 = vadd.f32 %v5151, %v8180
        %v8241 = vadd.f32 %v5152, %v8185
        %v8242 = vadd.f32 %v5153, %v8188
        %v8243 = vadd.f32 %v5154, %v8193
        %v8244 = vadd.f32 %v5155, %v8196
        %v8245 = vadd.f32 %v5156, %v8201
        %v8246 = vadd.f32 %v5157, %v8204
        %v8247 = vadd.f32 %v5158, %v8209
        %v8248 = vadd.f32 %v5159, %v8212
        %v8249 = vadd.f32 %v5160, %v8217
        %v8250 = vadd.f32 %v5161, %v8220
        %v8251 = vadd.f32 %v5162, %v8225
        %v8252 = vadd.f32 %v5163, %v8228
        %v8253 = vadd.f32 %v5164, %v8233
        %v8254 = vadd.f32 %v5165, %v8236
        %8255 = vst [vmem:[%s875] sm:$0xff] %v8239
        %8256 = vst [vmem:[%s875 + $0x8] sm:$0xff] %v8240
        %8257 = vst [vmem:[%s875 + $0x10] sm:$0xff] %v8241
        %8258 = vst [vmem:[%s875 + $0x18] sm:$0xff] %v8242
        %8259 = vst [vmem:[%s875 + $0x20] sm:$0xff] %v8243
        %8260 = vst [vmem:[%s875 + $0x28] sm:$0xff] %v8244
        %8261 = vst [vmem:[%s875 + $0x30] sm:$0xff] %v8245
        %8262 = vst [vmem:[%s875 + $0x38] sm:$0xff] %v8246
        %8263 = vst [vmem:[%s875 + $0x40] sm:$0xff] %v8247
        %8264 = vst [vmem:[%s875 + $0x48] sm:$0xff] %v8248
        %8265 = vst [vmem:[%s875 + $0x50] sm:$0xff] %v8249
        %8266 = vst [vmem:[%s875 + $0x58] sm:$0xff] %v8250
        %8267 = vst [vmem:[%s875 + $0x60] sm:$0xff] %v8251
        %8268 = vst [vmem:[%s875 + $0x68] sm:$0xff] %v8252
        %8269 = vst [vmem:[%s875 + $0x70] sm:$0xff] %v8253
        %8270 = vst [vmem:[%s875 + $0x78] sm:$0xff] %v8254
        %s8271 = sand.u32 %s542, 1
        %s8272 = scalar_lea.sflag [#allocation7], %s8271
        %s8273 = sand.u32 %s542, 1
        %s8274 = smul.addr %s8273, 128
        %s8275 = scalar_lea.vmem [#allocation22], %s8274
        // Predicated region
        $region153: #{tpu_custom_call.1} parent=107 // pred_check
          %p8276 = pneg %p552
        $region154: #{tpu_custom_call.1} parent=107 // pred_check_branch
          %8278 = sbr.rel (%p8276) target = $region156
        $region155: #{tpu_custom_call.1} parent=107 // pred_region
          %s8279 = smul.u32 16, %s51
          %s8281 = ssub.s32 2048, 2048
          %8282 = vsyncadd %s8272, %s8281
          %s8283 = smul.addr %s50, 32
          %s8284 = sadd.s32 %s8279, %s8283
          %s8285 = smul.addr %s8284, 128
          %s8286 = scalar_lea.hbm %s22, %s8285
          %s8287 = sshll.u32 %s8275, 4
          %s8288 = int_to_ptr.vmem [resolvable:$true] %s8287
          %8293 = dma.vmem_to_hbm [thread:$0]  %s8288, 2048, %s8286, %s8272, 128, 128, 8
        $region156: #{tpu_custom_call.1} parent=107 // pred_fallthru
          _
      $region108: #{tpu_custom_call.1} parent=5 // pred_fallthru
        _
      %p8294 = scmp.le.s32.totalorder 2, %s41
      // Predicated region
      $region157: #{tpu_custom_call.1} parent=5 // pred_check
        %p8295 = pneg %p8294
      $region158: #{tpu_custom_call.1} parent=5 // pred_check_branch
        %8297 = sbr.rel (%p8295) target = $region160
      $region159: #{tpu_custom_call.1} parent=5 // pred_region
        %s8298 = ssub.s32 %s41, 2
        // Predicated region
        $region161: #{tpu_custom_call.1} parent=159 // pred_check
          %p8299 = pneg %p558
        $region162: #{tpu_custom_call.1} parent=159 // pred_check_branch
          %8301 = sbr.rel (%p8299) target = $region164
        $region163: #{tpu_custom_call.1} parent=159 // pred_region
          %s8302 = sand.u32 %s543, 1
          %s8303 = scalar_lea.sflag [#allocation7], %s8302
          %s8304 = sand.u32 %s543, 1
          %s8305 = smul.addr %s8304, 128
          %s8306 = scalar_lea.vmem [#allocation22], %s8305
          %8307 = dma.done %s8303, 2048
        $region164: #{tpu_custom_call.1} parent=159 // pred_fallthru
          _
      $region160: #{tpu_custom_call.1} parent=5 // pred_fallthru
        _
    $region6: #{tpu_custom_call.1} parent=1 // loop_footer
      %s45 = sadd.s32 1, %s41
    $region7: #{tpu_custom_call.1} parent=1 // loop_footer_branch
      %40 = sbr.rel target = $region3
    $region8: #{tpu_custom_call.1} parent=1 // loop_exit
      _
    %8308 = vsyncpa [#allocation6], 1
    %s8309 = scalar_lea.sflag [#allocation6], 1
    %8310 = vsyncpa %s8309, 1
    %8311 = vsyncpa [#allocation9], 1
    %s8312 = scalar_lea.sflag [#allocation9], 1
    %8313 = vsyncpa %s8312, 1
    %8314 = vsyncpa [#allocation12], 1
    %8315 = vsyncpa [#allocation15], 1
    %8316 = vsyncpa [#allocation18], 1
    %8317 = vsyncpa [#allocation21], 1
    %8318 = vsyncpa [#allocation7], 1
    %s8319 = scalar_lea.sflag [#allocation7], 1
    %8320 = vsyncpa %s8319, 1

</llo_original>
